<compile_context>
chip_gen: v5e
topology: v5e:2x2
jax: 0.10.0
libtpu: 0.0.40
codegen_flags: <defaults>
</compile_context>

<pallas_src>
import math

import jax
import jax.numpy as jnp
from jax.experimental import pallas as pl
from jax.experimental.pallas import tpu as pltpu

# ----------------------------- model constants -----------------------------
STATE_DIM = 12
INFO_DIM = 4
ACTION_DIM = 1
FEATURE_DIM = 256
Z1_DIM = 32
Z2_DIM = 256
HIDDEN = 256
SEQ_LEN = 5
DECODER_STD = math.sqrt(0.1)

_VMEM = pl.BlockSpec(memory_space=pltpu.MemorySpace.VMEM)

N_DATA = 7  # info_pad, state_all, act, eps1a, eps2a, eps1b, eps2b
N_OUT = 5   # z1_mean_post, z1_std_post, z1_mean_pri, z1_std_pri, pred_mean

# Fixed flattening order of all weights (wrapper and kernel share this).
WEIGHT_NAMES = (
    # FusionModel (first_encoder): relu(x@W1+b1), relu(@W2+b2); W1 split info/state
    "fe_w1_info", "fe_w1_state", "fe_b1", "fe_w2", "fe_b2",
    # MyMLPEncoder (encoder)
    "enc_w1", "enc_b1", "enc_w2", "enc_b2",
    # z1_posterior_init : Gaussian(FEATURE -> Z1)
    "z1pi_w1", "z1pi_b1", "z1pi_w2", "z1pi_b2",
    "z1pi_wm", "z1pi_bm", "z1pi_ws", "z1pi_bs",
    # z2_prior_init (== z2_posterior_init, shared weights) : Gaussian(Z1 -> Z2)
    "z2pi_w1", "z2pi_b1", "z2pi_w2", "z2pi_b2",
    "z2pi_wm", "z2pi_bm", "z2pi_ws", "z2pi_bs",
    # z1_posterior : Gaussian(FEATURE + Z2 + ACT -> Z1), W1 split by input block
    "z1p_w1_feat", "z1p_w1_z2", "z1p_w1_act", "z1p_b1", "z1p_w2", "z1p_b2",
    "z1p_wm", "z1p_bm", "z1p_ws", "z1p_bs",
    # z2_prior (== z2_posterior, shared weights) : Gaussian(Z1 + Z2 + ACT -> Z2)
    "z2p_w1_z1", "z2p_w1_z2", "z2p_w1_act", "z2p_b1", "z2p_w2", "z2p_b2",
    "z2p_wm", "z2p_bm", "z2p_ws", "z2p_bs",
    # z1_prior : Gaussian(Z2 + ACT -> Z1), W1 split
    "z1pr_w1_z2", "z1pr_w1_act", "z1pr_b1", "z1pr_w2", "z1pr_b2",
    "z1pr_wm", "z1pr_bm", "z1pr_ws", "z1pr_bs",
    # MyMLPDecoder (decoder) : Z1 + Z2 -> STATE_DIM + 1, W1 split
    "dec_w1_z1", "dec_w1_z2", "dec_b1", "dec_w2", "dec_b2", "dec_w3", "dec_b3",
)


# ------------------------------ fused kernel ------------------------------
def _fused_forward_kernel(*refs):
    n_w = len(WEIGHT_NAMES)
    (info_ref, state_ref, act_ref,
     e1a_ref, e2a_ref, e1b_ref, e2b_ref) = refs[:N_DATA]
    w = dict(zip(WEIGHT_NAMES, refs[N_DATA:N_DATA + n_w]))
    (z1m_post_ref, z1s_post_ref, z1m_pri_ref, z1s_pri_ref,
     pred_mean_ref) = refs[N_DATA + n_w:]

    n_rows = act_ref.shape[0]          # B * SEQ_LEN (static)
    batch = n_rows // SEQ_LEN

    def dot(x, name):
        # bf16 MXU operands, f32 accumulation; everything else stays f32.
        return jnp.dot(x.astype(jnp.bfloat16), w[name][...],
                       preferred_element_type=jnp.float32)

    def bias(name):
        return w[name][...]

    act = act_ref[...]                 # [N, 1] f32 (VPU broadcast term)

    # ------------------------- features (encoders) -------------------------
    # Both encoders run on all N rows (info is zero-padded past row `batch`);
    # the fusion result is selected for the t==0 rows with a row-index mask —
    # avoids sublane concatenation / unaligned partial stores entirely.
    info = info_ref[...]
    state = state_ref[...]
    h = jax.nn.relu(dot(info, "fe_w1_info") + dot(state, "fe_w1_state")
                    + bias("fe_b1"))
    feat_fuse = jax.nn.relu(dot(h, "fe_w2") + bias("fe_b2"))
    h = jax.nn.relu(dot(state, "enc_w1") + bias("enc_b1"))
    feat_enc = jax.nn.relu(dot(h, "enc_w2") + bias("enc_b2"))
    row_id = jax.lax.broadcasted_iota(jnp.int32, feat_enc.shape, 0)
    feat = jnp.where(row_id < batch, feat_fuse, feat_enc)      # [N, FEATURE]

    def gaussian(pre1, prefix):
        hh = jax.nn.relu(pre1)
        hh = jax.nn.relu(dot(hh, prefix + "_w2") + bias(prefix + "_b2"))
        mean = dot(hh, prefix + "_wm") + bias(prefix + "_bm")
        std = jax.nn.softplus(dot(hh, prefix + "_ws") + bias(prefix + "_bs")) + 1e-5
        return mean, std

    # ----------------------- posterior / prior chain -----------------------
    # z1 ~ z1_posterior_init(feat)
    m1, s1 = gaussian(dot(feat, "z1pi_w1") + bias("z1pi_b1"), "z1pi")
    z1 = m1 + e1a_ref[...] * s1
    # z2 ~ z2_posterior_init(z1)   (shared with z2_prior_init)
    m2, s2 = gaussian(dot(z1, "z2pi_w1") + bias("z2pi_b1"), "z2pi")
    z2 = m2 + e2a_ref[...] * s2
    # z1 ~ z1_posterior([feat, z2, act])
    pre = (dot(feat, "z1p_w1_feat") + dot(z2, "z1p_w1_z2")
           + act * w["z1p_w1_act"][...] + bias("z1p_b1"))
    m1, s1 = gaussian(pre, "z1p")
    z1 = m1 + e1b_ref[...] * s1
    # z2 ~ z2_posterior([z1, z2, act])   (shared with z2_prior)
    pre = (dot(z1, "z2p_w1_z1") + dot(z2, "z2p_w1_z2")
           + act * w["z2p_w1_act"][...] + bias("z2p_b1"))
    m2, s2 = gaussian(pre, "z2p")
    z2 = m2 + e2b_ref[...] * s2
    # prior on z1 given sampled z2: z1_prior([z2, act])
    pre = (dot(z2, "z1pr_w1_z2") + act * w["z1pr_w1_act"][...]
           + bias("z1pr_b1"))
    m1_pri, s1_pri = gaussian(pre, "z1pr")
    # decoder([z1, z2])
    hd = jax.nn.relu(dot(z1, "dec_w1_z1") + dot(z2, "dec_w1_z2")
                     + bias("dec_b1"))
    hd = jax.nn.relu(dot(hd, "dec_w2") + bias("dec_b2"))
    pred_mean = dot(hd, "dec_w3") + bias("dec_b3")

    z1m_post_ref[...] = m1
    z1s_post_ref[...] = s1
    z1m_pri_ref[...] = m1_pri
    z1s_pri_ref[...] = s1_pri
    pred_mean_ref[...] = pred_mean


# ------------------------------ parameter init ------------------------------
def _init_w(key, fan_in_total, fin, fout, dtype=jnp.bfloat16):
    wgt = jax.random.normal(key, (fin, fout), jnp.float32) / math.sqrt(fan_in_total)
    return wgt.astype(dtype)


def _init_b(fout):
    return jnp.zeros((1, fout), jnp.float32)


def _init_gaussian(p, keys, prefix, in_blocks, out_dim):
    fan_in = sum(f for _, f in in_blocks)
    for suffix, f in in_blocks:
        # ACTION_DIM=1 rows are used as VPU broadcast multiplies -> keep f32.
        dt = jnp.float32 if f == 1 else jnp.bfloat16
        p[f"{prefix}_w1{suffix}"] = _init_w(next(keys), fan_in, f, HIDDEN, dt)
    p[f"{prefix}_b1"] = _init_b(HIDDEN)
    p[f"{prefix}_w2"] = _init_w(next(keys), HIDDEN, HIDDEN, HIDDEN)
    p[f"{prefix}_b2"] = _init_b(HIDDEN)
    p[f"{prefix}_wm"] = _init_w(next(keys), HIDDEN, HIDDEN, out_dim)
    p[f"{prefix}_bm"] = _init_b(out_dim)
    p[f"{prefix}_ws"] = _init_w(next(keys), HIDDEN, HIDDEN, out_dim)
    p[f"{prefix}_bs"] = _init_b(out_dim)


def init_params(key):
    keys = iter(jax.random.split(key, 64))
    p = {}
    # first_encoder: FusionModel(info, state0) -> FEATURE_DIM
    fan = INFO_DIM + STATE_DIM
    p["fe_w1_info"] = _init_w(next(keys), fan, INFO_DIM, HIDDEN)
    p["fe_w1_state"] = _init_w(next(keys), fan, STATE_DIM, HIDDEN)
    p["fe_b1"] = _init_b(HIDDEN)
    p["fe_w2"] = _init_w(next(keys), HIDDEN, HIDDEN, FEATURE_DIM)
    p["fe_b2"] = _init_b(FEATURE_DIM)
    # encoder: MyMLPEncoder(state) -> FEATURE_DIM
    p["enc_w1"] = _init_w(next(keys), STATE_DIM, STATE_DIM, HIDDEN)
    p["enc_b1"] = _init_b(HIDDEN)
    p["enc_w2"] = _init_w(next(keys), HIDDEN, HIDDEN, FEATURE_DIM)
    p["enc_b2"] = _init_b(FEATURE_DIM)
    # Gaussians
    _init_gaussian(p, keys, "z1pi", [("", FEATURE_DIM)], Z1_DIM)
    _init_gaussian(p, keys, "z2pi", [("", Z1_DIM)], Z2_DIM)
    _init_gaussian(p, keys, "z1p",
                   [("_feat", FEATURE_DIM), ("_z2", Z2_DIM), ("_act", ACTION_DIM)],
                   Z1_DIM)
    _init_gaussian(p, keys, "z2p",
                   [("_z1", Z1_DIM), ("_z2", Z2_DIM), ("_act", ACTION_DIM)],
                   Z2_DIM)
    _init_gaussian(p, keys, "z1pr",
                   [("_z2", Z2_DIM), ("_act", ACTION_DIM)], Z1_DIM)
    # decoder
    fan = Z1_DIM + Z2_DIM
    p["dec_w1_z1"] = _init_w(next(keys), fan, Z1_DIM, HIDDEN)
    p["dec_w1_z2"] = _init_w(next(keys), fan, Z2_DIM, HIDDEN)
    p["dec_b1"] = _init_b(HIDDEN)
    p["dec_w2"] = _init_w(next(keys), HIDDEN, HIDDEN, HIDDEN)
    p["dec_b2"] = _init_b(HIDDEN)
    p["dec_w3"] = _init_w(next(keys), HIDDEN, HIDDEN, STATE_DIM + 1)
    p["dec_b3"] = _init_b(STATE_DIM + 1)
    assert set(p) == set(WEIGHT_NAMES)
    return p


# -------------------------------- forward pass -------------------------------
def latent_forward(params, state, info, action, key):
    """state [B,T,12], info [B,4,1], action [B,T,1] -> 6 outputs, each [B,T,D]."""
    batch = state.shape[0]
    n_rows = batch * SEQ_LEN

    # Time-major row flattening: row = t * batch + b.
    state_all = jnp.transpose(state, (1, 0, 2)).reshape(n_rows, STATE_DIM)
    state_all = state_all.astype(jnp.float32)
    act_all = jnp.transpose(action, (1, 0, 2)).reshape(n_rows, ACTION_DIM)
    act_all = act_all.astype(jnp.float32)
    # info is only consumed at t == 0; zero-pad remaining rows (their fusion
    # output is discarded by the in-kernel row select).
    info_pad = jnp.concatenate(
        [info[:, :, 0].astype(jnp.float32),
         jnp.zeros((n_rows - batch, INFO_DIM), jnp.float32)], axis=0)

    # One-shot standard-normal draws (~23 KB total); mean + eps*std is in-kernel.
    k1, k2, k3, k4 = jax.random.split(key, 4)
    eps1a = jax.random.normal(k1, (n_rows, Z1_DIM), jnp.float32)
    eps2a = jax.random.normal(k2, (n_rows, Z2_DIM), jnp.float32)
    eps1b = jax.random.normal(k3, (n_rows, Z1_DIM), jnp.float32)
    eps2b = jax.random.normal(k4, (n_rows, Z2_DIM), jnp.float32)

    data = (info_pad, state_all, act_all, eps1a, eps2a, eps1b, eps2b)
    weights = tuple(params[name] for name in WEIGHT_NAMES)

    out_shapes = (
        jax.ShapeDtypeStruct((n_rows, Z1_DIM), jnp.float32),         # z1_mean_post
        jax.ShapeDtypeStruct((n_rows, Z1_DIM), jnp.float32),         # z1_std_post
        jax.ShapeDtypeStruct((n_rows, Z1_DIM), jnp.float32),         # z1_mean_pri
        jax.ShapeDtypeStruct((n_rows, Z1_DIM), jnp.float32),         # z1_std_pri
        jax.ShapeDtypeStruct((n_rows, STATE_DIM + 1), jnp.float32),  # pred_mean
    )

    flops = sum(2 * n_rows * wg.shape[0] * wg.shape[1]
                for name, wg in zip(WEIGHT_NAMES, weights) if "_b" not in name)
    transcendentals = 2 * n_rows * (3 * Z1_DIM + 2 * Z2_DIM)
    bytes_accessed = (
        sum(math.prod(a.shape) * a.dtype.itemsize for a in weights)
        + sum(math.prod(a.shape) * a.dtype.itemsize for a in data)
        + sum(math.prod(o.shape) * o.dtype.itemsize for o in out_shapes))

    outs = pl.pallas_call(
        _fused_forward_kernel,
        out_shape=out_shapes,
        in_specs=[_VMEM] * (len(data) + len(weights)),
        out_specs=(_VMEM,) * len(out_shapes),
        cost_estimate=pl.CostEstimate(
            flops=flops, transcendentals=transcendentals,
            bytes_accessed=bytes_accessed),
    )(*data, *weights)

    def to_btd(x):
        return jnp.swapaxes(x.reshape(SEQ_LEN, batch, x.shape[-1]), 0, 1)

    z1m_post, z1s_post, z1m_pri, z1s_pri, pred_mean = (to_btd(o) for o in outs)
    pred_std = jnp.full_like(pred_mean, DECODER_STD)
    return z1m_post, z1s_post, z1m_pri, z1s_pri, pred_mean, pred_std


# ------------------------------------ main ------------------------------------
if __name__ == "__main__":
    key = jax.random.PRNGKey(0)
    k_params, k_state, k_info, k_action, k_noise = jax.random.split(key, 5)

    B = 2
    params = init_params(k_params)
    state = jax.random.normal(k_state, (B, SEQ_LEN, STATE_DIM), jnp.float32)
    info = jax.random.normal(k_info, (B, INFO_DIM, 1), jnp.float32)
    action = jax.random.normal(k_action, (B, SEQ_LEN, ACTION_DIM), jnp.float32)

    fwd = jax.jit(latent_forward)
    outs = jax.block_until_ready(fwd(params, state, info, action, k_noise))

    z1m_post, z1s_post, z1m_pri, z1s_pri, pred_mean, pred_std = outs
    assert z1m_post.shape == (B, SEQ_LEN, Z1_DIM)
    assert z1s_post.shape == (B, SEQ_LEN, Z1_DIM)
    assert z1m_pri.shape == (B, SEQ_LEN, Z1_DIM)
    assert z1s_pri.shape == (B, SEQ_LEN, Z1_DIM)
    assert pred_mean.shape == (B, SEQ_LEN, STATE_DIM + 1)
    assert pred_std.shape == (B, SEQ_LEN, STATE_DIM + 1)
    assert all(bool(jnp.all(jnp.isfinite(o))) for o in outs)

    print("KERNEL_OK")
</pallas_src>

<mosaic_0001>
module attributes {stable_mosaic.version = 11 : i64} {
  func.func @_fused_forward_kernel(%arg0: memref<10x4xf32, #tpu.memory_space<vmem>>, %arg1: memref<10x12xf32, #tpu.memory_space<vmem>>, %arg2: memref<10x1xf32, #tpu.memory_space<vmem>>, %arg3: memref<10x32xf32, #tpu.memory_space<vmem>>, %arg4: memref<10x256xf32, #tpu.memory_space<vmem>>, %arg5: memref<10x32xf32, #tpu.memory_space<vmem>>, %arg6: memref<10x256xf32, #tpu.memory_space<vmem>>, %arg7: memref<4x256xbf16, #tpu.memory_space<vmem>>, %arg8: memref<12x256xbf16, #tpu.memory_space<vmem>>, %arg9: memref<1x256xf32, #tpu.memory_space<vmem>>, %arg10: memref<256x256xbf16, #tpu.memory_space<vmem>>, %arg11: memref<1x256xf32, #tpu.memory_space<vmem>>, %arg12: memref<12x256xbf16, #tpu.memory_space<vmem>>, %arg13: memref<1x256xf32, #tpu.memory_space<vmem>>, %arg14: memref<256x256xbf16, #tpu.memory_space<vmem>>, %arg15: memref<1x256xf32, #tpu.memory_space<vmem>>, %arg16: memref<256x256xbf16, #tpu.memory_space<vmem>>, %arg17: memref<1x256xf32, #tpu.memory_space<vmem>>, %arg18: memref<256x256xbf16, #tpu.memory_space<vmem>>, %arg19: memref<1x256xf32, #tpu.memory_space<vmem>>, %arg20: memref<256x32xbf16, #tpu.memory_space<vmem>>, %arg21: memref<1x32xf32, #tpu.memory_space<vmem>>, %arg22: memref<256x32xbf16, #tpu.memory_space<vmem>>, %arg23: memref<1x32xf32, #tpu.memory_space<vmem>>, %arg24: memref<32x256xbf16, #tpu.memory_space<vmem>>, %arg25: memref<1x256xf32, #tpu.memory_space<vmem>>, %arg26: memref<256x256xbf16, #tpu.memory_space<vmem>>, %arg27: memref<1x256xf32, #tpu.memory_space<vmem>>, %arg28: memref<256x256xbf16, #tpu.memory_space<vmem>>, %arg29: memref<1x256xf32, #tpu.memory_space<vmem>>, %arg30: memref<256x256xbf16, #tpu.memory_space<vmem>>, %arg31: memref<1x256xf32, #tpu.memory_space<vmem>>, %arg32: memref<256x256xbf16, #tpu.memory_space<vmem>>, %arg33: memref<256x256xbf16, #tpu.memory_space<vmem>>, %arg34: memref<1x256xf32, #tpu.memory_space<vmem>>, %arg35: memref<1x256xf32, #tpu.memory_space<vmem>>, %arg36: memref<256x256xbf16, #tpu.memory_space<vmem>>, %arg37: memref<1x256xf32, #tpu.memory_space<vmem>>, %arg38: memref<256x32xbf16, #tpu.memory_space<vmem>>, %arg39: memref<1x32xf32, #tpu.memory_space<vmem>>, %arg40: memref<256x32xbf16, #tpu.memory_space<vmem>>, %arg41: memref<1x32xf32, #tpu.memory_space<vmem>>, %arg42: memref<32x256xbf16, #tpu.memory_space<vmem>>, %arg43: memref<256x256xbf16, #tpu.memory_space<vmem>>, %arg44: memref<1x256xf32, #tpu.memory_space<vmem>>, %arg45: memref<1x256xf32, #tpu.memory_space<vmem>>, %arg46: memref<256x256xbf16, #tpu.memory_space<vmem>>, %arg47: memref<1x256xf32, #tpu.memory_space<vmem>>, %arg48: memref<256x256xbf16, #tpu.memory_space<vmem>>, %arg49: memref<1x256xf32, #tpu.memory_space<vmem>>, %arg50: memref<256x256xbf16, #tpu.memory_space<vmem>>, %arg51: memref<1x256xf32, #tpu.memory_space<vmem>>, %arg52: memref<256x256xbf16, #tpu.memory_space<vmem>>, %arg53: memref<1x256xf32, #tpu.memory_space<vmem>>, %arg54: memref<1x256xf32, #tpu.memory_space<vmem>>, %arg55: memref<256x256xbf16, #tpu.memory_space<vmem>>, %arg56: memref<1x256xf32, #tpu.memory_space<vmem>>, %arg57: memref<256x32xbf16, #tpu.memory_space<vmem>>, %arg58: memref<1x32xf32, #tpu.memory_space<vmem>>, %arg59: memref<256x32xbf16, #tpu.memory_space<vmem>>, %arg60: memref<1x32xf32, #tpu.memory_space<vmem>>, %arg61: memref<32x256xbf16, #tpu.memory_space<vmem>>, %arg62: memref<256x256xbf16, #tpu.memory_space<vmem>>, %arg63: memref<1x256xf32, #tpu.memory_space<vmem>>, %arg64: memref<256x256xbf16, #tpu.memory_space<vmem>>, %arg65: memref<1x256xf32, #tpu.memory_space<vmem>>, %arg66: memref<256x13xbf16, #tpu.memory_space<vmem>>, %arg67: memref<1x13xf32, #tpu.memory_space<vmem>>, %arg68: memref<10x32xf32, #tpu.memory_space<vmem>>, %arg69: memref<10x32xf32, #tpu.memory_space<vmem>>, %arg70: memref<10x32xf32, #tpu.memory_space<vmem>>, %arg71: memref<10x32xf32, #tpu.memory_space<vmem>>, %arg72: memref<10x13xf32, #tpu.memory_space<vmem>>) attributes {dimension_semantics = [], scalar_prefetch = 0 : i64, scratch_operands = 0 : i64, tpu.core_type = #tpu.core_type<tc>} {
    %c0 = arith.constant 0 : index
    %c0_0 = arith.constant 0 : index
    %0 = vector.load %arg2[%c0, %c0_0] : memref<10x1xf32, #tpu.memory_space<vmem>>, vector<10x1xf32>
    %c0_1 = arith.constant 0 : index
    %c0_2 = arith.constant 0 : index
    %1 = vector.load %arg0[%c0_1, %c0_2] : memref<10x4xf32, #tpu.memory_space<vmem>>, vector<10x4xf32>
    %c0_3 = arith.constant 0 : index
    %c0_4 = arith.constant 0 : index
    %2 = vector.load %arg1[%c0_3, %c0_4] : memref<10x12xf32, #tpu.memory_space<vmem>>, vector<10x12xf32>
    %3 = arith.truncf %1 : vector<10x4xf32> to vector<10x4xbf16>
    %c0_5 = arith.constant 0 : index
    %c0_6 = arith.constant 0 : index
    %4 = vector.load %arg7[%c0_5, %c0_6] : memref<4x256xbf16, #tpu.memory_space<vmem>>, vector<4x256xbf16>
    %cst = arith.constant dense<0.000000e+00> : vector<10x256xf32>
    %5 = tpu.matmul %3, %4, %cst {dimension_numbers = #tpu.dot_dimension_numbers<[1], [0], [0], [1], [0, 0, 1, 1], [], []>} : vector<10x4xbf16>, vector<4x256xbf16>, vector<10x256xf32> -> vector<10x256xf32>
    %6 = arith.truncf %2 : vector<10x12xf32> to vector<10x12xbf16>
    %c0_7 = arith.constant 0 : index
    %c0_8 = arith.constant 0 : index
    %7 = vector.load %arg8[%c0_7, %c0_8] : memref<12x256xbf16, #tpu.memory_space<vmem>>, vector<12x256xbf16>
    %cst_9 = arith.constant dense<0.000000e+00> : vector<10x256xf32>
    %8 = tpu.matmul %6, %7, %cst_9 {dimension_numbers = #tpu.dot_dimension_numbers<[1], [0], [0], [1], [0, 0, 1, 1], [], []>} : vector<10x12xbf16>, vector<12x256xbf16>, vector<10x256xf32> -> vector<10x256xf32>
    %9 = arith.addf %5, %8 : vector<10x256xf32>
    %c0_10 = arith.constant 0 : index
    %c0_11 = arith.constant 0 : index
    %10 = vector.load %arg9[%c0_10, %c0_11] : memref<1x256xf32, #tpu.memory_space<vmem>>, vector<1x256xf32>
    %11 = vector.broadcast %10 : vector<1x256xf32> to vector<10x256xf32>
    %12 = arith.addf %9, %11 : vector<10x256xf32>
    %cst_12 = arith.constant 0.000000e+00 : f32
    %13 = vector.broadcast %cst_12 : f32 to vector<10x256xf32>
    %14 = arith.maximumf %12, %13 : vector<10x256xf32>
    %15 = arith.truncf %14 : vector<10x256xf32> to vector<10x256xbf16>
    %c0_13 = arith.constant 0 : index
    %c0_14 = arith.constant 0 : index
    %16 = vector.load %arg10[%c0_13, %c0_14] : memref<256x256xbf16, #tpu.memory_space<vmem>>, vector<256x256xbf16>
    %cst_15 = arith.constant dense<0.000000e+00> : vector<10x256xf32>
    %17 = tpu.matmul %15, %16, %cst_15 {dimension_numbers = #tpu.dot_dimension_numbers<[1], [0], [0], [1], [0, 0, 1, 1], [], []>} : vector<10x256xbf16>, vector<256x256xbf16>, vector<10x256xf32> -> vector<10x256xf32>
    %c0_16 = arith.constant 0 : index
    %c0_17 = arith.constant 0 : index
    %18 = vector.load %arg11[%c0_16, %c0_17] : memref<1x256xf32, #tpu.memory_space<vmem>>, vector<1x256xf32>
    %19 = vector.broadcast %18 : vector<1x256xf32> to vector<10x256xf32>
    %20 = arith.addf %17, %19 : vector<10x256xf32>
    %cst_18 = arith.constant 0.000000e+00 : f32
    %21 = vector.broadcast %cst_18 : f32 to vector<10x256xf32>
    %22 = arith.maximumf %20, %21 : vector<10x256xf32>
    %23 = arith.truncf %2 : vector<10x12xf32> to vector<10x12xbf16>
    %c0_19 = arith.constant 0 : index
    %c0_20 = arith.constant 0 : index
    %24 = vector.load %arg12[%c0_19, %c0_20] : memref<12x256xbf16, #tpu.memory_space<vmem>>, vector<12x256xbf16>
    %cst_21 = arith.constant dense<0.000000e+00> : vector<10x256xf32>
    %25 = tpu.matmul %23, %24, %cst_21 {dimension_numbers = #tpu.dot_dimension_numbers<[1], [0], [0], [1], [0, 0, 1, 1], [], []>} : vector<10x12xbf16>, vector<12x256xbf16>, vector<10x256xf32> -> vector<10x256xf32>
    %c0_22 = arith.constant 0 : index
    %c0_23 = arith.constant 0 : index
    %26 = vector.load %arg13[%c0_22, %c0_23] : memref<1x256xf32, #tpu.memory_space<vmem>>, vector<1x256xf32>
    %27 = vector.broadcast %26 : vector<1x256xf32> to vector<10x256xf32>
    %28 = arith.addf %25, %27 : vector<10x256xf32>
    %cst_24 = arith.constant 0.000000e+00 : f32
    %29 = vector.broadcast %cst_24 : f32 to vector<10x256xf32>
    %30 = arith.maximumf %28, %29 : vector<10x256xf32>
    %31 = arith.truncf %30 : vector<10x256xf32> to vector<10x256xbf16>
    %c0_25 = arith.constant 0 : index
    %c0_26 = arith.constant 0 : index
    %32 = vector.load %arg14[%c0_25, %c0_26] : memref<256x256xbf16, #tpu.memory_space<vmem>>, vector<256x256xbf16>
    %cst_27 = arith.constant dense<0.000000e+00> : vector<10x256xf32>
    %33 = tpu.matmul %31, %32, %cst_27 {dimension_numbers = #tpu.dot_dimension_numbers<[1], [0], [0], [1], [0, 0, 1, 1], [], []>} : vector<10x256xbf16>, vector<256x256xbf16>, vector<10x256xf32> -> vector<10x256xf32>
    %c0_28 = arith.constant 0 : index
    %c0_29 = arith.constant 0 : index
    %34 = vector.load %arg15[%c0_28, %c0_29] : memref<1x256xf32, #tpu.memory_space<vmem>>, vector<1x256xf32>
    %35 = vector.broadcast %34 : vector<1x256xf32> to vector<10x256xf32>
    %36 = arith.addf %33, %35 : vector<10x256xf32>
    %cst_30 = arith.constant 0.000000e+00 : f32
    %37 = vector.broadcast %cst_30 : f32 to vector<10x256xf32>
    %38 = arith.maximumf %36, %37 : vector<10x256xf32>
    %39 = tpu.iota {dimensions = array<i32: 0>} : vector<10x256xi32>
    %c2_i32 = arith.constant 2 : i32
    %40 = vector.broadcast %c2_i32 : i32 to vector<10x256xi32>
    %41 = arith.cmpi slt, %39, %40 : vector<10x256xi32>
    %42 = arith.select %41, %22, %38 : vector<10x256xi1>, vector<10x256xf32>
    %43 = arith.truncf %42 : vector<10x256xf32> to vector<10x256xbf16>
    %c0_31 = arith.constant 0 : index
    %c0_32 = arith.constant 0 : index
    %44 = vector.load %arg16[%c0_31, %c0_32] : memref<256x256xbf16, #tpu.memory_space<vmem>>, vector<256x256xbf16>
    %cst_33 = arith.constant dense<0.000000e+00> : vector<10x256xf32>
    %45 = tpu.matmul %43, %44, %cst_33 {dimension_numbers = #tpu.dot_dimension_numbers<[1], [0], [0], [1], [0, 0, 1, 1], [], []>} : vector<10x256xbf16>, vector<256x256xbf16>, vector<10x256xf32> -> vector<10x256xf32>
    %c0_34 = arith.constant 0 : index
    %c0_35 = arith.constant 0 : index
    %46 = vector.load %arg17[%c0_34, %c0_35] : memref<1x256xf32, #tpu.memory_space<vmem>>, vector<1x256xf32>
    %47 = vector.broadcast %46 : vector<1x256xf32> to vector<10x256xf32>
    %48 = arith.addf %45, %47 : vector<10x256xf32>
    %cst_36 = arith.constant 0.000000e+00 : f32
    %49 = vector.broadcast %cst_36 : f32 to vector<10x256xf32>
    %50 = arith.maximumf %48, %49 : vector<10x256xf32>
    %51 = arith.truncf %50 : vector<10x256xf32> to vector<10x256xbf16>
    %c0_37 = arith.constant 0 : index
    %c0_38 = arith.constant 0 : index
    %52 = vector.load %arg18[%c0_37, %c0_38] : memref<256x256xbf16, #tpu.memory_space<vmem>>, vector<256x256xbf16>
    %cst_39 = arith.constant dense<0.000000e+00> : vector<10x256xf32>
    %53 = tpu.matmul %51, %52, %cst_39 {dimension_numbers = #tpu.dot_dimension_numbers<[1], [0], [0], [1], [0, 0, 1, 1], [], []>} : vector<10x256xbf16>, vector<256x256xbf16>, vector<10x256xf32> -> vector<10x256xf32>
    %c0_40 = arith.constant 0 : index
    %c0_41 = arith.constant 0 : index
    %54 = vector.load %arg19[%c0_40, %c0_41] : memref<1x256xf32, #tpu.memory_space<vmem>>, vector<1x256xf32>
    %55 = vector.broadcast %54 : vector<1x256xf32> to vector<10x256xf32>
    %56 = arith.addf %53, %55 : vector<10x256xf32>
    %cst_42 = arith.constant 0.000000e+00 : f32
    %57 = vector.broadcast %cst_42 : f32 to vector<10x256xf32>
    %58 = arith.maximumf %56, %57 : vector<10x256xf32>
    %59 = arith.truncf %58 : vector<10x256xf32> to vector<10x256xbf16>
    %c0_43 = arith.constant 0 : index
    %c0_44 = arith.constant 0 : index
    %60 = vector.load %arg20[%c0_43, %c0_44] : memref<256x32xbf16, #tpu.memory_space<vmem>>, vector<256x32xbf16>
    %cst_45 = arith.constant dense<0.000000e+00> : vector<10x32xf32>
    %61 = tpu.matmul %59, %60, %cst_45 {dimension_numbers = #tpu.dot_dimension_numbers<[1], [0], [0], [1], [0, 0, 1, 1], [], []>} : vector<10x256xbf16>, vector<256x32xbf16>, vector<10x32xf32> -> vector<10x32xf32>
    %c0_46 = arith.constant 0 : index
    %c0_47 = arith.constant 0 : index
    %62 = vector.load %arg21[%c0_46, %c0_47] : memref<1x32xf32, #tpu.memory_space<vmem>>, vector<1x32xf32>
    %63 = vector.broadcast %62 : vector<1x32xf32> to vector<10x32xf32>
    %64 = arith.addf %61, %63 : vector<10x32xf32>
    %65 = arith.truncf %58 : vector<10x256xf32> to vector<10x256xbf16>
    %c0_48 = arith.constant 0 : index
    %c0_49 = arith.constant 0 : index
    %66 = vector.load %arg22[%c0_48, %c0_49] : memref<256x32xbf16, #tpu.memory_space<vmem>>, vector<256x32xbf16>
    %cst_50 = arith.constant dense<0.000000e+00> : vector<10x32xf32>
    %67 = tpu.matmul %65, %66, %cst_50 {dimension_numbers = #tpu.dot_dimension_numbers<[1], [0], [0], [1], [0, 0, 1, 1], [], []>} : vector<10x256xbf16>, vector<256x32xbf16>, vector<10x32xf32> -> vector<10x32xf32>
    %c0_51 = arith.constant 0 : index
    %c0_52 = arith.constant 0 : index
    %68 = vector.load %arg23[%c0_51, %c0_52] : memref<1x32xf32, #tpu.memory_space<vmem>>, vector<1x32xf32>
    %69 = vector.broadcast %68 : vector<1x32xf32> to vector<10x32xf32>
    %70 = arith.addf %67, %69 : vector<10x32xf32>
    %cst_53 = arith.constant 0.000000e+00 : f32
    %71 = vector.broadcast %cst_53 : f32 to vector<10x32xf32>
    %72 = arith.maximumf %70, %71 : vector<10x32xf32>
    %73 = vector.broadcast %cst_53 : f32 to vector<10x32xf32>
    %74 = arith.subf %70, %73 : vector<10x32xf32>
    %75 = arith.cmpf one, %74, %74 : vector<10x32xf32>
    %76 = vector.broadcast %cst_53 : f32 to vector<10x32xf32>
    %77 = arith.addf %70, %76 : vector<10x32xf32>
    %78 = math.absf %74 : vector<10x32xf32>
    %cst_54 = arith.constant 0.000000e+00 : f32
    %79 = vector.broadcast %cst_54 : f32 to vector<10x32xf32>
    %80 = arith.subf %79, %78 : vector<10x32xf32>
    %81 = math.exp %80 : vector<10x32xf32>
    %82 = math.log1p %81 : vector<10x32xf32>
    %83 = arith.addf %72, %82 : vector<10x32xf32>
    %84 = arith.select %75, %77, %83 : vector<10x32xi1>, vector<10x32xf32>
    %cst_55 = arith.constant 9.99999974E-6 : f32
    %85 = vector.broadcast %cst_55 : f32 to vector<10x32xf32>
    %86 = arith.addf %84, %85 : vector<10x32xf32>
    %c0_56 = arith.constant 0 : index
    %c0_57 = arith.constant 0 : index
    %87 = vector.load %arg3[%c0_56, %c0_57] : memref<10x32xf32, #tpu.memory_space<vmem>>, vector<10x32xf32>
    %88 = arith.mulf %87, %86 : vector<10x32xf32>
    %89 = arith.addf %64, %88 : vector<10x32xf32>
    %90 = arith.truncf %89 : vector<10x32xf32> to vector<10x32xbf16>
    %c0_58 = arith.constant 0 : index
    %c0_59 = arith.constant 0 : index
    %91 = vector.load %arg24[%c0_58, %c0_59] : memref<32x256xbf16, #tpu.memory_space<vmem>>, vector<32x256xbf16>
    %cst_60 = arith.constant dense<0.000000e+00> : vector<10x256xf32>
    %92 = tpu.matmul %90, %91, %cst_60 {dimension_numbers = #tpu.dot_dimension_numbers<[1], [0], [0], [1], [0, 0, 1, 1], [], []>} : vector<10x32xbf16>, vector<32x256xbf16>, vector<10x256xf32> -> vector<10x256xf32>
    %c0_61 = arith.constant 0 : index
    %c0_62 = arith.constant 0 : index
    %93 = vector.load %arg25[%c0_61, %c0_62] : memref<1x256xf32, #tpu.memory_space<vmem>>, vector<1x256xf32>
    %94 = vector.broadcast %93 : vector<1x256xf32> to vector<10x256xf32>
    %95 = arith.addf %92, %94 : vector<10x256xf32>
    %cst_63 = arith.constant 0.000000e+00 : f32
    %96 = vector.broadcast %cst_63 : f32 to vector<10x256xf32>
    %97 = arith.maximumf %95, %96 : vector<10x256xf32>
    %98 = arith.truncf %97 : vector<10x256xf32> to vector<10x256xbf16>
    %c0_64 = arith.constant 0 : index
    %c0_65 = arith.constant 0 : index
    %99 = vector.load %arg26[%c0_64, %c0_65] : memref<256x256xbf16, #tpu.memory_space<vmem>>, vector<256x256xbf16>
    %cst_66 = arith.constant dense<0.000000e+00> : vector<10x256xf32>
    %100 = tpu.matmul %98, %99, %cst_66 {dimension_numbers = #tpu.dot_dimension_numbers<[1], [0], [0], [1], [0, 0, 1, 1], [], []>} : vector<10x256xbf16>, vector<256x256xbf16>, vector<10x256xf32> -> vector<10x256xf32>
    %c0_67 = arith.constant 0 : index
    %c0_68 = arith.constant 0 : index
    %101 = vector.load %arg27[%c0_67, %c0_68] : memref<1x256xf32, #tpu.memory_space<vmem>>, vector<1x256xf32>
    %102 = vector.broadcast %101 : vector<1x256xf32> to vector<10x256xf32>
    %103 = arith.addf %100, %102 : vector<10x256xf32>
    %cst_69 = arith.constant 0.000000e+00 : f32
    %104 = vector.broadcast %cst_69 : f32 to vector<10x256xf32>
    %105 = arith.maximumf %103, %104 : vector<10x256xf32>
    %106 = arith.truncf %105 : vector<10x256xf32> to vector<10x256xbf16>
    %c0_70 = arith.constant 0 : index
    %c0_71 = arith.constant 0 : index
    %107 = vector.load %arg28[%c0_70, %c0_71] : memref<256x256xbf16, #tpu.memory_space<vmem>>, vector<256x256xbf16>
    %cst_72 = arith.constant dense<0.000000e+00> : vector<10x256xf32>
    %108 = tpu.matmul %106, %107, %cst_72 {dimension_numbers = #tpu.dot_dimension_numbers<[1], [0], [0], [1], [0, 0, 1, 1], [], []>} : vector<10x256xbf16>, vector<256x256xbf16>, vector<10x256xf32> -> vector<10x256xf32>
    %c0_73 = arith.constant 0 : index
    %c0_74 = arith.constant 0 : index
    %109 = vector.load %arg29[%c0_73, %c0_74] : memref<1x256xf32, #tpu.memory_space<vmem>>, vector<1x256xf32>
    %110 = vector.broadcast %109 : vector<1x256xf32> to vector<10x256xf32>
    %111 = arith.addf %108, %110 : vector<10x256xf32>
    %112 = arith.truncf %105 : vector<10x256xf32> to vector<10x256xbf16>
    %c0_75 = arith.constant 0 : index
    %c0_76 = arith.constant 0 : index
    %113 = vector.load %arg30[%c0_75, %c0_76] : memref<256x256xbf16, #tpu.memory_space<vmem>>, vector<256x256xbf16>
    %cst_77 = arith.constant dense<0.000000e+00> : vector<10x256xf32>
    %114 = tpu.matmul %112, %113, %cst_77 {dimension_numbers = #tpu.dot_dimension_numbers<[1], [0], [0], [1], [0, 0, 1, 1], [], []>} : vector<10x256xbf16>, vector<256x256xbf16>, vector<10x256xf32> -> vector<10x256xf32>
    %c0_78 = arith.constant 0 : index
    %c0_79 = arith.constant 0 : index
    %115 = vector.load %arg31[%c0_78, %c0_79] : memref<1x256xf32, #tpu.memory_space<vmem>>, vector<1x256xf32>
    %116 = vector.broadcast %115 : vector<1x256xf32> to vector<10x256xf32>
    %117 = arith.addf %114, %116 : vector<10x256xf32>
    %cst_80 = arith.constant 0.000000e+00 : f32
    %118 = vector.broadcast %cst_80 : f32 to vector<10x256xf32>
    %119 = arith.maximumf %117, %118 : vector<10x256xf32>
    %120 = vector.broadcast %cst_80 : f32 to vector<10x256xf32>
    %121 = arith.subf %117, %120 : vector<10x256xf32>
    %122 = arith.cmpf one, %121, %121 : vector<10x256xf32>
    %123 = vector.broadcast %cst_80 : f32 to vector<10x256xf32>
    %124 = arith.addf %117, %123 : vector<10x256xf32>
    %125 = math.absf %121 : vector<10x256xf32>
    %cst_81 = arith.constant 0.000000e+00 : f32
    %126 = vector.broadcast %cst_81 : f32 to vector<10x256xf32>
    %127 = arith.subf %126, %125 : vector<10x256xf32>
    %128 = math.exp %127 : vector<10x256xf32>
    %129 = math.log1p %128 : vector<10x256xf32>
    %130 = arith.addf %119, %129 : vector<10x256xf32>
    %131 = arith.select %122, %124, %130 : vector<10x256xi1>, vector<10x256xf32>
    %cst_82 = arith.constant 9.99999974E-6 : f32
    %132 = vector.broadcast %cst_82 : f32 to vector<10x256xf32>
    %133 = arith.addf %131, %132 : vector<10x256xf32>
    %c0_83 = arith.constant 0 : index
    %c0_84 = arith.constant 0 : index
    %134 = vector.load %arg4[%c0_83, %c0_84] : memref<10x256xf32, #tpu.memory_space<vmem>>, vector<10x256xf32>
    %135 = arith.mulf %134, %133 : vector<10x256xf32>
    %136 = arith.addf %111, %135 : vector<10x256xf32>
    %137 = arith.truncf %42 : vector<10x256xf32> to vector<10x256xbf16>
    %c0_85 = arith.constant 0 : index
    %c0_86 = arith.constant 0 : index
    %138 = vector.load %arg32[%c0_85, %c0_86] : memref<256x256xbf16, #tpu.memory_space<vmem>>, vector<256x256xbf16>
    %cst_87 = arith.constant dense<0.000000e+00> : vector<10x256xf32>
    %139 = tpu.matmul %137, %138, %cst_87 {dimension_numbers = #tpu.dot_dimension_numbers<[1], [0], [0], [1], [0, 0, 1, 1], [], []>} : vector<10x256xbf16>, vector<256x256xbf16>, vector<10x256xf32> -> vector<10x256xf32>
    %140 = arith.truncf %136 : vector<10x256xf32> to vector<10x256xbf16>
    %c0_88 = arith.constant 0 : index
    %c0_89 = arith.constant 0 : index
    %141 = vector.load %arg33[%c0_88, %c0_89] : memref<256x256xbf16, #tpu.memory_space<vmem>>, vector<256x256xbf16>
    %cst_90 = arith.constant dense<0.000000e+00> : vector<10x256xf32>
    %142 = tpu.matmul %140, %141, %cst_90 {dimension_numbers = #tpu.dot_dimension_numbers<[1], [0], [0], [1], [0, 0, 1, 1], [], []>} : vector<10x256xbf16>, vector<256x256xbf16>, vector<10x256xf32> -> vector<10x256xf32>
    %143 = arith.addf %139, %142 : vector<10x256xf32>
    %c0_91 = arith.constant 0 : index
    %c0_92 = arith.constant 0 : index
    %144 = vector.load %arg34[%c0_91, %c0_92] : memref<1x256xf32, #tpu.memory_space<vmem>>, vector<1x256xf32>
    %145 = vector.broadcast %0 : vector<10x1xf32> to vector<10x256xf32>
    %146 = vector.broadcast %144 : vector<1x256xf32> to vector<10x256xf32>
    %147 = arith.mulf %145, %146 : vector<10x256xf32>
    %148 = arith.addf %143, %147 : vector<10x256xf32>
    %c0_93 = arith.constant 0 : index
    %c0_94 = arith.constant 0 : index
    %149 = vector.load %arg35[%c0_93, %c0_94] : memref<1x256xf32, #tpu.memory_space<vmem>>, vector<1x256xf32>
    %150 = vector.broadcast %149 : vector<1x256xf32> to vector<10x256xf32>
    %151 = arith.addf %148, %150 : vector<10x256xf32>
    %cst_95 = arith.constant 0.000000e+00 : f32
    %152 = vector.broadcast %cst_95 : f32 to vector<10x256xf32>
    %153 = arith.maximumf %151, %152 : vector<10x256xf32>
    %154 = arith.truncf %153 : vector<10x256xf32> to vector<10x256xbf16>
    %c0_96 = arith.constant 0 : index
    %c0_97 = arith.constant 0 : index
    %155 = vector.load %arg36[%c0_96, %c0_97] : memref<256x256xbf16, #tpu.memory_space<vmem>>, vector<256x256xbf16>
    %cst_98 = arith.constant dense<0.000000e+00> : vector<10x256xf32>
    %156 = tpu.matmul %154, %155, %cst_98 {dimension_numbers = #tpu.dot_dimension_numbers<[1], [0], [0], [1], [0, 0, 1, 1], [], []>} : vector<10x256xbf16>, vector<256x256xbf16>, vector<10x256xf32> -> vector<10x256xf32>
    %c0_99 = arith.constant 0 : index
    %c0_100 = arith.constant 0 : index
    %157 = vector.load %arg37[%c0_99, %c0_100] : memref<1x256xf32, #tpu.memory_space<vmem>>, vector<1x256xf32>
    %158 = vector.broadcast %157 : vector<1x256xf32> to vector<10x256xf32>
    %159 = arith.addf %156, %158 : vector<10x256xf32>
    %cst_101 = arith.constant 0.000000e+00 : f32
    %160 = vector.broadcast %cst_101 : f32 to vector<10x256xf32>
    %161 = arith.maximumf %159, %160 : vector<10x256xf32>
    %162 = arith.truncf %161 : vector<10x256xf32> to vector<10x256xbf16>
    %c0_102 = arith.constant 0 : index
    %c0_103 = arith.constant 0 : index
    %163 = vector.load %arg38[%c0_102, %c0_103] : memref<256x32xbf16, #tpu.memory_space<vmem>>, vector<256x32xbf16>
    %cst_104 = arith.constant dense<0.000000e+00> : vector<10x32xf32>
    %164 = tpu.matmul %162, %163, %cst_104 {dimension_numbers = #tpu.dot_dimension_numbers<[1], [0], [0], [1], [0, 0, 1, 1], [], []>} : vector<10x256xbf16>, vector<256x32xbf16>, vector<10x32xf32> -> vector<10x32xf32>
    %c0_105 = arith.constant 0 : index
    %c0_106 = arith.constant 0 : index
    %165 = vector.load %arg39[%c0_105, %c0_106] : memref<1x32xf32, #tpu.memory_space<vmem>>, vector<1x32xf32>
    %166 = vector.broadcast %165 : vector<1x32xf32> to vector<10x32xf32>
    %167 = arith.addf %164, %166 : vector<10x32xf32>
    %168 = arith.truncf %161 : vector<10x256xf32> to vector<10x256xbf16>
    %c0_107 = arith.constant 0 : index
    %c0_108 = arith.constant 0 : index
    %169 = vector.load %arg40[%c0_107, %c0_108] : memref<256x32xbf16, #tpu.memory_space<vmem>>, vector<256x32xbf16>
    %cst_109 = arith.constant dense<0.000000e+00> : vector<10x32xf32>
    %170 = tpu.matmul %168, %169, %cst_109 {dimension_numbers = #tpu.dot_dimension_numbers<[1], [0], [0], [1], [0, 0, 1, 1], [], []>} : vector<10x256xbf16>, vector<256x32xbf16>, vector<10x32xf32> -> vector<10x32xf32>
    %c0_110 = arith.constant 0 : index
    %c0_111 = arith.constant 0 : index
    %171 = vector.load %arg41[%c0_110, %c0_111] : memref<1x32xf32, #tpu.memory_space<vmem>>, vector<1x32xf32>
    %172 = vector.broadcast %171 : vector<1x32xf32> to vector<10x32xf32>
    %173 = arith.addf %170, %172 : vector<10x32xf32>
    %cst_112 = arith.constant 0.000000e+00 : f32
    %174 = vector.broadcast %cst_112 : f32 to vector<10x32xf32>
    %175 = arith.maximumf %173, %174 : vector<10x32xf32>
    %176 = vector.broadcast %cst_112 : f32 to vector<10x32xf32>
    %177 = arith.subf %173, %176 : vector<10x32xf32>
    %178 = arith.cmpf one, %177, %177 : vector<10x32xf32>
    %179 = vector.broadcast %cst_112 : f32 to vector<10x32xf32>
    %180 = arith.addf %173, %179 : vector<10x32xf32>
    %181 = math.absf %177 : vector<10x32xf32>
    %cst_113 = arith.constant 0.000000e+00 : f32
    %182 = vector.broadcast %cst_113 : f32 to vector<10x32xf32>
    %183 = arith.subf %182, %181 : vector<10x32xf32>
    %184 = math.exp %183 : vector<10x32xf32>
    %185 = math.log1p %184 : vector<10x32xf32>
    %186 = arith.addf %175, %185 : vector<10x32xf32>
    %187 = arith.select %178, %180, %186 : vector<10x32xi1>, vector<10x32xf32>
    %cst_114 = arith.constant 9.99999974E-6 : f32
    %188 = vector.broadcast %cst_114 : f32 to vector<10x32xf32>
    %189 = arith.addf %187, %188 : vector<10x32xf32>
    %c0_115 = arith.constant 0 : index
    %c0_116 = arith.constant 0 : index
    %190 = vector.load %arg5[%c0_115, %c0_116] : memref<10x32xf32, #tpu.memory_space<vmem>>, vector<10x32xf32>
    %191 = arith.mulf %190, %189 : vector<10x32xf32>
    %192 = arith.addf %167, %191 : vector<10x32xf32>
    %193 = arith.truncf %192 : vector<10x32xf32> to vector<10x32xbf16>
    %c0_117 = arith.constant 0 : index
    %c0_118 = arith.constant 0 : index
    %194 = vector.load %arg42[%c0_117, %c0_118] : memref<32x256xbf16, #tpu.memory_space<vmem>>, vector<32x256xbf16>
    %cst_119 = arith.constant dense<0.000000e+00> : vector<10x256xf32>
    %195 = tpu.matmul %193, %194, %cst_119 {dimension_numbers = #tpu.dot_dimension_numbers<[1], [0], [0], [1], [0, 0, 1, 1], [], []>} : vector<10x32xbf16>, vector<32x256xbf16>, vector<10x256xf32> -> vector<10x256xf32>
    %196 = arith.truncf %136 : vector<10x256xf32> to vector<10x256xbf16>
    %c0_120 = arith.constant 0 : index
    %c0_121 = arith.constant 0 : index
    %197 = vector.load %arg43[%c0_120, %c0_121] : memref<256x256xbf16, #tpu.memory_space<vmem>>, vector<256x256xbf16>
    %cst_122 = arith.constant dense<0.000000e+00> : vector<10x256xf32>
    %198 = tpu.matmul %196, %197, %cst_122 {dimension_numbers = #tpu.dot_dimension_numbers<[1], [0], [0], [1], [0, 0, 1, 1], [], []>} : vector<10x256xbf16>, vector<256x256xbf16>, vector<10x256xf32> -> vector<10x256xf32>
    %199 = arith.addf %195, %198 : vector<10x256xf32>
    %c0_123 = arith.constant 0 : index
    %c0_124 = arith.constant 0 : index
    %200 = vector.load %arg44[%c0_123, %c0_124] : memref<1x256xf32, #tpu.memory_space<vmem>>, vector<1x256xf32>
    %201 = vector.broadcast %0 : vector<10x1xf32> to vector<10x256xf32>
    %202 = vector.broadcast %200 : vector<1x256xf32> to vector<10x256xf32>
    %203 = arith.mulf %201, %202 : vector<10x256xf32>
    %204 = arith.addf %199, %203 : vector<10x256xf32>
    %c0_125 = arith.constant 0 : index
    %c0_126 = arith.constant 0 : index
    %205 = vector.load %arg45[%c0_125, %c0_126] : memref<1x256xf32, #tpu.memory_space<vmem>>, vector<1x256xf32>
    %206 = vector.broadcast %205 : vector<1x256xf32> to vector<10x256xf32>
    %207 = arith.addf %204, %206 : vector<10x256xf32>
    %cst_127 = arith.constant 0.000000e+00 : f32
    %208 = vector.broadcast %cst_127 : f32 to vector<10x256xf32>
    %209 = arith.maximumf %207, %208 : vector<10x256xf32>
    %210 = arith.truncf %209 : vector<10x256xf32> to vector<10x256xbf16>
    %c0_128 = arith.constant 0 : index
    %c0_129 = arith.constant 0 : index
    %211 = vector.load %arg46[%c0_128, %c0_129] : memref<256x256xbf16, #tpu.memory_space<vmem>>, vector<256x256xbf16>
    %cst_130 = arith.constant dense<0.000000e+00> : vector<10x256xf32>
    %212 = tpu.matmul %210, %211, %cst_130 {dimension_numbers = #tpu.dot_dimension_numbers<[1], [0], [0], [1], [0, 0, 1, 1], [], []>} : vector<10x256xbf16>, vector<256x256xbf16>, vector<10x256xf32> -> vector<10x256xf32>
    %c0_131 = arith.constant 0 : index
    %c0_132 = arith.constant 0 : index
    %213 = vector.load %arg47[%c0_131, %c0_132] : memref<1x256xf32, #tpu.memory_space<vmem>>, vector<1x256xf32>
    %214 = vector.broadcast %213 : vector<1x256xf32> to vector<10x256xf32>
    %215 = arith.addf %212, %214 : vector<10x256xf32>
    %cst_133 = arith.constant 0.000000e+00 : f32
    %216 = vector.broadcast %cst_133 : f32 to vector<10x256xf32>
    %217 = arith.maximumf %215, %216 : vector<10x256xf32>
    %218 = arith.truncf %217 : vector<10x256xf32> to vector<10x256xbf16>
    %c0_134 = arith.constant 0 : index
    %c0_135 = arith.constant 0 : index
    %219 = vector.load %arg48[%c0_134, %c0_135] : memref<256x256xbf16, #tpu.memory_space<vmem>>, vector<256x256xbf16>
    %cst_136 = arith.constant dense<0.000000e+00> : vector<10x256xf32>
    %220 = tpu.matmul %218, %219, %cst_136 {dimension_numbers = #tpu.dot_dimension_numbers<[1], [0], [0], [1], [0, 0, 1, 1], [], []>} : vector<10x256xbf16>, vector<256x256xbf16>, vector<10x256xf32> -> vector<10x256xf32>
    %c0_137 = arith.constant 0 : index
    %c0_138 = arith.constant 0 : index
    %221 = vector.load %arg49[%c0_137, %c0_138] : memref<1x256xf32, #tpu.memory_space<vmem>>, vector<1x256xf32>
    %222 = vector.broadcast %221 : vector<1x256xf32> to vector<10x256xf32>
    %223 = arith.addf %220, %222 : vector<10x256xf32>
    %224 = arith.truncf %217 : vector<10x256xf32> to vector<10x256xbf16>
    %c0_139 = arith.constant 0 : index
    %c0_140 = arith.constant 0 : index
    %225 = vector.load %arg50[%c0_139, %c0_140] : memref<256x256xbf16, #tpu.memory_space<vmem>>, vector<256x256xbf16>
    %cst_141 = arith.constant dense<0.000000e+00> : vector<10x256xf32>
    %226 = tpu.matmul %224, %225, %cst_141 {dimension_numbers = #tpu.dot_dimension_numbers<[1], [0], [0], [1], [0, 0, 1, 1], [], []>} : vector<10x256xbf16>, vector<256x256xbf16>, vector<10x256xf32> -> vector<10x256xf32>
    %c0_142 = arith.constant 0 : index
    %c0_143 = arith.constant 0 : index
    %227 = vector.load %arg51[%c0_142, %c0_143] : memref<1x256xf32, #tpu.memory_space<vmem>>, vector<1x256xf32>
    %228 = vector.broadcast %227 : vector<1x256xf32> to vector<10x256xf32>
    %229 = arith.addf %226, %228 : vector<10x256xf32>
    %cst_144 = arith.constant 0.000000e+00 : f32
    %230 = vector.broadcast %cst_144 : f32 to vector<10x256xf32>
    %231 = arith.maximumf %229, %230 : vector<10x256xf32>
    %232 = vector.broadcast %cst_144 : f32 to vector<10x256xf32>
    %233 = arith.subf %229, %232 : vector<10x256xf32>
    %234 = arith.cmpf one, %233, %233 : vector<10x256xf32>
    %235 = vector.broadcast %cst_144 : f32 to vector<10x256xf32>
    %236 = arith.addf %229, %235 : vector<10x256xf32>
    %237 = math.absf %233 : vector<10x256xf32>
    %cst_145 = arith.constant 0.000000e+00 : f32
    %238 = vector.broadcast %cst_145 : f32 to vector<10x256xf32>
    %239 = arith.subf %238, %237 : vector<10x256xf32>
    %240 = math.exp %239 : vector<10x256xf32>
    %241 = math.log1p %240 : vector<10x256xf32>
    %242 = arith.addf %231, %241 : vector<10x256xf32>
    %243 = arith.select %234, %236, %242 : vector<10x256xi1>, vector<10x256xf32>
    %cst_146 = arith.constant 9.99999974E-6 : f32
    %244 = vector.broadcast %cst_146 : f32 to vector<10x256xf32>
    %245 = arith.addf %243, %244 : vector<10x256xf32>
    %c0_147 = arith.constant 0 : index
    %c0_148 = arith.constant 0 : index
    %246 = vector.load %arg6[%c0_147, %c0_148] : memref<10x256xf32, #tpu.memory_space<vmem>>, vector<10x256xf32>
    %247 = arith.mulf %246, %245 : vector<10x256xf32>
    %248 = arith.addf %223, %247 : vector<10x256xf32>
    %249 = arith.truncf %248 : vector<10x256xf32> to vector<10x256xbf16>
    %c0_149 = arith.constant 0 : index
    %c0_150 = arith.constant 0 : index
    %250 = vector.load %arg52[%c0_149, %c0_150] : memref<256x256xbf16, #tpu.memory_space<vmem>>, vector<256x256xbf16>
    %cst_151 = arith.constant dense<0.000000e+00> : vector<10x256xf32>
    %251 = tpu.matmul %249, %250, %cst_151 {dimension_numbers = #tpu.dot_dimension_numbers<[1], [0], [0], [1], [0, 0, 1, 1], [], []>} : vector<10x256xbf16>, vector<256x256xbf16>, vector<10x256xf32> -> vector<10x256xf32>
    %c0_152 = arith.constant 0 : index
    %c0_153 = arith.constant 0 : index
    %252 = vector.load %arg53[%c0_152, %c0_153] : memref<1x256xf32, #tpu.memory_space<vmem>>, vector<1x256xf32>
    %253 = vector.broadcast %0 : vector<10x1xf32> to vector<10x256xf32>
    %254 = vector.broadcast %252 : vector<1x256xf32> to vector<10x256xf32>
    %255 = arith.mulf %253, %254 : vector<10x256xf32>
    %256 = arith.addf %251, %255 : vector<10x256xf32>
    %c0_154 = arith.constant 0 : index
    %c0_155 = arith.constant 0 : index
    %257 = vector.load %arg54[%c0_154, %c0_155] : memref<1x256xf32, #tpu.memory_space<vmem>>, vector<1x256xf32>
    %258 = vector.broadcast %257 : vector<1x256xf32> to vector<10x256xf32>
    %259 = arith.addf %256, %258 : vector<10x256xf32>
    %cst_156 = arith.constant 0.000000e+00 : f32
    %260 = vector.broadcast %cst_156 : f32 to vector<10x256xf32>
    %261 = arith.maximumf %259, %260 : vector<10x256xf32>
    %262 = arith.truncf %261 : vector<10x256xf32> to vector<10x256xbf16>
    %c0_157 = arith.constant 0 : index
    %c0_158 = arith.constant 0 : index
    %263 = vector.load %arg55[%c0_157, %c0_158] : memref<256x256xbf16, #tpu.memory_space<vmem>>, vector<256x256xbf16>
    %cst_159 = arith.constant dense<0.000000e+00> : vector<10x256xf32>
    %264 = tpu.matmul %262, %263, %cst_159 {dimension_numbers = #tpu.dot_dimension_numbers<[1], [0], [0], [1], [0, 0, 1, 1], [], []>} : vector<10x256xbf16>, vector<256x256xbf16>, vector<10x256xf32> -> vector<10x256xf32>
    %c0_160 = arith.constant 0 : index
    %c0_161 = arith.constant 0 : index
    %265 = vector.load %arg56[%c0_160, %c0_161] : memref<1x256xf32, #tpu.memory_space<vmem>>, vector<1x256xf32>
    %266 = vector.broadcast %265 : vector<1x256xf32> to vector<10x256xf32>
    %267 = arith.addf %264, %266 : vector<10x256xf32>
    %cst_162 = arith.constant 0.000000e+00 : f32
    %268 = vector.broadcast %cst_162 : f32 to vector<10x256xf32>
    %269 = arith.maximumf %267, %268 : vector<10x256xf32>
    %270 = arith.truncf %269 : vector<10x256xf32> to vector<10x256xbf16>
    %c0_163 = arith.constant 0 : index
    %c0_164 = arith.constant 0 : index
    %271 = vector.load %arg57[%c0_163, %c0_164] : memref<256x32xbf16, #tpu.memory_space<vmem>>, vector<256x32xbf16>
    %cst_165 = arith.constant dense<0.000000e+00> : vector<10x32xf32>
    %272 = tpu.matmul %270, %271, %cst_165 {dimension_numbers = #tpu.dot_dimension_numbers<[1], [0], [0], [1], [0, 0, 1, 1], [], []>} : vector<10x256xbf16>, vector<256x32xbf16>, vector<10x32xf32> -> vector<10x32xf32>
    %c0_166 = arith.constant 0 : index
    %c0_167 = arith.constant 0 : index
    %273 = vector.load %arg58[%c0_166, %c0_167] : memref<1x32xf32, #tpu.memory_space<vmem>>, vector<1x32xf32>
    %274 = vector.broadcast %273 : vector<1x32xf32> to vector<10x32xf32>
    %275 = arith.addf %272, %274 : vector<10x32xf32>
    %276 = arith.truncf %269 : vector<10x256xf32> to vector<10x256xbf16>
    %c0_168 = arith.constant 0 : index
    %c0_169 = arith.constant 0 : index
    %277 = vector.load %arg59[%c0_168, %c0_169] : memref<256x32xbf16, #tpu.memory_space<vmem>>, vector<256x32xbf16>
    %cst_170 = arith.constant dense<0.000000e+00> : vector<10x32xf32>
    %278 = tpu.matmul %276, %277, %cst_170 {dimension_numbers = #tpu.dot_dimension_numbers<[1], [0], [0], [1], [0, 0, 1, 1], [], []>} : vector<10x256xbf16>, vector<256x32xbf16>, vector<10x32xf32> -> vector<10x32xf32>
    %c0_171 = arith.constant 0 : index
    %c0_172 = arith.constant 0 : index
    %279 = vector.load %arg60[%c0_171, %c0_172] : memref<1x32xf32, #tpu.memory_space<vmem>>, vector<1x32xf32>
    %280 = vector.broadcast %279 : vector<1x32xf32> to vector<10x32xf32>
    %281 = arith.addf %278, %280 : vector<10x32xf32>
    %cst_173 = arith.constant 0.000000e+00 : f32
    %282 = vector.broadcast %cst_173 : f32 to vector<10x32xf32>
    %283 = arith.maximumf %281, %282 : vector<10x32xf32>
    %284 = vector.broadcast %cst_173 : f32 to vector<10x32xf32>
    %285 = arith.subf %281, %284 : vector<10x32xf32>
    %286 = arith.cmpf one, %285, %285 : vector<10x32xf32>
    %287 = vector.broadcast %cst_173 : f32 to vector<10x32xf32>
    %288 = arith.addf %281, %287 : vector<10x32xf32>
    %289 = math.absf %285 : vector<10x32xf32>
    %cst_174 = arith.constant 0.000000e+00 : f32
    %290 = vector.broadcast %cst_174 : f32 to vector<10x32xf32>
    %291 = arith.subf %290, %289 : vector<10x32xf32>
    %292 = math.exp %291 : vector<10x32xf32>
    %293 = math.log1p %292 : vector<10x32xf32>
    %294 = arith.addf %283, %293 : vector<10x32xf32>
    %295 = arith.select %286, %288, %294 : vector<10x32xi1>, vector<10x32xf32>
    %cst_175 = arith.constant 9.99999974E-6 : f32
    %296 = vector.broadcast %cst_175 : f32 to vector<10x32xf32>
    %297 = arith.addf %295, %296 : vector<10x32xf32>
    %298 = arith.truncf %192 : vector<10x32xf32> to vector<10x32xbf16>
    %c0_176 = arith.constant 0 : index
    %c0_177 = arith.constant 0 : index
    %299 = vector.load %arg61[%c0_176, %c0_177] : memref<32x256xbf16, #tpu.memory_space<vmem>>, vector<32x256xbf16>
    %cst_178 = arith.constant dense<0.000000e+00> : vector<10x256xf32>
    %300 = tpu.matmul %298, %299, %cst_178 {dimension_numbers = #tpu.dot_dimension_numbers<[1], [0], [0], [1], [0, 0, 1, 1], [], []>} : vector<10x32xbf16>, vector<32x256xbf16>, vector<10x256xf32> -> vector<10x256xf32>
    %301 = arith.truncf %248 : vector<10x256xf32> to vector<10x256xbf16>
    %c0_179 = arith.constant 0 : index
    %c0_180 = arith.constant 0 : index
    %302 = vector.load %arg62[%c0_179, %c0_180] : memref<256x256xbf16, #tpu.memory_space<vmem>>, vector<256x256xbf16>
    %cst_181 = arith.constant dense<0.000000e+00> : vector<10x256xf32>
    %303 = tpu.matmul %301, %302, %cst_181 {dimension_numbers = #tpu.dot_dimension_numbers<[1], [0], [0], [1], [0, 0, 1, 1], [], []>} : vector<10x256xbf16>, vector<256x256xbf16>, vector<10x256xf32> -> vector<10x256xf32>
    %304 = arith.addf %300, %303 : vector<10x256xf32>
    %c0_182 = arith.constant 0 : index
    %c0_183 = arith.constant 0 : index
    %305 = vector.load %arg63[%c0_182, %c0_183] : memref<1x256xf32, #tpu.memory_space<vmem>>, vector<1x256xf32>
    %306 = vector.broadcast %305 : vector<1x256xf32> to vector<10x256xf32>
    %307 = arith.addf %304, %306 : vector<10x256xf32>
    %cst_184 = arith.constant 0.000000e+00 : f32
    %308 = vector.broadcast %cst_184 : f32 to vector<10x256xf32>
    %309 = arith.maximumf %307, %308 : vector<10x256xf32>
    %310 = arith.truncf %309 : vector<10x256xf32> to vector<10x256xbf16>
    %c0_185 = arith.constant 0 : index
    %c0_186 = arith.constant 0 : index
    %311 = vector.load %arg64[%c0_185, %c0_186] : memref<256x256xbf16, #tpu.memory_space<vmem>>, vector<256x256xbf16>
    %cst_187 = arith.constant dense<0.000000e+00> : vector<10x256xf32>
    %312 = tpu.matmul %310, %311, %cst_187 {dimension_numbers = #tpu.dot_dimension_numbers<[1], [0], [0], [1], [0, 0, 1, 1], [], []>} : vector<10x256xbf16>, vector<256x256xbf16>, vector<10x256xf32> -> vector<10x256xf32>
    %c0_188 = arith.constant 0 : index
    %c0_189 = arith.constant 0 : index
    %313 = vector.load %arg65[%c0_188, %c0_189] : memref<1x256xf32, #tpu.memory_space<vmem>>, vector<1x256xf32>
    %314 = vector.broadcast %313 : vector<1x256xf32> to vector<10x256xf32>
    %315 = arith.addf %312, %314 : vector<10x256xf32>
    %cst_190 = arith.constant 0.000000e+00 : f32
    %316 = vector.broadcast %cst_190 : f32 to vector<10x256xf32>
    %317 = arith.maximumf %315, %316 : vector<10x256xf32>
    %318 = arith.truncf %317 : vector<10x256xf32> to vector<10x256xbf16>
    %c0_191 = arith.constant 0 : index
    %c0_192 = arith.constant 0 : index
    %319 = vector.load %arg66[%c0_191, %c0_192] : memref<256x13xbf16, #tpu.memory_space<vmem>>, vector<256x13xbf16>
    %cst_193 = arith.constant dense<0.000000e+00> : vector<10x13xf32>
    %320 = tpu.matmul %318, %319, %cst_193 {dimension_numbers = #tpu.dot_dimension_numbers<[1], [0], [0], [1], [0, 0, 1, 1], [], []>} : vector<10x256xbf16>, vector<256x13xbf16>, vector<10x13xf32> -> vector<10x13xf32>
    %c0_194 = arith.constant 0 : index
    %c0_195 = arith.constant 0 : index
    %321 = vector.load %arg67[%c0_194, %c0_195] : memref<1x13xf32, #tpu.memory_space<vmem>>, vector<1x13xf32>
    %322 = vector.broadcast %321 : vector<1x13xf32> to vector<10x13xf32>
    %323 = arith.addf %320, %322 : vector<10x13xf32>
    %c0_196 = arith.constant 0 : index
    %c0_197 = arith.constant 0 : index
    %324 = vector.load %arg68[%c0_196, %c0_197] : memref<10x32xf32, #tpu.memory_space<vmem>>, vector<10x32xf32>
    tpu.vector_store %arg68[%c0_196, %c0_197], %167 {strides = array<i32>} : memref<10x32xf32, #tpu.memory_space<vmem>>, vector<10x32xf32>,
    %c0_198 = arith.constant 0 : index
    %c0_199 = arith.constant 0 : index
    %325 = vector.load %arg69[%c0_198, %c0_199] : memref<10x32xf32, #tpu.memory_space<vmem>>, vector<10x32xf32>
    tpu.vector_store %arg69[%c0_198, %c0_199], %189 {strides = array<i32>} : memref<10x32xf32, #tpu.memory_space<vmem>>, vector<10x32xf32>,
    %c0_200 = arith.constant 0 : index
    %c0_201 = arith.constant 0 : index
    %326 = vector.load %arg70[%c0_200, %c0_201] : memref<10x32xf32, #tpu.memory_space<vmem>>, vector<10x32xf32>
    tpu.vector_store %arg70[%c0_200, %c0_201], %275 {strides = array<i32>} : memref<10x32xf32, #tpu.memory_space<vmem>>, vector<10x32xf32>,
    %c0_202 = arith.constant 0 : index
    %c0_203 = arith.constant 0 : index
    %327 = vector.load %arg71[%c0_202, %c0_203] : memref<10x32xf32, #tpu.memory_space<vmem>>, vector<10x32xf32>
    tpu.vector_store %arg71[%c0_202, %c0_203], %297 {strides = array<i32>} : memref<10x32xf32, #tpu.memory_space<vmem>>, vector<10x32xf32>,
    %c0_204 = arith.constant 0 : index
    %c0_205 = arith.constant 0 : index
    %328 = vector.load %arg72[%c0_204, %c0_205] : memref<10x13xf32, #tpu.memory_space<vmem>>, vector<10x13xf32>
    tpu.vector_store %arg72[%c0_204, %c0_205], %323 {strides = array<i32>} : memref<10x13xf32, #tpu.memory_space<vmem>>, vector<10x13xf32>,
    return
  }
}

</mosaic_0001>

<llo_original>
// kernel: latent_forward.3
$region0: #{latent_forward.3}
  #allocation0 [shape = 'u32[]', space=smem, size = 0x4, offset = 0x4, fixed_abs, tag = 'smem constant byte address 0x4 - core index']
  #allocation1 [shape = 'u32[72,128]{1,0:T(1,128)}', space=vmem, size = 0x9000, scoped, tag = 'internal scratch']
  %s0 = inlined_call_operand.smem [shape: u32[73], index: -1, kind: input, shape index: {}]
  %s1 = sld [smem:[%s0]]
  %s2 = scalar_lea.smem %s0, 1
  %s3 = sld [smem:[%s2]]
  %s4 = scalar_lea.smem %s0, 2
  %s5 = sld [smem:[%s4]]
  %s6 = scalar_lea.smem %s0, 3
  %s7 = sld [smem:[%s6]]
  %s8 = scalar_lea.smem %s0, 4
  %s9 = sld [smem:[%s8]]
  %s10 = scalar_lea.smem %s0, 5
  %s11 = sld [smem:[%s10]]
  %s12 = scalar_lea.smem %s0, 6
  %s13 = sld [smem:[%s12]]
  %s14 = scalar_lea.smem %s0, 7
  %s15 = sld [smem:[%s14]]
  %s16 = scalar_lea.smem %s0, 8
  %s17 = sld [smem:[%s16]]
  %s18 = scalar_lea.smem %s0, 9
  %s19 = sld [smem:[%s18]]
  %s20 = scalar_lea.smem %s0, 10
  %s21 = sld [smem:[%s20]]
  %s22 = scalar_lea.smem %s0, 11
  %s23 = sld [smem:[%s22]]
  %s24 = scalar_lea.smem %s0, 12
  %s25 = sld [smem:[%s24]]
  %s26 = scalar_lea.smem %s0, 13
  %s27 = sld [smem:[%s26]]
  %s28 = scalar_lea.smem %s0, 14
  %s29 = sld [smem:[%s28]]
  %s30 = scalar_lea.smem %s0, 15
  %s31 = sld [smem:[%s30]]
  %s32 = scalar_lea.smem %s0, 16
  %s33 = sld [smem:[%s32]]
  %s34 = scalar_lea.smem %s0, 17
  %s35 = sld [smem:[%s34]]
  %s36 = scalar_lea.smem %s0, 18
  %s37 = sld [smem:[%s36]]
  %s38 = scalar_lea.smem %s0, 19
  %s39 = sld [smem:[%s38]]
  %s40 = scalar_lea.smem %s0, 20
  %s41 = sld [smem:[%s40]]
  %s42 = scalar_lea.smem %s0, 21
  %s43 = sld [smem:[%s42]]
  %s44 = scalar_lea.smem %s0, 22
  %s45 = sld [smem:[%s44]]
  %s46 = scalar_lea.smem %s0, 23
  %s47 = sld [smem:[%s46]]
  %s48 = scalar_lea.smem %s0, 24
  %s49 = sld [smem:[%s48]]
  %s50 = scalar_lea.smem %s0, 25
  %s51 = sld [smem:[%s50]]
  %s52 = scalar_lea.smem %s0, 26
  %s53 = sld [smem:[%s52]]
  %s54 = scalar_lea.smem %s0, 27
  %s55 = sld [smem:[%s54]]
  %s56 = scalar_lea.smem %s0, 28
  %s57 = sld [smem:[%s56]]
  %s58 = scalar_lea.smem %s0, 29
  %s59 = sld [smem:[%s58]]
  %s60 = scalar_lea.smem %s0, 30
  %s61 = sld [smem:[%s60]]
  %s62 = scalar_lea.smem %s0, 31
  %s63 = sld [smem:[%s62]]
  %s64 = scalar_lea.smem %s0, 32
  %s65 = sld [smem:[%s64]]
  %s66 = scalar_lea.smem %s0, 33
  %s67 = sld [smem:[%s66]]
  %s68 = scalar_lea.smem %s0, 34
  %s69 = sld [smem:[%s68]]
  %s70 = scalar_lea.smem %s0, 35
  %s71 = sld [smem:[%s70]]
  %s72 = scalar_lea.smem %s0, 36
  %s73 = sld [smem:[%s72]]
  %s74 = scalar_lea.smem %s0, 37
  %s75 = sld [smem:[%s74]]
  %s76 = scalar_lea.smem %s0, 38
  %s77 = sld [smem:[%s76]]
  %s78 = scalar_lea.smem %s0, 39
  %s79 = sld [smem:[%s78]]
  %s80 = scalar_lea.smem %s0, 40
  %s81 = sld [smem:[%s80]]
  %s82 = scalar_lea.smem %s0, 41
  %s83 = sld [smem:[%s82]]
  %s84 = scalar_lea.smem %s0, 42
  %s85 = sld [smem:[%s84]]
  %s86 = scalar_lea.smem %s0, 43
  %s87 = sld [smem:[%s86]]
  %s88 = scalar_lea.smem %s0, 44
  %s89 = sld [smem:[%s88]]
  %s90 = scalar_lea.smem %s0, 45
  %s91 = sld [smem:[%s90]]
  %s92 = scalar_lea.smem %s0, 46
  %s93 = sld [smem:[%s92]]
  %s94 = scalar_lea.smem %s0, 47
  %s95 = sld [smem:[%s94]]
  %s96 = scalar_lea.smem %s0, 48
  %s97 = sld [smem:[%s96]]
  %s98 = scalar_lea.smem %s0, 49
  %s99 = sld [smem:[%s98]]
  %s100 = scalar_lea.smem %s0, 50
  %s101 = sld [smem:[%s100]]
  %s102 = scalar_lea.smem %s0, 51
  %s103 = sld [smem:[%s102]]
  %s104 = scalar_lea.smem %s0, 52
  %s105 = sld [smem:[%s104]]
  %s106 = scalar_lea.smem %s0, 53
  %s107 = sld [smem:[%s106]]
  %s108 = scalar_lea.smem %s0, 54
  %s109 = sld [smem:[%s108]]
  %s110 = scalar_lea.smem %s0, 55
  %s111 = sld [smem:[%s110]]
  %s112 = scalar_lea.smem %s0, 56
  %s113 = sld [smem:[%s112]]
  %s114 = scalar_lea.smem %s0, 57
  %s115 = sld [smem:[%s114]]
  %s116 = scalar_lea.smem %s0, 58
  %s117 = sld [smem:[%s116]]
  %s118 = scalar_lea.smem %s0, 59
  %s119 = sld [smem:[%s118]]
  %s120 = scalar_lea.smem %s0, 60
  %s121 = sld [smem:[%s120]]
  %s122 = scalar_lea.smem %s0, 61
  %s123 = sld [smem:[%s122]]
  %s124 = scalar_lea.smem %s0, 62
  %s125 = sld [smem:[%s124]]
  %s126 = scalar_lea.smem %s0, 63
  %s127 = sld [smem:[%s126]]
  %s128 = scalar_lea.smem %s0, 64
  %s129 = sld [smem:[%s128]]
  %s130 = scalar_lea.smem %s0, 65
  %s131 = sld [smem:[%s130]]
  %s132 = scalar_lea.smem %s0, 66
  %s133 = sld [smem:[%s132]]
  %s134 = scalar_lea.smem %s0, 67
  %s135 = sld [smem:[%s134]]
  %s136 = scalar_lea.smem %s0, 68
  %s137 = sld [smem:[%s136]]
  %s138 = scalar_lea.smem %s0, 69
  %s139 = sld [smem:[%s138]]
  %s140 = scalar_lea.smem %s0, 70
  %s141 = sld [smem:[%s140]]
  %s142 = scalar_lea.smem %s0, 71
  %s143 = sld [smem:[%s142]]
  %s144 = scalar_lea.smem %s0, 72
  %s145 = sld [smem:[%s144]]
  %146 = xla_tuple %s137, %s139, %s141, %s143, %s145
  %s147 = sld [smem:[#allocation0]]
  $region510: #{latent_forward.3} parent=0
    _
  %s149 = ssub.s32 1, %s147
  %s150 = scalar_select 0, %s149, %s147
  $region1: #{latent_forward.3} parent=0
    #allocation2 [shape = 'u8[2048]{0}', space=vmem, size = 0x800, scoped, tag = 'input window, operand 7, single buffered']
    #allocation3 [shape = 's32[1]{0}', space=sflag, size = 0x4, scoped, tag = 'scoped memory for latent_forward.3']
    #allocation4 [shape = 'u8[8192]{0}', space=vmem, size = 0x2000, scoped, tag = 'input window, operand 8, single buffered']
    #allocation5 [shape = 's32[1]{0}', space=sflag, size = 0x4, scoped, tag = 'scoped memory for latent_forward.3']
    #allocation6 [shape = 'u8[1024]{0}', space=vmem, size = 0x400, scoped, tag = 'input window, operand 9, single buffered']
    #allocation7 [shape = 'u8[1024]{0}', space=vmem, size = 0x400, scoped, tag = 'input window, operand 11, single buffered']
    #allocation8 [shape = 's32[1]{0}', space=sflag, size = 0x4, scoped, tag = 'scoped memory for latent_forward.3']
    #allocation9 [shape = 'u8[8192]{0}', space=vmem, size = 0x2000, scoped, tag = 'input window, operand 12, single buffered']
    #allocation10 [shape = 'u8[1024]{0}', space=vmem, size = 0x400, scoped, tag = 'input window, operand 13, single buffered']
    #allocation11 [shape = 's32[1]{0}', space=sflag, size = 0x4, scoped, tag = 'scoped memory for latent_forward.3']
    #allocation12 [shape = 'u8[1024]{0}', space=vmem, size = 0x400, scoped, tag = 'input window, operand 15, single buffered']
    #allocation13 [shape = 'u8[1024]{0}', space=vmem, size = 0x400, scoped, tag = 'input window, operand 17, single buffered']
    #allocation14 [shape = 's32[1]{0}', space=sflag, size = 0x4, scoped, tag = 'scoped memory for latent_forward.3']
    #allocation15 [shape = 'u8[1024]{0}', space=vmem, size = 0x400, scoped, tag = 'input window, operand 19, single buffered']
    #allocation16 [shape = 'u8[512]{0}', space=vmem, size = 0x400, scoped, tag = 'input window, operand 21, single buffered']
    #allocation17 [shape = 's32[1]{0}', space=sflag, size = 0x4, scoped, tag = 'scoped memory for latent_forward.3']
    #allocation18 [shape = 'u8[512]{0}', space=vmem, size = 0x400, scoped, tag = 'input window, operand 23, single buffered']
    #allocation19 [shape = 'u8[16384]{0}', space=vmem, size = 0x4000, scoped, tag = 'input window, operand 24, single buffered']
    #allocation20 [shape = 's32[1]{0}', space=sflag, size = 0x4, scoped, tag = 'scoped memory for latent_forward.3']
    #allocation21 [shape = 'u8[1024]{0}', space=vmem, size = 0x400, scoped, tag = 'input window, operand 25, single buffered']
    #allocation22 [shape = 'u8[1024]{0}', space=vmem, size = 0x400, scoped, tag = 'input window, operand 27, single buffered']
    #allocation23 [shape = 's32[1]{0}', space=sflag, size = 0x4, scoped, tag = 'scoped memory for latent_forward.3']
    #allocation24 [shape = 'u8[131072]{0}', space=vmem, size = 0x20000, scoped, tag = 'input window, operand 28, single buffered']
    #allocation25 [shape = 'u8[1024]{0}', space=vmem, size = 0x400, scoped, tag = 'input window, operand 29, single buffered']
    #allocation26 [shape = 's32[1]{0}', space=sflag, size = 0x4, scoped, tag = 'scoped memory for latent_forward.3']
    #allocation27 [shape = 'u8[131072]{0}', space=vmem, size = 0x20000, scoped, tag = 'input window, operand 30, single buffered']
    #allocation28 [shape = 'u8[1024]{0}', space=vmem, size = 0x400, scoped, tag = 'input window, operand 31, single buffered']
    #allocation29 [shape = 's32[1]{0}', space=sflag, size = 0x4, scoped, tag = 'scoped memory for latent_forward.3']
    #allocation30 [shape = 'u8[131072]{0}', space=vmem, size = 0x20000, scoped, tag = 'input window, operand 32, single buffered']
    #allocation31 [shape = 'u8[131072]{0}', space=vmem, size = 0x20000, scoped, tag = 'input window, operand 33, single buffered']
    #allocation32 [shape = 's32[1]{0}', space=sflag, size = 0x4, scoped, tag = 'scoped memory for latent_forward.3']
    #allocation33 [shape = 'u8[1024]{0}', space=vmem, size = 0x400, scoped, tag = 'input window, operand 34, single buffered']
    #allocation34 [shape = 'u8[1024]{0}', space=vmem, size = 0x400, scoped, tag = 'input window, operand 35, single buffered']
    #allocation35 [shape = 's32[1]{0}', space=sflag, size = 0x4, scoped, tag = 'scoped memory for latent_forward.3']
    #allocation36 [shape = 'u8[131072]{0}', space=vmem, size = 0x20000, scoped, tag = 'input window, operand 36, single buffered']
    #allocation37 [shape = 'u8[1024]{0}', space=vmem, size = 0x400, scoped, tag = 'input window, operand 37, single buffered']
    #allocation38 [shape = 's32[1]{0}', space=sflag, size = 0x4, scoped, tag = 'scoped memory for latent_forward.3']
    #allocation39 [shape = 'u8[512]{0}', space=vmem, size = 0x400, scoped, tag = 'input window, operand 39, single buffered']
    #allocation40 [shape = 'u8[512]{0}', space=vmem, size = 0x400, scoped, tag = 'input window, operand 41, single buffered']
    #allocation41 [shape = 's32[1]{0}', space=sflag, size = 0x4, scoped, tag = 'scoped memory for latent_forward.3']
    #allocation42 [shape = 'u8[16384]{0}', space=vmem, size = 0x4000, scoped, tag = 'input window, operand 42, single buffered']
    #allocation43 [shape = 'u8[131072]{0}', space=vmem, size = 0x20000, scoped, tag = 'input window, operand 43, single buffered']
    #allocation44 [shape = 's32[1]{0}', space=sflag, size = 0x4, scoped, tag = 'scoped memory for latent_forward.3']
    #allocation45 [shape = 'u8[1024]{0}', space=vmem, size = 0x400, scoped, tag = 'input window, operand 44, single buffered']
    #allocation46 [shape = 'u8[1024]{0}', space=vmem, size = 0x400, scoped, tag = 'input window, operand 45, single buffered']
    #allocation47 [shape = 's32[1]{0}', space=sflag, size = 0x4, scoped, tag = 'scoped memory for latent_forward.3']
    #allocation48 [shape = 'u8[131072]{0}', space=vmem, size = 0x20000, scoped, tag = 'input window, operand 46, single buffered']
    #allocation49 [shape = 'u8[1024]{0}', space=vmem, size = 0x400, scoped, tag = 'input window, operand 47, single buffered']
    #allocation50 [shape = 's32[1]{0}', space=sflag, size = 0x4, scoped, tag = 'scoped memory for latent_forward.3']
    #allocation51 [shape = 'u8[131072]{0}', space=vmem, size = 0x20000, scoped, tag = 'input window, operand 48, single buffered']
    #allocation52 [shape = 'u8[1024]{0}', space=vmem, size = 0x400, scoped, tag = 'input window, operand 49, single buffered']
    #allocation53 [shape = 's32[1]{0}', space=sflag, size = 0x4, scoped, tag = 'scoped memory for latent_forward.3']
    #allocation54 [shape = 'u8[131072]{0}', space=vmem, size = 0x20000, scoped, tag = 'input window, operand 50, single buffered']
    #allocation55 [shape = 'u8[1024]{0}', space=vmem, size = 0x400, scoped, tag = 'input window, operand 51, single buffered']
    #allocation56 [shape = 's32[1]{0}', space=sflag, size = 0x4, scoped, tag = 'scoped memory for latent_forward.3']
    #allocation57 [shape = 'u8[131072]{0}', space=vmem, size = 0x20000, scoped, tag = 'input window, operand 52, single buffered']
    #allocation58 [shape = 'u8[1024]{0}', space=vmem, size = 0x400, scoped, tag = 'input window, operand 53, single buffered']
    #allocation59 [shape = 's32[1]{0}', space=sflag, size = 0x4, scoped, tag = 'scoped memory for latent_forward.3']
    #allocation60 [shape = 'u8[1024]{0}', space=vmem, size = 0x400, scoped, tag = 'input window, operand 54, single buffered']
    #allocation61 [shape = 'u8[131072]{0}', space=vmem, size = 0x20000, scoped, tag = 'input window, operand 55, single buffered']
    #allocation62 [shape = 's32[1]{0}', space=sflag, size = 0x4, scoped, tag = 'scoped memory for latent_forward.3']
    #allocation63 [shape = 'u8[1024]{0}', space=vmem, size = 0x400, scoped, tag = 'input window, operand 56, single buffered']
    #allocation64 [shape = 'u8[512]{0}', space=vmem, size = 0x400, scoped, tag = 'input window, operand 58, single buffered']
    #allocation65 [shape = 's32[1]{0}', space=sflag, size = 0x4, scoped, tag = 'scoped memory for latent_forward.3']
    #allocation66 [shape = 'u8[512]{0}', space=vmem, size = 0x400, scoped, tag = 'input window, operand 60, single buffered']
    #allocation67 [shape = 'u8[16384]{0}', space=vmem, size = 0x4000, scoped, tag = 'input window, operand 61, single buffered']
    #allocation68 [shape = 's32[1]{0}', space=sflag, size = 0x4, scoped, tag = 'scoped memory for latent_forward.3']
    #allocation69 [shape = 'u8[131072]{0}', space=vmem, size = 0x20000, scoped, tag = 'input window, operand 62, single buffered']
    #allocation70 [shape = 'u8[1024]{0}', space=vmem, size = 0x400, scoped, tag = 'input window, operand 63, single buffered']
    #allocation71 [shape = 's32[1]{0}', space=sflag, size = 0x4, scoped, tag = 'scoped memory for latent_forward.3']
    #allocation72 [shape = 'u8[131072]{0}', space=vmem, size = 0x20000, scoped, tag = 'input window, operand 64, single buffered']
    #allocation73 [shape = 'u8[1024]{0}', space=vmem, size = 0x400, scoped, tag = 'input window, operand 65, single buffered']
    #allocation74 [shape = 's32[1]{0}', space=sflag, size = 0x4, scoped, tag = 'scoped memory for latent_forward.3']
    #allocation75 [shape = 'u8[512]{0}', space=vmem, size = 0x400, scoped, tag = 'input window, operand 67, single buffered']
    %151 = vsyncpa [#allocation3], 0
    %152 = vsyncpa [#allocation5], 0
    %153 = vsyncpa [#allocation8], 0
    %154 = vsyncpa [#allocation11], 0
    %155 = vsyncpa [#allocation14], 0
    %156 = vsyncpa [#allocation17], 0
    %157 = vsyncpa [#allocation20], 0
    %158 = vsyncpa [#allocation23], 0
    %159 = vsyncpa [#allocation26], 0
    %160 = vsyncpa [#allocation29], 0
    %161 = vsyncpa [#allocation32], 0
    %162 = vsyncpa [#allocation35], 0
    %163 = vsyncpa [#allocation38], 0
    %164 = vsyncpa [#allocation41], 0
    %165 = vsyncpa [#allocation44], 0
    %166 = vsyncpa [#allocation47], 0
    %167 = vsyncpa [#allocation50], 0
    %168 = vsyncpa [#allocation53], 0
    %169 = vsyncpa [#allocation56], 0
    %170 = vsyncpa [#allocation59], 0
    %171 = vsyncpa [#allocation62], 0
    %172 = vsyncpa [#allocation65], 0
    %173 = vsyncpa [#allocation68], 0
    %174 = vsyncpa [#allocation71], 0
    %175 = vsyncpa [#allocation74], 0
    // Predicated region
    $region2: #{latent_forward.3} parent=1 // pred_check
      _
    $region3: #{latent_forward.3} parent=1 // pred_check_branch
      %177 = sbr.rel (0) target = $region5
    $region4: #{latent_forward.3} parent=1 // pred_region
      _
    $region5: #{latent_forward.3} parent=1 // pred_fallthru
      _
    // Predicated region
    $region6: #{latent_forward.3} parent=1 // pred_check
      _
    $region7: #{latent_forward.3} parent=1 // pred_check_branch
      %179 = sbr.rel (0) target = $region9
    $region8: #{latent_forward.3} parent=1 // pred_region
      _
    $region9: #{latent_forward.3} parent=1 // pred_fallthru
      _
    // Predicated region
    $region10: #{latent_forward.3} parent=1 // pred_check
      _
    $region11: #{latent_forward.3} parent=1 // pred_check_branch
      %181 = sbr.rel (0) target = $region13
    $region12: #{latent_forward.3} parent=1 // pred_region
      _
    $region13: #{latent_forward.3} parent=1 // pred_fallthru
      _
    // Predicated region
    $region14: #{latent_forward.3} parent=1 // pred_check
      _
    $region15: #{latent_forward.3} parent=1 // pred_check_branch
      %183 = sbr.rel (0) target = $region17
    $region16: #{latent_forward.3} parent=1 // pred_region
      _
    $region17: #{latent_forward.3} parent=1 // pred_fallthru
      _
    // Predicated region
    $region18: #{latent_forward.3} parent=1 // pred_check
      _
    $region19: #{latent_forward.3} parent=1 // pred_check_branch
      %185 = sbr.rel (0) target = $region21
    $region20: #{latent_forward.3} parent=1 // pred_region
      _
    $region21: #{latent_forward.3} parent=1 // pred_fallthru
      _
    // Predicated region
    $region22: #{latent_forward.3} parent=1 // pred_check
      _
    $region23: #{latent_forward.3} parent=1 // pred_check_branch
      %187 = sbr.rel (0) target = $region25
    $region24: #{latent_forward.3} parent=1 // pred_region
      _
    $region25: #{latent_forward.3} parent=1 // pred_fallthru
      _
    // Predicated region
    $region26: #{latent_forward.3} parent=1 // pred_check
      _
    $region27: #{latent_forward.3} parent=1 // pred_check_branch
      %189 = sbr.rel (0) target = $region29
    $region28: #{latent_forward.3} parent=1 // pred_region
      _
    $region29: #{latent_forward.3} parent=1 // pred_fallthru
      _
    // Predicated region
    $region30: #{latent_forward.3} parent=1 // pred_check
      _
    $region31: #{latent_forward.3} parent=1 // pred_check_branch
      %191 = sbr.rel (0) target = $region33
    $region32: #{latent_forward.3} parent=1 // pred_region
      %193 = vsyncadd [#allocation3], 0
      %s195 = sshll.u32 %s15, 4
      %s196 = int_to_ptr.hbm [resolvable:$true] %s195
      %s197 = sshll.u32 [#allocation2], 4
      %s198 = int_to_ptr.vmem [resolvable:$true] %s197
      %200 = dma.hbm_to_vmem [thread:$0]  %s196, 64, %s198, [#allocation3]
    $region33: #{latent_forward.3} parent=1 // pred_fallthru
      _
    // Predicated region
    $region34: #{latent_forward.3} parent=1 // pred_check
      _
    $region35: #{latent_forward.3} parent=1 // pred_check_branch
      %202 = sbr.rel (0) target = $region37
    $region36: #{latent_forward.3} parent=1 // pred_region
      %204 = vsyncadd [#allocation5], 0
      %s205 = sshll.u32 %s17, 4
      %s206 = int_to_ptr.hbm [resolvable:$true] %s205
      %s207 = sshll.u32 [#allocation4], 4
      %s208 = int_to_ptr.vmem [resolvable:$true] %s207
      %213 = dma.hbm_to_vmem [thread:$0]  %s206, 256, %s208, [#allocation5], 128, 128, 8
    $region37: #{latent_forward.3} parent=1 // pred_fallthru
      _
    // Predicated region
    $region38: #{latent_forward.3} parent=1 // pred_check
      _
    $region39: #{latent_forward.3} parent=1 // pred_check_branch
      %215 = sbr.rel (0) target = $region41
    $region40: #{latent_forward.3} parent=1 // pred_region
      %217 = vsyncadd [#allocation5], 0
      %s219 = sshll.u32 %s19, 4
      %s220 = int_to_ptr.hbm [resolvable:$true] %s219
      %s221 = sshll.u32 [#allocation6], 4
      %s222 = int_to_ptr.vmem [resolvable:$true] %s221
      %224 = dma.hbm_to_vmem [thread:$0]  %s220, 32, %s222, [#allocation5]
    $region41: #{latent_forward.3} parent=1 // pred_fallthru
      _
    // Predicated region
    $region42: #{latent_forward.3} parent=1 // pred_check
      _
    $region43: #{latent_forward.3} parent=1 // pred_check_branch
      %226 = sbr.rel (0) target = $region45
    $region44: #{latent_forward.3} parent=1 // pred_region
      _
    $region45: #{latent_forward.3} parent=1 // pred_fallthru
      _
    // Predicated region
    $region46: #{latent_forward.3} parent=1 // pred_check
      _
    $region47: #{latent_forward.3} parent=1 // pred_check_branch
      %228 = sbr.rel (0) target = $region49
    $region48: #{latent_forward.3} parent=1 // pred_region
      %230 = vsyncadd [#allocation8], 0
      %s232 = sshll.u32 %s23, 4
      %s233 = int_to_ptr.hbm [resolvable:$true] %s232
      %s234 = sshll.u32 [#allocation7], 4
      %s235 = int_to_ptr.vmem [resolvable:$true] %s234
      %237 = dma.hbm_to_vmem [thread:$0]  %s233, 32, %s235, [#allocation8]
    $region49: #{latent_forward.3} parent=1 // pred_fallthru
      _
    // Predicated region
    $region50: #{latent_forward.3} parent=1 // pred_check
      _
    $region51: #{latent_forward.3} parent=1 // pred_check_branch
      %239 = sbr.rel (0) target = $region53
    $region52: #{latent_forward.3} parent=1 // pred_region
      %241 = vsyncadd [#allocation8], 0
      %s242 = sshll.u32 %s25, 4
      %s243 = int_to_ptr.hbm [resolvable:$true] %s242
      %s244 = sshll.u32 [#allocation9], 4
      %s245 = int_to_ptr.vmem [resolvable:$true] %s244
      %250 = dma.hbm_to_vmem [thread:$0]  %s243, 256, %s245, [#allocation8], 128, 128, 8
    $region53: #{latent_forward.3} parent=1 // pred_fallthru
      _
    // Predicated region
    $region54: #{latent_forward.3} parent=1 // pred_check
      _
    $region55: #{latent_forward.3} parent=1 // pred_check_branch
      %252 = sbr.rel (0) target = $region57
    $region56: #{latent_forward.3} parent=1 // pred_region
      %254 = vsyncadd [#allocation11], 0
      %s256 = sshll.u32 %s27, 4
      %s257 = int_to_ptr.hbm [resolvable:$true] %s256
      %s258 = sshll.u32 [#allocation10], 4
      %s259 = int_to_ptr.vmem [resolvable:$true] %s258
      %261 = dma.hbm_to_vmem [thread:$0]  %s257, 32, %s259, [#allocation11]
    $region57: #{latent_forward.3} parent=1 // pred_fallthru
      _
    // Predicated region
    $region58: #{latent_forward.3} parent=1 // pred_check
      _
    $region59: #{latent_forward.3} parent=1 // pred_check_branch
      %263 = sbr.rel (0) target = $region61
    $region60: #{latent_forward.3} parent=1 // pred_region
      _
    $region61: #{latent_forward.3} parent=1 // pred_fallthru
      _
    // Predicated region
    $region62: #{latent_forward.3} parent=1 // pred_check
      _
    $region63: #{latent_forward.3} parent=1 // pred_check_branch
      %265 = sbr.rel (0) target = $region65
    $region64: #{latent_forward.3} parent=1 // pred_region
      %267 = vsyncadd [#allocation11], 0
      %s269 = sshll.u32 %s31, 4
      %s270 = int_to_ptr.hbm [resolvable:$true] %s269
      %s271 = sshll.u32 [#allocation12], 4
      %s272 = int_to_ptr.vmem [resolvable:$true] %s271
      %274 = dma.hbm_to_vmem [thread:$0]  %s270, 32, %s272, [#allocation11]
    $region65: #{latent_forward.3} parent=1 // pred_fallthru
      _
    // Predicated region
    $region66: #{latent_forward.3} parent=1 // pred_check
      _
    $region67: #{latent_forward.3} parent=1 // pred_check_branch
      %276 = sbr.rel (0) target = $region69
    $region68: #{latent_forward.3} parent=1 // pred_region
      _
    $region69: #{latent_forward.3} parent=1 // pred_fallthru
      _
    // Predicated region
    $region70: #{latent_forward.3} parent=1 // pred_check
      _
    $region71: #{latent_forward.3} parent=1 // pred_check_branch
      %278 = sbr.rel (0) target = $region73
    $region72: #{latent_forward.3} parent=1 // pred_region
      %280 = vsyncadd [#allocation14], 0
      %s282 = sshll.u32 %s35, 4
      %s283 = int_to_ptr.hbm [resolvable:$true] %s282
      %s284 = sshll.u32 [#allocation13], 4
      %s285 = int_to_ptr.vmem [resolvable:$true] %s284
      %287 = dma.hbm_to_vmem [thread:$0]  %s283, 32, %s285, [#allocation14]
    $region73: #{latent_forward.3} parent=1 // pred_fallthru
      _
    // Predicated region
    $region74: #{latent_forward.3} parent=1 // pred_check
      _
    $region75: #{latent_forward.3} parent=1 // pred_check_branch
      %289 = sbr.rel (0) target = $region77
    $region76: #{latent_forward.3} parent=1 // pred_region
      _
    $region77: #{latent_forward.3} parent=1 // pred_fallthru
      _
    // Predicated region
    $region78: #{latent_forward.3} parent=1 // pred_check
      _
    $region79: #{latent_forward.3} parent=1 // pred_check_branch
      %291 = sbr.rel (0) target = $region81
    $region80: #{latent_forward.3} parent=1 // pred_region
      %293 = vsyncadd [#allocation14], 0
      %s295 = sshll.u32 %s39, 4
      %s296 = int_to_ptr.hbm [resolvable:$true] %s295
      %s297 = sshll.u32 [#allocation15], 4
      %s298 = int_to_ptr.vmem [resolvable:$true] %s297
      %300 = dma.hbm_to_vmem [thread:$0]  %s296, 32, %s298, [#allocation14]
    $region81: #{latent_forward.3} parent=1 // pred_fallthru
      _
    // Predicated region
    $region82: #{latent_forward.3} parent=1 // pred_check
      _
    $region83: #{latent_forward.3} parent=1 // pred_check_branch
      %302 = sbr.rel (0) target = $region85
    $region84: #{latent_forward.3} parent=1 // pred_region
      _
    $region85: #{latent_forward.3} parent=1 // pred_fallthru
      _
    // Predicated region
    $region86: #{latent_forward.3} parent=1 // pred_check
      _
    $region87: #{latent_forward.3} parent=1 // pred_check_branch
      %304 = sbr.rel (0) target = $region89
    $region88: #{latent_forward.3} parent=1 // pred_region
      %306 = vsyncadd [#allocation17], 0
      %s308 = sshll.u32 %s43, 4
      %s309 = int_to_ptr.hbm [resolvable:$true] %s308
      %s310 = sshll.u32 [#allocation16], 4
      %s311 = int_to_ptr.vmem [resolvable:$true] %s310
      %313 = dma.hbm_to_vmem [thread:$0]  %s309, 16, %s311, [#allocation17]
    $region89: #{latent_forward.3} parent=1 // pred_fallthru
      _
    // Predicated region
    $region90: #{latent_forward.3} parent=1 // pred_check
      _
    $region91: #{latent_forward.3} parent=1 // pred_check_branch
      %315 = sbr.rel (0) target = $region93
    $region92: #{latent_forward.3} parent=1 // pred_region
      _
    $region93: #{latent_forward.3} parent=1 // pred_fallthru
      _
    // Predicated region
    $region94: #{latent_forward.3} parent=1 // pred_check
      _
    $region95: #{latent_forward.3} parent=1 // pred_check_branch
      %317 = sbr.rel (0) target = $region97
    $region96: #{latent_forward.3} parent=1 // pred_region
      %319 = vsyncadd [#allocation17], 0
      %s321 = sshll.u32 %s47, 4
      %s322 = int_to_ptr.hbm [resolvable:$true] %s321
      %s323 = sshll.u32 [#allocation18], 4
      %s324 = int_to_ptr.vmem [resolvable:$true] %s323
      %326 = dma.hbm_to_vmem [thread:$0]  %s322, 16, %s324, [#allocation17]
    $region97: #{latent_forward.3} parent=1 // pred_fallthru
      _
    // Predicated region
    $region98: #{latent_forward.3} parent=1 // pred_check
      _
    $region99: #{latent_forward.3} parent=1 // pred_check_branch
      %328 = sbr.rel (0) target = $region101
    $region100: #{latent_forward.3} parent=1 // pred_region
      %330 = vsyncadd [#allocation20], 0
      %s331 = sshll.u32 %s49, 4
      %s332 = int_to_ptr.hbm [resolvable:$true] %s331
      %s333 = sshll.u32 [#allocation19], 4
      %s334 = int_to_ptr.vmem [resolvable:$true] %s333
      %339 = dma.hbm_to_vmem [thread:$0]  %s332, 512, %s334, [#allocation20], 128, 128, 8
    $region101: #{latent_forward.3} parent=1 // pred_fallthru
      _
    // Predicated region
    $region102: #{latent_forward.3} parent=1 // pred_check
      _
    $region103: #{latent_forward.3} parent=1 // pred_check_branch
      %341 = sbr.rel (0) target = $region105
    $region104: #{latent_forward.3} parent=1 // pred_region
      %343 = vsyncadd [#allocation20], 0
      %s345 = sshll.u32 %s51, 4
      %s346 = int_to_ptr.hbm [resolvable:$true] %s345
      %s347 = sshll.u32 [#allocation21], 4
      %s348 = int_to_ptr.vmem [resolvable:$true] %s347
      %350 = dma.hbm_to_vmem [thread:$0]  %s346, 32, %s348, [#allocation20]
    $region105: #{latent_forward.3} parent=1 // pred_fallthru
      _
    // Predicated region
    $region106: #{latent_forward.3} parent=1 // pred_check
      _
    $region107: #{latent_forward.3} parent=1 // pred_check_branch
      %352 = sbr.rel (0) target = $region109
    $region108: #{latent_forward.3} parent=1 // pred_region
      _
    $region109: #{latent_forward.3} parent=1 // pred_fallthru
      _
    // Predicated region
    $region110: #{latent_forward.3} parent=1 // pred_check
      _
    $region111: #{latent_forward.3} parent=1 // pred_check_branch
      %354 = sbr.rel (0) target = $region113
    $region112: #{latent_forward.3} parent=1 // pred_region
      %356 = vsyncadd [#allocation23], 0
      %s358 = sshll.u32 %s55, 4
      %s359 = int_to_ptr.hbm [resolvable:$true] %s358
      %s360 = sshll.u32 [#allocation22], 4
      %s361 = int_to_ptr.vmem [resolvable:$true] %s360
      %363 = dma.hbm_to_vmem [thread:$0]  %s359, 32, %s361, [#allocation23]
    $region113: #{latent_forward.3} parent=1 // pred_fallthru
      _
    // Predicated region
    $region114: #{latent_forward.3} parent=1 // pred_check
      _
    $region115: #{latent_forward.3} parent=1 // pred_check_branch
      %365 = sbr.rel (0) target = $region117
    $region116: #{latent_forward.3} parent=1 // pred_region
      %367 = vsyncadd [#allocation23], 0
      %s368 = sshll.u32 %s57, 4
      %s369 = int_to_ptr.hbm [resolvable:$true] %s368
      %s370 = sshll.u32 [#allocation24], 4
      %s371 = int_to_ptr.vmem [resolvable:$true] %s370
      %376 = dma.hbm_to_vmem [thread:$0]  %s369, 4096, %s371, [#allocation23], 128, 128, 8
    $region117: #{latent_forward.3} parent=1 // pred_fallthru
      _
    // Predicated region
    $region118: #{latent_forward.3} parent=1 // pred_check
      _
    $region119: #{latent_forward.3} parent=1 // pred_check_branch
      %378 = sbr.rel (0) target = $region121
    $region120: #{latent_forward.3} parent=1 // pred_region
      %380 = vsyncadd [#allocation26], 0
      %s382 = sshll.u32 %s59, 4
      %s383 = int_to_ptr.hbm [resolvable:$true] %s382
      %s384 = sshll.u32 [#allocation25], 4
      %s385 = int_to_ptr.vmem [resolvable:$true] %s384
      %387 = dma.hbm_to_vmem [thread:$0]  %s383, 32, %s385, [#allocation26]
    $region121: #{latent_forward.3} parent=1 // pred_fallthru
      _
    // Predicated region
    $region122: #{latent_forward.3} parent=1 // pred_check
      _
    $region123: #{latent_forward.3} parent=1 // pred_check_branch
      %389 = sbr.rel (0) target = $region125
    $region124: #{latent_forward.3} parent=1 // pred_region
      %391 = vsyncadd [#allocation26], 0
      %s392 = sshll.u32 %s61, 4
      %s393 = int_to_ptr.hbm [resolvable:$true] %s392
      %s394 = sshll.u32 [#allocation27], 4
      %s395 = int_to_ptr.vmem [resolvable:$true] %s394
      %400 = dma.hbm_to_vmem [thread:$0]  %s393, 4096, %s395, [#allocation26], 128, 128, 8
    $region125: #{latent_forward.3} parent=1 // pred_fallthru
      _
    // Predicated region
    $region126: #{latent_forward.3} parent=1 // pred_check
      _
    $region127: #{latent_forward.3} parent=1 // pred_check_branch
      %402 = sbr.rel (0) target = $region129
    $region128: #{latent_forward.3} parent=1 // pred_region
      %404 = vsyncadd [#allocation29], 0
      %s406 = sshll.u32 %s63, 4
      %s407 = int_to_ptr.hbm [resolvable:$true] %s406
      %s408 = sshll.u32 [#allocation28], 4
      %s409 = int_to_ptr.vmem [resolvable:$true] %s408
      %411 = dma.hbm_to_vmem [thread:$0]  %s407, 32, %s409, [#allocation29]
    $region129: #{latent_forward.3} parent=1 // pred_fallthru
      _
    // Predicated region
    $region130: #{latent_forward.3} parent=1 // pred_check
      _
    $region131: #{latent_forward.3} parent=1 // pred_check_branch
      %413 = sbr.rel (0) target = $region133
    $region132: #{latent_forward.3} parent=1 // pred_region
      %415 = vsyncadd [#allocation29], 0
      %s416 = sshll.u32 %s65, 4
      %s417 = int_to_ptr.hbm [resolvable:$true] %s416
      %s418 = sshll.u32 [#allocation30], 4
      %s419 = int_to_ptr.vmem [resolvable:$true] %s418
      %424 = dma.hbm_to_vmem [thread:$0]  %s417, 4096, %s419, [#allocation29], 128, 128, 8
    $region133: #{latent_forward.3} parent=1 // pred_fallthru
      _
    // Predicated region
    $region134: #{latent_forward.3} parent=1 // pred_check
      _
    $region135: #{latent_forward.3} parent=1 // pred_check_branch
      %426 = sbr.rel (0) target = $region137
    $region136: #{latent_forward.3} parent=1 // pred_region
      %428 = vsyncadd [#allocation32], 0
      %s429 = sshll.u32 %s67, 4
      %s430 = int_to_ptr.hbm [resolvable:$true] %s429
      %s431 = sshll.u32 [#allocation31], 4
      %s432 = int_to_ptr.vmem [resolvable:$true] %s431
      %437 = dma.hbm_to_vmem [thread:$0]  %s430, 4096, %s432, [#allocation32], 128, 128, 8
    $region137: #{latent_forward.3} parent=1 // pred_fallthru
      _
    // Predicated region
    $region138: #{latent_forward.3} parent=1 // pred_check
      _
    $region139: #{latent_forward.3} parent=1 // pred_check_branch
      %439 = sbr.rel (0) target = $region141
    $region140: #{latent_forward.3} parent=1 // pred_region
      %441 = vsyncadd [#allocation32], 0
      %s443 = sshll.u32 %s69, 4
      %s444 = int_to_ptr.hbm [resolvable:$true] %s443
      %s445 = sshll.u32 [#allocation33], 4
      %s446 = int_to_ptr.vmem [resolvable:$true] %s445
      %448 = dma.hbm_to_vmem [thread:$0]  %s444, 32, %s446, [#allocation32]
    $region141: #{latent_forward.3} parent=1 // pred_fallthru
      _
    // Predicated region
    $region142: #{latent_forward.3} parent=1 // pred_check
      _
    $region143: #{latent_forward.3} parent=1 // pred_check_branch
      %450 = sbr.rel (0) target = $region145
    $region144: #{latent_forward.3} parent=1 // pred_region
      %452 = vsyncadd [#allocation35], 0
      %s454 = sshll.u32 %s71, 4
      %s455 = int_to_ptr.hbm [resolvable:$true] %s454
      %s456 = sshll.u32 [#allocation34], 4
      %s457 = int_to_ptr.vmem [resolvable:$true] %s456
      %459 = dma.hbm_to_vmem [thread:$0]  %s455, 32, %s457, [#allocation35]
    $region145: #{latent_forward.3} parent=1 // pred_fallthru
      _
    // Predicated region
    $region146: #{latent_forward.3} parent=1 // pred_check
      _
    $region147: #{latent_forward.3} parent=1 // pred_check_branch
      %461 = sbr.rel (0) target = $region149
    $region148: #{latent_forward.3} parent=1 // pred_region
      %463 = vsyncadd [#allocation35], 0
      %s464 = sshll.u32 %s73, 4
      %s465 = int_to_ptr.hbm [resolvable:$true] %s464
      %s466 = sshll.u32 [#allocation36], 4
      %s467 = int_to_ptr.vmem [resolvable:$true] %s466
      %472 = dma.hbm_to_vmem [thread:$0]  %s465, 4096, %s467, [#allocation35], 128, 128, 8
    $region149: #{latent_forward.3} parent=1 // pred_fallthru
      _
    // Predicated region
    $region150: #{latent_forward.3} parent=1 // pred_check
      _
    $region151: #{latent_forward.3} parent=1 // pred_check_branch
      %474 = sbr.rel (0) target = $region153
    $region152: #{latent_forward.3} parent=1 // pred_region
      %476 = vsyncadd [#allocation38], 0
      %s478 = sshll.u32 %s75, 4
      %s479 = int_to_ptr.hbm [resolvable:$true] %s478
      %s480 = sshll.u32 [#allocation37], 4
      %s481 = int_to_ptr.vmem [resolvable:$true] %s480
      %483 = dma.hbm_to_vmem [thread:$0]  %s479, 32, %s481, [#allocation38]
    $region153: #{latent_forward.3} parent=1 // pred_fallthru
      _
    // Predicated region
    $region154: #{latent_forward.3} parent=1 // pred_check
      _
    $region155: #{latent_forward.3} parent=1 // pred_check_branch
      %485 = sbr.rel (0) target = $region157
    $region156: #{latent_forward.3} parent=1 // pred_region
      _
    $region157: #{latent_forward.3} parent=1 // pred_fallthru
      _
    // Predicated region
    $region158: #{latent_forward.3} parent=1 // pred_check
      _
    $region159: #{latent_forward.3} parent=1 // pred_check_branch
      %487 = sbr.rel (0) target = $region161
    $region160: #{latent_forward.3} parent=1 // pred_region
      %489 = vsyncadd [#allocation38], 0
      %s491 = sshll.u32 %s79, 4
      %s492 = int_to_ptr.hbm [resolvable:$true] %s491
      %s493 = sshll.u32 [#allocation39], 4
      %s494 = int_to_ptr.vmem [resolvable:$true] %s493
      %496 = dma.hbm_to_vmem [thread:$0]  %s492, 16, %s494, [#allocation38]
    $region161: #{latent_forward.3} parent=1 // pred_fallthru
      _
    // Predicated region
    $region162: #{latent_forward.3} parent=1 // pred_check
      _
    $region163: #{latent_forward.3} parent=1 // pred_check_branch
      %498 = sbr.rel (0) target = $region165
    $region164: #{latent_forward.3} parent=1 // pred_region
      _
    $region165: #{latent_forward.3} parent=1 // pred_fallthru
      _
    // Predicated region
    $region166: #{latent_forward.3} parent=1 // pred_check
      _
    $region167: #{latent_forward.3} parent=1 // pred_check_branch
      %500 = sbr.rel (0) target = $region169
    $region168: #{latent_forward.3} parent=1 // pred_region
      %502 = vsyncadd [#allocation41], 0
      %s504 = sshll.u32 %s83, 4
      %s505 = int_to_ptr.hbm [resolvable:$true] %s504
      %s506 = sshll.u32 [#allocation40], 4
      %s507 = int_to_ptr.vmem [resolvable:$true] %s506
      %509 = dma.hbm_to_vmem [thread:$0]  %s505, 16, %s507, [#allocation41]
    $region169: #{latent_forward.3} parent=1 // pred_fallthru
      _
    // Predicated region
    $region170: #{latent_forward.3} parent=1 // pred_check
      _
    $region171: #{latent_forward.3} parent=1 // pred_check_branch
      %511 = sbr.rel (0) target = $region173
    $region172: #{latent_forward.3} parent=1 // pred_region
      %513 = vsyncadd [#allocation41], 0
      %s514 = sshll.u32 %s85, 4
      %s515 = int_to_ptr.hbm [resolvable:$true] %s514
      %s516 = sshll.u32 [#allocation42], 4
      %s517 = int_to_ptr.vmem [resolvable:$true] %s516
      %522 = dma.hbm_to_vmem [thread:$0]  %s515, 512, %s517, [#allocation41], 128, 128, 8
    $region173: #{latent_forward.3} parent=1 // pred_fallthru
      _
    // Predicated region
    $region174: #{latent_forward.3} parent=1 // pred_check
      _
    $region175: #{latent_forward.3} parent=1 // pred_check_branch
      %524 = sbr.rel (0) target = $region177
    $region176: #{latent_forward.3} parent=1 // pred_region
      %526 = vsyncadd [#allocation44], 0
      %s527 = sshll.u32 %s87, 4
      %s528 = int_to_ptr.hbm [resolvable:$true] %s527
      %s529 = sshll.u32 [#allocation43], 4
      %s530 = int_to_ptr.vmem [resolvable:$true] %s529
      %535 = dma.hbm_to_vmem [thread:$0]  %s528, 4096, %s530, [#allocation44], 128, 128, 8
    $region177: #{latent_forward.3} parent=1 // pred_fallthru
      _
    // Predicated region
    $region178: #{latent_forward.3} parent=1 // pred_check
      _
    $region179: #{latent_forward.3} parent=1 // pred_check_branch
      %537 = sbr.rel (0) target = $region181
    $region180: #{latent_forward.3} parent=1 // pred_region
      %539 = vsyncadd [#allocation44], 0
      %s541 = sshll.u32 %s89, 4
      %s542 = int_to_ptr.hbm [resolvable:$true] %s541
      %s543 = sshll.u32 [#allocation45], 4
      %s544 = int_to_ptr.vmem [resolvable:$true] %s543
      %546 = dma.hbm_to_vmem [thread:$0]  %s542, 32, %s544, [#allocation44]
    $region181: #{latent_forward.3} parent=1 // pred_fallthru
      _
    // Predicated region
    $region182: #{latent_forward.3} parent=1 // pred_check
      _
    $region183: #{latent_forward.3} parent=1 // pred_check_branch
      %548 = sbr.rel (0) target = $region185
    $region184: #{latent_forward.3} parent=1 // pred_region
      %550 = vsyncadd [#allocation47], 0
      %s552 = sshll.u32 %s91, 4
      %s553 = int_to_ptr.hbm [resolvable:$true] %s552
      %s554 = sshll.u32 [#allocation46], 4
      %s555 = int_to_ptr.vmem [resolvable:$true] %s554
      %557 = dma.hbm_to_vmem [thread:$0]  %s553, 32, %s555, [#allocation47]
    $region185: #{latent_forward.3} parent=1 // pred_fallthru
      _
    // Predicated region
    $region186: #{latent_forward.3} parent=1 // pred_check
      _
    $region187: #{latent_forward.3} parent=1 // pred_check_branch
      %559 = sbr.rel (0) target = $region189
    $region188: #{latent_forward.3} parent=1 // pred_region
      %561 = vsyncadd [#allocation47], 0
      %s562 = sshll.u32 %s93, 4
      %s563 = int_to_ptr.hbm [resolvable:$true] %s562
      %s564 = sshll.u32 [#allocation48], 4
      %s565 = int_to_ptr.vmem [resolvable:$true] %s564
      %570 = dma.hbm_to_vmem [thread:$0]  %s563, 4096, %s565, [#allocation47], 128, 128, 8
    $region189: #{latent_forward.3} parent=1 // pred_fallthru
      _
    // Predicated region
    $region190: #{latent_forward.3} parent=1 // pred_check
      _
    $region191: #{latent_forward.3} parent=1 // pred_check_branch
      %572 = sbr.rel (0) target = $region193
    $region192: #{latent_forward.3} parent=1 // pred_region
      %574 = vsyncadd [#allocation50], 0
      %s576 = sshll.u32 %s95, 4
      %s577 = int_to_ptr.hbm [resolvable:$true] %s576
      %s578 = sshll.u32 [#allocation49], 4
      %s579 = int_to_ptr.vmem [resolvable:$true] %s578
      %581 = dma.hbm_to_vmem [thread:$0]  %s577, 32, %s579, [#allocation50]
    $region193: #{latent_forward.3} parent=1 // pred_fallthru
      _
    // Predicated region
    $region194: #{latent_forward.3} parent=1 // pred_check
      _
    $region195: #{latent_forward.3} parent=1 // pred_check_branch
      %583 = sbr.rel (0) target = $region197
    $region196: #{latent_forward.3} parent=1 // pred_region
      %585 = vsyncadd [#allocation50], 0
      %s586 = sshll.u32 %s97, 4
      %s587 = int_to_ptr.hbm [resolvable:$true] %s586
      %s588 = sshll.u32 [#allocation51], 4
      %s589 = int_to_ptr.vmem [resolvable:$true] %s588
      %594 = dma.hbm_to_vmem [thread:$0]  %s587, 4096, %s589, [#allocation50], 128, 128, 8
    $region197: #{latent_forward.3} parent=1 // pred_fallthru
      _
    // Predicated region
    $region198: #{latent_forward.3} parent=1 // pred_check
      _
    $region199: #{latent_forward.3} parent=1 // pred_check_branch
      %596 = sbr.rel (0) target = $region201
    $region200: #{latent_forward.3} parent=1 // pred_region
      %598 = vsyncadd [#allocation53], 0
      %s600 = sshll.u32 %s99, 4
      %s601 = int_to_ptr.hbm [resolvable:$true] %s600
      %s602 = sshll.u32 [#allocation52], 4
      %s603 = int_to_ptr.vmem [resolvable:$true] %s602
      %605 = dma.hbm_to_vmem [thread:$0]  %s601, 32, %s603, [#allocation53]
    $region201: #{latent_forward.3} parent=1 // pred_fallthru
      _
    // Predicated region
    $region202: #{latent_forward.3} parent=1 // pred_check
      _
    $region203: #{latent_forward.3} parent=1 // pred_check_branch
      %607 = sbr.rel (0) target = $region205
    $region204: #{latent_forward.3} parent=1 // pred_region
      %609 = vsyncadd [#allocation53], 0
      %s610 = sshll.u32 %s101, 4
      %s611 = int_to_ptr.hbm [resolvable:$true] %s610
      %s612 = sshll.u32 [#allocation54], 4
      %s613 = int_to_ptr.vmem [resolvable:$true] %s612
      %618 = dma.hbm_to_vmem [thread:$0]  %s611, 4096, %s613, [#allocation53], 128, 128, 8
    $region205: #{latent_forward.3} parent=1 // pred_fallthru
      _
    // Predicated region
    $region206: #{latent_forward.3} parent=1 // pred_check
      _
    $region207: #{latent_forward.3} parent=1 // pred_check_branch
      %620 = sbr.rel (0) target = $region209
    $region208: #{latent_forward.3} parent=1 // pred_region
      %622 = vsyncadd [#allocation56], 0
      %s624 = sshll.u32 %s103, 4
      %s625 = int_to_ptr.hbm [resolvable:$true] %s624
      %s626 = sshll.u32 [#allocation55], 4
      %s627 = int_to_ptr.vmem [resolvable:$true] %s626
      %629 = dma.hbm_to_vmem [thread:$0]  %s625, 32, %s627, [#allocation56]
    $region209: #{latent_forward.3} parent=1 // pred_fallthru
      _
    // Predicated region
    $region210: #{latent_forward.3} parent=1 // pred_check
      _
    $region211: #{latent_forward.3} parent=1 // pred_check_branch
      %631 = sbr.rel (0) target = $region213
    $region212: #{latent_forward.3} parent=1 // pred_region
      %633 = vsyncadd [#allocation56], 0
      %s634 = sshll.u32 %s105, 4
      %s635 = int_to_ptr.hbm [resolvable:$true] %s634
      %s636 = sshll.u32 [#allocation57], 4
      %s637 = int_to_ptr.vmem [resolvable:$true] %s636
      %642 = dma.hbm_to_vmem [thread:$0]  %s635, 4096, %s637, [#allocation56], 128, 128, 8
    $region213: #{latent_forward.3} parent=1 // pred_fallthru
      _
    // Predicated region
    $region214: #{latent_forward.3} parent=1 // pred_check
      _
    $region215: #{latent_forward.3} parent=1 // pred_check_branch
      %644 = sbr.rel (0) target = $region217
    $region216: #{latent_forward.3} parent=1 // pred_region
      %646 = vsyncadd [#allocation59], 0
      %s648 = sshll.u32 %s107, 4
      %s649 = int_to_ptr.hbm [resolvable:$true] %s648
      %s650 = sshll.u32 [#allocation58], 4
      %s651 = int_to_ptr.vmem [resolvable:$true] %s650
      %653 = dma.hbm_to_vmem [thread:$0]  %s649, 32, %s651, [#allocation59]
    $region217: #{latent_forward.3} parent=1 // pred_fallthru
      _
    // Predicated region
    $region218: #{latent_forward.3} parent=1 // pred_check
      _
    $region219: #{latent_forward.3} parent=1 // pred_check_branch
      %655 = sbr.rel (0) target = $region221
    $region220: #{latent_forward.3} parent=1 // pred_region
      %657 = vsyncadd [#allocation59], 0
      %s659 = sshll.u32 %s109, 4
      %s660 = int_to_ptr.hbm [resolvable:$true] %s659
      %s661 = sshll.u32 [#allocation60], 4
      %s662 = int_to_ptr.vmem [resolvable:$true] %s661
      %664 = dma.hbm_to_vmem [thread:$0]  %s660, 32, %s662, [#allocation59]
    $region221: #{latent_forward.3} parent=1 // pred_fallthru
      _
    // Predicated region
    $region222: #{latent_forward.3} parent=1 // pred_check
      _
    $region223: #{latent_forward.3} parent=1 // pred_check_branch
      %666 = sbr.rel (0) target = $region225
    $region224: #{latent_forward.3} parent=1 // pred_region
      %668 = vsyncadd [#allocation62], 0
      %s669 = sshll.u32 %s111, 4
      %s670 = int_to_ptr.hbm [resolvable:$true] %s669
      %s671 = sshll.u32 [#allocation61], 4
      %s672 = int_to_ptr.vmem [resolvable:$true] %s671
      %677 = dma.hbm_to_vmem [thread:$0]  %s670, 4096, %s672, [#allocation62], 128, 128, 8
    $region225: #{latent_forward.3} parent=1 // pred_fallthru
      _
    // Predicated region
    $region226: #{latent_forward.3} parent=1 // pred_check
      _
    $region227: #{latent_forward.3} parent=1 // pred_check_branch
      %679 = sbr.rel (0) target = $region229
    $region228: #{latent_forward.3} parent=1 // pred_region
      %681 = vsyncadd [#allocation62], 0
      %s683 = sshll.u32 %s113, 4
      %s684 = int_to_ptr.hbm [resolvable:$true] %s683
      %s685 = sshll.u32 [#allocation63], 4
      %s686 = int_to_ptr.vmem [resolvable:$true] %s685
      %688 = dma.hbm_to_vmem [thread:$0]  %s684, 32, %s686, [#allocation62]
    $region229: #{latent_forward.3} parent=1 // pred_fallthru
      _
    // Predicated region
    $region230: #{latent_forward.3} parent=1 // pred_check
      _
    $region231: #{latent_forward.3} parent=1 // pred_check_branch
      %690 = sbr.rel (0) target = $region233
    $region232: #{latent_forward.3} parent=1 // pred_region
      _
    $region233: #{latent_forward.3} parent=1 // pred_fallthru
      _
    // Predicated region
    $region234: #{latent_forward.3} parent=1 // pred_check
      _
    $region235: #{latent_forward.3} parent=1 // pred_check_branch
      %692 = sbr.rel (0) target = $region237
    $region236: #{latent_forward.3} parent=1 // pred_region
      %694 = vsyncadd [#allocation65], 0
      %s696 = sshll.u32 %s117, 4
      %s697 = int_to_ptr.hbm [resolvable:$true] %s696
      %s698 = sshll.u32 [#allocation64], 4
      %s699 = int_to_ptr.vmem [resolvable:$true] %s698
      %701 = dma.hbm_to_vmem [thread:$0]  %s697, 16, %s699, [#allocation65]
    $region237: #{latent_forward.3} parent=1 // pred_fallthru
      _
    // Predicated region
    $region238: #{latent_forward.3} parent=1 // pred_check
      _
    $region239: #{latent_forward.3} parent=1 // pred_check_branch
      %703 = sbr.rel (0) target = $region241
    $region240: #{latent_forward.3} parent=1 // pred_region
      _
    $region241: #{latent_forward.3} parent=1 // pred_fallthru
      _
    // Predicated region
    $region242: #{latent_forward.3} parent=1 // pred_check
      _
    $region243: #{latent_forward.3} parent=1 // pred_check_branch
      %705 = sbr.rel (0) target = $region245
    $region244: #{latent_forward.3} parent=1 // pred_region
      %707 = vsyncadd [#allocation65], 0
      %s709 = sshll.u32 %s121, 4
      %s710 = int_to_ptr.hbm [resolvable:$true] %s709
      %s711 = sshll.u32 [#allocation66], 4
      %s712 = int_to_ptr.vmem [resolvable:$true] %s711
      %714 = dma.hbm_to_vmem [thread:$0]  %s710, 16, %s712, [#allocation65]
    $region245: #{latent_forward.3} parent=1 // pred_fallthru
      _
    // Predicated region
    $region246: #{latent_forward.3} parent=1 // pred_check
      _
    $region247: #{latent_forward.3} parent=1 // pred_check_branch
      %716 = sbr.rel (0) target = $region249
    $region248: #{latent_forward.3} parent=1 // pred_region
      %718 = vsyncadd [#allocation68], 0
      %s719 = sshll.u32 %s123, 4
      %s720 = int_to_ptr.hbm [resolvable:$true] %s719
      %s721 = sshll.u32 [#allocation67], 4
      %s722 = int_to_ptr.vmem [resolvable:$true] %s721
      %727 = dma.hbm_to_vmem [thread:$0]  %s720, 512, %s722, [#allocation68], 128, 128, 8
    $region249: #{latent_forward.3} parent=1 // pred_fallthru
      _
    // Predicated region
    $region250: #{latent_forward.3} parent=1 // pred_check
      _
    $region251: #{latent_forward.3} parent=1 // pred_check_branch
      %729 = sbr.rel (0) target = $region253
    $region252: #{latent_forward.3} parent=1 // pred_region
      %731 = vsyncadd [#allocation68], 0
      %s732 = sshll.u32 %s125, 4
      %s733 = int_to_ptr.hbm [resolvable:$true] %s732
      %s734 = sshll.u32 [#allocation69], 4
      %s735 = int_to_ptr.vmem [resolvable:$true] %s734
      %740 = dma.hbm_to_vmem [thread:$0]  %s733, 4096, %s735, [#allocation68], 128, 128, 8
    $region253: #{latent_forward.3} parent=1 // pred_fallthru
      _
    // Predicated region
    $region254: #{latent_forward.3} parent=1 // pred_check
      _
    $region255: #{latent_forward.3} parent=1 // pred_check_branch
      %742 = sbr.rel (0) target = $region257
    $region256: #{latent_forward.3} parent=1 // pred_region
      %744 = vsyncadd [#allocation71], 0
      %s746 = sshll.u32 %s127, 4
      %s747 = int_to_ptr.hbm [resolvable:$true] %s746
      %s748 = sshll.u32 [#allocation70], 4
      %s749 = int_to_ptr.vmem [resolvable:$true] %s748
      %751 = dma.hbm_to_vmem [thread:$0]  %s747, 32, %s749, [#allocation71]
    $region257: #{latent_forward.3} parent=1 // pred_fallthru
      _
    // Predicated region
    $region258: #{latent_forward.3} parent=1 // pred_check
      _
    $region259: #{latent_forward.3} parent=1 // pred_check_branch
      %753 = sbr.rel (0) target = $region261
    $region260: #{latent_forward.3} parent=1 // pred_region
      %755 = vsyncadd [#allocation71], 0
      %s756 = sshll.u32 %s129, 4
      %s757 = int_to_ptr.hbm [resolvable:$true] %s756
      %s758 = sshll.u32 [#allocation72], 4
      %s759 = int_to_ptr.vmem [resolvable:$true] %s758
      %764 = dma.hbm_to_vmem [thread:$0]  %s757, 4096, %s759, [#allocation71], 128, 128, 8
    $region261: #{latent_forward.3} parent=1 // pred_fallthru
      _
    // Predicated region
    $region262: #{latent_forward.3} parent=1 // pred_check
      _
    $region263: #{latent_forward.3} parent=1 // pred_check_branch
      %766 = sbr.rel (0) target = $region265
    $region264: #{latent_forward.3} parent=1 // pred_region
      %768 = vsyncadd [#allocation74], 0
      %s770 = sshll.u32 %s131, 4
      %s771 = int_to_ptr.hbm [resolvable:$true] %s770
      %s772 = sshll.u32 [#allocation73], 4
      %s773 = int_to_ptr.vmem [resolvable:$true] %s772
      %775 = dma.hbm_to_vmem [thread:$0]  %s771, 32, %s773, [#allocation74]
    $region265: #{latent_forward.3} parent=1 // pred_fallthru
      _
    // Predicated region
    $region266: #{latent_forward.3} parent=1 // pred_check
      _
    $region267: #{latent_forward.3} parent=1 // pred_check_branch
      %777 = sbr.rel (0) target = $region269
    $region268: #{latent_forward.3} parent=1 // pred_region
      _
    $region269: #{latent_forward.3} parent=1 // pred_fallthru
      _
    // Predicated region
    $region270: #{latent_forward.3} parent=1 // pred_check
      _
    $region271: #{latent_forward.3} parent=1 // pred_check_branch
      %779 = sbr.rel (0) target = $region273
    $region272: #{latent_forward.3} parent=1 // pred_region
      %781 = vsyncadd [#allocation74], 0
      %s783 = sshll.u32 %s135, 4
      %s784 = int_to_ptr.hbm [resolvable:$true] %s783
      %s785 = sshll.u32 [#allocation75], 4
      %s786 = int_to_ptr.vmem [resolvable:$true] %s785
      %788 = dma.hbm_to_vmem [thread:$0]  %s784, 16, %s786, [#allocation74]
    $region273: #{latent_forward.3} parent=1 // pred_fallthru
      _
    // Predicated region
    $region274: #{latent_forward.3} parent=1 // pred_check
      _
    $region275: #{latent_forward.3} parent=1 // pred_check_branch
      %790 = sbr.rel (0) target = $region277
    $region276: #{latent_forward.3} parent=1 // pred_region
      %792 = dma.done [#allocation3], 64
    $region277: #{latent_forward.3} parent=1 // pred_fallthru
      _
    // Predicated region
    $region278: #{latent_forward.3} parent=1 // pred_check
      _
    $region279: #{latent_forward.3} parent=1 // pred_check_branch
      %794 = sbr.rel (0) target = $region281
    $region280: #{latent_forward.3} parent=1 // pred_region
      %796 = dma.done [#allocation5], 256
    $region281: #{latent_forward.3} parent=1 // pred_fallthru
      _
    // Predicated region
    $region282: #{latent_forward.3} parent=1 // pred_check
      _
    $region283: #{latent_forward.3} parent=1 // pred_check_branch
      %798 = sbr.rel (0) target = $region285
    $region284: #{latent_forward.3} parent=1 // pred_region
      %800 = dma.done [#allocation5], 32
    $region285: #{latent_forward.3} parent=1 // pred_fallthru
      _
    // Predicated region
    $region286: #{latent_forward.3} parent=1 // pred_check
      _
    $region287: #{latent_forward.3} parent=1 // pred_check_branch
      %802 = sbr.rel (0) target = $region289
    $region288: #{latent_forward.3} parent=1 // pred_region
      %804 = dma.done [#allocation8], 32
    $region289: #{latent_forward.3} parent=1 // pred_fallthru
      _
    // Predicated region
    $region290: #{latent_forward.3} parent=1 // pred_check
      _
    $region291: #{latent_forward.3} parent=1 // pred_check_branch
      %806 = sbr.rel (0) target = $region293
    $region292: #{latent_forward.3} parent=1 // pred_region
      %808 = dma.done [#allocation8], 256
    $region293: #{latent_forward.3} parent=1 // pred_fallthru
      _
    // Predicated region
    $region294: #{latent_forward.3} parent=1 // pred_check
      _
    $region295: #{latent_forward.3} parent=1 // pred_check_branch
      %810 = sbr.rel (0) target = $region297
    $region296: #{latent_forward.3} parent=1 // pred_region
      %812 = dma.done [#allocation11], 32
    $region297: #{latent_forward.3} parent=1 // pred_fallthru
      _
    // Predicated region
    $region298: #{latent_forward.3} parent=1 // pred_check
      _
    $region299: #{latent_forward.3} parent=1 // pred_check_branch
      %814 = sbr.rel (0) target = $region301
    $region300: #{latent_forward.3} parent=1 // pred_region
      %816 = dma.done [#allocation11], 32
    $region301: #{latent_forward.3} parent=1 // pred_fallthru
      _
    // Predicated region
    $region302: #{latent_forward.3} parent=1 // pred_check
      _
    $region303: #{latent_forward.3} parent=1 // pred_check_branch
      %818 = sbr.rel (0) target = $region305
    $region304: #{latent_forward.3} parent=1 // pred_region
      %820 = dma.done [#allocation14], 32
    $region305: #{latent_forward.3} parent=1 // pred_fallthru
      _
    // Predicated region
    $region306: #{latent_forward.3} parent=1 // pred_check
      _
    $region307: #{latent_forward.3} parent=1 // pred_check_branch
      %822 = sbr.rel (0) target = $region309
    $region308: #{latent_forward.3} parent=1 // pred_region
      %824 = dma.done [#allocation14], 32
    $region309: #{latent_forward.3} parent=1 // pred_fallthru
      _
    // Predicated region
    $region310: #{latent_forward.3} parent=1 // pred_check
      _
    $region311: #{latent_forward.3} parent=1 // pred_check_branch
      %826 = sbr.rel (0) target = $region313
    $region312: #{latent_forward.3} parent=1 // pred_region
      %828 = dma.done [#allocation17], 16
    $region313: #{latent_forward.3} parent=1 // pred_fallthru
      _
    // Predicated region
    $region314: #{latent_forward.3} parent=1 // pred_check
      _
    $region315: #{latent_forward.3} parent=1 // pred_check_branch
      %830 = sbr.rel (0) target = $region317
    $region316: #{latent_forward.3} parent=1 // pred_region
      %832 = dma.done [#allocation17], 16
    $region317: #{latent_forward.3} parent=1 // pred_fallthru
      _
    // Predicated region
    $region318: #{latent_forward.3} parent=1 // pred_check
      _
    $region319: #{latent_forward.3} parent=1 // pred_check_branch
      %834 = sbr.rel (0) target = $region321
    $region320: #{latent_forward.3} parent=1 // pred_region
      %836 = dma.done [#allocation20], 512
    $region321: #{latent_forward.3} parent=1 // pred_fallthru
      _
    // Predicated region
    $region322: #{latent_forward.3} parent=1 // pred_check
      _
    $region323: #{latent_forward.3} parent=1 // pred_check_branch
      %838 = sbr.rel (0) target = $region325
    $region324: #{latent_forward.3} parent=1 // pred_region
      %840 = dma.done [#allocation20], 32
    $region325: #{latent_forward.3} parent=1 // pred_fallthru
      _
    // Predicated region
    $region326: #{latent_forward.3} parent=1 // pred_check
      _
    $region327: #{latent_forward.3} parent=1 // pred_check_branch
      %842 = sbr.rel (0) target = $region329
    $region328: #{latent_forward.3} parent=1 // pred_region
      %844 = dma.done [#allocation23], 32
    $region329: #{latent_forward.3} parent=1 // pred_fallthru
      _
    // Predicated region
    $region330: #{latent_forward.3} parent=1 // pred_check
      _
    $region331: #{latent_forward.3} parent=1 // pred_check_branch
      %846 = sbr.rel (0) target = $region333
    $region332: #{latent_forward.3} parent=1 // pred_region
      %848 = dma.done [#allocation23], 4096
    $region333: #{latent_forward.3} parent=1 // pred_fallthru
      _
    // Predicated region
    $region334: #{latent_forward.3} parent=1 // pred_check
      _
    $region335: #{latent_forward.3} parent=1 // pred_check_branch
      %850 = sbr.rel (0) target = $region337
    $region336: #{latent_forward.3} parent=1 // pred_region
      %852 = dma.done [#allocation26], 32
    $region337: #{latent_forward.3} parent=1 // pred_fallthru
      _
    // Predicated region
    $region338: #{latent_forward.3} parent=1 // pred_check
      _
    $region339: #{latent_forward.3} parent=1 // pred_check_branch
      %854 = sbr.rel (0) target = $region341
    $region340: #{latent_forward.3} parent=1 // pred_region
      %856 = dma.done [#allocation26], 4096
    $region341: #{latent_forward.3} parent=1 // pred_fallthru
      _
    // Predicated region
    $region342: #{latent_forward.3} parent=1 // pred_check
      _
    $region343: #{latent_forward.3} parent=1 // pred_check_branch
      %858 = sbr.rel (0) target = $region345
    $region344: #{latent_forward.3} parent=1 // pred_region
      %860 = dma.done [#allocation29], 32
    $region345: #{latent_forward.3} parent=1 // pred_fallthru
      _
    // Predicated region
    $region346: #{latent_forward.3} parent=1 // pred_check
      _
    $region347: #{latent_forward.3} parent=1 // pred_check_branch
      %862 = sbr.rel (0) target = $region349
    $region348: #{latent_forward.3} parent=1 // pred_region
      %864 = dma.done [#allocation29], 4096
    $region349: #{latent_forward.3} parent=1 // pred_fallthru
      _
    // Predicated region
    $region350: #{latent_forward.3} parent=1 // pred_check
      _
    $region351: #{latent_forward.3} parent=1 // pred_check_branch
      %866 = sbr.rel (0) target = $region353
    $region352: #{latent_forward.3} parent=1 // pred_region
      %868 = dma.done [#allocation32], 4096
    $region353: #{latent_forward.3} parent=1 // pred_fallthru
      _
    // Predicated region
    $region354: #{latent_forward.3} parent=1 // pred_check
      _
    $region355: #{latent_forward.3} parent=1 // pred_check_branch
      %870 = sbr.rel (0) target = $region357
    $region356: #{latent_forward.3} parent=1 // pred_region
      %872 = dma.done [#allocation32], 32
    $region357: #{latent_forward.3} parent=1 // pred_fallthru
      _
    // Predicated region
    $region358: #{latent_forward.3} parent=1 // pred_check
      _
    $region359: #{latent_forward.3} parent=1 // pred_check_branch
      %874 = sbr.rel (0) target = $region361
    $region360: #{latent_forward.3} parent=1 // pred_region
      %876 = dma.done [#allocation35], 32
    $region361: #{latent_forward.3} parent=1 // pred_fallthru
      _
    // Predicated region
    $region362: #{latent_forward.3} parent=1 // pred_check
      _
    $region363: #{latent_forward.3} parent=1 // pred_check_branch
      %878 = sbr.rel (0) target = $region365
    $region364: #{latent_forward.3} parent=1 // pred_region
      %880 = dma.done [#allocation35], 4096
    $region365: #{latent_forward.3} parent=1 // pred_fallthru
      _
    // Predicated region
    $region366: #{latent_forward.3} parent=1 // pred_check
      _
    $region367: #{latent_forward.3} parent=1 // pred_check_branch
      %882 = sbr.rel (0) target = $region369
    $region368: #{latent_forward.3} parent=1 // pred_region
      %884 = dma.done [#allocation38], 32
    $region369: #{latent_forward.3} parent=1 // pred_fallthru
      _
    // Predicated region
    $region370: #{latent_forward.3} parent=1 // pred_check
      _
    $region371: #{latent_forward.3} parent=1 // pred_check_branch
      %886 = sbr.rel (0) target = $region373
    $region372: #{latent_forward.3} parent=1 // pred_region
      %888 = dma.done [#allocation38], 16
    $region373: #{latent_forward.3} parent=1 // pred_fallthru
      _
    // Predicated region
    $region374: #{latent_forward.3} parent=1 // pred_check
      _
    $region375: #{latent_forward.3} parent=1 // pred_check_branch
      %890 = sbr.rel (0) target = $region377
    $region376: #{latent_forward.3} parent=1 // pred_region
      %892 = dma.done [#allocation41], 16
    $region377: #{latent_forward.3} parent=1 // pred_fallthru
      _
    // Predicated region
    $region378: #{latent_forward.3} parent=1 // pred_check
      _
    $region379: #{latent_forward.3} parent=1 // pred_check_branch
      %894 = sbr.rel (0) target = $region381
    $region380: #{latent_forward.3} parent=1 // pred_region
      %896 = dma.done [#allocation41], 512
    $region381: #{latent_forward.3} parent=1 // pred_fallthru
      _
    // Predicated region
    $region382: #{latent_forward.3} parent=1 // pred_check
      _
    $region383: #{latent_forward.3} parent=1 // pred_check_branch
      %898 = sbr.rel (0) target = $region385
    $region384: #{latent_forward.3} parent=1 // pred_region
      %900 = dma.done [#allocation44], 4096
    $region385: #{latent_forward.3} parent=1 // pred_fallthru
      _
    // Predicated region
    $region386: #{latent_forward.3} parent=1 // pred_check
      _
    $region387: #{latent_forward.3} parent=1 // pred_check_branch
      %902 = sbr.rel (0) target = $region389
    $region388: #{latent_forward.3} parent=1 // pred_region
      %904 = dma.done [#allocation44], 32
    $region389: #{latent_forward.3} parent=1 // pred_fallthru
      _
    // Predicated region
    $region390: #{latent_forward.3} parent=1 // pred_check
      _
    $region391: #{latent_forward.3} parent=1 // pred_check_branch
      %906 = sbr.rel (0) target = $region393
    $region392: #{latent_forward.3} parent=1 // pred_region
      %908 = dma.done [#allocation47], 32
    $region393: #{latent_forward.3} parent=1 // pred_fallthru
      _
    // Predicated region
    $region394: #{latent_forward.3} parent=1 // pred_check
      _
    $region395: #{latent_forward.3} parent=1 // pred_check_branch
      %910 = sbr.rel (0) target = $region397
    $region396: #{latent_forward.3} parent=1 // pred_region
      %912 = dma.done [#allocation47], 4096
    $region397: #{latent_forward.3} parent=1 // pred_fallthru
      _
    // Predicated region
    $region398: #{latent_forward.3} parent=1 // pred_check
      _
    $region399: #{latent_forward.3} parent=1 // pred_check_branch
      %914 = sbr.rel (0) target = $region401
    $region400: #{latent_forward.3} parent=1 // pred_region
      %916 = dma.done [#allocation50], 32
    $region401: #{latent_forward.3} parent=1 // pred_fallthru
      _
    // Predicated region
    $region402: #{latent_forward.3} parent=1 // pred_check
      _
    $region403: #{latent_forward.3} parent=1 // pred_check_branch
      %918 = sbr.rel (0) target = $region405
    $region404: #{latent_forward.3} parent=1 // pred_region
      %920 = dma.done [#allocation50], 4096
    $region405: #{latent_forward.3} parent=1 // pred_fallthru
      _
    // Predicated region
    $region406: #{latent_forward.3} parent=1 // pred_check
      _
    $region407: #{latent_forward.3} parent=1 // pred_check_branch
      %922 = sbr.rel (0) target = $region409
    $region408: #{latent_forward.3} parent=1 // pred_region
      %924 = dma.done [#allocation53], 32
    $region409: #{latent_forward.3} parent=1 // pred_fallthru
      _
    // Predicated region
    $region410: #{latent_forward.3} parent=1 // pred_check
      _
    $region411: #{latent_forward.3} parent=1 // pred_check_branch
      %926 = sbr.rel (0) target = $region413
    $region412: #{latent_forward.3} parent=1 // pred_region
      %928 = dma.done [#allocation53], 4096
    $region413: #{latent_forward.3} parent=1 // pred_fallthru
      _
    // Predicated region
    $region414: #{latent_forward.3} parent=1 // pred_check
      _
    $region415: #{latent_forward.3} parent=1 // pred_check_branch
      %930 = sbr.rel (0) target = $region417
    $region416: #{latent_forward.3} parent=1 // pred_region
      %932 = dma.done [#allocation56], 32
    $region417: #{latent_forward.3} parent=1 // pred_fallthru
      _
    // Predicated region
    $region418: #{latent_forward.3} parent=1 // pred_check
      _
    $region419: #{latent_forward.3} parent=1 // pred_check_branch
      %934 = sbr.rel (0) target = $region421
    $region420: #{latent_forward.3} parent=1 // pred_region
      %936 = dma.done [#allocation56], 4096
    $region421: #{latent_forward.3} parent=1 // pred_fallthru
      _
    // Predicated region
    $region422: #{latent_forward.3} parent=1 // pred_check
      _
    $region423: #{latent_forward.3} parent=1 // pred_check_branch
      %938 = sbr.rel (0) target = $region425
    $region424: #{latent_forward.3} parent=1 // pred_region
      %940 = dma.done [#allocation59], 32
    $region425: #{latent_forward.3} parent=1 // pred_fallthru
      _
    // Predicated region
    $region426: #{latent_forward.3} parent=1 // pred_check
      _
    $region427: #{latent_forward.3} parent=1 // pred_check_branch
      %942 = sbr.rel (0) target = $region429
    $region428: #{latent_forward.3} parent=1 // pred_region
      %944 = dma.done [#allocation59], 32
    $region429: #{latent_forward.3} parent=1 // pred_fallthru
      _
    // Predicated region
    $region430: #{latent_forward.3} parent=1 // pred_check
      _
    $region431: #{latent_forward.3} parent=1 // pred_check_branch
      %946 = sbr.rel (0) target = $region433
    $region432: #{latent_forward.3} parent=1 // pred_region
      %948 = dma.done [#allocation62], 4096
    $region433: #{latent_forward.3} parent=1 // pred_fallthru
      _
    // Predicated region
    $region434: #{latent_forward.3} parent=1 // pred_check
      _
    $region435: #{latent_forward.3} parent=1 // pred_check_branch
      %950 = sbr.rel (0) target = $region437
    $region436: #{latent_forward.3} parent=1 // pred_region
      %952 = dma.done [#allocation62], 32
    $region437: #{latent_forward.3} parent=1 // pred_fallthru
      _
    // Predicated region
    $region438: #{latent_forward.3} parent=1 // pred_check
      _
    $region439: #{latent_forward.3} parent=1 // pred_check_branch
      %954 = sbr.rel (0) target = $region441
    $region440: #{latent_forward.3} parent=1 // pred_region
      %956 = dma.done [#allocation65], 16
    $region441: #{latent_forward.3} parent=1 // pred_fallthru
      _
    // Predicated region
    $region442: #{latent_forward.3} parent=1 // pred_check
      _
    $region443: #{latent_forward.3} parent=1 // pred_check_branch
      %958 = sbr.rel (0) target = $region445
    $region444: #{latent_forward.3} parent=1 // pred_region
      %960 = dma.done [#allocation65], 16
    $region445: #{latent_forward.3} parent=1 // pred_fallthru
      _
    // Predicated region
    $region446: #{latent_forward.3} parent=1 // pred_check
      _
    $region447: #{latent_forward.3} parent=1 // pred_check_branch
      %962 = sbr.rel (0) target = $region449
    $region448: #{latent_forward.3} parent=1 // pred_region
      %964 = dma.done [#allocation68], 512
    $region449: #{latent_forward.3} parent=1 // pred_fallthru
      _
    // Predicated region
    $region450: #{latent_forward.3} parent=1 // pred_check
      _
    $region451: #{latent_forward.3} parent=1 // pred_check_branch
      %966 = sbr.rel (0) target = $region453
    $region452: #{latent_forward.3} parent=1 // pred_region
      %968 = dma.done [#allocation68], 4096
    $region453: #{latent_forward.3} parent=1 // pred_fallthru
      _
    // Predicated region
    $region454: #{latent_forward.3} parent=1 // pred_check
      _
    $region455: #{latent_forward.3} parent=1 // pred_check_branch
      %970 = sbr.rel (0) target = $region457
    $region456: #{latent_forward.3} parent=1 // pred_region
      %972 = dma.done [#allocation71], 32
    $region457: #{latent_forward.3} parent=1 // pred_fallthru
      _
    // Predicated region
    $region458: #{latent_forward.3} parent=1 // pred_check
      _
    $region459: #{latent_forward.3} parent=1 // pred_check_branch
      %974 = sbr.rel (0) target = $region461
    $region460: #{latent_forward.3} parent=1 // pred_region
      %976 = dma.done [#allocation71], 4096
    $region461: #{latent_forward.3} parent=1 // pred_fallthru
      _
    // Predicated region
    $region462: #{latent_forward.3} parent=1 // pred_check
      _
    $region463: #{latent_forward.3} parent=1 // pred_check_branch
      %978 = sbr.rel (0) target = $region465
    $region464: #{latent_forward.3} parent=1 // pred_region
      %980 = dma.done [#allocation74], 32
    $region465: #{latent_forward.3} parent=1 // pred_fallthru
      _
    // Predicated region
    $region466: #{latent_forward.3} parent=1 // pred_check
      _
    $region467: #{latent_forward.3} parent=1 // pred_check_branch
      %982 = sbr.rel (0) target = $region469
    $region468: #{latent_forward.3} parent=1 // pred_region
      %984 = dma.done [#allocation74], 16
    $region469: #{latent_forward.3} parent=1 // pred_fallthru
      _
    %v986 = vld [vmem:[%s5] sm:$0xff]
    %v987 = vld [vmem:[%s5 + $0x8] sm:$0x3]
    %v988 = vld [vmem:[%s1] sm:$0xff]
    %v989 = vld [vmem:[%s1 + $0x8] sm:$0x3]
    %v990 = vld [vmem:[%s3] sm:$0xff]
    %v991 = vld [vmem:[%s3 + $0x8] sm:$0x3]
    %v992 = vpack.c.bf16 %v989, %v988
    %v993 = vld [vmem:[#allocation2] sm:$0xf]
    %v994 = vpack.c.bf16 %v991, %v990
    %v995 = vld [vmem:[#allocation4] sm:$0xff]
    %v996 = vld [vmem:[#allocation4 + $0x8] sm:$0x33]
    %v999 = vunpack.c.l.b16 %v995
    %v1000 = vunpack.c.h.b16 %v995
    %v1001 = vunpack.c.l.b16 %v996
    %v1002 = vunpack.c.h.b16 %v996
    %v1003 = vpack.c.b16 %v1001, %v999
    %v1004 = vpack.c.b16 %v1002, %v1000
    %vm1005 = vcmask 97280
    %v1007 = vsel %vm1005, %v994, 0
    %vm1009 = vcmask 1045504
    %v1011 = vsel %vm1009, %v1003, 0
    %v1014 = vsel %vm1009, %v1004, 0
    %1016 = vmatpush.bf16.msra.mxu0 0
    %1017 = vmatpush.bf16.msra.mxu0 0
    %1018 = vmatpush.bf16.msra.mxu0 0
    %1019 = vmatpush.bf16.msra.mxu0 0
    %1020 = vmatpush.bf16.msra.mxu0 0
    %1021 = vmatpush.bf16.msra.mxu0 0
    %1022 = vmatpush.bf16.msra.mxu0 0
    %1023 = vmatpush.bf16.msra.mxu0 %v1011
    %1024 = vmatmul.bf16.gmra.mxu0 %v1007
    %v1025 = vpop.f32.mrf.mxu0
    %v1026 = vadd.f32 0.0, %v1025
    %v1027 = vpop.f32.mrf.mxu0
    %v1028 = vadd.f32 0.0, %v1027
    %1029 = vdwg.mxu0
    %1030 = vmatpush.bf16.msra.mxu0 0
    %1031 = vmatpush.bf16.msra.mxu0 0
    %1032 = vmatpush.bf16.msra.mxu0 0
    %1033 = vmatpush.bf16.msra.mxu0 0
    %1034 = vmatpush.bf16.msra.mxu0 0
    %1035 = vmatpush.bf16.msra.mxu0 0
    %1036 = vmatpush.bf16.msra.mxu0 0
    %1037 = vmatpush.bf16.msra.mxu0 %v1014
    %1038 = vmatmul.bf16.gmra.mxu0 %v1007
    %v1039 = vpop.f32.mrf.mxu0
    %v1040 = vadd.f32 0.0, %v1039
    %v1041 = vpop.f32.mrf.mxu0
    %v1042 = vadd.f32 0.0, %v1041
    %1043 = vdwg.mxu0
    %1045 = vst [vmem:[#allocation1] ss:$4 sm:$0xff] %v993
    %v1046 = vld.sshfl [vmem:[#allocation1] sm:$0xff pattern:$0x73625140]
    %v1047 = vld.sshfl [vmem:[#allocation1 + $0x8] sm:$0xff pattern:$0x73625140]
    %vm1048 = vcmask 31744
    %v1050 = vsel %vm1048, %v992, 0
    %vm1052 = vcmask 1041408
    %v1053 = vsel %vm1052, %v1046, 0
    %v1055 = vsel %vm1052, %v1047, 0
    %1057 = vmatpush.bf16.msra.mxu0 0
    %1058 = vmatpush.bf16.msra.mxu0 0
    %1059 = vmatpush.bf16.msra.mxu0 0
    %1060 = vmatpush.bf16.msra.mxu0 0
    %1061 = vmatpush.bf16.msra.mxu0 0
    %1062 = vmatpush.bf16.msra.mxu0 0
    %1063 = vmatpush.bf16.msra.mxu0 0
    %1064 = vmatpush.bf16.msra.mxu0 %v1053
    %1065 = vmatmul.bf16.gmra.mxu0 %v1050
    %v1066 = vpop.f32.mrf.mxu0
    %v1067 = vadd.f32 %v1026, %v1066
    %v1068 = vpop.f32.mrf.mxu0
    %v1069 = vadd.f32 %v1028, %v1068
    %1070 = vdwg.mxu0
    %1071 = vmatpush.bf16.msra.mxu0 0
    %1072 = vmatpush.bf16.msra.mxu0 0
    %1073 = vmatpush.bf16.msra.mxu0 0
    %1074 = vmatpush.bf16.msra.mxu0 0
    %1075 = vmatpush.bf16.msra.mxu0 0
    %1076 = vmatpush.bf16.msra.mxu0 0
    %1077 = vmatpush.bf16.msra.mxu0 0
    %1078 = vmatpush.bf16.msra.mxu0 %v1055
    %1079 = vmatmul.bf16.gmra.mxu0 %v1050
    %v1080 = vpop.f32.mrf.mxu0
    %v1081 = vadd.f32 %v1040, %v1080
    %v1082 = vpop.f32.mrf.mxu0
    %v1083 = vadd.f32 %v1042, %v1082
    %1084 = vdwg.mxu0
    %v1085 = vld [vmem:[#allocation6] sm:$0x3]
    %v1087 = vperm.slane %v1085, 0
    %v1088 = vperm.slane %v1085, 1
    %v1091 = vadd.f32 %v1067, %v1087
    %v1092 = vadd.f32 %v1081, %v1088
    %v1093 = vadd.f32 %v1069, %v1087
    %v1094 = vadd.f32 %v1083, %v1088
    %v1095 = vmax.f32 %v1091, 0.0
    %v1096 = vmax.f32 %v1092, 0.0
    %v1097 = vmax.f32 %v1093, 0.0
    %v1098 = vmax.f32 %v1094, 0.0
    %v1099 = vpack.c.bf16 %v1097, %v1095
    %v1100 = vpack.c.bf16 %v1098, %v1096
    %v1101 = vld [vmem:[%s21] sm:$0xff]
    %v1102 = vld [vmem:[%s21 + $0x8] sm:$0xff]
    %v1103 = vld [vmem:[%s21 + $0x10] sm:$0xff]
    %v1104 = vld [vmem:[%s21 + $0x18] sm:$0xff]
    %v1105 = vld [vmem:[%s21 + $0x20] sm:$0xff]
    %v1106 = vld [vmem:[%s21 + $0x28] sm:$0xff]
    %v1107 = vld [vmem:[%s21 + $0x30] sm:$0xff]
    %v1108 = vld [vmem:[%s21 + $0x38] sm:$0xff]
    %v1109 = vld [vmem:[%s21 + $0x40] sm:$0xff]
    %v1110 = vld [vmem:[%s21 + $0x48] sm:$0xff]
    %v1111 = vld [vmem:[%s21 + $0x50] sm:$0xff]
    %v1112 = vld [vmem:[%s21 + $0x58] sm:$0xff]
    %v1113 = vld [vmem:[%s21 + $0x60] sm:$0xff]
    %v1114 = vld [vmem:[%s21 + $0x68] sm:$0xff]
    %v1115 = vld [vmem:[%s21 + $0x70] sm:$0xff]
    %v1116 = vld [vmem:[%s21 + $0x78] sm:$0xff]
    %v1117 = vld [vmem:[%s21 + $0x80] sm:$0xff]
    %v1118 = vld [vmem:[%s21 + $0x88] sm:$0xff]
    %v1119 = vld [vmem:[%s21 + $0x90] sm:$0xff]
    %v1120 = vld [vmem:[%s21 + $0x98] sm:$0xff]
    %v1121 = vld [vmem:[%s21 + $0xa0] sm:$0xff]
    %v1122 = vld [vmem:[%s21 + $0xa8] sm:$0xff]
    %v1123 = vld [vmem:[%s21 + $0xb0] sm:$0xff]
    %v1124 = vld [vmem:[%s21 + $0xb8] sm:$0xff]
    %v1125 = vld [vmem:[%s21 + $0xc0] sm:$0xff]
    %v1126 = vld [vmem:[%s21 + $0xc8] sm:$0xff]
    %v1127 = vld [vmem:[%s21 + $0xd0] sm:$0xff]
    %v1128 = vld [vmem:[%s21 + $0xd8] sm:$0xff]
    %v1129 = vld [vmem:[%s21 + $0xe0] sm:$0xff]
    %v1130 = vld [vmem:[%s21 + $0xe8] sm:$0xff]
    %v1131 = vld [vmem:[%s21 + $0xf0] sm:$0xff]
    %v1132 = vld [vmem:[%s21 + $0xf8] sm:$0xff]
    %v1133 = vld [vmem:[#allocation7] sm:$0x3]
    %v1135 = vperm.slane %v1133, 0
    %v1136 = vperm.slane %v1133, 1
    %v1171 = vunpack.c.l.b16 %v1101
    %v1172 = vunpack.c.h.b16 %v1101
    %v1173 = vunpack.c.l.b16 %v1102
    %v1174 = vunpack.c.h.b16 %v1102
    %v1175 = vunpack.c.l.b16 %v1103
    %v1176 = vunpack.c.h.b16 %v1103
    %v1177 = vunpack.c.l.b16 %v1104
    %v1178 = vunpack.c.h.b16 %v1104
    %v1179 = vunpack.c.l.b16 %v1105
    %v1180 = vunpack.c.h.b16 %v1105
    %v1181 = vunpack.c.l.b16 %v1106
    %v1182 = vunpack.c.h.b16 %v1106
    %v1183 = vunpack.c.l.b16 %v1107
    %v1184 = vunpack.c.h.b16 %v1107
    %v1185 = vunpack.c.l.b16 %v1108
    %v1186 = vunpack.c.h.b16 %v1108
    %v1187 = vunpack.c.l.b16 %v1109
    %v1188 = vunpack.c.h.b16 %v1109
    %v1189 = vunpack.c.l.b16 %v1110
    %v1190 = vunpack.c.h.b16 %v1110
    %v1191 = vunpack.c.l.b16 %v1111
    %v1192 = vunpack.c.h.b16 %v1111
    %v1193 = vunpack.c.l.b16 %v1112
    %v1194 = vunpack.c.h.b16 %v1112
    %v1195 = vunpack.c.l.b16 %v1113
    %v1196 = vunpack.c.h.b16 %v1113
    %v1197 = vunpack.c.l.b16 %v1114
    %v1198 = vunpack.c.h.b16 %v1114
    %v1199 = vunpack.c.l.b16 %v1115
    %v1200 = vunpack.c.h.b16 %v1115
    %v1201 = vunpack.c.l.b16 %v1116
    %v1202 = vunpack.c.h.b16 %v1116
    %v1203 = vunpack.c.l.b16 %v1117
    %v1204 = vunpack.c.h.b16 %v1117
    %v1205 = vunpack.c.l.b16 %v1118
    %v1206 = vunpack.c.h.b16 %v1118
    %v1207 = vunpack.c.l.b16 %v1119
    %v1208 = vunpack.c.h.b16 %v1119
    %v1209 = vunpack.c.l.b16 %v1120
    %v1210 = vunpack.c.h.b16 %v1120
    %v1211 = vunpack.c.l.b16 %v1121
    %v1212 = vunpack.c.h.b16 %v1121
    %v1213 = vunpack.c.l.b16 %v1122
    %v1214 = vunpack.c.h.b16 %v1122
    %v1215 = vunpack.c.l.b16 %v1123
    %v1216 = vunpack.c.h.b16 %v1123
    %v1217 = vunpack.c.l.b16 %v1124
    %v1218 = vunpack.c.h.b16 %v1124
    %v1219 = vunpack.c.l.b16 %v1125
    %v1220 = vunpack.c.h.b16 %v1125
    %v1221 = vunpack.c.l.b16 %v1126
    %v1222 = vunpack.c.h.b16 %v1126
    %v1223 = vunpack.c.l.b16 %v1127
    %v1224 = vunpack.c.h.b16 %v1127
    %v1225 = vunpack.c.l.b16 %v1128
    %v1226 = vunpack.c.h.b16 %v1128
    %v1227 = vunpack.c.l.b16 %v1129
    %v1228 = vunpack.c.h.b16 %v1129
    %v1229 = vunpack.c.l.b16 %v1130
    %v1230 = vunpack.c.h.b16 %v1130
    %v1231 = vunpack.c.l.b16 %v1131
    %v1232 = vunpack.c.h.b16 %v1131
    %v1233 = vunpack.c.l.b16 %v1132
    %v1234 = vunpack.c.h.b16 %v1132
    %v1235 = vpack.c.b16 %v1173, %v1171
    %v1236 = vpack.c.b16 %v1174, %v1172
    %v1237 = vpack.c.b16 %v1177, %v1175
    %v1238 = vpack.c.b16 %v1178, %v1176
    %v1239 = vpack.c.b16 %v1181, %v1179
    %v1240 = vpack.c.b16 %v1182, %v1180
    %v1241 = vpack.c.b16 %v1185, %v1183
    %v1242 = vpack.c.b16 %v1186, %v1184
    %v1243 = vpack.c.b16 %v1189, %v1187
    %v1244 = vpack.c.b16 %v1190, %v1188
    %v1245 = vpack.c.b16 %v1193, %v1191
    %v1246 = vpack.c.b16 %v1194, %v1192
    %v1247 = vpack.c.b16 %v1197, %v1195
    %v1248 = vpack.c.b16 %v1198, %v1196
    %v1249 = vpack.c.b16 %v1201, %v1199
    %v1250 = vpack.c.b16 %v1202, %v1200
    %v1251 = vpack.c.b16 %v1205, %v1203
    %v1252 = vpack.c.b16 %v1206, %v1204
    %v1253 = vpack.c.b16 %v1209, %v1207
    %v1254 = vpack.c.b16 %v1210, %v1208
    %v1255 = vpack.c.b16 %v1213, %v1211
    %v1256 = vpack.c.b16 %v1214, %v1212
    %v1257 = vpack.c.b16 %v1217, %v1215
    %v1258 = vpack.c.b16 %v1218, %v1216
    %v1259 = vpack.c.b16 %v1221, %v1219
    %v1260 = vpack.c.b16 %v1222, %v1220
    %v1261 = vpack.c.b16 %v1225, %v1223
    %v1262 = vpack.c.b16 %v1226, %v1224
    %v1263 = vpack.c.b16 %v1229, %v1227
    %v1264 = vpack.c.b16 %v1230, %v1228
    %v1265 = vpack.c.b16 %v1233, %v1231
    %v1266 = vpack.c.b16 %v1234, %v1232
    %1299 = vmatpush.bf16.msra.mxu0 %v1249
    %1300 = vmatpush.bf16.msra.mxu0 %v1247
    %1301 = vmatpush.bf16.msra.mxu0 %v1245
    %1302 = vmatpush.bf16.msra.mxu0 %v1243
    %1303 = vmatpush.bf16.msra.mxu0 %v1241
    %1304 = vmatpush.bf16.msra.mxu0 %v1239
    %1305 = vmatpush.bf16.msra.mxu0 %v1237
    %1306 = vmatpush.bf16.msra.mxu0 %v1235
    %1307 = vmatmul.bf16.gmra.mxu0 %v1099
    %v1308 = vpop.f32.mrf.mxu0
    %v1309 = vadd.f32 %v1135, %v1308
    %v1310 = vpop.f32.mrf.mxu0
    %v1311 = vadd.f32 %v1135, %v1310
    %1312 = vdwg.mxu0
    %1313 = vmatpush.bf16.msra.mxu0 %v1265
    %1314 = vmatpush.bf16.msra.mxu0 %v1263
    %1315 = vmatpush.bf16.msra.mxu0 %v1261
    %1316 = vmatpush.bf16.msra.mxu0 %v1259
    %1317 = vmatpush.bf16.msra.mxu0 %v1257
    %1318 = vmatpush.bf16.msra.mxu0 %v1255
    %1319 = vmatpush.bf16.msra.mxu0 %v1253
    %1320 = vmatpush.bf16.msra.mxu0 %v1251
    %1321 = vmatmul.bf16.gmra.mxu0 %v1100
    %v1322 = vpop.f32.mrf.mxu0
    %v1323 = vadd.f32 %v1309, %v1322
    %v1324 = vpop.f32.mrf.mxu0
    %v1325 = vadd.f32 %v1311, %v1324
    %1326 = vdwg.mxu0
    %1327 = vmatpush.bf16.msra.mxu0 %v1250
    %1328 = vmatpush.bf16.msra.mxu0 %v1248
    %1329 = vmatpush.bf16.msra.mxu0 %v1246
    %1330 = vmatpush.bf16.msra.mxu0 %v1244
    %1331 = vmatpush.bf16.msra.mxu0 %v1242
    %1332 = vmatpush.bf16.msra.mxu0 %v1240
    %1333 = vmatpush.bf16.msra.mxu0 %v1238
    %1334 = vmatpush.bf16.msra.mxu0 %v1236
    %1335 = vmatmul.bf16.gmra.mxu0 %v1099
    %v1336 = vpop.f32.mrf.mxu0
    %v1337 = vadd.f32 %v1136, %v1336
    %v1338 = vpop.f32.mrf.mxu0
    %v1339 = vadd.f32 %v1136, %v1338
    %1340 = vdwg.mxu0
    %1341 = vmatpush.bf16.msra.mxu0 %v1266
    %1342 = vmatpush.bf16.msra.mxu0 %v1264
    %1343 = vmatpush.bf16.msra.mxu0 %v1262
    %1344 = vmatpush.bf16.msra.mxu0 %v1260
    %1345 = vmatpush.bf16.msra.mxu0 %v1258
    %1346 = vmatpush.bf16.msra.mxu0 %v1256
    %1347 = vmatpush.bf16.msra.mxu0 %v1254
    %1348 = vmatpush.bf16.msra.mxu0 %v1252
    %1349 = vmatmul.bf16.gmra.mxu0 %v1100
    %v1350 = vpop.f32.mrf.mxu0
    %v1351 = vadd.f32 %v1337, %v1350
    %v1352 = vpop.f32.mrf.mxu0
    %v1353 = vadd.f32 %v1339, %v1352
    %1354 = vdwg.mxu0
    %v1355 = vmax.f32 %v1323, 0.0
    %v1356 = vmax.f32 %v1351, 0.0
    %v1357 = vmax.f32 %v1325, 0.0
    %v1358 = vmax.f32 %v1353, 0.0
    %v1359 = vld [vmem:[#allocation9] sm:$0xff]
    %v1360 = vld [vmem:[#allocation9 + $0x8] sm:$0x33]
    %v1361 = vld [vmem:[#allocation10] sm:$0x3]
    %v1363 = vperm.slane %v1361, 0
    %v1364 = vperm.slane %v1361, 1
    %v1369 = vunpack.c.l.b16 %v1359
    %v1370 = vunpack.c.h.b16 %v1359
    %v1371 = vunpack.c.l.b16 %v1360
    %v1372 = vunpack.c.h.b16 %v1360
    %v1373 = vpack.c.b16 %v1371, %v1369
    %v1374 = vpack.c.b16 %v1372, %v1370
    %v1376 = vsel %vm1009, %v1373, 0
    %v1379 = vsel %vm1009, %v1374, 0
    %1381 = vmatpush.bf16.msra.mxu0 0
    %1382 = vmatpush.bf16.msra.mxu0 0
    %1383 = vmatpush.bf16.msra.mxu0 0
    %1384 = vmatpush.bf16.msra.mxu0 0
    %1385 = vmatpush.bf16.msra.mxu0 0
    %1386 = vmatpush.bf16.msra.mxu0 0
    %1387 = vmatpush.bf16.msra.mxu0 0
    %1388 = vmatpush.bf16.msra.mxu0 %v1376
    %1389 = vmatmul.bf16.gmra.mxu0 %v1007
    %v1390 = vpop.f32.mrf.mxu0
    %v1391 = vadd.f32 %v1363, %v1390
    %v1392 = vpop.f32.mrf.mxu0
    %v1393 = vadd.f32 %v1363, %v1392
    %1394 = vdwg.mxu0
    %1395 = vmatpush.bf16.msra.mxu0 0
    %1396 = vmatpush.bf16.msra.mxu0 0
    %1397 = vmatpush.bf16.msra.mxu0 0
    %1398 = vmatpush.bf16.msra.mxu0 0
    %1399 = vmatpush.bf16.msra.mxu0 0
    %1400 = vmatpush.bf16.msra.mxu0 0
    %1401 = vmatpush.bf16.msra.mxu0 0
    %1402 = vmatpush.bf16.msra.mxu0 %v1379
    %1403 = vmatmul.bf16.gmra.mxu0 %v1007
    %v1404 = vpop.f32.mrf.mxu0
    %v1405 = vadd.f32 %v1364, %v1404
    %v1406 = vpop.f32.mrf.mxu0
    %v1407 = vadd.f32 %v1364, %v1406
    %1408 = vdwg.mxu0
    %v1409 = vmax.f32 %v1391, 0.0
    %v1410 = vmax.f32 %v1405, 0.0
    %v1411 = vmax.f32 %v1393, 0.0
    %v1412 = vmax.f32 %v1407, 0.0
    %v1413 = vpack.c.bf16 %v1411, %v1409
    %v1414 = vpack.c.bf16 %v1412, %v1410
    %v1415 = vld [vmem:[%s29] sm:$0xff]
    %v1416 = vld [vmem:[%s29 + $0x8] sm:$0xff]
    %v1417 = vld [vmem:[%s29 + $0x10] sm:$0xff]
    %v1418 = vld [vmem:[%s29 + $0x18] sm:$0xff]
    %v1419 = vld [vmem:[%s29 + $0x20] sm:$0xff]
    %v1420 = vld [vmem:[%s29 + $0x28] sm:$0xff]
    %v1421 = vld [vmem:[%s29 + $0x30] sm:$0xff]
    %v1422 = vld [vmem:[%s29 + $0x38] sm:$0xff]
    %v1423 = vld [vmem:[%s29 + $0x40] sm:$0xff]
    %v1424 = vld [vmem:[%s29 + $0x48] sm:$0xff]
    %v1425 = vld [vmem:[%s29 + $0x50] sm:$0xff]
    %v1426 = vld [vmem:[%s29 + $0x58] sm:$0xff]
    %v1427 = vld [vmem:[%s29 + $0x60] sm:$0xff]
    %v1428 = vld [vmem:[%s29 + $0x68] sm:$0xff]
    %v1429 = vld [vmem:[%s29 + $0x70] sm:$0xff]
    %v1430 = vld [vmem:[%s29 + $0x78] sm:$0xff]
    %v1431 = vld [vmem:[%s29 + $0x80] sm:$0xff]
    %v1432 = vld [vmem:[%s29 + $0x88] sm:$0xff]
    %v1433 = vld [vmem:[%s29 + $0x90] sm:$0xff]
    %v1434 = vld [vmem:[%s29 + $0x98] sm:$0xff]
    %v1435 = vld [vmem:[%s29 + $0xa0] sm:$0xff]
    %v1436 = vld [vmem:[%s29 + $0xa8] sm:$0xff]
    %v1437 = vld [vmem:[%s29 + $0xb0] sm:$0xff]
    %v1438 = vld [vmem:[%s29 + $0xb8] sm:$0xff]
    %v1439 = vld [vmem:[%s29 + $0xc0] sm:$0xff]
    %v1440 = vld [vmem:[%s29 + $0xc8] sm:$0xff]
    %v1441 = vld [vmem:[%s29 + $0xd0] sm:$0xff]
    %v1442 = vld [vmem:[%s29 + $0xd8] sm:$0xff]
    %v1443 = vld [vmem:[%s29 + $0xe0] sm:$0xff]
    %v1444 = vld [vmem:[%s29 + $0xe8] sm:$0xff]
    %v1445 = vld [vmem:[%s29 + $0xf0] sm:$0xff]
    %v1446 = vld [vmem:[%s29 + $0xf8] sm:$0xff]
    %v1447 = vld [vmem:[#allocation12] sm:$0x3]
    %v1449 = vperm.slane %v1447, 0
    %v1450 = vperm.slane %v1447, 1
    %v1485 = vunpack.c.l.b16 %v1415
    %v1486 = vunpack.c.h.b16 %v1415
    %v1487 = vunpack.c.l.b16 %v1416
    %v1488 = vunpack.c.h.b16 %v1416
    %v1489 = vunpack.c.l.b16 %v1417
    %v1490 = vunpack.c.h.b16 %v1417
    %v1491 = vunpack.c.l.b16 %v1418
    %v1492 = vunpack.c.h.b16 %v1418
    %v1493 = vunpack.c.l.b16 %v1419
    %v1494 = vunpack.c.h.b16 %v1419
    %v1495 = vunpack.c.l.b16 %v1420
    %v1496 = vunpack.c.h.b16 %v1420
    %v1497 = vunpack.c.l.b16 %v1421
    %v1498 = vunpack.c.h.b16 %v1421
    %v1499 = vunpack.c.l.b16 %v1422
    %v1500 = vunpack.c.h.b16 %v1422
    %v1501 = vunpack.c.l.b16 %v1423
    %v1502 = vunpack.c.h.b16 %v1423
    %v1503 = vunpack.c.l.b16 %v1424
    %v1504 = vunpack.c.h.b16 %v1424
    %v1505 = vunpack.c.l.b16 %v1425
    %v1506 = vunpack.c.h.b16 %v1425
    %v1507 = vunpack.c.l.b16 %v1426
    %v1508 = vunpack.c.h.b16 %v1426
    %v1509 = vunpack.c.l.b16 %v1427
    %v1510 = vunpack.c.h.b16 %v1427
    %v1511 = vunpack.c.l.b16 %v1428
    %v1512 = vunpack.c.h.b16 %v1428
    %v1513 = vunpack.c.l.b16 %v1429
    %v1514 = vunpack.c.h.b16 %v1429
    %v1515 = vunpack.c.l.b16 %v1430
    %v1516 = vunpack.c.h.b16 %v1430
    %v1517 = vunpack.c.l.b16 %v1431
    %v1518 = vunpack.c.h.b16 %v1431
    %v1519 = vunpack.c.l.b16 %v1432
    %v1520 = vunpack.c.h.b16 %v1432
    %v1521 = vunpack.c.l.b16 %v1433
    %v1522 = vunpack.c.h.b16 %v1433
    %v1523 = vunpack.c.l.b16 %v1434
    %v1524 = vunpack.c.h.b16 %v1434
    %v1525 = vunpack.c.l.b16 %v1435
    %v1526 = vunpack.c.h.b16 %v1435
    %v1527 = vunpack.c.l.b16 %v1436
    %v1528 = vunpack.c.h.b16 %v1436
    %v1529 = vunpack.c.l.b16 %v1437
    %v1530 = vunpack.c.h.b16 %v1437
    %v1531 = vunpack.c.l.b16 %v1438
    %v1532 = vunpack.c.h.b16 %v1438
    %v1533 = vunpack.c.l.b16 %v1439
    %v1534 = vunpack.c.h.b16 %v1439
    %v1535 = vunpack.c.l.b16 %v1440
    %v1536 = vunpack.c.h.b16 %v1440
    %v1537 = vunpack.c.l.b16 %v1441
    %v1538 = vunpack.c.h.b16 %v1441
    %v1539 = vunpack.c.l.b16 %v1442
    %v1540 = vunpack.c.h.b16 %v1442
    %v1541 = vunpack.c.l.b16 %v1443
    %v1542 = vunpack.c.h.b16 %v1443
    %v1543 = vunpack.c.l.b16 %v1444
    %v1544 = vunpack.c.h.b16 %v1444
    %v1545 = vunpack.c.l.b16 %v1445
    %v1546 = vunpack.c.h.b16 %v1445
    %v1547 = vunpack.c.l.b16 %v1446
    %v1548 = vunpack.c.h.b16 %v1446
    %v1549 = vpack.c.b16 %v1487, %v1485
    %v1550 = vpack.c.b16 %v1488, %v1486
    %v1551 = vpack.c.b16 %v1491, %v1489
    %v1552 = vpack.c.b16 %v1492, %v1490
    %v1553 = vpack.c.b16 %v1495, %v1493
    %v1554 = vpack.c.b16 %v1496, %v1494
    %v1555 = vpack.c.b16 %v1499, %v1497
    %v1556 = vpack.c.b16 %v1500, %v1498
    %v1557 = vpack.c.b16 %v1503, %v1501
    %v1558 = vpack.c.b16 %v1504, %v1502
    %v1559 = vpack.c.b16 %v1507, %v1505
    %v1560 = vpack.c.b16 %v1508, %v1506
    %v1561 = vpack.c.b16 %v1511, %v1509
    %v1562 = vpack.c.b16 %v1512, %v1510
    %v1563 = vpack.c.b16 %v1515, %v1513
    %v1564 = vpack.c.b16 %v1516, %v1514
    %v1565 = vpack.c.b16 %v1519, %v1517
    %v1566 = vpack.c.b16 %v1520, %v1518
    %v1567 = vpack.c.b16 %v1523, %v1521
    %v1568 = vpack.c.b16 %v1524, %v1522
    %v1569 = vpack.c.b16 %v1527, %v1525
    %v1570 = vpack.c.b16 %v1528, %v1526
    %v1571 = vpack.c.b16 %v1531, %v1529
    %v1572 = vpack.c.b16 %v1532, %v1530
    %v1573 = vpack.c.b16 %v1535, %v1533
    %v1574 = vpack.c.b16 %v1536, %v1534
    %v1575 = vpack.c.b16 %v1539, %v1537
    %v1576 = vpack.c.b16 %v1540, %v1538
    %v1577 = vpack.c.b16 %v1543, %v1541
    %v1578 = vpack.c.b16 %v1544, %v1542
    %v1579 = vpack.c.b16 %v1547, %v1545
    %v1580 = vpack.c.b16 %v1548, %v1546
    %1613 = vmatpush.bf16.msra.mxu0 %v1563
    %1614 = vmatpush.bf16.msra.mxu0 %v1561
    %1615 = vmatpush.bf16.msra.mxu0 %v1559
    %1616 = vmatpush.bf16.msra.mxu0 %v1557
    %1617 = vmatpush.bf16.msra.mxu0 %v1555
    %1618 = vmatpush.bf16.msra.mxu0 %v1553
    %1619 = vmatpush.bf16.msra.mxu0 %v1551
    %1620 = vmatpush.bf16.msra.mxu0 %v1549
    %1621 = vmatmul.bf16.gmra.mxu0 %v1413
    %v1622 = vpop.f32.mrf.mxu0
    %v1623 = vadd.f32 %v1449, %v1622
    %v1624 = vpop.f32.mrf.mxu0
    %v1625 = vadd.f32 %v1449, %v1624
    %1626 = vdwg.mxu0
    %1627 = vmatpush.bf16.msra.mxu0 %v1579
    %1628 = vmatpush.bf16.msra.mxu0 %v1577
    %1629 = vmatpush.bf16.msra.mxu0 %v1575
    %1630 = vmatpush.bf16.msra.mxu0 %v1573
    %1631 = vmatpush.bf16.msra.mxu0 %v1571
    %1632 = vmatpush.bf16.msra.mxu0 %v1569
    %1633 = vmatpush.bf16.msra.mxu0 %v1567
    %1634 = vmatpush.bf16.msra.mxu0 %v1565
    %1635 = vmatmul.bf16.gmra.mxu0 %v1414
    %v1636 = vpop.f32.mrf.mxu0
    %v1637 = vadd.f32 %v1623, %v1636
    %v1638 = vpop.f32.mrf.mxu0
    %v1639 = vadd.f32 %v1625, %v1638
    %1640 = vdwg.mxu0
    %1641 = vmatpush.bf16.msra.mxu0 %v1564
    %1642 = vmatpush.bf16.msra.mxu0 %v1562
    %1643 = vmatpush.bf16.msra.mxu0 %v1560
    %1644 = vmatpush.bf16.msra.mxu0 %v1558
    %1645 = vmatpush.bf16.msra.mxu0 %v1556
    %1646 = vmatpush.bf16.msra.mxu0 %v1554
    %1647 = vmatpush.bf16.msra.mxu0 %v1552
    %1648 = vmatpush.bf16.msra.mxu0 %v1550
    %1649 = vmatmul.bf16.gmra.mxu0 %v1413
    %v1650 = vpop.f32.mrf.mxu0
    %v1651 = vadd.f32 %v1450, %v1650
    %v1652 = vpop.f32.mrf.mxu0
    %v1653 = vadd.f32 %v1450, %v1652
    %1654 = vdwg.mxu0
    %1655 = vmatpush.bf16.msra.mxu0 %v1580
    %1656 = vmatpush.bf16.msra.mxu0 %v1578
    %1657 = vmatpush.bf16.msra.mxu0 %v1576
    %1658 = vmatpush.bf16.msra.mxu0 %v1574
    %1659 = vmatpush.bf16.msra.mxu0 %v1572
    %1660 = vmatpush.bf16.msra.mxu0 %v1570
    %1661 = vmatpush.bf16.msra.mxu0 %v1568
    %1662 = vmatpush.bf16.msra.mxu0 %v1566
    %1663 = vmatmul.bf16.gmra.mxu0 %v1414
    %v1664 = vpop.f32.mrf.mxu0
    %v1665 = vadd.f32 %v1651, %v1664
    %v1666 = vpop.f32.mrf.mxu0
    %v1667 = vadd.f32 %v1653, %v1666
    %1668 = vdwg.mxu0
    %v1669 = vmax.f32 %v1637, 0.0
    %v1670 = vmax.f32 %v1665, 0.0
    %v1671 = vmax.f32 %v1639, 0.0
    %v1672 = vmax.f32 %v1667, 0.0
    %v1673 = vlaneseq
    %v1674 = vshrl.u32 %v1673, 7
    %v1675 = vadd.s32 %v1674, 8
    %vm1676 = vcmp.lt.s32.totalorder %v1674, 2
    %vm1677 = vcmp.lt.s32.totalorder %v1675, 2
    %v1678 = vsel %vm1676, %v1355, %v1669
    %v1679 = vsel %vm1676, %v1356, %v1670
    %v1680 = vsel %vm1677, %v1357, %v1671
    %v1681 = vsel %vm1677, %v1358, %v1672
    %v1682 = vpack.c.bf16 %v1680, %v1678
    %v1683 = vpack.c.bf16 %v1681, %v1679
    %v1684 = vld [vmem:[%s33] sm:$0xff]
    %v1685 = vld [vmem:[%s33 + $0x8] sm:$0xff]
    %v1686 = vld [vmem:[%s33 + $0x10] sm:$0xff]
    %v1687 = vld [vmem:[%s33 + $0x18] sm:$0xff]
    %v1688 = vld [vmem:[%s33 + $0x20] sm:$0xff]
    %v1689 = vld [vmem:[%s33 + $0x28] sm:$0xff]
    %v1690 = vld [vmem:[%s33 + $0x30] sm:$0xff]
    %v1691 = vld [vmem:[%s33 + $0x38] sm:$0xff]
    %v1692 = vld [vmem:[%s33 + $0x40] sm:$0xff]
    %v1693 = vld [vmem:[%s33 + $0x48] sm:$0xff]
    %v1694 = vld [vmem:[%s33 + $0x50] sm:$0xff]
    %v1695 = vld [vmem:[%s33 + $0x58] sm:$0xff]
    %v1696 = vld [vmem:[%s33 + $0x60] sm:$0xff]
    %v1697 = vld [vmem:[%s33 + $0x68] sm:$0xff]
    %v1698 = vld [vmem:[%s33 + $0x70] sm:$0xff]
    %v1699 = vld [vmem:[%s33 + $0x78] sm:$0xff]
    %v1700 = vld [vmem:[%s33 + $0x80] sm:$0xff]
    %v1701 = vld [vmem:[%s33 + $0x88] sm:$0xff]
    %v1702 = vld [vmem:[%s33 + $0x90] sm:$0xff]
    %v1703 = vld [vmem:[%s33 + $0x98] sm:$0xff]
    %v1704 = vld [vmem:[%s33 + $0xa0] sm:$0xff]
    %v1705 = vld [vmem:[%s33 + $0xa8] sm:$0xff]
    %v1706 = vld [vmem:[%s33 + $0xb0] sm:$0xff]
    %v1707 = vld [vmem:[%s33 + $0xb8] sm:$0xff]
    %v1708 = vld [vmem:[%s33 + $0xc0] sm:$0xff]
    %v1709 = vld [vmem:[%s33 + $0xc8] sm:$0xff]
    %v1710 = vld [vmem:[%s33 + $0xd0] sm:$0xff]
    %v1711 = vld [vmem:[%s33 + $0xd8] sm:$0xff]
    %v1712 = vld [vmem:[%s33 + $0xe0] sm:$0xff]
    %v1713 = vld [vmem:[%s33 + $0xe8] sm:$0xff]
    %v1714 = vld [vmem:[%s33 + $0xf0] sm:$0xff]
    %v1715 = vld [vmem:[%s33 + $0xf8] sm:$0xff]
    %v1716 = vld [vmem:[#allocation13] sm:$0x3]
    %v1718 = vperm.slane %v1716, 0
    %v1719 = vperm.slane %v1716, 1
    %v1754 = vunpack.c.l.b16 %v1684
    %v1755 = vunpack.c.h.b16 %v1684
    %v1756 = vunpack.c.l.b16 %v1685
    %v1757 = vunpack.c.h.b16 %v1685
    %v1758 = vunpack.c.l.b16 %v1686
    %v1759 = vunpack.c.h.b16 %v1686
    %v1760 = vunpack.c.l.b16 %v1687
    %v1761 = vunpack.c.h.b16 %v1687
    %v1762 = vunpack.c.l.b16 %v1688
    %v1763 = vunpack.c.h.b16 %v1688
    %v1764 = vunpack.c.l.b16 %v1689
    %v1765 = vunpack.c.h.b16 %v1689
    %v1766 = vunpack.c.l.b16 %v1690
    %v1767 = vunpack.c.h.b16 %v1690
    %v1768 = vunpack.c.l.b16 %v1691
    %v1769 = vunpack.c.h.b16 %v1691
    %v1770 = vunpack.c.l.b16 %v1692
    %v1771 = vunpack.c.h.b16 %v1692
    %v1772 = vunpack.c.l.b16 %v1693
    %v1773 = vunpack.c.h.b16 %v1693
    %v1774 = vunpack.c.l.b16 %v1694
    %v1775 = vunpack.c.h.b16 %v1694
    %v1776 = vunpack.c.l.b16 %v1695
    %v1777 = vunpack.c.h.b16 %v1695
    %v1778 = vunpack.c.l.b16 %v1696
    %v1779 = vunpack.c.h.b16 %v1696
    %v1780 = vunpack.c.l.b16 %v1697
    %v1781 = vunpack.c.h.b16 %v1697
    %v1782 = vunpack.c.l.b16 %v1698
    %v1783 = vunpack.c.h.b16 %v1698
    %v1784 = vunpack.c.l.b16 %v1699
    %v1785 = vunpack.c.h.b16 %v1699
    %v1786 = vunpack.c.l.b16 %v1700
    %v1787 = vunpack.c.h.b16 %v1700
    %v1788 = vunpack.c.l.b16 %v1701
    %v1789 = vunpack.c.h.b16 %v1701
    %v1790 = vunpack.c.l.b16 %v1702
    %v1791 = vunpack.c.h.b16 %v1702
    %v1792 = vunpack.c.l.b16 %v1703
    %v1793 = vunpack.c.h.b16 %v1703
    %v1794 = vunpack.c.l.b16 %v1704
    %v1795 = vunpack.c.h.b16 %v1704
    %v1796 = vunpack.c.l.b16 %v1705
    %v1797 = vunpack.c.h.b16 %v1705
    %v1798 = vunpack.c.l.b16 %v1706
    %v1799 = vunpack.c.h.b16 %v1706
    %v1800 = vunpack.c.l.b16 %v1707
    %v1801 = vunpack.c.h.b16 %v1707
    %v1802 = vunpack.c.l.b16 %v1708
    %v1803 = vunpack.c.h.b16 %v1708
    %v1804 = vunpack.c.l.b16 %v1709
    %v1805 = vunpack.c.h.b16 %v1709
    %v1806 = vunpack.c.l.b16 %v1710
    %v1807 = vunpack.c.h.b16 %v1710
    %v1808 = vunpack.c.l.b16 %v1711
    %v1809 = vunpack.c.h.b16 %v1711
    %v1810 = vunpack.c.l.b16 %v1712
    %v1811 = vunpack.c.h.b16 %v1712
    %v1812 = vunpack.c.l.b16 %v1713
    %v1813 = vunpack.c.h.b16 %v1713
    %v1814 = vunpack.c.l.b16 %v1714
    %v1815 = vunpack.c.h.b16 %v1714
    %v1816 = vunpack.c.l.b16 %v1715
    %v1817 = vunpack.c.h.b16 %v1715
    %v1818 = vpack.c.b16 %v1756, %v1754
    %v1819 = vpack.c.b16 %v1757, %v1755
    %v1820 = vpack.c.b16 %v1760, %v1758
    %v1821 = vpack.c.b16 %v1761, %v1759
    %v1822 = vpack.c.b16 %v1764, %v1762
    %v1823 = vpack.c.b16 %v1765, %v1763
    %v1824 = vpack.c.b16 %v1768, %v1766
    %v1825 = vpack.c.b16 %v1769, %v1767
    %v1826 = vpack.c.b16 %v1772, %v1770
    %v1827 = vpack.c.b16 %v1773, %v1771
    %v1828 = vpack.c.b16 %v1776, %v1774
    %v1829 = vpack.c.b16 %v1777, %v1775
    %v1830 = vpack.c.b16 %v1780, %v1778
    %v1831 = vpack.c.b16 %v1781, %v1779
    %v1832 = vpack.c.b16 %v1784, %v1782
    %v1833 = vpack.c.b16 %v1785, %v1783
    %v1834 = vpack.c.b16 %v1788, %v1786
    %v1835 = vpack.c.b16 %v1789, %v1787
    %v1836 = vpack.c.b16 %v1792, %v1790
    %v1837 = vpack.c.b16 %v1793, %v1791
    %v1838 = vpack.c.b16 %v1796, %v1794
    %v1839 = vpack.c.b16 %v1797, %v1795
    %v1840 = vpack.c.b16 %v1800, %v1798
    %v1841 = vpack.c.b16 %v1801, %v1799
    %v1842 = vpack.c.b16 %v1804, %v1802
    %v1843 = vpack.c.b16 %v1805, %v1803
    %v1844 = vpack.c.b16 %v1808, %v1806
    %v1845 = vpack.c.b16 %v1809, %v1807
    %v1846 = vpack.c.b16 %v1812, %v1810
    %v1847 = vpack.c.b16 %v1813, %v1811
    %v1848 = vpack.c.b16 %v1816, %v1814
    %v1849 = vpack.c.b16 %v1817, %v1815
    %1882 = vmatpush.bf16.msra.mxu0 %v1832
    %1883 = vmatpush.bf16.msra.mxu0 %v1830
    %1884 = vmatpush.bf16.msra.mxu0 %v1828
    %1885 = vmatpush.bf16.msra.mxu0 %v1826
    %1886 = vmatpush.bf16.msra.mxu0 %v1824
    %1887 = vmatpush.bf16.msra.mxu0 %v1822
    %1888 = vmatpush.bf16.msra.mxu0 %v1820
    %1889 = vmatpush.bf16.msra.mxu0 %v1818
    %1890 = vmatmul.bf16.gmra.mxu0 %v1682
    %v1891 = vpop.f32.mrf.mxu0
    %v1892 = vadd.f32 %v1718, %v1891
    %v1893 = vpop.f32.mrf.mxu0
    %v1894 = vadd.f32 %v1718, %v1893
    %1895 = vdwg.mxu0
    %1896 = vmatpush.bf16.msra.mxu0 %v1848
    %1897 = vmatpush.bf16.msra.mxu0 %v1846
    %1898 = vmatpush.bf16.msra.mxu0 %v1844
    %1899 = vmatpush.bf16.msra.mxu0 %v1842
    %1900 = vmatpush.bf16.msra.mxu0 %v1840
    %1901 = vmatpush.bf16.msra.mxu0 %v1838
    %1902 = vmatpush.bf16.msra.mxu0 %v1836
    %1903 = vmatpush.bf16.msra.mxu0 %v1834
    %1904 = vmatmul.bf16.gmra.mxu0 %v1683
    %v1905 = vpop.f32.mrf.mxu0
    %v1906 = vadd.f32 %v1892, %v1905
    %v1907 = vpop.f32.mrf.mxu0
    %v1908 = vadd.f32 %v1894, %v1907
    %1909 = vdwg.mxu0
    %1910 = vmatpush.bf16.msra.mxu0 %v1833
    %1911 = vmatpush.bf16.msra.mxu0 %v1831
    %1912 = vmatpush.bf16.msra.mxu0 %v1829
    %1913 = vmatpush.bf16.msra.mxu0 %v1827
    %1914 = vmatpush.bf16.msra.mxu0 %v1825
    %1915 = vmatpush.bf16.msra.mxu0 %v1823
    %1916 = vmatpush.bf16.msra.mxu0 %v1821
    %1917 = vmatpush.bf16.msra.mxu0 %v1819
    %1918 = vmatmul.bf16.gmra.mxu0 %v1682
    %v1919 = vpop.f32.mrf.mxu0
    %v1920 = vadd.f32 %v1719, %v1919
    %v1921 = vpop.f32.mrf.mxu0
    %v1922 = vadd.f32 %v1719, %v1921
    %1923 = vdwg.mxu0
    %1924 = vmatpush.bf16.msra.mxu0 %v1849
    %1925 = vmatpush.bf16.msra.mxu0 %v1847
    %1926 = vmatpush.bf16.msra.mxu0 %v1845
    %1927 = vmatpush.bf16.msra.mxu0 %v1843
    %1928 = vmatpush.bf16.msra.mxu0 %v1841
    %1929 = vmatpush.bf16.msra.mxu0 %v1839
    %1930 = vmatpush.bf16.msra.mxu0 %v1837
    %1931 = vmatpush.bf16.msra.mxu0 %v1835
    %1932 = vmatmul.bf16.gmra.mxu0 %v1683
    %v1933 = vpop.f32.mrf.mxu0
    %v1934 = vadd.f32 %v1920, %v1933
    %v1935 = vpop.f32.mrf.mxu0
    %v1936 = vadd.f32 %v1922, %v1935
    %1937 = vdwg.mxu0
    %v1938 = vmax.f32 %v1906, 0.0
    %v1939 = vmax.f32 %v1934, 0.0
    %v1940 = vmax.f32 %v1908, 0.0
    %v1941 = vmax.f32 %v1936, 0.0
    %v1942 = vpack.c.bf16 %v1940, %v1938
    %v1943 = vpack.c.bf16 %v1941, %v1939
    %v1944 = vld [vmem:[%s37] sm:$0xff]
    %v1945 = vld [vmem:[%s37 + $0x8] sm:$0xff]
    %v1946 = vld [vmem:[%s37 + $0x10] sm:$0xff]
    %v1947 = vld [vmem:[%s37 + $0x18] sm:$0xff]
    %v1948 = vld [vmem:[%s37 + $0x20] sm:$0xff]
    %v1949 = vld [vmem:[%s37 + $0x28] sm:$0xff]
    %v1950 = vld [vmem:[%s37 + $0x30] sm:$0xff]
    %v1951 = vld [vmem:[%s37 + $0x38] sm:$0xff]
    %v1952 = vld [vmem:[%s37 + $0x40] sm:$0xff]
    %v1953 = vld [vmem:[%s37 + $0x48] sm:$0xff]
    %v1954 = vld [vmem:[%s37 + $0x50] sm:$0xff]
    %v1955 = vld [vmem:[%s37 + $0x58] sm:$0xff]
    %v1956 = vld [vmem:[%s37 + $0x60] sm:$0xff]
    %v1957 = vld [vmem:[%s37 + $0x68] sm:$0xff]
    %v1958 = vld [vmem:[%s37 + $0x70] sm:$0xff]
    %v1959 = vld [vmem:[%s37 + $0x78] sm:$0xff]
    %v1960 = vld [vmem:[%s37 + $0x80] sm:$0xff]
    %v1961 = vld [vmem:[%s37 + $0x88] sm:$0xff]
    %v1962 = vld [vmem:[%s37 + $0x90] sm:$0xff]
    %v1963 = vld [vmem:[%s37 + $0x98] sm:$0xff]
    %v1964 = vld [vmem:[%s37 + $0xa0] sm:$0xff]
    %v1965 = vld [vmem:[%s37 + $0xa8] sm:$0xff]
    %v1966 = vld [vmem:[%s37 + $0xb0] sm:$0xff]
    %v1967 = vld [vmem:[%s37 + $0xb8] sm:$0xff]
    %v1968 = vld [vmem:[%s37 + $0xc0] sm:$0xff]
    %v1969 = vld [vmem:[%s37 + $0xc8] sm:$0xff]
    %v1970 = vld [vmem:[%s37 + $0xd0] sm:$0xff]
    %v1971 = vld [vmem:[%s37 + $0xd8] sm:$0xff]
    %v1972 = vld [vmem:[%s37 + $0xe0] sm:$0xff]
    %v1973 = vld [vmem:[%s37 + $0xe8] sm:$0xff]
    %v1974 = vld [vmem:[%s37 + $0xf0] sm:$0xff]
    %v1975 = vld [vmem:[%s37 + $0xf8] sm:$0xff]
    %v1976 = vld [vmem:[#allocation15] sm:$0x3]
    %v1978 = vperm.slane %v1976, 0
    %v1979 = vperm.slane %v1976, 1
    %v2014 = vunpack.c.l.b16 %v1944
    %v2015 = vunpack.c.h.b16 %v1944
    %v2016 = vunpack.c.l.b16 %v1945
    %v2017 = vunpack.c.h.b16 %v1945
    %v2018 = vunpack.c.l.b16 %v1946
    %v2019 = vunpack.c.h.b16 %v1946
    %v2020 = vunpack.c.l.b16 %v1947
    %v2021 = vunpack.c.h.b16 %v1947
    %v2022 = vunpack.c.l.b16 %v1948
    %v2023 = vunpack.c.h.b16 %v1948
    %v2024 = vunpack.c.l.b16 %v1949
    %v2025 = vunpack.c.h.b16 %v1949
    %v2026 = vunpack.c.l.b16 %v1950
    %v2027 = vunpack.c.h.b16 %v1950
    %v2028 = vunpack.c.l.b16 %v1951
    %v2029 = vunpack.c.h.b16 %v1951
    %v2030 = vunpack.c.l.b16 %v1952
    %v2031 = vunpack.c.h.b16 %v1952
    %v2032 = vunpack.c.l.b16 %v1953
    %v2033 = vunpack.c.h.b16 %v1953
    %v2034 = vunpack.c.l.b16 %v1954
    %v2035 = vunpack.c.h.b16 %v1954
    %v2036 = vunpack.c.l.b16 %v1955
    %v2037 = vunpack.c.h.b16 %v1955
    %v2038 = vunpack.c.l.b16 %v1956
    %v2039 = vunpack.c.h.b16 %v1956
    %v2040 = vunpack.c.l.b16 %v1957
    %v2041 = vunpack.c.h.b16 %v1957
    %v2042 = vunpack.c.l.b16 %v1958
    %v2043 = vunpack.c.h.b16 %v1958
    %v2044 = vunpack.c.l.b16 %v1959
    %v2045 = vunpack.c.h.b16 %v1959
    %v2046 = vunpack.c.l.b16 %v1960
    %v2047 = vunpack.c.h.b16 %v1960
    %v2048 = vunpack.c.l.b16 %v1961
    %v2049 = vunpack.c.h.b16 %v1961
    %v2050 = vunpack.c.l.b16 %v1962
    %v2051 = vunpack.c.h.b16 %v1962
    %v2052 = vunpack.c.l.b16 %v1963
    %v2053 = vunpack.c.h.b16 %v1963
    %v2054 = vunpack.c.l.b16 %v1964
    %v2055 = vunpack.c.h.b16 %v1964
    %v2056 = vunpack.c.l.b16 %v1965
    %v2057 = vunpack.c.h.b16 %v1965
    %v2058 = vunpack.c.l.b16 %v1966
    %v2059 = vunpack.c.h.b16 %v1966
    %v2060 = vunpack.c.l.b16 %v1967
    %v2061 = vunpack.c.h.b16 %v1967
    %v2062 = vunpack.c.l.b16 %v1968
    %v2063 = vunpack.c.h.b16 %v1968
    %v2064 = vunpack.c.l.b16 %v1969
    %v2065 = vunpack.c.h.b16 %v1969
    %v2066 = vunpack.c.l.b16 %v1970
    %v2067 = vunpack.c.h.b16 %v1970
    %v2068 = vunpack.c.l.b16 %v1971
    %v2069 = vunpack.c.h.b16 %v1971
    %v2070 = vunpack.c.l.b16 %v1972
    %v2071 = vunpack.c.h.b16 %v1972
    %v2072 = vunpack.c.l.b16 %v1973
    %v2073 = vunpack.c.h.b16 %v1973
    %v2074 = vunpack.c.l.b16 %v1974
    %v2075 = vunpack.c.h.b16 %v1974
    %v2076 = vunpack.c.l.b16 %v1975
    %v2077 = vunpack.c.h.b16 %v1975
    %v2078 = vpack.c.b16 %v2016, %v2014
    %v2079 = vpack.c.b16 %v2017, %v2015
    %v2080 = vpack.c.b16 %v2020, %v2018
    %v2081 = vpack.c.b16 %v2021, %v2019
    %v2082 = vpack.c.b16 %v2024, %v2022
    %v2083 = vpack.c.b16 %v2025, %v2023
    %v2084 = vpack.c.b16 %v2028, %v2026
    %v2085 = vpack.c.b16 %v2029, %v2027
    %v2086 = vpack.c.b16 %v2032, %v2030
    %v2087 = vpack.c.b16 %v2033, %v2031
    %v2088 = vpack.c.b16 %v2036, %v2034
    %v2089 = vpack.c.b16 %v2037, %v2035
    %v2090 = vpack.c.b16 %v2040, %v2038
    %v2091 = vpack.c.b16 %v2041, %v2039
    %v2092 = vpack.c.b16 %v2044, %v2042
    %v2093 = vpack.c.b16 %v2045, %v2043
    %v2094 = vpack.c.b16 %v2048, %v2046
    %v2095 = vpack.c.b16 %v2049, %v2047
    %v2096 = vpack.c.b16 %v2052, %v2050
    %v2097 = vpack.c.b16 %v2053, %v2051
    %v2098 = vpack.c.b16 %v2056, %v2054
    %v2099 = vpack.c.b16 %v2057, %v2055
    %v2100 = vpack.c.b16 %v2060, %v2058
    %v2101 = vpack.c.b16 %v2061, %v2059
    %v2102 = vpack.c.b16 %v2064, %v2062
    %v2103 = vpack.c.b16 %v2065, %v2063
    %v2104 = vpack.c.b16 %v2068, %v2066
    %v2105 = vpack.c.b16 %v2069, %v2067
    %v2106 = vpack.c.b16 %v2072, %v2070
    %v2107 = vpack.c.b16 %v2073, %v2071
    %v2108 = vpack.c.b16 %v2076, %v2074
    %v2109 = vpack.c.b16 %v2077, %v2075
    %2142 = vmatpush.bf16.msra.mxu0 %v2092
    %2143 = vmatpush.bf16.msra.mxu0 %v2090
    %2144 = vmatpush.bf16.msra.mxu0 %v2088
    %2145 = vmatpush.bf16.msra.mxu0 %v2086
    %2146 = vmatpush.bf16.msra.mxu0 %v2084
    %2147 = vmatpush.bf16.msra.mxu0 %v2082
    %2148 = vmatpush.bf16.msra.mxu0 %v2080
    %2149 = vmatpush.bf16.msra.mxu0 %v2078
    %2150 = vmatmul.bf16.gmra.mxu0 %v1942
    %v2151 = vpop.f32.mrf.mxu0
    %v2152 = vadd.f32 %v1978, %v2151
    %v2153 = vpop.f32.mrf.mxu0
    %v2154 = vadd.f32 %v1978, %v2153
    %2155 = vdwg.mxu0
    %2156 = vmatpush.bf16.msra.mxu0 %v2108
    %2157 = vmatpush.bf16.msra.mxu0 %v2106
    %2158 = vmatpush.bf16.msra.mxu0 %v2104
    %2159 = vmatpush.bf16.msra.mxu0 %v2102
    %2160 = vmatpush.bf16.msra.mxu0 %v2100
    %2161 = vmatpush.bf16.msra.mxu0 %v2098
    %2162 = vmatpush.bf16.msra.mxu0 %v2096
    %2163 = vmatpush.bf16.msra.mxu0 %v2094
    %2164 = vmatmul.bf16.gmra.mxu0 %v1943
    %v2165 = vpop.f32.mrf.mxu0
    %v2166 = vadd.f32 %v2152, %v2165
    %v2167 = vpop.f32.mrf.mxu0
    %v2168 = vadd.f32 %v2154, %v2167
    %2169 = vdwg.mxu0
    %2170 = vmatpush.bf16.msra.mxu0 %v2093
    %2171 = vmatpush.bf16.msra.mxu0 %v2091
    %2172 = vmatpush.bf16.msra.mxu0 %v2089
    %2173 = vmatpush.bf16.msra.mxu0 %v2087
    %2174 = vmatpush.bf16.msra.mxu0 %v2085
    %2175 = vmatpush.bf16.msra.mxu0 %v2083
    %2176 = vmatpush.bf16.msra.mxu0 %v2081
    %2177 = vmatpush.bf16.msra.mxu0 %v2079
    %2178 = vmatmul.bf16.gmra.mxu0 %v1942
    %v2179 = vpop.f32.mrf.mxu0
    %v2180 = vadd.f32 %v1979, %v2179
    %v2181 = vpop.f32.mrf.mxu0
    %v2182 = vadd.f32 %v1979, %v2181
    %2183 = vdwg.mxu0
    %2184 = vmatpush.bf16.msra.mxu0 %v2109
    %2185 = vmatpush.bf16.msra.mxu0 %v2107
    %2186 = vmatpush.bf16.msra.mxu0 %v2105
    %2187 = vmatpush.bf16.msra.mxu0 %v2103
    %2188 = vmatpush.bf16.msra.mxu0 %v2101
    %2189 = vmatpush.bf16.msra.mxu0 %v2099
    %2190 = vmatpush.bf16.msra.mxu0 %v2097
    %2191 = vmatpush.bf16.msra.mxu0 %v2095
    %2192 = vmatmul.bf16.gmra.mxu0 %v1943
    %v2193 = vpop.f32.mrf.mxu0
    %v2194 = vadd.f32 %v2180, %v2193
    %v2195 = vpop.f32.mrf.mxu0
    %v2196 = vadd.f32 %v2182, %v2195
    %2197 = vdwg.mxu0
    %v2198 = vmax.f32 %v2166, 0.0
    %v2199 = vmax.f32 %v2194, 0.0
    %v2200 = vmax.f32 %v2168, 0.0
    %v2201 = vmax.f32 %v2196, 0.0
    %v2202 = vpack.c.bf16 %v2200, %v2198
    %v2203 = vpack.c.bf16 %v2201, %v2199
    %v2204 = vld [vmem:[%s41] sm:$0xf]
    %v2205 = vld [vmem:[%s41 + $0x4] sm:$0xf]
    %v2206 = vld [vmem:[%s41 + $0x8] sm:$0xf]
    %v2207 = vld [vmem:[%s41 + $0xc] sm:$0xf]
    %v2208 = vld [vmem:[%s41 + $0x10] sm:$0xf]
    %v2209 = vld [vmem:[%s41 + $0x14] sm:$0xf]
    %v2210 = vld [vmem:[%s41 + $0x18] sm:$0xf]
    %v2211 = vld [vmem:[%s41 + $0x1c] sm:$0xf]
    %v2212 = vld [vmem:[%s41 + $0x20] sm:$0xf]
    %v2213 = vld [vmem:[%s41 + $0x24] sm:$0xf]
    %v2214 = vld [vmem:[%s41 + $0x28] sm:$0xf]
    %v2215 = vld [vmem:[%s41 + $0x2c] sm:$0xf]
    %v2216 = vld [vmem:[%s41 + $0x30] sm:$0xf]
    %v2217 = vld [vmem:[%s41 + $0x34] sm:$0xf]
    %v2218 = vld [vmem:[%s41 + $0x38] sm:$0xf]
    %v2219 = vld [vmem:[%s41 + $0x3c] sm:$0xf]
    %v2220 = vld [vmem:[%s41 + $0x40] sm:$0xf]
    %v2221 = vld [vmem:[%s41 + $0x44] sm:$0xf]
    %v2222 = vld [vmem:[%s41 + $0x48] sm:$0xf]
    %v2223 = vld [vmem:[%s41 + $0x4c] sm:$0xf]
    %v2224 = vld [vmem:[%s41 + $0x50] sm:$0xf]
    %v2225 = vld [vmem:[%s41 + $0x54] sm:$0xf]
    %v2226 = vld [vmem:[%s41 + $0x58] sm:$0xf]
    %v2227 = vld [vmem:[%s41 + $0x5c] sm:$0xf]
    %v2228 = vld [vmem:[%s41 + $0x60] sm:$0xf]
    %v2229 = vld [vmem:[%s41 + $0x64] sm:$0xf]
    %v2230 = vld [vmem:[%s41 + $0x68] sm:$0xf]
    %v2231 = vld [vmem:[%s41 + $0x6c] sm:$0xf]
    %v2232 = vld [vmem:[%s41 + $0x70] sm:$0xf]
    %v2233 = vld [vmem:[%s41 + $0x74] sm:$0xf]
    %v2234 = vld [vmem:[%s41 + $0x78] sm:$0xf]
    %v2235 = vld [vmem:[%s41 + $0x7c] sm:$0xf]
    %v2236 = vld [vmem:[#allocation16] sm:$0x1]
    %v2238 = vperm.slane %v2236, 0
    %v2272 = vunpack.c.l.b16 %v2204
    %v2273 = vunpack.c.l.b16 %v2205
    %v2274 = vunpack.c.l.b16 %v2206
    %v2275 = vunpack.c.l.b16 %v2207
    %v2276 = vunpack.c.l.b16 %v2208
    %v2277 = vunpack.c.l.b16 %v2209
    %v2278 = vunpack.c.l.b16 %v2210
    %v2279 = vunpack.c.l.b16 %v2211
    %v2280 = vunpack.c.l.b16 %v2212
    %v2281 = vunpack.c.l.b16 %v2213
    %v2282 = vunpack.c.l.b16 %v2214
    %v2283 = vunpack.c.l.b16 %v2215
    %v2284 = vunpack.c.l.b16 %v2216
    %v2285 = vunpack.c.l.b16 %v2217
    %v2286 = vunpack.c.l.b16 %v2218
    %v2287 = vunpack.c.l.b16 %v2219
    %v2288 = vunpack.c.l.b16 %v2220
    %v2289 = vunpack.c.l.b16 %v2221
    %v2290 = vunpack.c.l.b16 %v2222
    %v2291 = vunpack.c.l.b16 %v2223
    %v2292 = vunpack.c.l.b16 %v2224
    %v2293 = vunpack.c.l.b16 %v2225
    %v2294 = vunpack.c.l.b16 %v2226
    %v2295 = vunpack.c.l.b16 %v2227
    %v2296 = vunpack.c.l.b16 %v2228
    %v2297 = vunpack.c.l.b16 %v2229
    %v2298 = vunpack.c.l.b16 %v2230
    %v2299 = vunpack.c.l.b16 %v2231
    %v2300 = vunpack.c.l.b16 %v2232
    %v2301 = vunpack.c.l.b16 %v2233
    %v2302 = vunpack.c.l.b16 %v2234
    %v2303 = vunpack.c.l.b16 %v2235
    %v2304 = vpack.c.b16 %v2273, %v2272
    %v2305 = vpack.c.b16 %v2275, %v2274
    %v2306 = vpack.c.b16 %v2277, %v2276
    %v2307 = vpack.c.b16 %v2279, %v2278
    %v2308 = vpack.c.b16 %v2281, %v2280
    %v2309 = vpack.c.b16 %v2283, %v2282
    %v2310 = vpack.c.b16 %v2285, %v2284
    %v2311 = vpack.c.b16 %v2287, %v2286
    %v2312 = vpack.c.b16 %v2289, %v2288
    %v2313 = vpack.c.b16 %v2291, %v2290
    %v2314 = vpack.c.b16 %v2293, %v2292
    %v2315 = vpack.c.b16 %v2295, %v2294
    %v2316 = vpack.c.b16 %v2297, %v2296
    %v2317 = vpack.c.b16 %v2299, %v2298
    %v2318 = vpack.c.b16 %v2301, %v2300
    %v2319 = vpack.c.b16 %v2303, %v2302
    %2336 = vmatpush.bf16.msra.mxu0 %v2311
    %2337 = vmatpush.bf16.msra.mxu0 %v2310
    %2338 = vmatpush.bf16.msra.mxu0 %v2309
    %2339 = vmatpush.bf16.msra.mxu0 %v2308
    %2340 = vmatpush.bf16.msra.mxu0 %v2307
    %2341 = vmatpush.bf16.msra.mxu0 %v2306
    %2342 = vmatpush.bf16.msra.mxu0 %v2305
    %2343 = vmatpush.bf16.msra.mxu0 %v2304
    %2344 = vmatmul.bf16.gmra.mxu0 %v2202
    %v2345 = vpop.f32.mrf.mxu0
    %v2346 = vadd.f32 %v2238, %v2345
    %v2347 = vpop.f32.mrf.mxu0
    %v2348 = vadd.f32 %v2238, %v2347
    %2349 = vdwg.mxu0
    %2350 = vmatpush.bf16.msra.mxu0 %v2319
    %2351 = vmatpush.bf16.msra.mxu0 %v2318
    %2352 = vmatpush.bf16.msra.mxu0 %v2317
    %2353 = vmatpush.bf16.msra.mxu0 %v2316
    %2354 = vmatpush.bf16.msra.mxu0 %v2315
    %2355 = vmatpush.bf16.msra.mxu0 %v2314
    %2356 = vmatpush.bf16.msra.mxu0 %v2313
    %2357 = vmatpush.bf16.msra.mxu0 %v2312
    %2358 = vmatmul.bf16.gmra.mxu0 %v2203
    %v2359 = vpop.f32.mrf.mxu0
    %v2360 = vadd.f32 %v2346, %v2359
    %v2361 = vpop.f32.mrf.mxu0
    %v2362 = vadd.f32 %v2348, %v2361
    %2363 = vdwg.mxu0
    %v2364 = vld [vmem:[%s45] sm:$0xf]
    %v2365 = vld [vmem:[%s45 + $0x4] sm:$0xf]
    %v2366 = vld [vmem:[%s45 + $0x8] sm:$0xf]
    %v2367 = vld [vmem:[%s45 + $0xc] sm:$0xf]
    %v2368 = vld [vmem:[%s45 + $0x10] sm:$0xf]
    %v2369 = vld [vmem:[%s45 + $0x14] sm:$0xf]
    %v2370 = vld [vmem:[%s45 + $0x18] sm:$0xf]
    %v2371 = vld [vmem:[%s45 + $0x1c] sm:$0xf]
    %v2372 = vld [vmem:[%s45 + $0x20] sm:$0xf]
    %v2373 = vld [vmem:[%s45 + $0x24] sm:$0xf]
    %v2374 = vld [vmem:[%s45 + $0x28] sm:$0xf]
    %v2375 = vld [vmem:[%s45 + $0x2c] sm:$0xf]
    %v2376 = vld [vmem:[%s45 + $0x30] sm:$0xf]
    %v2377 = vld [vmem:[%s45 + $0x34] sm:$0xf]
    %v2378 = vld [vmem:[%s45 + $0x38] sm:$0xf]
    %v2379 = vld [vmem:[%s45 + $0x3c] sm:$0xf]
    %v2380 = vld [vmem:[%s45 + $0x40] sm:$0xf]
    %v2381 = vld [vmem:[%s45 + $0x44] sm:$0xf]
    %v2382 = vld [vmem:[%s45 + $0x48] sm:$0xf]
    %v2383 = vld [vmem:[%s45 + $0x4c] sm:$0xf]
    %v2384 = vld [vmem:[%s45 + $0x50] sm:$0xf]
    %v2385 = vld [vmem:[%s45 + $0x54] sm:$0xf]
    %v2386 = vld [vmem:[%s45 + $0x58] sm:$0xf]
    %v2387 = vld [vmem:[%s45 + $0x5c] sm:$0xf]
    %v2388 = vld [vmem:[%s45 + $0x60] sm:$0xf]
    %v2389 = vld [vmem:[%s45 + $0x64] sm:$0xf]
    %v2390 = vld [vmem:[%s45 + $0x68] sm:$0xf]
    %v2391 = vld [vmem:[%s45 + $0x6c] sm:$0xf]
    %v2392 = vld [vmem:[%s45 + $0x70] sm:$0xf]
    %v2393 = vld [vmem:[%s45 + $0x74] sm:$0xf]
    %v2394 = vld [vmem:[%s45 + $0x78] sm:$0xf]
    %v2395 = vld [vmem:[%s45 + $0x7c] sm:$0xf]
    %v2396 = vld [vmem:[#allocation18] sm:$0x1]
    %v2398 = vperm.slane %v2396, 0
    %v2432 = vunpack.c.l.b16 %v2364
    %v2433 = vunpack.c.l.b16 %v2365
    %v2434 = vunpack.c.l.b16 %v2366
    %v2435 = vunpack.c.l.b16 %v2367
    %v2436 = vunpack.c.l.b16 %v2368
    %v2437 = vunpack.c.l.b16 %v2369
    %v2438 = vunpack.c.l.b16 %v2370
    %v2439 = vunpack.c.l.b16 %v2371
    %v2440 = vunpack.c.l.b16 %v2372
    %v2441 = vunpack.c.l.b16 %v2373
    %v2442 = vunpack.c.l.b16 %v2374
    %v2443 = vunpack.c.l.b16 %v2375
    %v2444 = vunpack.c.l.b16 %v2376
    %v2445 = vunpack.c.l.b16 %v2377
    %v2446 = vunpack.c.l.b16 %v2378
    %v2447 = vunpack.c.l.b16 %v2379
    %v2448 = vunpack.c.l.b16 %v2380
    %v2449 = vunpack.c.l.b16 %v2381
    %v2450 = vunpack.c.l.b16 %v2382
    %v2451 = vunpack.c.l.b16 %v2383
    %v2452 = vunpack.c.l.b16 %v2384
    %v2453 = vunpack.c.l.b16 %v2385
    %v2454 = vunpack.c.l.b16 %v2386
    %v2455 = vunpack.c.l.b16 %v2387
    %v2456 = vunpack.c.l.b16 %v2388
    %v2457 = vunpack.c.l.b16 %v2389
    %v2458 = vunpack.c.l.b16 %v2390
    %v2459 = vunpack.c.l.b16 %v2391
    %v2460 = vunpack.c.l.b16 %v2392
    %v2461 = vunpack.c.l.b16 %v2393
    %v2462 = vunpack.c.l.b16 %v2394
    %v2463 = vunpack.c.l.b16 %v2395
    %v2464 = vpack.c.b16 %v2433, %v2432
    %v2465 = vpack.c.b16 %v2435, %v2434
    %v2466 = vpack.c.b16 %v2437, %v2436
    %v2467 = vpack.c.b16 %v2439, %v2438
    %v2468 = vpack.c.b16 %v2441, %v2440
    %v2469 = vpack.c.b16 %v2443, %v2442
    %v2470 = vpack.c.b16 %v2445, %v2444
    %v2471 = vpack.c.b16 %v2447, %v2446
    %v2472 = vpack.c.b16 %v2449, %v2448
    %v2473 = vpack.c.b16 %v2451, %v2450
    %v2474 = vpack.c.b16 %v2453, %v2452
    %v2475 = vpack.c.b16 %v2455, %v2454
    %v2476 = vpack.c.b16 %v2457, %v2456
    %v2477 = vpack.c.b16 %v2459, %v2458
    %v2478 = vpack.c.b16 %v2461, %v2460
    %v2479 = vpack.c.b16 %v2463, %v2462
    %2496 = vmatpush.bf16.msra.mxu0 %v2471
    %2497 = vmatpush.bf16.msra.mxu0 %v2470
    %2498 = vmatpush.bf16.msra.mxu0 %v2469
    %2499 = vmatpush.bf16.msra.mxu0 %v2468
    %2500 = vmatpush.bf16.msra.mxu0 %v2467
    %2501 = vmatpush.bf16.msra.mxu0 %v2466
    %2502 = vmatpush.bf16.msra.mxu0 %v2465
    %2503 = vmatpush.bf16.msra.mxu0 %v2464
    %2504 = vmatmul.bf16.gmra.mxu0 %v2202
    %v2505 = vpop.f32.mrf.mxu0
    %v2506 = vadd.f32 %v2398, %v2505
    %v2507 = vpop.f32.mrf.mxu0
    %v2508 = vadd.f32 %v2398, %v2507
    %2509 = vdwg.mxu0
    %2510 = vmatpush.bf16.msra.mxu0 %v2479
    %2511 = vmatpush.bf16.msra.mxu0 %v2478
    %2512 = vmatpush.bf16.msra.mxu0 %v2477
    %2513 = vmatpush.bf16.msra.mxu0 %v2476
    %2514 = vmatpush.bf16.msra.mxu0 %v2475
    %2515 = vmatpush.bf16.msra.mxu0 %v2474
    %2516 = vmatpush.bf16.msra.mxu0 %v2473
    %2517 = vmatpush.bf16.msra.mxu0 %v2472
    %2518 = vmatmul.bf16.gmra.mxu0 %v2203
    %v2519 = vpop.f32.mrf.mxu0
    %v2520 = vadd.f32 %v2506, %v2519
    %v2521 = vpop.f32.mrf.mxu0
    %v2522 = vadd.f32 %v2508, %v2521
    %2523 = vdwg.mxu0
    %v2524 = vmax.f32 %v2520, 0.0
    %v2525 = vmax.f32 %v2522, 0.0
    %vm2526 = vcmp.ne.f32.partialorder %v2520, %v2520
    %vm2527 = vcmp.ne.f32.partialorder %v2522, %v2522
    %v2528 = vadd.f32 %v2520, 0.0
    %v2529 = vadd.f32 %v2522, 0.0
    %v2530 = vand.u32 2147483647, %v2520
    %v2531 = vand.u32 2147483647, %v2522
    %v2532 = vsub.f32 0.0, %v2530
    %v2533 = vsub.f32 0.0, %v2531
    %v2534 = vmul.f32 %v2532, 1.442695
    %v2535 = vpow.pop %v2534
    %v2536 = vmul.f32 %v2533, 1.442695
    %v2537 = vpow.pop %v2536
    %v2538 = vadd.f32 %v2535, 1.0
    %v2539 = vlog2.pop %v2538
    %v2540 = vmul.f32 %v2539, 0.6931472
    %v2541 = vmul.f32 -0.5, %v2535
    %v2542 = vadd.f32 %v2541, 1.0
    %v2543 = vmul.f32 %v2542, %v2535
    %v2544 = vand.u32 2147483647, %v2535
    %vm2545 = vcmp.lt.f32.partialorder %v2544, 0.0004427343
    %v2546 = vsel %vm2545, %v2543, %v2540
    %v2547 = vadd.f32 %v2537, 1.0
    %v2548 = vlog2.pop %v2547
    %v2549 = vmul.f32 %v2548, 0.6931472
    %v2550 = vmul.f32 -0.5, %v2537
    %v2551 = vadd.f32 %v2550, 1.0
    %v2552 = vmul.f32 %v2551, %v2537
    %v2553 = vand.u32 2147483647, %v2537
    %vm2554 = vcmp.lt.f32.partialorder %v2553, 0.0004427343
    %v2555 = vsel %vm2554, %v2552, %v2549
    %v2556 = vadd.f32 %v2524, %v2546
    %v2557 = vadd.f32 %v2525, %v2555
    %v2558 = vsel %vm2526, %v2528, %v2556
    %v2559 = vsel %vm2527, %v2529, %v2557
    %v2560 = vadd.f32 %v2558, 1e-05
    %v2561 = vadd.f32 %v2559, 1e-05
    %v2562 = vld [vmem:[%s7] sm:$0xff]
    %v2563 = vld [vmem:[%s7 + $0x8] sm:$0x3]
    %v2564 = vmul.f32 %v2562, %v2560
    %v2565 = vmul.f32 %v2563, %v2561
    %v2566 = vadd.f32 %v2360, %v2564
    %v2567 = vadd.f32 %v2362, %v2565
    %v2568 = vpack.c.bf16 %v2567, %v2566
    %v2569 = vld [vmem:[#allocation19] sm:$0xff]
    %v2570 = vld [vmem:[#allocation19 + $0x8] sm:$0xff]
    %v2571 = vld [vmem:[#allocation19 + $0x10] sm:$0xff]
    %v2572 = vld [vmem:[#allocation19 + $0x18] sm:$0xff]
    %v2573 = vld [vmem:[#allocation21] sm:$0x3]
    %v2575 = vperm.slane %v2573, 0
    %v2576 = vperm.slane %v2573, 1
    %v2583 = vunpack.c.l.b16 %v2569
    %v2584 = vunpack.c.h.b16 %v2569
    %v2585 = vunpack.c.l.b16 %v2570
    %v2586 = vunpack.c.h.b16 %v2570
    %v2587 = vunpack.c.l.b16 %v2571
    %v2588 = vunpack.c.h.b16 %v2571
    %v2589 = vunpack.c.l.b16 %v2572
    %v2590 = vunpack.c.h.b16 %v2572
    %v2591 = vpack.c.b16 %v2585, %v2583
    %v2592 = vpack.c.b16 %v2586, %v2584
    %v2593 = vpack.c.b16 %v2589, %v2587
    %v2594 = vpack.c.b16 %v2590, %v2588
    %vm2599 = vcmask 261120
    %v2601 = vsel %vm2599, %v2568, 0
    %2603 = vmatpush.bf16.msra.mxu0 0
    %2604 = vmatpush.bf16.msra.mxu0 0
    %2605 = vmatpush.bf16.msra.mxu0 0
    %2606 = vmatpush.bf16.msra.mxu0 0
    %2607 = vmatpush.bf16.msra.mxu0 0
    %2608 = vmatpush.bf16.msra.mxu0 0
    %2609 = vmatpush.bf16.msra.mxu0 %v2593
    %2610 = vmatpush.bf16.msra.mxu0 %v2591
    %2611 = vmatmul.bf16.gmra.mxu0 %v2601
    %v2612 = vpop.f32.mrf.mxu0
    %v2613 = vadd.f32 %v2575, %v2612
    %v2614 = vpop.f32.mrf.mxu0
    %v2615 = vadd.f32 %v2575, %v2614
    %2616 = vdwg.mxu0
    %2617 = vmatpush.bf16.msra.mxu0 0
    %2618 = vmatpush.bf16.msra.mxu0 0
    %2619 = vmatpush.bf16.msra.mxu0 0
    %2620 = vmatpush.bf16.msra.mxu0 0
    %2621 = vmatpush.bf16.msra.mxu0 0
    %2622 = vmatpush.bf16.msra.mxu0 0
    %2623 = vmatpush.bf16.msra.mxu0 %v2594
    %2624 = vmatpush.bf16.msra.mxu0 %v2592
    %2625 = vmatmul.bf16.gmra.mxu0 %v2601
    %v2626 = vpop.f32.mrf.mxu0
    %v2627 = vadd.f32 %v2576, %v2626
    %v2628 = vpop.f32.mrf.mxu0
    %v2629 = vadd.f32 %v2576, %v2628
    %2630 = vdwg.mxu0
    %v2631 = vmax.f32 %v2613, 0.0
    %v2632 = vmax.f32 %v2627, 0.0
    %v2633 = vmax.f32 %v2615, 0.0
    %v2634 = vmax.f32 %v2629, 0.0
    %v2635 = vpack.c.bf16 %v2633, %v2631
    %v2636 = vpack.c.bf16 %v2634, %v2632
    %v2637 = vld [vmem:[%s53] sm:$0xff]
    %v2638 = vld [vmem:[%s53 + $0x8] sm:$0xff]
    %v2639 = vld [vmem:[%s53 + $0x10] sm:$0xff]
    %v2640 = vld [vmem:[%s53 + $0x18] sm:$0xff]
    %v2641 = vld [vmem:[%s53 + $0x20] sm:$0xff]
    %v2642 = vld [vmem:[%s53 + $0x28] sm:$0xff]
    %v2643 = vld [vmem:[%s53 + $0x30] sm:$0xff]
    %v2644 = vld [vmem:[%s53 + $0x38] sm:$0xff]
    %v2645 = vld [vmem:[%s53 + $0x40] sm:$0xff]
    %v2646 = vld [vmem:[%s53 + $0x48] sm:$0xff]
    %v2647 = vld [vmem:[%s53 + $0x50] sm:$0xff]
    %v2648 = vld [vmem:[%s53 + $0x58] sm:$0xff]
    %v2649 = vld [vmem:[%s53 + $0x60] sm:$0xff]
    %v2650 = vld [vmem:[%s53 + $0x68] sm:$0xff]
    %v2651 = vld [vmem:[%s53 + $0x70] sm:$0xff]
    %v2652 = vld [vmem:[%s53 + $0x78] sm:$0xff]
    %v2653 = vld [vmem:[%s53 + $0x80] sm:$0xff]
    %v2654 = vld [vmem:[%s53 + $0x88] sm:$0xff]
    %v2655 = vld [vmem:[%s53 + $0x90] sm:$0xff]
    %v2656 = vld [vmem:[%s53 + $0x98] sm:$0xff]
    %v2657 = vld [vmem:[%s53 + $0xa0] sm:$0xff]
    %v2658 = vld [vmem:[%s53 + $0xa8] sm:$0xff]
    %v2659 = vld [vmem:[%s53 + $0xb0] sm:$0xff]
    %v2660 = vld [vmem:[%s53 + $0xb8] sm:$0xff]
    %v2661 = vld [vmem:[%s53 + $0xc0] sm:$0xff]
    %v2662 = vld [vmem:[%s53 + $0xc8] sm:$0xff]
    %v2663 = vld [vmem:[%s53 + $0xd0] sm:$0xff]
    %v2664 = vld [vmem:[%s53 + $0xd8] sm:$0xff]
    %v2665 = vld [vmem:[%s53 + $0xe0] sm:$0xff]
    %v2666 = vld [vmem:[%s53 + $0xe8] sm:$0xff]
    %v2667 = vld [vmem:[%s53 + $0xf0] sm:$0xff]
    %v2668 = vld [vmem:[%s53 + $0xf8] sm:$0xff]
    %v2669 = vld [vmem:[#allocation22] sm:$0x3]
    %v2671 = vperm.slane %v2669, 0
    %v2672 = vperm.slane %v2669, 1
    %v2707 = vunpack.c.l.b16 %v2637
    %v2708 = vunpack.c.h.b16 %v2637
    %v2709 = vunpack.c.l.b16 %v2638
    %v2710 = vunpack.c.h.b16 %v2638
    %v2711 = vunpack.c.l.b16 %v2639
    %v2712 = vunpack.c.h.b16 %v2639
    %v2713 = vunpack.c.l.b16 %v2640
    %v2714 = vunpack.c.h.b16 %v2640
    %v2715 = vunpack.c.l.b16 %v2641
    %v2716 = vunpack.c.h.b16 %v2641
    %v2717 = vunpack.c.l.b16 %v2642
    %v2718 = vunpack.c.h.b16 %v2642
    %v2719 = vunpack.c.l.b16 %v2643
    %v2720 = vunpack.c.h.b16 %v2643
    %v2721 = vunpack.c.l.b16 %v2644
    %v2722 = vunpack.c.h.b16 %v2644
    %v2723 = vunpack.c.l.b16 %v2645
    %v2724 = vunpack.c.h.b16 %v2645
    %v2725 = vunpack.c.l.b16 %v2646
    %v2726 = vunpack.c.h.b16 %v2646
    %v2727 = vunpack.c.l.b16 %v2647
    %v2728 = vunpack.c.h.b16 %v2647
    %v2729 = vunpack.c.l.b16 %v2648
    %v2730 = vunpack.c.h.b16 %v2648
    %v2731 = vunpack.c.l.b16 %v2649
    %v2732 = vunpack.c.h.b16 %v2649
    %v2733 = vunpack.c.l.b16 %v2650
    %v2734 = vunpack.c.h.b16 %v2650
    %v2735 = vunpack.c.l.b16 %v2651
    %v2736 = vunpack.c.h.b16 %v2651
    %v2737 = vunpack.c.l.b16 %v2652
    %v2738 = vunpack.c.h.b16 %v2652
    %v2739 = vunpack.c.l.b16 %v2653
    %v2740 = vunpack.c.h.b16 %v2653
    %v2741 = vunpack.c.l.b16 %v2654
    %v2742 = vunpack.c.h.b16 %v2654
    %v2743 = vunpack.c.l.b16 %v2655
    %v2744 = vunpack.c.h.b16 %v2655
    %v2745 = vunpack.c.l.b16 %v2656
    %v2746 = vunpack.c.h.b16 %v2656
    %v2747 = vunpack.c.l.b16 %v2657
    %v2748 = vunpack.c.h.b16 %v2657
    %v2749 = vunpack.c.l.b16 %v2658
    %v2750 = vunpack.c.h.b16 %v2658
    %v2751 = vunpack.c.l.b16 %v2659
    %v2752 = vunpack.c.h.b16 %v2659
    %v2753 = vunpack.c.l.b16 %v2660
    %v2754 = vunpack.c.h.b16 %v2660
    %v2755 = vunpack.c.l.b16 %v2661
    %v2756 = vunpack.c.h.b16 %v2661
    %v2757 = vunpack.c.l.b16 %v2662
    %v2758 = vunpack.c.h.b16 %v2662
    %v2759 = vunpack.c.l.b16 %v2663
    %v2760 = vunpack.c.h.b16 %v2663
    %v2761 = vunpack.c.l.b16 %v2664
    %v2762 = vunpack.c.h.b16 %v2664
    %v2763 = vunpack.c.l.b16 %v2665
    %v2764 = vunpack.c.h.b16 %v2665
    %v2765 = vunpack.c.l.b16 %v2666
    %v2766 = vunpack.c.h.b16 %v2666
    %v2767 = vunpack.c.l.b16 %v2667
    %v2768 = vunpack.c.h.b16 %v2667
    %v2769 = vunpack.c.l.b16 %v2668
    %v2770 = vunpack.c.h.b16 %v2668
    %v2771 = vpack.c.b16 %v2709, %v2707
    %v2772 = vpack.c.b16 %v2710, %v2708
    %v2773 = vpack.c.b16 %v2713, %v2711
    %v2774 = vpack.c.b16 %v2714, %v2712
    %v2775 = vpack.c.b16 %v2717, %v2715
    %v2776 = vpack.c.b16 %v2718, %v2716
    %v2777 = vpack.c.b16 %v2721, %v2719
    %v2778 = vpack.c.b16 %v2722, %v2720
    %v2779 = vpack.c.b16 %v2725, %v2723
    %v2780 = vpack.c.b16 %v2726, %v2724
    %v2781 = vpack.c.b16 %v2729, %v2727
    %v2782 = vpack.c.b16 %v2730, %v2728
    %v2783 = vpack.c.b16 %v2733, %v2731
    %v2784 = vpack.c.b16 %v2734, %v2732
    %v2785 = vpack.c.b16 %v2737, %v2735
    %v2786 = vpack.c.b16 %v2738, %v2736
    %v2787 = vpack.c.b16 %v2741, %v2739
    %v2788 = vpack.c.b16 %v2742, %v2740
    %v2789 = vpack.c.b16 %v2745, %v2743
    %v2790 = vpack.c.b16 %v2746, %v2744
    %v2791 = vpack.c.b16 %v2749, %v2747
    %v2792 = vpack.c.b16 %v2750, %v2748
    %v2793 = vpack.c.b16 %v2753, %v2751
    %v2794 = vpack.c.b16 %v2754, %v2752
    %v2795 = vpack.c.b16 %v2757, %v2755
    %v2796 = vpack.c.b16 %v2758, %v2756
    %v2797 = vpack.c.b16 %v2761, %v2759
    %v2798 = vpack.c.b16 %v2762, %v2760
    %v2799 = vpack.c.b16 %v2765, %v2763
    %v2800 = vpack.c.b16 %v2766, %v2764
    %v2801 = vpack.c.b16 %v2769, %v2767
    %v2802 = vpack.c.b16 %v2770, %v2768
    %2835 = vmatpush.bf16.msra.mxu0 %v2785
    %2836 = vmatpush.bf16.msra.mxu0 %v2783
    %2837 = vmatpush.bf16.msra.mxu0 %v2781
    %2838 = vmatpush.bf16.msra.mxu0 %v2779
    %2839 = vmatpush.bf16.msra.mxu0 %v2777
    %2840 = vmatpush.bf16.msra.mxu0 %v2775
    %2841 = vmatpush.bf16.msra.mxu0 %v2773
    %2842 = vmatpush.bf16.msra.mxu0 %v2771
    %2843 = vmatmul.bf16.gmra.mxu0 %v2635
    %v2844 = vpop.f32.mrf.mxu0
    %v2845 = vadd.f32 %v2671, %v2844
    %v2846 = vpop.f32.mrf.mxu0
    %v2847 = vadd.f32 %v2671, %v2846
    %2848 = vdwg.mxu0
    %2849 = vmatpush.bf16.msra.mxu0 %v2801
    %2850 = vmatpush.bf16.msra.mxu0 %v2799
    %2851 = vmatpush.bf16.msra.mxu0 %v2797
    %2852 = vmatpush.bf16.msra.mxu0 %v2795
    %2853 = vmatpush.bf16.msra.mxu0 %v2793
    %2854 = vmatpush.bf16.msra.mxu0 %v2791
    %2855 = vmatpush.bf16.msra.mxu0 %v2789
    %2856 = vmatpush.bf16.msra.mxu0 %v2787
    %2857 = vmatmul.bf16.gmra.mxu0 %v2636
    %v2858 = vpop.f32.mrf.mxu0
    %v2859 = vadd.f32 %v2845, %v2858
    %v2860 = vpop.f32.mrf.mxu0
    %v2861 = vadd.f32 %v2847, %v2860
    %2862 = vdwg.mxu0
    %2863 = vmatpush.bf16.msra.mxu0 %v2786
    %2864 = vmatpush.bf16.msra.mxu0 %v2784
    %2865 = vmatpush.bf16.msra.mxu0 %v2782
    %2866 = vmatpush.bf16.msra.mxu0 %v2780
    %2867 = vmatpush.bf16.msra.mxu0 %v2778
    %2868 = vmatpush.bf16.msra.mxu0 %v2776
    %2869 = vmatpush.bf16.msra.mxu0 %v2774
    %2870 = vmatpush.bf16.msra.mxu0 %v2772
    %2871 = vmatmul.bf16.gmra.mxu0 %v2635
    %v2872 = vpop.f32.mrf.mxu0
    %v2873 = vadd.f32 %v2672, %v2872
    %v2874 = vpop.f32.mrf.mxu0
    %v2875 = vadd.f32 %v2672, %v2874
    %2876 = vdwg.mxu0
    %2877 = vmatpush.bf16.msra.mxu0 %v2802
    %2878 = vmatpush.bf16.msra.mxu0 %v2800
    %2879 = vmatpush.bf16.msra.mxu0 %v2798
    %2880 = vmatpush.bf16.msra.mxu0 %v2796
    %2881 = vmatpush.bf16.msra.mxu0 %v2794
    %2882 = vmatpush.bf16.msra.mxu0 %v2792
    %2883 = vmatpush.bf16.msra.mxu0 %v2790
    %2884 = vmatpush.bf16.msra.mxu0 %v2788
    %2885 = vmatmul.bf16.gmra.mxu0 %v2636
    %v2886 = vpop.f32.mrf.mxu0
    %v2887 = vadd.f32 %v2873, %v2886
    %v2888 = vpop.f32.mrf.mxu0
    %v2889 = vadd.f32 %v2875, %v2888
    %2890 = vdwg.mxu0
    %v2891 = vmax.f32 %v2859, 0.0
    %v2892 = vmax.f32 %v2887, 0.0
    %v2893 = vmax.f32 %v2861, 0.0
    %v2894 = vmax.f32 %v2889, 0.0
    %v2895 = vpack.c.bf16 %v2893, %v2891
    %v2896 = vpack.c.bf16 %v2894, %v2892
    %v2897 = vld [vmem:[#allocation24] sm:$0xff]
    %v2898 = vld [vmem:[#allocation24 + $0x8] sm:$0xff]
    %v2899 = vld [vmem:[#allocation24 + $0x10] sm:$0xff]
    %v2900 = vld [vmem:[#allocation24 + $0x18] sm:$0xff]
    %v2901 = vld [vmem:[#allocation24 + $0x20] sm:$0xff]
    %v2902 = vld [vmem:[#allocation24 + $0x28] sm:$0xff]
    %v2903 = vld [vmem:[#allocation24 + $0x30] sm:$0xff]
    %v2904 = vld [vmem:[#allocation24 + $0x38] sm:$0xff]
    %v2905 = vld [vmem:[#allocation24 + $0x40] sm:$0xff]
    %v2906 = vld [vmem:[#allocation24 + $0x48] sm:$0xff]
    %v2907 = vld [vmem:[#allocation24 + $0x50] sm:$0xff]
    %v2908 = vld [vmem:[#allocation24 + $0x58] sm:$0xff]
    %v2909 = vld [vmem:[#allocation24 + $0x60] sm:$0xff]
    %v2910 = vld [vmem:[#allocation24 + $0x68] sm:$0xff]
    %v2911 = vld [vmem:[#allocation24 + $0x70] sm:$0xff]
    %v2912 = vld [vmem:[#allocation24 + $0x78] sm:$0xff]
    %v2913 = vld [vmem:[#allocation24 + $0x80] sm:$0xff]
    %v2914 = vld [vmem:[#allocation24 + $0x88] sm:$0xff]
    %v2915 = vld [vmem:[#allocation24 + $0x90] sm:$0xff]
    %v2916 = vld [vmem:[#allocation24 + $0x98] sm:$0xff]
    %v2917 = vld [vmem:[#allocation24 + $0xa0] sm:$0xff]
    %v2918 = vld [vmem:[#allocation24 + $0xa8] sm:$0xff]
    %v2919 = vld [vmem:[#allocation24 + $0xb0] sm:$0xff]
    %v2920 = vld [vmem:[#allocation24 + $0xb8] sm:$0xff]
    %v2921 = vld [vmem:[#allocation24 + $0xc0] sm:$0xff]
    %v2922 = vld [vmem:[#allocation24 + $0xc8] sm:$0xff]
    %v2923 = vld [vmem:[#allocation24 + $0xd0] sm:$0xff]
    %v2924 = vld [vmem:[#allocation24 + $0xd8] sm:$0xff]
    %v2925 = vld [vmem:[#allocation24 + $0xe0] sm:$0xff]
    %v2926 = vld [vmem:[#allocation24 + $0xe8] sm:$0xff]
    %v2927 = vld [vmem:[#allocation24 + $0xf0] sm:$0xff]
    %v2928 = vld [vmem:[#allocation24 + $0xf8] sm:$0xff]
    %v2929 = vld [vmem:[#allocation25] sm:$0x3]
    %v2931 = vperm.slane %v2929, 0
    %v2932 = vperm.slane %v2929, 1
    %v2967 = vunpack.c.l.b16 %v2897
    %v2968 = vunpack.c.h.b16 %v2897
    %v2969 = vunpack.c.l.b16 %v2898
    %v2970 = vunpack.c.h.b16 %v2898
    %v2971 = vunpack.c.l.b16 %v2899
    %v2972 = vunpack.c.h.b16 %v2899
    %v2973 = vunpack.c.l.b16 %v2900
    %v2974 = vunpack.c.h.b16 %v2900
    %v2975 = vunpack.c.l.b16 %v2901
    %v2976 = vunpack.c.h.b16 %v2901
    %v2977 = vunpack.c.l.b16 %v2902
    %v2978 = vunpack.c.h.b16 %v2902
    %v2979 = vunpack.c.l.b16 %v2903
    %v2980 = vunpack.c.h.b16 %v2903
    %v2981 = vunpack.c.l.b16 %v2904
    %v2982 = vunpack.c.h.b16 %v2904
    %v2983 = vunpack.c.l.b16 %v2905
    %v2984 = vunpack.c.h.b16 %v2905
    %v2985 = vunpack.c.l.b16 %v2906
    %v2986 = vunpack.c.h.b16 %v2906
    %v2987 = vunpack.c.l.b16 %v2907
    %v2988 = vunpack.c.h.b16 %v2907
    %v2989 = vunpack.c.l.b16 %v2908
    %v2990 = vunpack.c.h.b16 %v2908
    %v2991 = vunpack.c.l.b16 %v2909
    %v2992 = vunpack.c.h.b16 %v2909
    %v2993 = vunpack.c.l.b16 %v2910
    %v2994 = vunpack.c.h.b16 %v2910
    %v2995 = vunpack.c.l.b16 %v2911
    %v2996 = vunpack.c.h.b16 %v2911
    %v2997 = vunpack.c.l.b16 %v2912
    %v2998 = vunpack.c.h.b16 %v2912
    %v2999 = vunpack.c.l.b16 %v2913
    %v3000 = vunpack.c.h.b16 %v2913
    %v3001 = vunpack.c.l.b16 %v2914
    %v3002 = vunpack.c.h.b16 %v2914
    %v3003 = vunpack.c.l.b16 %v2915
    %v3004 = vunpack.c.h.b16 %v2915
    %v3005 = vunpack.c.l.b16 %v2916
    %v3006 = vunpack.c.h.b16 %v2916
    %v3007 = vunpack.c.l.b16 %v2917
    %v3008 = vunpack.c.h.b16 %v2917
    %v3009 = vunpack.c.l.b16 %v2918
    %v3010 = vunpack.c.h.b16 %v2918
    %v3011 = vunpack.c.l.b16 %v2919
    %v3012 = vunpack.c.h.b16 %v2919
    %v3013 = vunpack.c.l.b16 %v2920
    %v3014 = vunpack.c.h.b16 %v2920
    %v3015 = vunpack.c.l.b16 %v2921
    %v3016 = vunpack.c.h.b16 %v2921
    %v3017 = vunpack.c.l.b16 %v2922
    %v3018 = vunpack.c.h.b16 %v2922
    %v3019 = vunpack.c.l.b16 %v2923
    %v3020 = vunpack.c.h.b16 %v2923
    %v3021 = vunpack.c.l.b16 %v2924
    %v3022 = vunpack.c.h.b16 %v2924
    %v3023 = vunpack.c.l.b16 %v2925
    %v3024 = vunpack.c.h.b16 %v2925
    %v3025 = vunpack.c.l.b16 %v2926
    %v3026 = vunpack.c.h.b16 %v2926
    %v3027 = vunpack.c.l.b16 %v2927
    %v3028 = vunpack.c.h.b16 %v2927
    %v3029 = vunpack.c.l.b16 %v2928
    %v3030 = vunpack.c.h.b16 %v2928
    %v3031 = vpack.c.b16 %v2969, %v2967
    %v3032 = vpack.c.b16 %v2970, %v2968
    %v3033 = vpack.c.b16 %v2973, %v2971
    %v3034 = vpack.c.b16 %v2974, %v2972
    %v3035 = vpack.c.b16 %v2977, %v2975
    %v3036 = vpack.c.b16 %v2978, %v2976
    %v3037 = vpack.c.b16 %v2981, %v2979
    %v3038 = vpack.c.b16 %v2982, %v2980
    %v3039 = vpack.c.b16 %v2985, %v2983
    %v3040 = vpack.c.b16 %v2986, %v2984
    %v3041 = vpack.c.b16 %v2989, %v2987
    %v3042 = vpack.c.b16 %v2990, %v2988
    %v3043 = vpack.c.b16 %v2993, %v2991
    %v3044 = vpack.c.b16 %v2994, %v2992
    %v3045 = vpack.c.b16 %v2997, %v2995
    %v3046 = vpack.c.b16 %v2998, %v2996
    %v3047 = vpack.c.b16 %v3001, %v2999
    %v3048 = vpack.c.b16 %v3002, %v3000
    %v3049 = vpack.c.b16 %v3005, %v3003
    %v3050 = vpack.c.b16 %v3006, %v3004
    %v3051 = vpack.c.b16 %v3009, %v3007
    %v3052 = vpack.c.b16 %v3010, %v3008
    %v3053 = vpack.c.b16 %v3013, %v3011
    %v3054 = vpack.c.b16 %v3014, %v3012
    %v3055 = vpack.c.b16 %v3017, %v3015
    %v3056 = vpack.c.b16 %v3018, %v3016
    %v3057 = vpack.c.b16 %v3021, %v3019
    %v3058 = vpack.c.b16 %v3022, %v3020
    %v3059 = vpack.c.b16 %v3025, %v3023
    %v3060 = vpack.c.b16 %v3026, %v3024
    %v3061 = vpack.c.b16 %v3029, %v3027
    %v3062 = vpack.c.b16 %v3030, %v3028
    %3095 = vmatpush.bf16.msra.mxu0 %v3045
    %3096 = vmatpush.bf16.msra.mxu0 %v3043
    %3097 = vmatpush.bf16.msra.mxu0 %v3041
    %3098 = vmatpush.bf16.msra.mxu0 %v3039
    %3099 = vmatpush.bf16.msra.mxu0 %v3037
    %3100 = vmatpush.bf16.msra.mxu0 %v3035
    %3101 = vmatpush.bf16.msra.mxu0 %v3033
    %3102 = vmatpush.bf16.msra.mxu0 %v3031
    %3103 = vmatmul.bf16.gmra.mxu0 %v2895
    %v3104 = vpop.f32.mrf.mxu0
    %v3105 = vadd.f32 %v2931, %v3104
    %v3106 = vpop.f32.mrf.mxu0
    %v3107 = vadd.f32 %v2931, %v3106
    %3108 = vdwg.mxu0
    %3109 = vmatpush.bf16.msra.mxu0 %v3061
    %3110 = vmatpush.bf16.msra.mxu0 %v3059
    %3111 = vmatpush.bf16.msra.mxu0 %v3057
    %3112 = vmatpush.bf16.msra.mxu0 %v3055
    %3113 = vmatpush.bf16.msra.mxu0 %v3053
    %3114 = vmatpush.bf16.msra.mxu0 %v3051
    %3115 = vmatpush.bf16.msra.mxu0 %v3049
    %3116 = vmatpush.bf16.msra.mxu0 %v3047
    %3117 = vmatmul.bf16.gmra.mxu0 %v2896
    %v3118 = vpop.f32.mrf.mxu0
    %v3119 = vadd.f32 %v3105, %v3118
    %v3120 = vpop.f32.mrf.mxu0
    %v3121 = vadd.f32 %v3107, %v3120
    %3122 = vdwg.mxu0
    %3123 = vmatpush.bf16.msra.mxu0 %v3046
    %3124 = vmatpush.bf16.msra.mxu0 %v3044
    %3125 = vmatpush.bf16.msra.mxu0 %v3042
    %3126 = vmatpush.bf16.msra.mxu0 %v3040
    %3127 = vmatpush.bf16.msra.mxu0 %v3038
    %3128 = vmatpush.bf16.msra.mxu0 %v3036
    %3129 = vmatpush.bf16.msra.mxu0 %v3034
    %3130 = vmatpush.bf16.msra.mxu0 %v3032
    %3131 = vmatmul.bf16.gmra.mxu0 %v2895
    %v3132 = vpop.f32.mrf.mxu0
    %v3133 = vadd.f32 %v2932, %v3132
    %v3134 = vpop.f32.mrf.mxu0
    %v3135 = vadd.f32 %v2932, %v3134
    %3136 = vdwg.mxu0
    %3137 = vmatpush.bf16.msra.mxu0 %v3062
    %3138 = vmatpush.bf16.msra.mxu0 %v3060
    %3139 = vmatpush.bf16.msra.mxu0 %v3058
    %3140 = vmatpush.bf16.msra.mxu0 %v3056
    %3141 = vmatpush.bf16.msra.mxu0 %v3054
    %3142 = vmatpush.bf16.msra.mxu0 %v3052
    %3143 = vmatpush.bf16.msra.mxu0 %v3050
    %3144 = vmatpush.bf16.msra.mxu0 %v3048
    %3145 = vmatmul.bf16.gmra.mxu0 %v2896
    %v3146 = vpop.f32.mrf.mxu0
    %v3147 = vadd.f32 %v3133, %v3146
    %v3148 = vpop.f32.mrf.mxu0
    %v3149 = vadd.f32 %v3135, %v3148
    %3150 = vdwg.mxu0
    %v3151 = vld [vmem:[#allocation27] sm:$0xff]
    %v3152 = vld [vmem:[#allocation27 + $0x8] sm:$0xff]
    %v3153 = vld [vmem:[#allocation27 + $0x10] sm:$0xff]
    %v3154 = vld [vmem:[#allocation27 + $0x18] sm:$0xff]
    %v3155 = vld [vmem:[#allocation27 + $0x20] sm:$0xff]
    %v3156 = vld [vmem:[#allocation27 + $0x28] sm:$0xff]
    %v3157 = vld [vmem:[#allocation27 + $0x30] sm:$0xff]
    %v3158 = vld [vmem:[#allocation27 + $0x38] sm:$0xff]
    %v3159 = vld [vmem:[#allocation27 + $0x40] sm:$0xff]
    %v3160 = vld [vmem:[#allocation27 + $0x48] sm:$0xff]
    %v3161 = vld [vmem:[#allocation27 + $0x50] sm:$0xff]
    %v3162 = vld [vmem:[#allocation27 + $0x58] sm:$0xff]
    %v3163 = vld [vmem:[#allocation27 + $0x60] sm:$0xff]
    %v3164 = vld [vmem:[#allocation27 + $0x68] sm:$0xff]
    %v3165 = vld [vmem:[#allocation27 + $0x70] sm:$0xff]
    %v3166 = vld [vmem:[#allocation27 + $0x78] sm:$0xff]
    %v3167 = vld [vmem:[#allocation27 + $0x80] sm:$0xff]
    %v3168 = vld [vmem:[#allocation27 + $0x88] sm:$0xff]
    %v3169 = vld [vmem:[#allocation27 + $0x90] sm:$0xff]
    %v3170 = vld [vmem:[#allocation27 + $0x98] sm:$0xff]
    %v3171 = vld [vmem:[#allocation27 + $0xa0] sm:$0xff]
    %v3172 = vld [vmem:[#allocation27 + $0xa8] sm:$0xff]
    %v3173 = vld [vmem:[#allocation27 + $0xb0] sm:$0xff]
    %v3174 = vld [vmem:[#allocation27 + $0xb8] sm:$0xff]
    %v3175 = vld [vmem:[#allocation27 + $0xc0] sm:$0xff]
    %v3176 = vld [vmem:[#allocation27 + $0xc8] sm:$0xff]
    %v3177 = vld [vmem:[#allocation27 + $0xd0] sm:$0xff]
    %v3178 = vld [vmem:[#allocation27 + $0xd8] sm:$0xff]
    %v3179 = vld [vmem:[#allocation27 + $0xe0] sm:$0xff]
    %v3180 = vld [vmem:[#allocation27 + $0xe8] sm:$0xff]
    %v3181 = vld [vmem:[#allocation27 + $0xf0] sm:$0xff]
    %v3182 = vld [vmem:[#allocation27 + $0xf8] sm:$0xff]
    %v3183 = vld [vmem:[#allocation28] sm:$0x3]
    %v3185 = vperm.slane %v3183, 0
    %v3186 = vperm.slane %v3183, 1
    %v3221 = vunpack.c.l.b16 %v3151
    %v3222 = vunpack.c.h.b16 %v3151
    %v3223 = vunpack.c.l.b16 %v3152
    %v3224 = vunpack.c.h.b16 %v3152
    %v3225 = vunpack.c.l.b16 %v3153
    %v3226 = vunpack.c.h.b16 %v3153
    %v3227 = vunpack.c.l.b16 %v3154
    %v3228 = vunpack.c.h.b16 %v3154
    %v3229 = vunpack.c.l.b16 %v3155
    %v3230 = vunpack.c.h.b16 %v3155
    %v3231 = vunpack.c.l.b16 %v3156
    %v3232 = vunpack.c.h.b16 %v3156
    %v3233 = vunpack.c.l.b16 %v3157
    %v3234 = vunpack.c.h.b16 %v3157
    %v3235 = vunpack.c.l.b16 %v3158
    %v3236 = vunpack.c.h.b16 %v3158
    %v3237 = vunpack.c.l.b16 %v3159
    %v3238 = vunpack.c.h.b16 %v3159
    %v3239 = vunpack.c.l.b16 %v3160
    %v3240 = vunpack.c.h.b16 %v3160
    %v3241 = vunpack.c.l.b16 %v3161
    %v3242 = vunpack.c.h.b16 %v3161
    %v3243 = vunpack.c.l.b16 %v3162
    %v3244 = vunpack.c.h.b16 %v3162
    %v3245 = vunpack.c.l.b16 %v3163
    %v3246 = vunpack.c.h.b16 %v3163
    %v3247 = vunpack.c.l.b16 %v3164
    %v3248 = vunpack.c.h.b16 %v3164
    %v3249 = vunpack.c.l.b16 %v3165
    %v3250 = vunpack.c.h.b16 %v3165
    %v3251 = vunpack.c.l.b16 %v3166
    %v3252 = vunpack.c.h.b16 %v3166
    %v3253 = vunpack.c.l.b16 %v3167
    %v3254 = vunpack.c.h.b16 %v3167
    %v3255 = vunpack.c.l.b16 %v3168
    %v3256 = vunpack.c.h.b16 %v3168
    %v3257 = vunpack.c.l.b16 %v3169
    %v3258 = vunpack.c.h.b16 %v3169
    %v3259 = vunpack.c.l.b16 %v3170
    %v3260 = vunpack.c.h.b16 %v3170
    %v3261 = vunpack.c.l.b16 %v3171
    %v3262 = vunpack.c.h.b16 %v3171
    %v3263 = vunpack.c.l.b16 %v3172
    %v3264 = vunpack.c.h.b16 %v3172
    %v3265 = vunpack.c.l.b16 %v3173
    %v3266 = vunpack.c.h.b16 %v3173
    %v3267 = vunpack.c.l.b16 %v3174
    %v3268 = vunpack.c.h.b16 %v3174
    %v3269 = vunpack.c.l.b16 %v3175
    %v3270 = vunpack.c.h.b16 %v3175
    %v3271 = vunpack.c.l.b16 %v3176
    %v3272 = vunpack.c.h.b16 %v3176
    %v3273 = vunpack.c.l.b16 %v3177
    %v3274 = vunpack.c.h.b16 %v3177
    %v3275 = vunpack.c.l.b16 %v3178
    %v3276 = vunpack.c.h.b16 %v3178
    %v3277 = vunpack.c.l.b16 %v3179
    %v3278 = vunpack.c.h.b16 %v3179
    %v3279 = vunpack.c.l.b16 %v3180
    %v3280 = vunpack.c.h.b16 %v3180
    %v3281 = vunpack.c.l.b16 %v3181
    %v3282 = vunpack.c.h.b16 %v3181
    %v3283 = vunpack.c.l.b16 %v3182
    %v3284 = vunpack.c.h.b16 %v3182
    %v3285 = vpack.c.b16 %v3223, %v3221
    %v3286 = vpack.c.b16 %v3224, %v3222
    %v3287 = vpack.c.b16 %v3227, %v3225
    %v3288 = vpack.c.b16 %v3228, %v3226
    %v3289 = vpack.c.b16 %v3231, %v3229
    %v3290 = vpack.c.b16 %v3232, %v3230
    %v3291 = vpack.c.b16 %v3235, %v3233
    %v3292 = vpack.c.b16 %v3236, %v3234
    %v3293 = vpack.c.b16 %v3239, %v3237
    %v3294 = vpack.c.b16 %v3240, %v3238
    %v3295 = vpack.c.b16 %v3243, %v3241
    %v3296 = vpack.c.b16 %v3244, %v3242
    %v3297 = vpack.c.b16 %v3247, %v3245
    %v3298 = vpack.c.b16 %v3248, %v3246
    %v3299 = vpack.c.b16 %v3251, %v3249
    %v3300 = vpack.c.b16 %v3252, %v3250
    %v3301 = vpack.c.b16 %v3255, %v3253
    %v3302 = vpack.c.b16 %v3256, %v3254
    %v3303 = vpack.c.b16 %v3259, %v3257
    %v3304 = vpack.c.b16 %v3260, %v3258
    %v3305 = vpack.c.b16 %v3263, %v3261
    %v3306 = vpack.c.b16 %v3264, %v3262
    %v3307 = vpack.c.b16 %v3267, %v3265
    %v3308 = vpack.c.b16 %v3268, %v3266
    %v3309 = vpack.c.b16 %v3271, %v3269
    %v3310 = vpack.c.b16 %v3272, %v3270
    %v3311 = vpack.c.b16 %v3275, %v3273
    %v3312 = vpack.c.b16 %v3276, %v3274
    %v3313 = vpack.c.b16 %v3279, %v3277
    %v3314 = vpack.c.b16 %v3280, %v3278
    %v3315 = vpack.c.b16 %v3283, %v3281
    %v3316 = vpack.c.b16 %v3284, %v3282
    %3349 = vmatpush.bf16.msra.mxu0 %v3299
    %3350 = vmatpush.bf16.msra.mxu0 %v3297
    %3351 = vmatpush.bf16.msra.mxu0 %v3295
    %3352 = vmatpush.bf16.msra.mxu0 %v3293
    %3353 = vmatpush.bf16.msra.mxu0 %v3291
    %3354 = vmatpush.bf16.msra.mxu0 %v3289
    %3355 = vmatpush.bf16.msra.mxu0 %v3287
    %3356 = vmatpush.bf16.msra.mxu0 %v3285
    %3357 = vmatmul.bf16.gmra.mxu0 %v2895
    %v3358 = vpop.f32.mrf.mxu0
    %v3359 = vadd.f32 %v3185, %v3358
    %v3360 = vpop.f32.mrf.mxu0
    %v3361 = vadd.f32 %v3185, %v3360
    %3362 = vdwg.mxu0
    %3363 = vmatpush.bf16.msra.mxu0 %v3315
    %3364 = vmatpush.bf16.msra.mxu0 %v3313
    %3365 = vmatpush.bf16.msra.mxu0 %v3311
    %3366 = vmatpush.bf16.msra.mxu0 %v3309
    %3367 = vmatpush.bf16.msra.mxu0 %v3307
    %3368 = vmatpush.bf16.msra.mxu0 %v3305
    %3369 = vmatpush.bf16.msra.mxu0 %v3303
    %3370 = vmatpush.bf16.msra.mxu0 %v3301
    %3371 = vmatmul.bf16.gmra.mxu0 %v2896
    %v3372 = vpop.f32.mrf.mxu0
    %v3373 = vadd.f32 %v3359, %v3372
    %v3374 = vpop.f32.mrf.mxu0
    %v3375 = vadd.f32 %v3361, %v3374
    %3376 = vdwg.mxu0
    %3377 = vmatpush.bf16.msra.mxu0 %v3300
    %3378 = vmatpush.bf16.msra.mxu0 %v3298
    %3379 = vmatpush.bf16.msra.mxu0 %v3296
    %3380 = vmatpush.bf16.msra.mxu0 %v3294
    %3381 = vmatpush.bf16.msra.mxu0 %v3292
    %3382 = vmatpush.bf16.msra.mxu0 %v3290
    %3383 = vmatpush.bf16.msra.mxu0 %v3288
    %3384 = vmatpush.bf16.msra.mxu0 %v3286
    %3385 = vmatmul.bf16.gmra.mxu0 %v2895
    %v3386 = vpop.f32.mrf.mxu0
    %v3387 = vadd.f32 %v3186, %v3386
    %v3388 = vpop.f32.mrf.mxu0
    %v3389 = vadd.f32 %v3186, %v3388
    %3390 = vdwg.mxu0
    %3391 = vmatpush.bf16.msra.mxu0 %v3316
    %3392 = vmatpush.bf16.msra.mxu0 %v3314
    %3393 = vmatpush.bf16.msra.mxu0 %v3312
    %3394 = vmatpush.bf16.msra.mxu0 %v3310
    %3395 = vmatpush.bf16.msra.mxu0 %v3308
    %3396 = vmatpush.bf16.msra.mxu0 %v3306
    %3397 = vmatpush.bf16.msra.mxu0 %v3304
    %3398 = vmatpush.bf16.msra.mxu0 %v3302
    %3399 = vmatmul.bf16.gmra.mxu0 %v2896
    %v3400 = vpop.f32.mrf.mxu0
    %v3401 = vadd.f32 %v3387, %v3400
    %v3402 = vpop.f32.mrf.mxu0
    %v3403 = vadd.f32 %v3389, %v3402
    %3404 = vdwg.mxu0
    %v3405 = vmax.f32 %v3373, 0.0
    %v3406 = vmax.f32 %v3401, 0.0
    %v3407 = vmax.f32 %v3375, 0.0
    %v3408 = vmax.f32 %v3403, 0.0
    %vm3409 = vcmp.ne.f32.partialorder %v3373, %v3373
    %vm3410 = vcmp.ne.f32.partialorder %v3401, %v3401
    %vm3411 = vcmp.ne.f32.partialorder %v3375, %v3375
    %vm3412 = vcmp.ne.f32.partialorder %v3403, %v3403
    %v3413 = vadd.f32 %v3373, 0.0
    %v3414 = vadd.f32 %v3401, 0.0
    %v3415 = vadd.f32 %v3375, 0.0
    %v3416 = vadd.f32 %v3403, 0.0
    %v3417 = vand.u32 2147483647, %v3373
    %v3418 = vand.u32 2147483647, %v3401
    %v3419 = vand.u32 2147483647, %v3375
    %v3420 = vand.u32 2147483647, %v3403
    %v3421 = vsub.f32 0.0, %v3417
    %v3422 = vsub.f32 0.0, %v3418
    %v3423 = vsub.f32 0.0, %v3419
    %v3424 = vsub.f32 0.0, %v3420
    %v3425 = vmul.f32 %v3421, 1.442695
    %v3426 = vpow.pop %v3425
    %v3427 = vmul.f32 %v3422, 1.442695
    %v3428 = vpow.pop %v3427
    %v3429 = vmul.f32 %v3423, 1.442695
    %v3430 = vpow.pop %v3429
    %v3431 = vmul.f32 %v3424, 1.442695
    %v3432 = vpow.pop %v3431
    %v3433 = vadd.f32 %v3426, 1.0
    %v3434 = vlog2.pop %v3433
    %v3435 = vmul.f32 %v3434, 0.6931472
    %v3436 = vmul.f32 -0.5, %v3426
    %v3437 = vadd.f32 %v3436, 1.0
    %v3438 = vmul.f32 %v3437, %v3426
    %v3439 = vand.u32 2147483647, %v3426
    %vm3440 = vcmp.lt.f32.partialorder %v3439, 0.0004427343
    %v3441 = vsel %vm3440, %v3438, %v3435
    %v3442 = vadd.f32 %v3428, 1.0
    %v3443 = vlog2.pop %v3442
    %v3444 = vmul.f32 %v3443, 0.6931472
    %v3445 = vmul.f32 -0.5, %v3428
    %v3446 = vadd.f32 %v3445, 1.0
    %v3447 = vmul.f32 %v3446, %v3428
    %v3448 = vand.u32 2147483647, %v3428
    %vm3449 = vcmp.lt.f32.partialorder %v3448, 0.0004427343
    %v3450 = vsel %vm3449, %v3447, %v3444
    %v3451 = vadd.f32 %v3430, 1.0
    %v3452 = vlog2.pop %v3451
    %v3453 = vmul.f32 %v3452, 0.6931472
    %v3454 = vmul.f32 -0.5, %v3430
    %v3455 = vadd.f32 %v3454, 1.0
    %v3456 = vmul.f32 %v3455, %v3430
    %v3457 = vand.u32 2147483647, %v3430
    %vm3458 = vcmp.lt.f32.partialorder %v3457, 0.0004427343
    %v3459 = vsel %vm3458, %v3456, %v3453
    %v3460 = vadd.f32 %v3432, 1.0
    %v3461 = vlog2.pop %v3460
    %v3462 = vmul.f32 %v3461, 0.6931472
    %v3463 = vmul.f32 -0.5, %v3432
    %v3464 = vadd.f32 %v3463, 1.0
    %v3465 = vmul.f32 %v3464, %v3432
    %v3466 = vand.u32 2147483647, %v3432
    %vm3467 = vcmp.lt.f32.partialorder %v3466, 0.0004427343
    %v3468 = vsel %vm3467, %v3465, %v3462
    %v3469 = vadd.f32 %v3405, %v3441
    %v3470 = vadd.f32 %v3406, %v3450
    %v3471 = vadd.f32 %v3407, %v3459
    %v3472 = vadd.f32 %v3408, %v3468
    %v3473 = vsel %vm3409, %v3413, %v3469
    %v3474 = vsel %vm3410, %v3414, %v3470
    %v3475 = vsel %vm3411, %v3415, %v3471
    %v3476 = vsel %vm3412, %v3416, %v3472
    %v3477 = vadd.f32 %v3473, 1e-05
    %v3478 = vadd.f32 %v3474, 1e-05
    %v3479 = vadd.f32 %v3475, 1e-05
    %v3480 = vadd.f32 %v3476, 1e-05
    %v3481 = vld [vmem:[%s9] sm:$0xff]
    %v3482 = vld [vmem:[%s9 + $0x8] sm:$0xff]
    %v3483 = vld [vmem:[%s9 + $0x10] sm:$0x3]
    %v3484 = vld [vmem:[%s9 + $0x18] sm:$0x3]
    %v3485 = vmul.f32 %v3481, %v3477
    %v3486 = vmul.f32 %v3482, %v3478
    %v3487 = vmul.f32 %v3483, %v3479
    %v3488 = vmul.f32 %v3484, %v3480
    %v3489 = vadd.f32 %v3119, %v3485
    %v3490 = vadd.f32 %v3147, %v3486
    %v3491 = vadd.f32 %v3121, %v3487
    %v3492 = vadd.f32 %v3149, %v3488
    %v3493 = vld [vmem:[#allocation30] sm:$0xff]
    %v3494 = vld [vmem:[#allocation30 + $0x8] sm:$0xff]
    %v3495 = vld [vmem:[#allocation30 + $0x10] sm:$0xff]
    %v3496 = vld [vmem:[#allocation30 + $0x18] sm:$0xff]
    %v3497 = vld [vmem:[#allocation30 + $0x20] sm:$0xff]
    %v3498 = vld [vmem:[#allocation30 + $0x28] sm:$0xff]
    %v3499 = vld [vmem:[#allocation30 + $0x30] sm:$0xff]
    %v3500 = vld [vmem:[#allocation30 + $0x38] sm:$0xff]
    %v3501 = vld [vmem:[#allocation30 + $0x40] sm:$0xff]
    %v3502 = vld [vmem:[#allocation30 + $0x48] sm:$0xff]
    %v3503 = vld [vmem:[#allocation30 + $0x50] sm:$0xff]
    %v3504 = vld [vmem:[#allocation30 + $0x58] sm:$0xff]
    %v3505 = vld [vmem:[#allocation30 + $0x60] sm:$0xff]
    %v3506 = vld [vmem:[#allocation30 + $0x68] sm:$0xff]
    %v3507 = vld [vmem:[#allocation30 + $0x70] sm:$0xff]
    %v3508 = vld [vmem:[#allocation30 + $0x78] sm:$0xff]
    %v3509 = vld [vmem:[#allocation30 + $0x80] sm:$0xff]
    %v3510 = vld [vmem:[#allocation30 + $0x88] sm:$0xff]
    %v3511 = vld [vmem:[#allocation30 + $0x90] sm:$0xff]
    %v3512 = vld [vmem:[#allocation30 + $0x98] sm:$0xff]
    %v3513 = vld [vmem:[#allocation30 + $0xa0] sm:$0xff]
    %v3514 = vld [vmem:[#allocation30 + $0xa8] sm:$0xff]
    %v3515 = vld [vmem:[#allocation30 + $0xb0] sm:$0xff]
    %v3516 = vld [vmem:[#allocation30 + $0xb8] sm:$0xff]
    %v3517 = vld [vmem:[#allocation30 + $0xc0] sm:$0xff]
    %v3518 = vld [vmem:[#allocation30 + $0xc8] sm:$0xff]
    %v3519 = vld [vmem:[#allocation30 + $0xd0] sm:$0xff]
    %v3520 = vld [vmem:[#allocation30 + $0xd8] sm:$0xff]
    %v3521 = vld [vmem:[#allocation30 + $0xe0] sm:$0xff]
    %v3522 = vld [vmem:[#allocation30 + $0xe8] sm:$0xff]
    %v3523 = vld [vmem:[#allocation30 + $0xf0] sm:$0xff]
    %v3524 = vld [vmem:[#allocation30 + $0xf8] sm:$0xff]
    %v3525 = vpack.c.bf16 %v3491, %v3489
    %v3526 = vpack.c.bf16 %v3492, %v3490
    %v3527 = vld [vmem:[#allocation31] sm:$0xff]
    %v3528 = vld [vmem:[#allocation31 + $0x8] sm:$0xff]
    %v3529 = vld [vmem:[#allocation31 + $0x10] sm:$0xff]
    %v3530 = vld [vmem:[#allocation31 + $0x18] sm:$0xff]
    %v3531 = vld [vmem:[#allocation31 + $0x20] sm:$0xff]
    %v3532 = vld [vmem:[#allocation31 + $0x28] sm:$0xff]
    %v3533 = vld [vmem:[#allocation31 + $0x30] sm:$0xff]
    %v3534 = vld [vmem:[#allocation31 + $0x38] sm:$0xff]
    %v3535 = vld [vmem:[#allocation31 + $0x40] sm:$0xff]
    %v3536 = vld [vmem:[#allocation31 + $0x48] sm:$0xff]
    %v3537 = vld [vmem:[#allocation31 + $0x50] sm:$0xff]
    %v3538 = vld [vmem:[#allocation31 + $0x58] sm:$0xff]
    %v3539 = vld [vmem:[#allocation31 + $0x60] sm:$0xff]
    %v3540 = vld [vmem:[#allocation31 + $0x68] sm:$0xff]
    %v3541 = vld [vmem:[#allocation31 + $0x70] sm:$0xff]
    %v3542 = vld [vmem:[#allocation31 + $0x78] sm:$0xff]
    %v3543 = vld [vmem:[#allocation31 + $0x80] sm:$0xff]
    %v3544 = vld [vmem:[#allocation31 + $0x88] sm:$0xff]
    %v3545 = vld [vmem:[#allocation31 + $0x90] sm:$0xff]
    %v3546 = vld [vmem:[#allocation31 + $0x98] sm:$0xff]
    %v3547 = vld [vmem:[#allocation31 + $0xa0] sm:$0xff]
    %v3548 = vld [vmem:[#allocation31 + $0xa8] sm:$0xff]
    %v3549 = vld [vmem:[#allocation31 + $0xb0] sm:$0xff]
    %v3550 = vld [vmem:[#allocation31 + $0xb8] sm:$0xff]
    %v3551 = vld [vmem:[#allocation31 + $0xc0] sm:$0xff]
    %v3552 = vld [vmem:[#allocation31 + $0xc8] sm:$0xff]
    %v3553 = vld [vmem:[#allocation31 + $0xd0] sm:$0xff]
    %v3554 = vld [vmem:[#allocation31 + $0xd8] sm:$0xff]
    %v3555 = vld [vmem:[#allocation31 + $0xe0] sm:$0xff]
    %v3556 = vld [vmem:[#allocation31 + $0xe8] sm:$0xff]
    %v3557 = vld [vmem:[#allocation31 + $0xf0] sm:$0xff]
    %v3558 = vld [vmem:[#allocation31 + $0xf8] sm:$0xff]
    %v3591 = vunpack.c.l.b16 %v3527
    %v3592 = vunpack.c.h.b16 %v3527
    %v3593 = vunpack.c.l.b16 %v3528
    %v3594 = vunpack.c.h.b16 %v3528
    %v3595 = vunpack.c.l.b16 %v3529
    %v3596 = vunpack.c.h.b16 %v3529
    %v3597 = vunpack.c.l.b16 %v3530
    %v3598 = vunpack.c.h.b16 %v3530
    %v3599 = vunpack.c.l.b16 %v3531
    %v3600 = vunpack.c.h.b16 %v3531
    %v3601 = vunpack.c.l.b16 %v3532
    %v3602 = vunpack.c.h.b16 %v3532
    %v3603 = vunpack.c.l.b16 %v3533
    %v3604 = vunpack.c.h.b16 %v3533
    %v3605 = vunpack.c.l.b16 %v3534
    %v3606 = vunpack.c.h.b16 %v3534
    %v3607 = vunpack.c.l.b16 %v3535
    %v3608 = vunpack.c.h.b16 %v3535
    %v3609 = vunpack.c.l.b16 %v3536
    %v3610 = vunpack.c.h.b16 %v3536
    %v3611 = vunpack.c.l.b16 %v3537
    %v3612 = vunpack.c.h.b16 %v3537
    %v3613 = vunpack.c.l.b16 %v3538
    %v3614 = vunpack.c.h.b16 %v3538
    %v3615 = vunpack.c.l.b16 %v3539
    %v3616 = vunpack.c.h.b16 %v3539
    %v3617 = vunpack.c.l.b16 %v3540
    %v3618 = vunpack.c.h.b16 %v3540
    %v3619 = vunpack.c.l.b16 %v3541
    %v3620 = vunpack.c.h.b16 %v3541
    %v3621 = vunpack.c.l.b16 %v3542
    %v3622 = vunpack.c.h.b16 %v3542
    %v3623 = vunpack.c.l.b16 %v3543
    %v3624 = vunpack.c.h.b16 %v3543
    %v3625 = vunpack.c.l.b16 %v3544
    %v3626 = vunpack.c.h.b16 %v3544
    %v3627 = vunpack.c.l.b16 %v3545
    %v3628 = vunpack.c.h.b16 %v3545
    %v3629 = vunpack.c.l.b16 %v3546
    %v3630 = vunpack.c.h.b16 %v3546
    %v3631 = vunpack.c.l.b16 %v3547
    %v3632 = vunpack.c.h.b16 %v3547
    %v3633 = vunpack.c.l.b16 %v3548
    %v3634 = vunpack.c.h.b16 %v3548
    %v3635 = vunpack.c.l.b16 %v3549
    %v3636 = vunpack.c.h.b16 %v3549
    %v3637 = vunpack.c.l.b16 %v3550
    %v3638 = vunpack.c.h.b16 %v3550
    %v3639 = vunpack.c.l.b16 %v3551
    %v3640 = vunpack.c.h.b16 %v3551
    %v3641 = vunpack.c.l.b16 %v3552
    %v3642 = vunpack.c.h.b16 %v3552
    %v3643 = vunpack.c.l.b16 %v3553
    %v3644 = vunpack.c.h.b16 %v3553
    %v3645 = vunpack.c.l.b16 %v3554
    %v3646 = vunpack.c.h.b16 %v3554
    %v3647 = vunpack.c.l.b16 %v3555
    %v3648 = vunpack.c.h.b16 %v3555
    %v3649 = vunpack.c.l.b16 %v3556
    %v3650 = vunpack.c.h.b16 %v3556
    %v3651 = vunpack.c.l.b16 %v3557
    %v3652 = vunpack.c.h.b16 %v3557
    %v3653 = vunpack.c.l.b16 %v3558
    %v3654 = vunpack.c.h.b16 %v3558
    %v3655 = vpack.c.b16 %v3593, %v3591
    %v3656 = vpack.c.b16 %v3594, %v3592
    %v3657 = vpack.c.b16 %v3597, %v3595
    %v3658 = vpack.c.b16 %v3598, %v3596
    %v3659 = vpack.c.b16 %v3601, %v3599
    %v3660 = vpack.c.b16 %v3602, %v3600
    %v3661 = vpack.c.b16 %v3605, %v3603
    %v3662 = vpack.c.b16 %v3606, %v3604
    %v3663 = vpack.c.b16 %v3609, %v3607
    %v3664 = vpack.c.b16 %v3610, %v3608
    %v3665 = vpack.c.b16 %v3613, %v3611
    %v3666 = vpack.c.b16 %v3614, %v3612
    %v3667 = vpack.c.b16 %v3617, %v3615
    %v3668 = vpack.c.b16 %v3618, %v3616
    %v3669 = vpack.c.b16 %v3621, %v3619
    %v3670 = vpack.c.b16 %v3622, %v3620
    %v3671 = vpack.c.b16 %v3625, %v3623
    %v3672 = vpack.c.b16 %v3626, %v3624
    %v3673 = vpack.c.b16 %v3629, %v3627
    %v3674 = vpack.c.b16 %v3630, %v3628
    %v3675 = vpack.c.b16 %v3633, %v3631
    %v3676 = vpack.c.b16 %v3634, %v3632
    %v3677 = vpack.c.b16 %v3637, %v3635
    %v3678 = vpack.c.b16 %v3638, %v3636
    %v3679 = vpack.c.b16 %v3641, %v3639
    %v3680 = vpack.c.b16 %v3642, %v3640
    %v3681 = vpack.c.b16 %v3645, %v3643
    %v3682 = vpack.c.b16 %v3646, %v3644
    %v3683 = vpack.c.b16 %v3649, %v3647
    %v3684 = vpack.c.b16 %v3650, %v3648
    %v3685 = vpack.c.b16 %v3653, %v3651
    %v3686 = vpack.c.b16 %v3654, %v3652
    %3719 = vmatpush.bf16.msra.mxu0 %v3669
    %3720 = vmatpush.bf16.msra.mxu0 %v3667
    %3721 = vmatpush.bf16.msra.mxu0 %v3665
    %3722 = vmatpush.bf16.msra.mxu0 %v3663
    %3723 = vmatpush.bf16.msra.mxu0 %v3661
    %3724 = vmatpush.bf16.msra.mxu0 %v3659
    %3725 = vmatpush.bf16.msra.mxu0 %v3657
    %3726 = vmatpush.bf16.msra.mxu0 %v3655
    %3727 = vmatmul.bf16.gmra.mxu0 %v3525
    %v3728 = vpop.f32.mrf.mxu0
    %v3729 = vadd.f32 0.0, %v3728
    %v3730 = vpop.f32.mrf.mxu0
    %v3731 = vadd.f32 0.0, %v3730
    %3732 = vdwg.mxu0
    %3733 = vmatpush.bf16.msra.mxu0 %v3685
    %3734 = vmatpush.bf16.msra.mxu0 %v3683
    %3735 = vmatpush.bf16.msra.mxu0 %v3681
    %3736 = vmatpush.bf16.msra.mxu0 %v3679
    %3737 = vmatpush.bf16.msra.mxu0 %v3677
    %3738 = vmatpush.bf16.msra.mxu0 %v3675
    %3739 = vmatpush.bf16.msra.mxu0 %v3673
    %3740 = vmatpush.bf16.msra.mxu0 %v3671
    %3741 = vmatmul.bf16.gmra.mxu0 %v3526
    %v3742 = vpop.f32.mrf.mxu0
    %v3743 = vadd.f32 %v3729, %v3742
    %v3744 = vpop.f32.mrf.mxu0
    %v3745 = vadd.f32 %v3731, %v3744
    %3746 = vdwg.mxu0
    %3747 = vmatpush.bf16.msra.mxu0 %v3670
    %3748 = vmatpush.bf16.msra.mxu0 %v3668
    %3749 = vmatpush.bf16.msra.mxu0 %v3666
    %3750 = vmatpush.bf16.msra.mxu0 %v3664
    %3751 = vmatpush.bf16.msra.mxu0 %v3662
    %3752 = vmatpush.bf16.msra.mxu0 %v3660
    %3753 = vmatpush.bf16.msra.mxu0 %v3658
    %3754 = vmatpush.bf16.msra.mxu0 %v3656
    %3755 = vmatmul.bf16.gmra.mxu0 %v3525
    %v3756 = vpop.f32.mrf.mxu0
    %v3757 = vadd.f32 0.0, %v3756
    %v3758 = vpop.f32.mrf.mxu0
    %v3759 = vadd.f32 0.0, %v3758
    %3760 = vdwg.mxu0
    %3761 = vmatpush.bf16.msra.mxu0 %v3686
    %3762 = vmatpush.bf16.msra.mxu0 %v3684
    %3763 = vmatpush.bf16.msra.mxu0 %v3682
    %3764 = vmatpush.bf16.msra.mxu0 %v3680
    %3765 = vmatpush.bf16.msra.mxu0 %v3678
    %3766 = vmatpush.bf16.msra.mxu0 %v3676
    %3767 = vmatpush.bf16.msra.mxu0 %v3674
    %3768 = vmatpush.bf16.msra.mxu0 %v3672
    %3769 = vmatmul.bf16.gmra.mxu0 %v3526
    %v3770 = vpop.f32.mrf.mxu0
    %v3771 = vadd.f32 %v3757, %v3770
    %v3772 = vpop.f32.mrf.mxu0
    %v3773 = vadd.f32 %v3759, %v3772
    %3774 = vdwg.mxu0
    %v3807 = vunpack.c.l.b16 %v3493
    %v3808 = vunpack.c.h.b16 %v3493
    %v3809 = vunpack.c.l.b16 %v3494
    %v3810 = vunpack.c.h.b16 %v3494
    %v3811 = vunpack.c.l.b16 %v3495
    %v3812 = vunpack.c.h.b16 %v3495
    %v3813 = vunpack.c.l.b16 %v3496
    %v3814 = vunpack.c.h.b16 %v3496
    %v3815 = vunpack.c.l.b16 %v3497
    %v3816 = vunpack.c.h.b16 %v3497
    %v3817 = vunpack.c.l.b16 %v3498
    %v3818 = vunpack.c.h.b16 %v3498
    %v3819 = vunpack.c.l.b16 %v3499
    %v3820 = vunpack.c.h.b16 %v3499
    %v3821 = vunpack.c.l.b16 %v3500
    %v3822 = vunpack.c.h.b16 %v3500
    %v3823 = vunpack.c.l.b16 %v3501
    %v3824 = vunpack.c.h.b16 %v3501
    %v3825 = vunpack.c.l.b16 %v3502
    %v3826 = vunpack.c.h.b16 %v3502
    %v3827 = vunpack.c.l.b16 %v3503
    %v3828 = vunpack.c.h.b16 %v3503
    %v3829 = vunpack.c.l.b16 %v3504
    %v3830 = vunpack.c.h.b16 %v3504
    %v3831 = vunpack.c.l.b16 %v3505
    %v3832 = vunpack.c.h.b16 %v3505
    %v3833 = vunpack.c.l.b16 %v3506
    %v3834 = vunpack.c.h.b16 %v3506
    %v3835 = vunpack.c.l.b16 %v3507
    %v3836 = vunpack.c.h.b16 %v3507
    %v3837 = vunpack.c.l.b16 %v3508
    %v3838 = vunpack.c.h.b16 %v3508
    %v3839 = vunpack.c.l.b16 %v3509
    %v3840 = vunpack.c.h.b16 %v3509
    %v3841 = vunpack.c.l.b16 %v3510
    %v3842 = vunpack.c.h.b16 %v3510
    %v3843 = vunpack.c.l.b16 %v3511
    %v3844 = vunpack.c.h.b16 %v3511
    %v3845 = vunpack.c.l.b16 %v3512
    %v3846 = vunpack.c.h.b16 %v3512
    %v3847 = vunpack.c.l.b16 %v3513
    %v3848 = vunpack.c.h.b16 %v3513
    %v3849 = vunpack.c.l.b16 %v3514
    %v3850 = vunpack.c.h.b16 %v3514
    %v3851 = vunpack.c.l.b16 %v3515
    %v3852 = vunpack.c.h.b16 %v3515
    %v3853 = vunpack.c.l.b16 %v3516
    %v3854 = vunpack.c.h.b16 %v3516
    %v3855 = vunpack.c.l.b16 %v3517
    %v3856 = vunpack.c.h.b16 %v3517
    %v3857 = vunpack.c.l.b16 %v3518
    %v3858 = vunpack.c.h.b16 %v3518
    %v3859 = vunpack.c.l.b16 %v3519
    %v3860 = vunpack.c.h.b16 %v3519
    %v3861 = vunpack.c.l.b16 %v3520
    %v3862 = vunpack.c.h.b16 %v3520
    %v3863 = vunpack.c.l.b16 %v3521
    %v3864 = vunpack.c.h.b16 %v3521
    %v3865 = vunpack.c.l.b16 %v3522
    %v3866 = vunpack.c.h.b16 %v3522
    %v3867 = vunpack.c.l.b16 %v3523
    %v3868 = vunpack.c.h.b16 %v3523
    %v3869 = vunpack.c.l.b16 %v3524
    %v3870 = vunpack.c.h.b16 %v3524
    %v3871 = vpack.c.b16 %v3809, %v3807
    %v3872 = vpack.c.b16 %v3810, %v3808
    %v3873 = vpack.c.b16 %v3813, %v3811
    %v3874 = vpack.c.b16 %v3814, %v3812
    %v3875 = vpack.c.b16 %v3817, %v3815
    %v3876 = vpack.c.b16 %v3818, %v3816
    %v3877 = vpack.c.b16 %v3821, %v3819
    %v3878 = vpack.c.b16 %v3822, %v3820
    %v3879 = vpack.c.b16 %v3825, %v3823
    %v3880 = vpack.c.b16 %v3826, %v3824
    %v3881 = vpack.c.b16 %v3829, %v3827
    %v3882 = vpack.c.b16 %v3830, %v3828
    %v3883 = vpack.c.b16 %v3833, %v3831
    %v3884 = vpack.c.b16 %v3834, %v3832
    %v3885 = vpack.c.b16 %v3837, %v3835
    %v3886 = vpack.c.b16 %v3838, %v3836
    %v3887 = vpack.c.b16 %v3841, %v3839
    %v3888 = vpack.c.b16 %v3842, %v3840
    %v3889 = vpack.c.b16 %v3845, %v3843
    %v3890 = vpack.c.b16 %v3846, %v3844
    %v3891 = vpack.c.b16 %v3849, %v3847
    %v3892 = vpack.c.b16 %v3850, %v3848
    %v3893 = vpack.c.b16 %v3853, %v3851
    %v3894 = vpack.c.b16 %v3854, %v3852
    %v3895 = vpack.c.b16 %v3857, %v3855
    %v3896 = vpack.c.b16 %v3858, %v3856
    %v3897 = vpack.c.b16 %v3861, %v3859
    %v3898 = vpack.c.b16 %v3862, %v3860
    %v3899 = vpack.c.b16 %v3865, %v3863
    %v3900 = vpack.c.b16 %v3866, %v3864
    %v3901 = vpack.c.b16 %v3869, %v3867
    %v3902 = vpack.c.b16 %v3870, %v3868
    %3935 = vmatpush.bf16.msra.mxu0 %v3885
    %3936 = vmatpush.bf16.msra.mxu0 %v3883
    %3937 = vmatpush.bf16.msra.mxu0 %v3881
    %3938 = vmatpush.bf16.msra.mxu0 %v3879
    %3939 = vmatpush.bf16.msra.mxu0 %v3877
    %3940 = vmatpush.bf16.msra.mxu0 %v3875
    %3941 = vmatpush.bf16.msra.mxu0 %v3873
    %3942 = vmatpush.bf16.msra.mxu0 %v3871
    %3943 = vmatmul.bf16.gmra.mxu0 %v1682
    %v3944 = vpop.f32.mrf.mxu0
    %v3945 = vadd.f32 %v3743, %v3944
    %v3946 = vpop.f32.mrf.mxu0
    %v3947 = vadd.f32 %v3745, %v3946
    %3948 = vdwg.mxu0
    %3949 = vmatpush.bf16.msra.mxu0 %v3901
    %3950 = vmatpush.bf16.msra.mxu0 %v3899
    %3951 = vmatpush.bf16.msra.mxu0 %v3897
    %3952 = vmatpush.bf16.msra.mxu0 %v3895
    %3953 = vmatpush.bf16.msra.mxu0 %v3893
    %3954 = vmatpush.bf16.msra.mxu0 %v3891
    %3955 = vmatpush.bf16.msra.mxu0 %v3889
    %3956 = vmatpush.bf16.msra.mxu0 %v3887
    %3957 = vmatmul.bf16.gmra.mxu0 %v1683
    %v3958 = vpop.f32.mrf.mxu0
    %v3959 = vadd.f32 %v3945, %v3958
    %v3960 = vpop.f32.mrf.mxu0
    %v3961 = vadd.f32 %v3947, %v3960
    %3962 = vdwg.mxu0
    %3963 = vmatpush.bf16.msra.mxu0 %v3886
    %3964 = vmatpush.bf16.msra.mxu0 %v3884
    %3965 = vmatpush.bf16.msra.mxu0 %v3882
    %3966 = vmatpush.bf16.msra.mxu0 %v3880
    %3967 = vmatpush.bf16.msra.mxu0 %v3878
    %3968 = vmatpush.bf16.msra.mxu0 %v3876
    %3969 = vmatpush.bf16.msra.mxu0 %v3874
    %3970 = vmatpush.bf16.msra.mxu0 %v3872
    %3971 = vmatmul.bf16.gmra.mxu0 %v1682
    %v3972 = vpop.f32.mrf.mxu0
    %v3973 = vadd.f32 %v3771, %v3972
    %v3974 = vpop.f32.mrf.mxu0
    %v3975 = vadd.f32 %v3773, %v3974
    %3976 = vdwg.mxu0
    %3977 = vmatpush.bf16.msra.mxu0 %v3902
    %3978 = vmatpush.bf16.msra.mxu0 %v3900
    %3979 = vmatpush.bf16.msra.mxu0 %v3898
    %3980 = vmatpush.bf16.msra.mxu0 %v3896
    %3981 = vmatpush.bf16.msra.mxu0 %v3894
    %3982 = vmatpush.bf16.msra.mxu0 %v3892
    %3983 = vmatpush.bf16.msra.mxu0 %v3890
    %3984 = vmatpush.bf16.msra.mxu0 %v3888
    %3985 = vmatmul.bf16.gmra.mxu0 %v1683
    %v3986 = vpop.f32.mrf.mxu0
    %v3987 = vadd.f32 %v3973, %v3986
    %v3988 = vpop.f32.mrf.mxu0
    %v3989 = vadd.f32 %v3975, %v3988
    %3990 = vdwg.mxu0
    %v3991 = vld [vmem:[#allocation33] sm:$0x3]
    %3993 = vset.pattern.permute.xlu0 0
    %3994 = vperm.xlu0 %3993, %v986
    %v3995 = vpop.permute.xlu0 %3994
    %3998 = vset.pattern.permute.xlu0 0
    %3999 = vperm.xlu0 %3998, %v987
    %v4000 = vpop.permute.xlu0 %3999
    %v4003 = vperm.slane %v3991, 0
    %v4004 = vperm.slane %v3991, 1
    %v4007 = vmul.f32 %v3995, %v4003
    %v4008 = vmul.f32 %v3995, %v4004
    %v4009 = vmul.f32 %v4000, %v4003
    %v4010 = vmul.f32 %v4000, %v4004
    %v4011 = vadd.f32 %v3959, %v4007
    %v4012 = vadd.f32 %v3987, %v4008
    %v4013 = vadd.f32 %v3961, %v4009
    %v4014 = vadd.f32 %v3989, %v4010
    %v4015 = vld [vmem:[#allocation34] sm:$0x3]
    %v4017 = vperm.slane %v4015, 0
    %v4018 = vperm.slane %v4015, 1
    %v4021 = vadd.f32 %v4011, %v4017
    %v4022 = vadd.f32 %v4012, %v4018
    %v4023 = vadd.f32 %v4013, %v4017
    %v4024 = vadd.f32 %v4014, %v4018
    %v4025 = vmax.f32 %v4021, 0.0
    %v4026 = vmax.f32 %v4022, 0.0
    %v4027 = vmax.f32 %v4023, 0.0
    %v4028 = vmax.f32 %v4024, 0.0
    %v4029 = vpack.c.bf16 %v4027, %v4025
    %v4030 = vpack.c.bf16 %v4028, %v4026
    %v4031 = vld [vmem:[#allocation36] sm:$0xff]
    %v4032 = vld [vmem:[#allocation36 + $0x8] sm:$0xff]
    %v4033 = vld [vmem:[#allocation36 + $0x10] sm:$0xff]
    %v4034 = vld [vmem:[#allocation36 + $0x18] sm:$0xff]
    %v4035 = vld [vmem:[#allocation36 + $0x20] sm:$0xff]
    %v4036 = vld [vmem:[#allocation36 + $0x28] sm:$0xff]
    %v4037 = vld [vmem:[#allocation36 + $0x30] sm:$0xff]
    %v4038 = vld [vmem:[#allocation36 + $0x38] sm:$0xff]
    %v4039 = vld [vmem:[#allocation36 + $0x40] sm:$0xff]
    %v4040 = vld [vmem:[#allocation36 + $0x48] sm:$0xff]
    %v4041 = vld [vmem:[#allocation36 + $0x50] sm:$0xff]
    %v4042 = vld [vmem:[#allocation36 + $0x58] sm:$0xff]
    %v4043 = vld [vmem:[#allocation36 + $0x60] sm:$0xff]
    %v4044 = vld [vmem:[#allocation36 + $0x68] sm:$0xff]
    %v4045 = vld [vmem:[#allocation36 + $0x70] sm:$0xff]
    %v4046 = vld [vmem:[#allocation36 + $0x78] sm:$0xff]
    %v4047 = vld [vmem:[#allocation36 + $0x80] sm:$0xff]
    %v4048 = vld [vmem:[#allocation36 + $0x88] sm:$0xff]
    %v4049 = vld [vmem:[#allocation36 + $0x90] sm:$0xff]
    %v4050 = vld [vmem:[#allocation36 + $0x98] sm:$0xff]
    %v4051 = vld [vmem:[#allocation36 + $0xa0] sm:$0xff]
    %v4052 = vld [vmem:[#allocation36 + $0xa8] sm:$0xff]
    %v4053 = vld [vmem:[#allocation36 + $0xb0] sm:$0xff]
    %v4054 = vld [vmem:[#allocation36 + $0xb8] sm:$0xff]
    %v4055 = vld [vmem:[#allocation36 + $0xc0] sm:$0xff]
    %v4056 = vld [vmem:[#allocation36 + $0xc8] sm:$0xff]
    %v4057 = vld [vmem:[#allocation36 + $0xd0] sm:$0xff]
    %v4058 = vld [vmem:[#allocation36 + $0xd8] sm:$0xff]
    %v4059 = vld [vmem:[#allocation36 + $0xe0] sm:$0xff]
    %v4060 = vld [vmem:[#allocation36 + $0xe8] sm:$0xff]
    %v4061 = vld [vmem:[#allocation36 + $0xf0] sm:$0xff]
    %v4062 = vld [vmem:[#allocation36 + $0xf8] sm:$0xff]
    %v4063 = vld [vmem:[#allocation37] sm:$0x3]
    %v4065 = vperm.slane %v4063, 0
    %v4066 = vperm.slane %v4063, 1
    %v4101 = vunpack.c.l.b16 %v4031
    %v4102 = vunpack.c.h.b16 %v4031
    %v4103 = vunpack.c.l.b16 %v4032
    %v4104 = vunpack.c.h.b16 %v4032
    %v4105 = vunpack.c.l.b16 %v4033
    %v4106 = vunpack.c.h.b16 %v4033
    %v4107 = vunpack.c.l.b16 %v4034
    %v4108 = vunpack.c.h.b16 %v4034
    %v4109 = vunpack.c.l.b16 %v4035
    %v4110 = vunpack.c.h.b16 %v4035
    %v4111 = vunpack.c.l.b16 %v4036
    %v4112 = vunpack.c.h.b16 %v4036
    %v4113 = vunpack.c.l.b16 %v4037
    %v4114 = vunpack.c.h.b16 %v4037
    %v4115 = vunpack.c.l.b16 %v4038
    %v4116 = vunpack.c.h.b16 %v4038
    %v4117 = vunpack.c.l.b16 %v4039
    %v4118 = vunpack.c.h.b16 %v4039
    %v4119 = vunpack.c.l.b16 %v4040
    %v4120 = vunpack.c.h.b16 %v4040
    %v4121 = vunpack.c.l.b16 %v4041
    %v4122 = vunpack.c.h.b16 %v4041
    %v4123 = vunpack.c.l.b16 %v4042
    %v4124 = vunpack.c.h.b16 %v4042
    %v4125 = vunpack.c.l.b16 %v4043
    %v4126 = vunpack.c.h.b16 %v4043
    %v4127 = vunpack.c.l.b16 %v4044
    %v4128 = vunpack.c.h.b16 %v4044
    %v4129 = vunpack.c.l.b16 %v4045
    %v4130 = vunpack.c.h.b16 %v4045
    %v4131 = vunpack.c.l.b16 %v4046
    %v4132 = vunpack.c.h.b16 %v4046
    %v4133 = vunpack.c.l.b16 %v4047
    %v4134 = vunpack.c.h.b16 %v4047
    %v4135 = vunpack.c.l.b16 %v4048
    %v4136 = vunpack.c.h.b16 %v4048
    %v4137 = vunpack.c.l.b16 %v4049
    %v4138 = vunpack.c.h.b16 %v4049
    %v4139 = vunpack.c.l.b16 %v4050
    %v4140 = vunpack.c.h.b16 %v4050
    %v4141 = vunpack.c.l.b16 %v4051
    %v4142 = vunpack.c.h.b16 %v4051
    %v4143 = vunpack.c.l.b16 %v4052
    %v4144 = vunpack.c.h.b16 %v4052
    %v4145 = vunpack.c.l.b16 %v4053
    %v4146 = vunpack.c.h.b16 %v4053
    %v4147 = vunpack.c.l.b16 %v4054
    %v4148 = vunpack.c.h.b16 %v4054
    %v4149 = vunpack.c.l.b16 %v4055
    %v4150 = vunpack.c.h.b16 %v4055
    %v4151 = vunpack.c.l.b16 %v4056
    %v4152 = vunpack.c.h.b16 %v4056
    %v4153 = vunpack.c.l.b16 %v4057
    %v4154 = vunpack.c.h.b16 %v4057
    %v4155 = vunpack.c.l.b16 %v4058
    %v4156 = vunpack.c.h.b16 %v4058
    %v4157 = vunpack.c.l.b16 %v4059
    %v4158 = vunpack.c.h.b16 %v4059
    %v4159 = vunpack.c.l.b16 %v4060
    %v4160 = vunpack.c.h.b16 %v4060
    %v4161 = vunpack.c.l.b16 %v4061
    %v4162 = vunpack.c.h.b16 %v4061
    %v4163 = vunpack.c.l.b16 %v4062
    %v4164 = vunpack.c.h.b16 %v4062
    %v4165 = vpack.c.b16 %v4103, %v4101
    %v4166 = vpack.c.b16 %v4104, %v4102
    %v4167 = vpack.c.b16 %v4107, %v4105
    %v4168 = vpack.c.b16 %v4108, %v4106
    %v4169 = vpack.c.b16 %v4111, %v4109
    %v4170 = vpack.c.b16 %v4112, %v4110
    %v4171 = vpack.c.b16 %v4115, %v4113
    %v4172 = vpack.c.b16 %v4116, %v4114
    %v4173 = vpack.c.b16 %v4119, %v4117
    %v4174 = vpack.c.b16 %v4120, %v4118
    %v4175 = vpack.c.b16 %v4123, %v4121
    %v4176 = vpack.c.b16 %v4124, %v4122
    %v4177 = vpack.c.b16 %v4127, %v4125
    %v4178 = vpack.c.b16 %v4128, %v4126
    %v4179 = vpack.c.b16 %v4131, %v4129
    %v4180 = vpack.c.b16 %v4132, %v4130
    %v4181 = vpack.c.b16 %v4135, %v4133
    %v4182 = vpack.c.b16 %v4136, %v4134
    %v4183 = vpack.c.b16 %v4139, %v4137
    %v4184 = vpack.c.b16 %v4140, %v4138
    %v4185 = vpack.c.b16 %v4143, %v4141
    %v4186 = vpack.c.b16 %v4144, %v4142
    %v4187 = vpack.c.b16 %v4147, %v4145
    %v4188 = vpack.c.b16 %v4148, %v4146
    %v4189 = vpack.c.b16 %v4151, %v4149
    %v4190 = vpack.c.b16 %v4152, %v4150
    %v4191 = vpack.c.b16 %v4155, %v4153
    %v4192 = vpack.c.b16 %v4156, %v4154
    %v4193 = vpack.c.b16 %v4159, %v4157
    %v4194 = vpack.c.b16 %v4160, %v4158
    %v4195 = vpack.c.b16 %v4163, %v4161
    %v4196 = vpack.c.b16 %v4164, %v4162
    %4229 = vmatpush.bf16.msra.mxu0 %v4179
    %4230 = vmatpush.bf16.msra.mxu0 %v4177
    %4231 = vmatpush.bf16.msra.mxu0 %v4175
    %4232 = vmatpush.bf16.msra.mxu0 %v4173
    %4233 = vmatpush.bf16.msra.mxu0 %v4171
    %4234 = vmatpush.bf16.msra.mxu0 %v4169
    %4235 = vmatpush.bf16.msra.mxu0 %v4167
    %4236 = vmatpush.bf16.msra.mxu0 %v4165
    %4237 = vmatmul.bf16.gmra.mxu0 %v4029
    %v4238 = vpop.f32.mrf.mxu0
    %v4239 = vadd.f32 %v4065, %v4238
    %v4240 = vpop.f32.mrf.mxu0
    %v4241 = vadd.f32 %v4065, %v4240
    %4242 = vdwg.mxu0
    %4243 = vmatpush.bf16.msra.mxu0 %v4195
    %4244 = vmatpush.bf16.msra.mxu0 %v4193
    %4245 = vmatpush.bf16.msra.mxu0 %v4191
    %4246 = vmatpush.bf16.msra.mxu0 %v4189
    %4247 = vmatpush.bf16.msra.mxu0 %v4187
    %4248 = vmatpush.bf16.msra.mxu0 %v4185
    %4249 = vmatpush.bf16.msra.mxu0 %v4183
    %4250 = vmatpush.bf16.msra.mxu0 %v4181
    %4251 = vmatmul.bf16.gmra.mxu0 %v4030
    %v4252 = vpop.f32.mrf.mxu0
    %v4253 = vadd.f32 %v4239, %v4252
    %v4254 = vpop.f32.mrf.mxu0
    %v4255 = vadd.f32 %v4241, %v4254
    %4256 = vdwg.mxu0
    %4257 = vmatpush.bf16.msra.mxu0 %v4180
    %4258 = vmatpush.bf16.msra.mxu0 %v4178
    %4259 = vmatpush.bf16.msra.mxu0 %v4176
    %4260 = vmatpush.bf16.msra.mxu0 %v4174
    %4261 = vmatpush.bf16.msra.mxu0 %v4172
    %4262 = vmatpush.bf16.msra.mxu0 %v4170
    %4263 = vmatpush.bf16.msra.mxu0 %v4168
    %4264 = vmatpush.bf16.msra.mxu0 %v4166
    %4265 = vmatmul.bf16.gmra.mxu0 %v4029
    %v4266 = vpop.f32.mrf.mxu0
    %v4267 = vadd.f32 %v4066, %v4266
    %v4268 = vpop.f32.mrf.mxu0
    %v4269 = vadd.f32 %v4066, %v4268
    %4270 = vdwg.mxu0
    %4271 = vmatpush.bf16.msra.mxu0 %v4196
    %4272 = vmatpush.bf16.msra.mxu0 %v4194
    %4273 = vmatpush.bf16.msra.mxu0 %v4192
    %4274 = vmatpush.bf16.msra.mxu0 %v4190
    %4275 = vmatpush.bf16.msra.mxu0 %v4188
    %4276 = vmatpush.bf16.msra.mxu0 %v4186
    %4277 = vmatpush.bf16.msra.mxu0 %v4184
    %4278 = vmatpush.bf16.msra.mxu0 %v4182
    %4279 = vmatmul.bf16.gmra.mxu0 %v4030
    %v4280 = vpop.f32.mrf.mxu0
    %v4281 = vadd.f32 %v4267, %v4280
    %v4282 = vpop.f32.mrf.mxu0
    %v4283 = vadd.f32 %v4269, %v4282
    %4284 = vdwg.mxu0
    %v4285 = vmax.f32 %v4253, 0.0
    %v4286 = vmax.f32 %v4281, 0.0
    %v4287 = vmax.f32 %v4255, 0.0
    %v4288 = vmax.f32 %v4283, 0.0
    %v4289 = vpack.c.bf16 %v4287, %v4285
    %v4290 = vpack.c.bf16 %v4288, %v4286
    %v4291 = vld [vmem:[%s77] sm:$0xf]
    %v4292 = vld [vmem:[%s77 + $0x4] sm:$0xf]
    %v4293 = vld [vmem:[%s77 + $0x8] sm:$0xf]
    %v4294 = vld [vmem:[%s77 + $0xc] sm:$0xf]
    %v4295 = vld [vmem:[%s77 + $0x10] sm:$0xf]
    %v4296 = vld [vmem:[%s77 + $0x14] sm:$0xf]
    %v4297 = vld [vmem:[%s77 + $0x18] sm:$0xf]
    %v4298 = vld [vmem:[%s77 + $0x1c] sm:$0xf]
    %v4299 = vld [vmem:[%s77 + $0x20] sm:$0xf]
    %v4300 = vld [vmem:[%s77 + $0x24] sm:$0xf]
    %v4301 = vld [vmem:[%s77 + $0x28] sm:$0xf]
    %v4302 = vld [vmem:[%s77 + $0x2c] sm:$0xf]
    %v4303 = vld [vmem:[%s77 + $0x30] sm:$0xf]
    %v4304 = vld [vmem:[%s77 + $0x34] sm:$0xf]
    %v4305 = vld [vmem:[%s77 + $0x38] sm:$0xf]
    %v4306 = vld [vmem:[%s77 + $0x3c] sm:$0xf]
    %v4307 = vld [vmem:[%s77 + $0x40] sm:$0xf]
    %v4308 = vld [vmem:[%s77 + $0x44] sm:$0xf]
    %v4309 = vld [vmem:[%s77 + $0x48] sm:$0xf]
    %v4310 = vld [vmem:[%s77 + $0x4c] sm:$0xf]
    %v4311 = vld [vmem:[%s77 + $0x50] sm:$0xf]
    %v4312 = vld [vmem:[%s77 + $0x54] sm:$0xf]
    %v4313 = vld [vmem:[%s77 + $0x58] sm:$0xf]
    %v4314 = vld [vmem:[%s77 + $0x5c] sm:$0xf]
    %v4315 = vld [vmem:[%s77 + $0x60] sm:$0xf]
    %v4316 = vld [vmem:[%s77 + $0x64] sm:$0xf]
    %v4317 = vld [vmem:[%s77 + $0x68] sm:$0xf]
    %v4318 = vld [vmem:[%s77 + $0x6c] sm:$0xf]
    %v4319 = vld [vmem:[%s77 + $0x70] sm:$0xf]
    %v4320 = vld [vmem:[%s77 + $0x74] sm:$0xf]
    %v4321 = vld [vmem:[%s77 + $0x78] sm:$0xf]
    %v4322 = vld [vmem:[%s77 + $0x7c] sm:$0xf]
    %v4323 = vld [vmem:[#allocation39] sm:$0x1]
    %v4325 = vperm.slane %v4323, 0
    %v4359 = vunpack.c.l.b16 %v4291
    %v4360 = vunpack.c.l.b16 %v4292
    %v4361 = vunpack.c.l.b16 %v4293
    %v4362 = vunpack.c.l.b16 %v4294
    %v4363 = vunpack.c.l.b16 %v4295
    %v4364 = vunpack.c.l.b16 %v4296
    %v4365 = vunpack.c.l.b16 %v4297
    %v4366 = vunpack.c.l.b16 %v4298
    %v4367 = vunpack.c.l.b16 %v4299
    %v4368 = vunpack.c.l.b16 %v4300
    %v4369 = vunpack.c.l.b16 %v4301
    %v4370 = vunpack.c.l.b16 %v4302
    %v4371 = vunpack.c.l.b16 %v4303
    %v4372 = vunpack.c.l.b16 %v4304
    %v4373 = vunpack.c.l.b16 %v4305
    %v4374 = vunpack.c.l.b16 %v4306
    %v4375 = vunpack.c.l.b16 %v4307
    %v4376 = vunpack.c.l.b16 %v4308
    %v4377 = vunpack.c.l.b16 %v4309
    %v4378 = vunpack.c.l.b16 %v4310
    %v4379 = vunpack.c.l.b16 %v4311
    %v4380 = vunpack.c.l.b16 %v4312
    %v4381 = vunpack.c.l.b16 %v4313
    %v4382 = vunpack.c.l.b16 %v4314
    %v4383 = vunpack.c.l.b16 %v4315
    %v4384 = vunpack.c.l.b16 %v4316
    %v4385 = vunpack.c.l.b16 %v4317
    %v4386 = vunpack.c.l.b16 %v4318
    %v4387 = vunpack.c.l.b16 %v4319
    %v4388 = vunpack.c.l.b16 %v4320
    %v4389 = vunpack.c.l.b16 %v4321
    %v4390 = vunpack.c.l.b16 %v4322
    %v4391 = vpack.c.b16 %v4360, %v4359
    %v4392 = vpack.c.b16 %v4362, %v4361
    %v4393 = vpack.c.b16 %v4364, %v4363
    %v4394 = vpack.c.b16 %v4366, %v4365
    %v4395 = vpack.c.b16 %v4368, %v4367
    %v4396 = vpack.c.b16 %v4370, %v4369
    %v4397 = vpack.c.b16 %v4372, %v4371
    %v4398 = vpack.c.b16 %v4374, %v4373
    %v4399 = vpack.c.b16 %v4376, %v4375
    %v4400 = vpack.c.b16 %v4378, %v4377
    %v4401 = vpack.c.b16 %v4380, %v4379
    %v4402 = vpack.c.b16 %v4382, %v4381
    %v4403 = vpack.c.b16 %v4384, %v4383
    %v4404 = vpack.c.b16 %v4386, %v4385
    %v4405 = vpack.c.b16 %v4388, %v4387
    %v4406 = vpack.c.b16 %v4390, %v4389
    %4423 = vmatpush.bf16.msra.mxu0 %v4398
    %4424 = vmatpush.bf16.msra.mxu0 %v4397
    %4425 = vmatpush.bf16.msra.mxu0 %v4396
    %4426 = vmatpush.bf16.msra.mxu0 %v4395
    %4427 = vmatpush.bf16.msra.mxu0 %v4394
    %4428 = vmatpush.bf16.msra.mxu0 %v4393
    %4429 = vmatpush.bf16.msra.mxu0 %v4392
    %4430 = vmatpush.bf16.msra.mxu0 %v4391
    %4431 = vmatmul.bf16.gmra.mxu0 %v4289
    %v4432 = vpop.f32.mrf.mxu0
    %v4433 = vadd.f32 %v4325, %v4432
    %v4434 = vpop.f32.mrf.mxu0
    %v4435 = vadd.f32 %v4325, %v4434
    %4436 = vdwg.mxu0
    %4437 = vmatpush.bf16.msra.mxu0 %v4406
    %4438 = vmatpush.bf16.msra.mxu0 %v4405
    %4439 = vmatpush.bf16.msra.mxu0 %v4404
    %4440 = vmatpush.bf16.msra.mxu0 %v4403
    %4441 = vmatpush.bf16.msra.mxu0 %v4402
    %4442 = vmatpush.bf16.msra.mxu0 %v4401
    %4443 = vmatpush.bf16.msra.mxu0 %v4400
    %4444 = vmatpush.bf16.msra.mxu0 %v4399
    %4445 = vmatmul.bf16.gmra.mxu0 %v4290
    %v4446 = vpop.f32.mrf.mxu0
    %v4447 = vadd.f32 %v4433, %v4446
    %v4448 = vpop.f32.mrf.mxu0
    %v4449 = vadd.f32 %v4435, %v4448
    %4450 = vdwg.mxu0
    %v4451 = vld [vmem:[%s81] sm:$0xf]
    %v4452 = vld [vmem:[%s81 + $0x4] sm:$0xf]
    %v4453 = vld [vmem:[%s81 + $0x8] sm:$0xf]
    %v4454 = vld [vmem:[%s81 + $0xc] sm:$0xf]
    %v4455 = vld [vmem:[%s81 + $0x10] sm:$0xf]
    %v4456 = vld [vmem:[%s81 + $0x14] sm:$0xf]
    %v4457 = vld [vmem:[%s81 + $0x18] sm:$0xf]
    %v4458 = vld [vmem:[%s81 + $0x1c] sm:$0xf]
    %v4459 = vld [vmem:[%s81 + $0x20] sm:$0xf]
    %v4460 = vld [vmem:[%s81 + $0x24] sm:$0xf]
    %v4461 = vld [vmem:[%s81 + $0x28] sm:$0xf]
    %v4462 = vld [vmem:[%s81 + $0x2c] sm:$0xf]
    %v4463 = vld [vmem:[%s81 + $0x30] sm:$0xf]
    %v4464 = vld [vmem:[%s81 + $0x34] sm:$0xf]
    %v4465 = vld [vmem:[%s81 + $0x38] sm:$0xf]
    %v4466 = vld [vmem:[%s81 + $0x3c] sm:$0xf]
    %v4467 = vld [vmem:[%s81 + $0x40] sm:$0xf]
    %v4468 = vld [vmem:[%s81 + $0x44] sm:$0xf]
    %v4469 = vld [vmem:[%s81 + $0x48] sm:$0xf]
    %v4470 = vld [vmem:[%s81 + $0x4c] sm:$0xf]
    %v4471 = vld [vmem:[%s81 + $0x50] sm:$0xf]
    %v4472 = vld [vmem:[%s81 + $0x54] sm:$0xf]
    %v4473 = vld [vmem:[%s81 + $0x58] sm:$0xf]
    %v4474 = vld [vmem:[%s81 + $0x5c] sm:$0xf]
    %v4475 = vld [vmem:[%s81 + $0x60] sm:$0xf]
    %v4476 = vld [vmem:[%s81 + $0x64] sm:$0xf]
    %v4477 = vld [vmem:[%s81 + $0x68] sm:$0xf]
    %v4478 = vld [vmem:[%s81 + $0x6c] sm:$0xf]
    %v4479 = vld [vmem:[%s81 + $0x70] sm:$0xf]
    %v4480 = vld [vmem:[%s81 + $0x74] sm:$0xf]
    %v4481 = vld [vmem:[%s81 + $0x78] sm:$0xf]
    %v4482 = vld [vmem:[%s81 + $0x7c] sm:$0xf]
    %v4483 = vld [vmem:[#allocation40] sm:$0x1]
    %v4485 = vperm.slane %v4483, 0
    %v4519 = vunpack.c.l.b16 %v4451
    %v4520 = vunpack.c.l.b16 %v4452
    %v4521 = vunpack.c.l.b16 %v4453
    %v4522 = vunpack.c.l.b16 %v4454
    %v4523 = vunpack.c.l.b16 %v4455
    %v4524 = vunpack.c.l.b16 %v4456
    %v4525 = vunpack.c.l.b16 %v4457
    %v4526 = vunpack.c.l.b16 %v4458
    %v4527 = vunpack.c.l.b16 %v4459
    %v4528 = vunpack.c.l.b16 %v4460
    %v4529 = vunpack.c.l.b16 %v4461
    %v4530 = vunpack.c.l.b16 %v4462
    %v4531 = vunpack.c.l.b16 %v4463
    %v4532 = vunpack.c.l.b16 %v4464
    %v4533 = vunpack.c.l.b16 %v4465
    %v4534 = vunpack.c.l.b16 %v4466
    %v4535 = vunpack.c.l.b16 %v4467
    %v4536 = vunpack.c.l.b16 %v4468
    %v4537 = vunpack.c.l.b16 %v4469
    %v4538 = vunpack.c.l.b16 %v4470
    %v4539 = vunpack.c.l.b16 %v4471
    %v4540 = vunpack.c.l.b16 %v4472
    %v4541 = vunpack.c.l.b16 %v4473
    %v4542 = vunpack.c.l.b16 %v4474
    %v4543 = vunpack.c.l.b16 %v4475
    %v4544 = vunpack.c.l.b16 %v4476
    %v4545 = vunpack.c.l.b16 %v4477
    %v4546 = vunpack.c.l.b16 %v4478
    %v4547 = vunpack.c.l.b16 %v4479
    %v4548 = vunpack.c.l.b16 %v4480
    %v4549 = vunpack.c.l.b16 %v4481
    %v4550 = vunpack.c.l.b16 %v4482
    %v4551 = vpack.c.b16 %v4520, %v4519
    %v4552 = vpack.c.b16 %v4522, %v4521
    %v4553 = vpack.c.b16 %v4524, %v4523
    %v4554 = vpack.c.b16 %v4526, %v4525
    %v4555 = vpack.c.b16 %v4528, %v4527
    %v4556 = vpack.c.b16 %v4530, %v4529
    %v4557 = vpack.c.b16 %v4532, %v4531
    %v4558 = vpack.c.b16 %v4534, %v4533
    %v4559 = vpack.c.b16 %v4536, %v4535
    %v4560 = vpack.c.b16 %v4538, %v4537
    %v4561 = vpack.c.b16 %v4540, %v4539
    %v4562 = vpack.c.b16 %v4542, %v4541
    %v4563 = vpack.c.b16 %v4544, %v4543
    %v4564 = vpack.c.b16 %v4546, %v4545
    %v4565 = vpack.c.b16 %v4548, %v4547
    %v4566 = vpack.c.b16 %v4550, %v4549
    %4583 = vmatpush.bf16.msra.mxu0 %v4558
    %4584 = vmatpush.bf16.msra.mxu0 %v4557
    %4585 = vmatpush.bf16.msra.mxu0 %v4556
    %4586 = vmatpush.bf16.msra.mxu0 %v4555
    %4587 = vmatpush.bf16.msra.mxu0 %v4554
    %4588 = vmatpush.bf16.msra.mxu0 %v4553
    %4589 = vmatpush.bf16.msra.mxu0 %v4552
    %4590 = vmatpush.bf16.msra.mxu0 %v4551
    %4591 = vmatmul.bf16.gmra.mxu0 %v4289
    %v4592 = vpop.f32.mrf.mxu0
    %v4593 = vadd.f32 %v4485, %v4592
    %v4594 = vpop.f32.mrf.mxu0
    %v4595 = vadd.f32 %v4485, %v4594
    %4596 = vdwg.mxu0
    %4597 = vmatpush.bf16.msra.mxu0 %v4566
    %4598 = vmatpush.bf16.msra.mxu0 %v4565
    %4599 = vmatpush.bf16.msra.mxu0 %v4564
    %4600 = vmatpush.bf16.msra.mxu0 %v4563
    %4601 = vmatpush.bf16.msra.mxu0 %v4562
    %4602 = vmatpush.bf16.msra.mxu0 %v4561
    %4603 = vmatpush.bf16.msra.mxu0 %v4560
    %4604 = vmatpush.bf16.msra.mxu0 %v4559
    %4605 = vmatmul.bf16.gmra.mxu0 %v4290
    %v4606 = vpop.f32.mrf.mxu0
    %v4607 = vadd.f32 %v4593, %v4606
    %v4608 = vpop.f32.mrf.mxu0
    %v4609 = vadd.f32 %v4595, %v4608
    %4610 = vdwg.mxu0
    %v4611 = vmax.f32 %v4607, 0.0
    %v4612 = vmax.f32 %v4609, 0.0
    %vm4613 = vcmp.ne.f32.partialorder %v4607, %v4607
    %vm4614 = vcmp.ne.f32.partialorder %v4609, %v4609
    %v4615 = vadd.f32 %v4607, 0.0
    %v4616 = vadd.f32 %v4609, 0.0
    %v4617 = vand.u32 2147483647, %v4607
    %v4618 = vand.u32 2147483647, %v4609
    %v4619 = vsub.f32 0.0, %v4617
    %v4620 = vsub.f32 0.0, %v4618
    %v4621 = vmul.f32 %v4619, 1.442695
    %v4622 = vpow.pop %v4621
    %v4623 = vmul.f32 %v4620, 1.442695
    %v4624 = vpow.pop %v4623
    %v4625 = vadd.f32 %v4622, 1.0
    %v4626 = vlog2.pop %v4625
    %v4627 = vmul.f32 %v4626, 0.6931472
    %v4628 = vmul.f32 -0.5, %v4622
    %v4629 = vadd.f32 %v4628, 1.0
    %v4630 = vmul.f32 %v4629, %v4622
    %v4631 = vand.u32 2147483647, %v4622
    %vm4632 = vcmp.lt.f32.partialorder %v4631, 0.0004427343
    %v4633 = vsel %vm4632, %v4630, %v4627
    %v4634 = vadd.f32 %v4624, 1.0
    %v4635 = vlog2.pop %v4634
    %v4636 = vmul.f32 %v4635, 0.6931472
    %v4637 = vmul.f32 -0.5, %v4624
    %v4638 = vadd.f32 %v4637, 1.0
    %v4639 = vmul.f32 %v4638, %v4624
    %v4640 = vand.u32 2147483647, %v4624
    %vm4641 = vcmp.lt.f32.partialorder %v4640, 0.0004427343
    %v4642 = vsel %vm4641, %v4639, %v4636
    %v4643 = vadd.f32 %v4611, %v4633
    %v4644 = vadd.f32 %v4612, %v4642
    %v4645 = vsel %vm4613, %v4615, %v4643
    %v4646 = vsel %vm4614, %v4616, %v4644
    %v4647 = vadd.f32 %v4645, 1e-05
    %v4648 = vadd.f32 %v4646, 1e-05
    %v4649 = vld [vmem:[%s11] sm:$0xff]
    %v4650 = vld [vmem:[%s11 + $0x8] sm:$0x3]
    %v4651 = vmul.f32 %v4649, %v4647
    %v4652 = vmul.f32 %v4650, %v4648
    %v4653 = vadd.f32 %v4447, %v4651
    %v4654 = vadd.f32 %v4449, %v4652
    %v4655 = vpack.c.bf16 %v4654, %v4653
    %v4656 = vld [vmem:[#allocation42] sm:$0xff]
    %v4657 = vld [vmem:[#allocation42 + $0x8] sm:$0xff]
    %v4658 = vld [vmem:[#allocation42 + $0x10] sm:$0xff]
    %v4659 = vld [vmem:[#allocation42 + $0x18] sm:$0xff]
    %v4660 = vld [vmem:[#allocation43] sm:$0xff]
    %v4661 = vld [vmem:[#allocation43 + $0x8] sm:$0xff]
    %v4662 = vld [vmem:[#allocation43 + $0x10] sm:$0xff]
    %v4663 = vld [vmem:[#allocation43 + $0x18] sm:$0xff]
    %v4664 = vld [vmem:[#allocation43 + $0x20] sm:$0xff]
    %v4665 = vld [vmem:[#allocation43 + $0x28] sm:$0xff]
    %v4666 = vld [vmem:[#allocation43 + $0x30] sm:$0xff]
    %v4667 = vld [vmem:[#allocation43 + $0x38] sm:$0xff]
    %v4668 = vld [vmem:[#allocation43 + $0x40] sm:$0xff]
    %v4669 = vld [vmem:[#allocation43 + $0x48] sm:$0xff]
    %v4670 = vld [vmem:[#allocation43 + $0x50] sm:$0xff]
    %v4671 = vld [vmem:[#allocation43 + $0x58] sm:$0xff]
    %v4672 = vld [vmem:[#allocation43 + $0x60] sm:$0xff]
    %v4673 = vld [vmem:[#allocation43 + $0x68] sm:$0xff]
    %v4674 = vld [vmem:[#allocation43 + $0x70] sm:$0xff]
    %v4675 = vld [vmem:[#allocation43 + $0x78] sm:$0xff]
    %v4676 = vld [vmem:[#allocation43 + $0x80] sm:$0xff]
    %v4677 = vld [vmem:[#allocation43 + $0x88] sm:$0xff]
    %v4678 = vld [vmem:[#allocation43 + $0x90] sm:$0xff]
    %v4679 = vld [vmem:[#allocation43 + $0x98] sm:$0xff]
    %v4680 = vld [vmem:[#allocation43 + $0xa0] sm:$0xff]
    %v4681 = vld [vmem:[#allocation43 + $0xa8] sm:$0xff]
    %v4682 = vld [vmem:[#allocation43 + $0xb0] sm:$0xff]
    %v4683 = vld [vmem:[#allocation43 + $0xb8] sm:$0xff]
    %v4684 = vld [vmem:[#allocation43 + $0xc0] sm:$0xff]
    %v4685 = vld [vmem:[#allocation43 + $0xc8] sm:$0xff]
    %v4686 = vld [vmem:[#allocation43 + $0xd0] sm:$0xff]
    %v4687 = vld [vmem:[#allocation43 + $0xd8] sm:$0xff]
    %v4688 = vld [vmem:[#allocation43 + $0xe0] sm:$0xff]
    %v4689 = vld [vmem:[#allocation43 + $0xe8] sm:$0xff]
    %v4690 = vld [vmem:[#allocation43 + $0xf0] sm:$0xff]
    %v4691 = vld [vmem:[#allocation43 + $0xf8] sm:$0xff]
    %v4724 = vunpack.c.l.b16 %v4660
    %v4725 = vunpack.c.h.b16 %v4660
    %v4726 = vunpack.c.l.b16 %v4661
    %v4727 = vunpack.c.h.b16 %v4661
    %v4728 = vunpack.c.l.b16 %v4662
    %v4729 = vunpack.c.h.b16 %v4662
    %v4730 = vunpack.c.l.b16 %v4663
    %v4731 = vunpack.c.h.b16 %v4663
    %v4732 = vunpack.c.l.b16 %v4664
    %v4733 = vunpack.c.h.b16 %v4664
    %v4734 = vunpack.c.l.b16 %v4665
    %v4735 = vunpack.c.h.b16 %v4665
    %v4736 = vunpack.c.l.b16 %v4666
    %v4737 = vunpack.c.h.b16 %v4666
    %v4738 = vunpack.c.l.b16 %v4667
    %v4739 = vunpack.c.h.b16 %v4667
    %v4740 = vunpack.c.l.b16 %v4668
    %v4741 = vunpack.c.h.b16 %v4668
    %v4742 = vunpack.c.l.b16 %v4669
    %v4743 = vunpack.c.h.b16 %v4669
    %v4744 = vunpack.c.l.b16 %v4670
    %v4745 = vunpack.c.h.b16 %v4670
    %v4746 = vunpack.c.l.b16 %v4671
    %v4747 = vunpack.c.h.b16 %v4671
    %v4748 = vunpack.c.l.b16 %v4672
    %v4749 = vunpack.c.h.b16 %v4672
    %v4750 = vunpack.c.l.b16 %v4673
    %v4751 = vunpack.c.h.b16 %v4673
    %v4752 = vunpack.c.l.b16 %v4674
    %v4753 = vunpack.c.h.b16 %v4674
    %v4754 = vunpack.c.l.b16 %v4675
    %v4755 = vunpack.c.h.b16 %v4675
    %v4756 = vunpack.c.l.b16 %v4676
    %v4757 = vunpack.c.h.b16 %v4676
    %v4758 = vunpack.c.l.b16 %v4677
    %v4759 = vunpack.c.h.b16 %v4677
    %v4760 = vunpack.c.l.b16 %v4678
    %v4761 = vunpack.c.h.b16 %v4678
    %v4762 = vunpack.c.l.b16 %v4679
    %v4763 = vunpack.c.h.b16 %v4679
    %v4764 = vunpack.c.l.b16 %v4680
    %v4765 = vunpack.c.h.b16 %v4680
    %v4766 = vunpack.c.l.b16 %v4681
    %v4767 = vunpack.c.h.b16 %v4681
    %v4768 = vunpack.c.l.b16 %v4682
    %v4769 = vunpack.c.h.b16 %v4682
    %v4770 = vunpack.c.l.b16 %v4683
    %v4771 = vunpack.c.h.b16 %v4683
    %v4772 = vunpack.c.l.b16 %v4684
    %v4773 = vunpack.c.h.b16 %v4684
    %v4774 = vunpack.c.l.b16 %v4685
    %v4775 = vunpack.c.h.b16 %v4685
    %v4776 = vunpack.c.l.b16 %v4686
    %v4777 = vunpack.c.h.b16 %v4686
    %v4778 = vunpack.c.l.b16 %v4687
    %v4779 = vunpack.c.h.b16 %v4687
    %v4780 = vunpack.c.l.b16 %v4688
    %v4781 = vunpack.c.h.b16 %v4688
    %v4782 = vunpack.c.l.b16 %v4689
    %v4783 = vunpack.c.h.b16 %v4689
    %v4784 = vunpack.c.l.b16 %v4690
    %v4785 = vunpack.c.h.b16 %v4690
    %v4786 = vunpack.c.l.b16 %v4691
    %v4787 = vunpack.c.h.b16 %v4691
    %v4788 = vpack.c.b16 %v4726, %v4724
    %v4789 = vpack.c.b16 %v4727, %v4725
    %v4790 = vpack.c.b16 %v4730, %v4728
    %v4791 = vpack.c.b16 %v4731, %v4729
    %v4792 = vpack.c.b16 %v4734, %v4732
    %v4793 = vpack.c.b16 %v4735, %v4733
    %v4794 = vpack.c.b16 %v4738, %v4736
    %v4795 = vpack.c.b16 %v4739, %v4737
    %v4796 = vpack.c.b16 %v4742, %v4740
    %v4797 = vpack.c.b16 %v4743, %v4741
    %v4798 = vpack.c.b16 %v4746, %v4744
    %v4799 = vpack.c.b16 %v4747, %v4745
    %v4800 = vpack.c.b16 %v4750, %v4748
    %v4801 = vpack.c.b16 %v4751, %v4749
    %v4802 = vpack.c.b16 %v4754, %v4752
    %v4803 = vpack.c.b16 %v4755, %v4753
    %v4804 = vpack.c.b16 %v4758, %v4756
    %v4805 = vpack.c.b16 %v4759, %v4757
    %v4806 = vpack.c.b16 %v4762, %v4760
    %v4807 = vpack.c.b16 %v4763, %v4761
    %v4808 = vpack.c.b16 %v4766, %v4764
    %v4809 = vpack.c.b16 %v4767, %v4765
    %v4810 = vpack.c.b16 %v4770, %v4768
    %v4811 = vpack.c.b16 %v4771, %v4769
    %v4812 = vpack.c.b16 %v4774, %v4772
    %v4813 = vpack.c.b16 %v4775, %v4773
    %v4814 = vpack.c.b16 %v4778, %v4776
    %v4815 = vpack.c.b16 %v4779, %v4777
    %v4816 = vpack.c.b16 %v4782, %v4780
    %v4817 = vpack.c.b16 %v4783, %v4781
    %v4818 = vpack.c.b16 %v4786, %v4784
    %v4819 = vpack.c.b16 %v4787, %v4785
    %4852 = vmatpush.bf16.msra.mxu0 %v4802
    %4853 = vmatpush.bf16.msra.mxu0 %v4800
    %4854 = vmatpush.bf16.msra.mxu0 %v4798
    %4855 = vmatpush.bf16.msra.mxu0 %v4796
    %4856 = vmatpush.bf16.msra.mxu0 %v4794
    %4857 = vmatpush.bf16.msra.mxu0 %v4792
    %4858 = vmatpush.bf16.msra.mxu0 %v4790
    %4859 = vmatpush.bf16.msra.mxu0 %v4788
    %4860 = vmatmul.bf16.gmra.mxu0 %v3525
    %v4861 = vpop.f32.mrf.mxu0
    %v4862 = vadd.f32 0.0, %v4861
    %v4863 = vpop.f32.mrf.mxu0
    %v4864 = vadd.f32 0.0, %v4863
    %4865 = vdwg.mxu0
    %4866 = vmatpush.bf16.msra.mxu0 %v4818
    %4867 = vmatpush.bf16.msra.mxu0 %v4816
    %4868 = vmatpush.bf16.msra.mxu0 %v4814
    %4869 = vmatpush.bf16.msra.mxu0 %v4812
    %4870 = vmatpush.bf16.msra.mxu0 %v4810
    %4871 = vmatpush.bf16.msra.mxu0 %v4808
    %4872 = vmatpush.bf16.msra.mxu0 %v4806
    %4873 = vmatpush.bf16.msra.mxu0 %v4804
    %4874 = vmatmul.bf16.gmra.mxu0 %v3526
    %v4875 = vpop.f32.mrf.mxu0
    %v4876 = vadd.f32 %v4862, %v4875
    %v4877 = vpop.f32.mrf.mxu0
    %v4878 = vadd.f32 %v4864, %v4877
    %4879 = vdwg.mxu0
    %4880 = vmatpush.bf16.msra.mxu0 %v4803
    %4881 = vmatpush.bf16.msra.mxu0 %v4801
    %4882 = vmatpush.bf16.msra.mxu0 %v4799
    %4883 = vmatpush.bf16.msra.mxu0 %v4797
    %4884 = vmatpush.bf16.msra.mxu0 %v4795
    %4885 = vmatpush.bf16.msra.mxu0 %v4793
    %4886 = vmatpush.bf16.msra.mxu0 %v4791
    %4887 = vmatpush.bf16.msra.mxu0 %v4789
    %4888 = vmatmul.bf16.gmra.mxu0 %v3525
    %v4889 = vpop.f32.mrf.mxu0
    %v4890 = vadd.f32 0.0, %v4889
    %v4891 = vpop.f32.mrf.mxu0
    %v4892 = vadd.f32 0.0, %v4891
    %4893 = vdwg.mxu0
    %4894 = vmatpush.bf16.msra.mxu0 %v4819
    %4895 = vmatpush.bf16.msra.mxu0 %v4817
    %4896 = vmatpush.bf16.msra.mxu0 %v4815
    %4897 = vmatpush.bf16.msra.mxu0 %v4813
    %4898 = vmatpush.bf16.msra.mxu0 %v4811
    %4899 = vmatpush.bf16.msra.mxu0 %v4809
    %4900 = vmatpush.bf16.msra.mxu0 %v4807
    %4901 = vmatpush.bf16.msra.mxu0 %v4805
    %4902 = vmatmul.bf16.gmra.mxu0 %v3526
    %v4903 = vpop.f32.mrf.mxu0
    %v4904 = vadd.f32 %v4890, %v4903
    %v4905 = vpop.f32.mrf.mxu0
    %v4906 = vadd.f32 %v4892, %v4905
    %4907 = vdwg.mxu0
    %v4912 = vunpack.c.l.b16 %v4656
    %v4913 = vunpack.c.h.b16 %v4656
    %v4914 = vunpack.c.l.b16 %v4657
    %v4915 = vunpack.c.h.b16 %v4657
    %v4916 = vunpack.c.l.b16 %v4658
    %v4917 = vunpack.c.h.b16 %v4658
    %v4918 = vunpack.c.l.b16 %v4659
    %v4919 = vunpack.c.h.b16 %v4659
    %v4920 = vpack.c.b16 %v4914, %v4912
    %v4921 = vpack.c.b16 %v4915, %v4913
    %v4922 = vpack.c.b16 %v4918, %v4916
    %v4923 = vpack.c.b16 %v4919, %v4917
    %v4929 = vsel %vm2599, %v4655, 0
    %4931 = vmatpush.bf16.msra.mxu0 0
    %4932 = vmatpush.bf16.msra.mxu0 0
    %4933 = vmatpush.bf16.msra.mxu0 0
    %4934 = vmatpush.bf16.msra.mxu0 0
    %4935 = vmatpush.bf16.msra.mxu0 0
    %4936 = vmatpush.bf16.msra.mxu0 0
    %4937 = vmatpush.bf16.msra.mxu0 %v4922
    %4938 = vmatpush.bf16.msra.mxu0 %v4920
    %4939 = vmatmul.bf16.gmra.mxu0 %v4929
    %v4940 = vpop.f32.mrf.mxu0
    %v4941 = vadd.f32 %v4876, %v4940
    %v4942 = vpop.f32.mrf.mxu0
    %v4943 = vadd.f32 %v4878, %v4942
    %4944 = vdwg.mxu0
    %4945 = vmatpush.bf16.msra.mxu0 0
    %4946 = vmatpush.bf16.msra.mxu0 0
    %4947 = vmatpush.bf16.msra.mxu0 0
    %4948 = vmatpush.bf16.msra.mxu0 0
    %4949 = vmatpush.bf16.msra.mxu0 0
    %4950 = vmatpush.bf16.msra.mxu0 0
    %4951 = vmatpush.bf16.msra.mxu0 %v4923
    %4952 = vmatpush.bf16.msra.mxu0 %v4921
    %4953 = vmatmul.bf16.gmra.mxu0 %v4929
    %v4954 = vpop.f32.mrf.mxu0
    %v4955 = vadd.f32 %v4904, %v4954
    %v4956 = vpop.f32.mrf.mxu0
    %v4957 = vadd.f32 %v4906, %v4956
    %4958 = vdwg.mxu0
    %v4959 = vld [vmem:[#allocation45] sm:$0x3]
    %v4961 = vperm.slane %v4959, 0
    %v4962 = vperm.slane %v4959, 1
    %v4965 = vmul.f32 %v3995, %v4961
    %v4966 = vmul.f32 %v3995, %v4962
    %v4967 = vmul.f32 %v4000, %v4961
    %v4968 = vmul.f32 %v4000, %v4962
    %v4969 = vadd.f32 %v4941, %v4965
    %v4970 = vadd.f32 %v4955, %v4966
    %v4971 = vadd.f32 %v4943, %v4967
    %v4972 = vadd.f32 %v4957, %v4968
    %v4973 = vld [vmem:[#allocation46] sm:$0x3]
    %v4975 = vperm.slane %v4973, 0
    %v4976 = vperm.slane %v4973, 1
    %v4979 = vadd.f32 %v4969, %v4975
    %v4980 = vadd.f32 %v4970, %v4976
    %v4981 = vadd.f32 %v4971, %v4975
    %v4982 = vadd.f32 %v4972, %v4976
    %v4983 = vmax.f32 %v4979, 0.0
    %v4984 = vmax.f32 %v4980, 0.0
    %v4985 = vmax.f32 %v4981, 0.0
    %v4986 = vmax.f32 %v4982, 0.0
    %v4987 = vpack.c.bf16 %v4985, %v4983
    %v4988 = vpack.c.bf16 %v4986, %v4984
    %v4989 = vld [vmem:[#allocation48] sm:$0xff]
    %v4990 = vld [vmem:[#allocation48 + $0x8] sm:$0xff]
    %v4991 = vld [vmem:[#allocation48 + $0x10] sm:$0xff]
    %v4992 = vld [vmem:[#allocation48 + $0x18] sm:$0xff]
    %v4993 = vld [vmem:[#allocation48 + $0x20] sm:$0xff]
    %v4994 = vld [vmem:[#allocation48 + $0x28] sm:$0xff]
    %v4995 = vld [vmem:[#allocation48 + $0x30] sm:$0xff]
    %v4996 = vld [vmem:[#allocation48 + $0x38] sm:$0xff]
    %v4997 = vld [vmem:[#allocation48 + $0x40] sm:$0xff]
    %v4998 = vld [vmem:[#allocation48 + $0x48] sm:$0xff]
    %v4999 = vld [vmem:[#allocation48 + $0x50] sm:$0xff]
    %v5000 = vld [vmem:[#allocation48 + $0x58] sm:$0xff]
    %v5001 = vld [vmem:[#allocation48 + $0x60] sm:$0xff]
    %v5002 = vld [vmem:[#allocation48 + $0x68] sm:$0xff]
    %v5003 = vld [vmem:[#allocation48 + $0x70] sm:$0xff]
    %v5004 = vld [vmem:[#allocation48 + $0x78] sm:$0xff]
    %v5005 = vld [vmem:[#allocation48 + $0x80] sm:$0xff]
    %v5006 = vld [vmem:[#allocation48 + $0x88] sm:$0xff]
    %v5007 = vld [vmem:[#allocation48 + $0x90] sm:$0xff]
    %v5008 = vld [vmem:[#allocation48 + $0x98] sm:$0xff]
    %v5009 = vld [vmem:[#allocation48 + $0xa0] sm:$0xff]
    %v5010 = vld [vmem:[#allocation48 + $0xa8] sm:$0xff]
    %v5011 = vld [vmem:[#allocation48 + $0xb0] sm:$0xff]
    %v5012 = vld [vmem:[#allocation48 + $0xb8] sm:$0xff]
    %v5013 = vld [vmem:[#allocation48 + $0xc0] sm:$0xff]
    %v5014 = vld [vmem:[#allocation48 + $0xc8] sm:$0xff]
    %v5015 = vld [vmem:[#allocation48 + $0xd0] sm:$0xff]
    %v5016 = vld [vmem:[#allocation48 + $0xd8] sm:$0xff]
    %v5017 = vld [vmem:[#allocation48 + $0xe0] sm:$0xff]
    %v5018 = vld [vmem:[#allocation48 + $0xe8] sm:$0xff]
    %v5019 = vld [vmem:[#allocation48 + $0xf0] sm:$0xff]
    %v5020 = vld [vmem:[#allocation48 + $0xf8] sm:$0xff]
    %v5021 = vld [vmem:[#allocation49] sm:$0x3]
    %v5023 = vperm.slane %v5021, 0
    %v5024 = vperm.slane %v5021, 1
    %v5059 = vunpack.c.l.b16 %v4989
    %v5060 = vunpack.c.h.b16 %v4989
    %v5061 = vunpack.c.l.b16 %v4990
    %v5062 = vunpack.c.h.b16 %v4990
    %v5063 = vunpack.c.l.b16 %v4991
    %v5064 = vunpack.c.h.b16 %v4991
    %v5065 = vunpack.c.l.b16 %v4992
    %v5066 = vunpack.c.h.b16 %v4992
    %v5067 = vunpack.c.l.b16 %v4993
    %v5068 = vunpack.c.h.b16 %v4993
    %v5069 = vunpack.c.l.b16 %v4994
    %v5070 = vunpack.c.h.b16 %v4994
    %v5071 = vunpack.c.l.b16 %v4995
    %v5072 = vunpack.c.h.b16 %v4995
    %v5073 = vunpack.c.l.b16 %v4996
    %v5074 = vunpack.c.h.b16 %v4996
    %v5075 = vunpack.c.l.b16 %v4997
    %v5076 = vunpack.c.h.b16 %v4997
    %v5077 = vunpack.c.l.b16 %v4998
    %v5078 = vunpack.c.h.b16 %v4998
    %v5079 = vunpack.c.l.b16 %v4999
    %v5080 = vunpack.c.h.b16 %v4999
    %v5081 = vunpack.c.l.b16 %v5000
    %v5082 = vunpack.c.h.b16 %v5000
    %v5083 = vunpack.c.l.b16 %v5001
    %v5084 = vunpack.c.h.b16 %v5001
    %v5085 = vunpack.c.l.b16 %v5002
    %v5086 = vunpack.c.h.b16 %v5002
    %v5087 = vunpack.c.l.b16 %v5003
    %v5088 = vunpack.c.h.b16 %v5003
    %v5089 = vunpack.c.l.b16 %v5004
    %v5090 = vunpack.c.h.b16 %v5004
    %v5091 = vunpack.c.l.b16 %v5005
    %v5092 = vunpack.c.h.b16 %v5005
    %v5093 = vunpack.c.l.b16 %v5006
    %v5094 = vunpack.c.h.b16 %v5006
    %v5095 = vunpack.c.l.b16 %v5007
    %v5096 = vunpack.c.h.b16 %v5007
    %v5097 = vunpack.c.l.b16 %v5008
    %v5098 = vunpack.c.h.b16 %v5008
    %v5099 = vunpack.c.l.b16 %v5009
    %v5100 = vunpack.c.h.b16 %v5009
    %v5101 = vunpack.c.l.b16 %v5010
    %v5102 = vunpack.c.h.b16 %v5010
    %v5103 = vunpack.c.l.b16 %v5011
    %v5104 = vunpack.c.h.b16 %v5011
    %v5105 = vunpack.c.l.b16 %v5012
    %v5106 = vunpack.c.h.b16 %v5012
    %v5107 = vunpack.c.l.b16 %v5013
    %v5108 = vunpack.c.h.b16 %v5013
    %v5109 = vunpack.c.l.b16 %v5014
    %v5110 = vunpack.c.h.b16 %v5014
    %v5111 = vunpack.c.l.b16 %v5015
    %v5112 = vunpack.c.h.b16 %v5015
    %v5113 = vunpack.c.l.b16 %v5016
    %v5114 = vunpack.c.h.b16 %v5016
    %v5115 = vunpack.c.l.b16 %v5017
    %v5116 = vunpack.c.h.b16 %v5017
    %v5117 = vunpack.c.l.b16 %v5018
    %v5118 = vunpack.c.h.b16 %v5018
    %v5119 = vunpack.c.l.b16 %v5019
    %v5120 = vunpack.c.h.b16 %v5019
    %v5121 = vunpack.c.l.b16 %v5020
    %v5122 = vunpack.c.h.b16 %v5020
    %v5123 = vpack.c.b16 %v5061, %v5059
    %v5124 = vpack.c.b16 %v5062, %v5060
    %v5125 = vpack.c.b16 %v5065, %v5063
    %v5126 = vpack.c.b16 %v5066, %v5064
    %v5127 = vpack.c.b16 %v5069, %v5067
    %v5128 = vpack.c.b16 %v5070, %v5068
    %v5129 = vpack.c.b16 %v5073, %v5071
    %v5130 = vpack.c.b16 %v5074, %v5072
    %v5131 = vpack.c.b16 %v5077, %v5075
    %v5132 = vpack.c.b16 %v5078, %v5076
    %v5133 = vpack.c.b16 %v5081, %v5079
    %v5134 = vpack.c.b16 %v5082, %v5080
    %v5135 = vpack.c.b16 %v5085, %v5083
    %v5136 = vpack.c.b16 %v5086, %v5084
    %v5137 = vpack.c.b16 %v5089, %v5087
    %v5138 = vpack.c.b16 %v5090, %v5088
    %v5139 = vpack.c.b16 %v5093, %v5091
    %v5140 = vpack.c.b16 %v5094, %v5092
    %v5141 = vpack.c.b16 %v5097, %v5095
    %v5142 = vpack.c.b16 %v5098, %v5096
    %v5143 = vpack.c.b16 %v5101, %v5099
    %v5144 = vpack.c.b16 %v5102, %v5100
    %v5145 = vpack.c.b16 %v5105, %v5103
    %v5146 = vpack.c.b16 %v5106, %v5104
    %v5147 = vpack.c.b16 %v5109, %v5107
    %v5148 = vpack.c.b16 %v5110, %v5108
    %v5149 = vpack.c.b16 %v5113, %v5111
    %v5150 = vpack.c.b16 %v5114, %v5112
    %v5151 = vpack.c.b16 %v5117, %v5115
    %v5152 = vpack.c.b16 %v5118, %v5116
    %v5153 = vpack.c.b16 %v5121, %v5119
    %v5154 = vpack.c.b16 %v5122, %v5120
    %5187 = vmatpush.bf16.msra.mxu0 %v5137
    %5188 = vmatpush.bf16.msra.mxu0 %v5135
    %5189 = vmatpush.bf16.msra.mxu0 %v5133
    %5190 = vmatpush.bf16.msra.mxu0 %v5131
    %5191 = vmatpush.bf16.msra.mxu0 %v5129
    %5192 = vmatpush.bf16.msra.mxu0 %v5127
    %5193 = vmatpush.bf16.msra.mxu0 %v5125
    %5194 = vmatpush.bf16.msra.mxu0 %v5123
    %5195 = vmatmul.bf16.gmra.mxu0 %v4987
    %v5196 = vpop.f32.mrf.mxu0
    %v5197 = vadd.f32 %v5023, %v5196
    %v5198 = vpop.f32.mrf.mxu0
    %v5199 = vadd.f32 %v5023, %v5198
    %5200 = vdwg.mxu0
    %5201 = vmatpush.bf16.msra.mxu0 %v5153
    %5202 = vmatpush.bf16.msra.mxu0 %v5151
    %5203 = vmatpush.bf16.msra.mxu0 %v5149
    %5204 = vmatpush.bf16.msra.mxu0 %v5147
    %5205 = vmatpush.bf16.msra.mxu0 %v5145
    %5206 = vmatpush.bf16.msra.mxu0 %v5143
    %5207 = vmatpush.bf16.msra.mxu0 %v5141
    %5208 = vmatpush.bf16.msra.mxu0 %v5139
    %5209 = vmatmul.bf16.gmra.mxu0 %v4988
    %v5210 = vpop.f32.mrf.mxu0
    %v5211 = vadd.f32 %v5197, %v5210
    %v5212 = vpop.f32.mrf.mxu0
    %v5213 = vadd.f32 %v5199, %v5212
    %5214 = vdwg.mxu0
    %5215 = vmatpush.bf16.msra.mxu0 %v5138
    %5216 = vmatpush.bf16.msra.mxu0 %v5136
    %5217 = vmatpush.bf16.msra.mxu0 %v5134
    %5218 = vmatpush.bf16.msra.mxu0 %v5132
    %5219 = vmatpush.bf16.msra.mxu0 %v5130
    %5220 = vmatpush.bf16.msra.mxu0 %v5128
    %5221 = vmatpush.bf16.msra.mxu0 %v5126
    %5222 = vmatpush.bf16.msra.mxu0 %v5124
    %5223 = vmatmul.bf16.gmra.mxu0 %v4987
    %v5224 = vpop.f32.mrf.mxu0
    %v5225 = vadd.f32 %v5024, %v5224
    %v5226 = vpop.f32.mrf.mxu0
    %v5227 = vadd.f32 %v5024, %v5226
    %5228 = vdwg.mxu0
    %5229 = vmatpush.bf16.msra.mxu0 %v5154
    %5230 = vmatpush.bf16.msra.mxu0 %v5152
    %5231 = vmatpush.bf16.msra.mxu0 %v5150
    %5232 = vmatpush.bf16.msra.mxu0 %v5148
    %5233 = vmatpush.bf16.msra.mxu0 %v5146
    %5234 = vmatpush.bf16.msra.mxu0 %v5144
    %5235 = vmatpush.bf16.msra.mxu0 %v5142
    %5236 = vmatpush.bf16.msra.mxu0 %v5140
    %5237 = vmatmul.bf16.gmra.mxu0 %v4988
    %v5238 = vpop.f32.mrf.mxu0
    %v5239 = vadd.f32 %v5225, %v5238
    %v5240 = vpop.f32.mrf.mxu0
    %v5241 = vadd.f32 %v5227, %v5240
    %5242 = vdwg.mxu0
    %v5243 = vmax.f32 %v5211, 0.0
    %v5244 = vmax.f32 %v5239, 0.0
    %v5245 = vmax.f32 %v5213, 0.0
    %v5246 = vmax.f32 %v5241, 0.0
    %v5247 = vpack.c.bf16 %v5245, %v5243
    %v5248 = vpack.c.bf16 %v5246, %v5244
    %v5249 = vld [vmem:[#allocation51] sm:$0xff]
    %v5250 = vld [vmem:[#allocation51 + $0x8] sm:$0xff]
    %v5251 = vld [vmem:[#allocation51 + $0x10] sm:$0xff]
    %v5252 = vld [vmem:[#allocation51 + $0x18] sm:$0xff]
    %v5253 = vld [vmem:[#allocation51 + $0x20] sm:$0xff]
    %v5254 = vld [vmem:[#allocation51 + $0x28] sm:$0xff]
    %v5255 = vld [vmem:[#allocation51 + $0x30] sm:$0xff]
    %v5256 = vld [vmem:[#allocation51 + $0x38] sm:$0xff]
    %v5257 = vld [vmem:[#allocation51 + $0x40] sm:$0xff]
    %v5258 = vld [vmem:[#allocation51 + $0x48] sm:$0xff]
    %v5259 = vld [vmem:[#allocation51 + $0x50] sm:$0xff]
    %v5260 = vld [vmem:[#allocation51 + $0x58] sm:$0xff]
    %v5261 = vld [vmem:[#allocation51 + $0x60] sm:$0xff]
    %v5262 = vld [vmem:[#allocation51 + $0x68] sm:$0xff]
    %v5263 = vld [vmem:[#allocation51 + $0x70] sm:$0xff]
    %v5264 = vld [vmem:[#allocation51 + $0x78] sm:$0xff]
    %v5265 = vld [vmem:[#allocation51 + $0x80] sm:$0xff]
    %v5266 = vld [vmem:[#allocation51 + $0x88] sm:$0xff]
    %v5267 = vld [vmem:[#allocation51 + $0x90] sm:$0xff]
    %v5268 = vld [vmem:[#allocation51 + $0x98] sm:$0xff]
    %v5269 = vld [vmem:[#allocation51 + $0xa0] sm:$0xff]
    %v5270 = vld [vmem:[#allocation51 + $0xa8] sm:$0xff]
    %v5271 = vld [vmem:[#allocation51 + $0xb0] sm:$0xff]
    %v5272 = vld [vmem:[#allocation51 + $0xb8] sm:$0xff]
    %v5273 = vld [vmem:[#allocation51 + $0xc0] sm:$0xff]
    %v5274 = vld [vmem:[#allocation51 + $0xc8] sm:$0xff]
    %v5275 = vld [vmem:[#allocation51 + $0xd0] sm:$0xff]
    %v5276 = vld [vmem:[#allocation51 + $0xd8] sm:$0xff]
    %v5277 = vld [vmem:[#allocation51 + $0xe0] sm:$0xff]
    %v5278 = vld [vmem:[#allocation51 + $0xe8] sm:$0xff]
    %v5279 = vld [vmem:[#allocation51 + $0xf0] sm:$0xff]
    %v5280 = vld [vmem:[#allocation51 + $0xf8] sm:$0xff]
    %v5281 = vld [vmem:[#allocation52] sm:$0x3]
    %v5283 = vperm.slane %v5281, 0
    %v5284 = vperm.slane %v5281, 1
    %v5319 = vunpack.c.l.b16 %v5249
    %v5320 = vunpack.c.h.b16 %v5249
    %v5321 = vunpack.c.l.b16 %v5250
    %v5322 = vunpack.c.h.b16 %v5250
    %v5323 = vunpack.c.l.b16 %v5251
    %v5324 = vunpack.c.h.b16 %v5251
    %v5325 = vunpack.c.l.b16 %v5252
    %v5326 = vunpack.c.h.b16 %v5252
    %v5327 = vunpack.c.l.b16 %v5253
    %v5328 = vunpack.c.h.b16 %v5253
    %v5329 = vunpack.c.l.b16 %v5254
    %v5330 = vunpack.c.h.b16 %v5254
    %v5331 = vunpack.c.l.b16 %v5255
    %v5332 = vunpack.c.h.b16 %v5255
    %v5333 = vunpack.c.l.b16 %v5256
    %v5334 = vunpack.c.h.b16 %v5256
    %v5335 = vunpack.c.l.b16 %v5257
    %v5336 = vunpack.c.h.b16 %v5257
    %v5337 = vunpack.c.l.b16 %v5258
    %v5338 = vunpack.c.h.b16 %v5258
    %v5339 = vunpack.c.l.b16 %v5259
    %v5340 = vunpack.c.h.b16 %v5259
    %v5341 = vunpack.c.l.b16 %v5260
    %v5342 = vunpack.c.h.b16 %v5260
    %v5343 = vunpack.c.l.b16 %v5261
    %v5344 = vunpack.c.h.b16 %v5261
    %v5345 = vunpack.c.l.b16 %v5262
    %v5346 = vunpack.c.h.b16 %v5262
    %v5347 = vunpack.c.l.b16 %v5263
    %v5348 = vunpack.c.h.b16 %v5263
    %v5349 = vunpack.c.l.b16 %v5264
    %v5350 = vunpack.c.h.b16 %v5264
    %v5351 = vunpack.c.l.b16 %v5265
    %v5352 = vunpack.c.h.b16 %v5265
    %v5353 = vunpack.c.l.b16 %v5266
    %v5354 = vunpack.c.h.b16 %v5266
    %v5355 = vunpack.c.l.b16 %v5267
    %v5356 = vunpack.c.h.b16 %v5267
    %v5357 = vunpack.c.l.b16 %v5268
    %v5358 = vunpack.c.h.b16 %v5268
    %v5359 = vunpack.c.l.b16 %v5269
    %v5360 = vunpack.c.h.b16 %v5269
    %v5361 = vunpack.c.l.b16 %v5270
    %v5362 = vunpack.c.h.b16 %v5270
    %v5363 = vunpack.c.l.b16 %v5271
    %v5364 = vunpack.c.h.b16 %v5271
    %v5365 = vunpack.c.l.b16 %v5272
    %v5366 = vunpack.c.h.b16 %v5272
    %v5367 = vunpack.c.l.b16 %v5273
    %v5368 = vunpack.c.h.b16 %v5273
    %v5369 = vunpack.c.l.b16 %v5274
    %v5370 = vunpack.c.h.b16 %v5274
    %v5371 = vunpack.c.l.b16 %v5275
    %v5372 = vunpack.c.h.b16 %v5275
    %v5373 = vunpack.c.l.b16 %v5276
    %v5374 = vunpack.c.h.b16 %v5276
    %v5375 = vunpack.c.l.b16 %v5277
    %v5376 = vunpack.c.h.b16 %v5277
    %v5377 = vunpack.c.l.b16 %v5278
    %v5378 = vunpack.c.h.b16 %v5278
    %v5379 = vunpack.c.l.b16 %v5279
    %v5380 = vunpack.c.h.b16 %v5279
    %v5381 = vunpack.c.l.b16 %v5280
    %v5382 = vunpack.c.h.b16 %v5280
    %v5383 = vpack.c.b16 %v5321, %v5319
    %v5384 = vpack.c.b16 %v5322, %v5320
    %v5385 = vpack.c.b16 %v5325, %v5323
    %v5386 = vpack.c.b16 %v5326, %v5324
    %v5387 = vpack.c.b16 %v5329, %v5327
    %v5388 = vpack.c.b16 %v5330, %v5328
    %v5389 = vpack.c.b16 %v5333, %v5331
    %v5390 = vpack.c.b16 %v5334, %v5332
    %v5391 = vpack.c.b16 %v5337, %v5335
    %v5392 = vpack.c.b16 %v5338, %v5336
    %v5393 = vpack.c.b16 %v5341, %v5339
    %v5394 = vpack.c.b16 %v5342, %v5340
    %v5395 = vpack.c.b16 %v5345, %v5343
    %v5396 = vpack.c.b16 %v5346, %v5344
    %v5397 = vpack.c.b16 %v5349, %v5347
    %v5398 = vpack.c.b16 %v5350, %v5348
    %v5399 = vpack.c.b16 %v5353, %v5351
    %v5400 = vpack.c.b16 %v5354, %v5352
    %v5401 = vpack.c.b16 %v5357, %v5355
    %v5402 = vpack.c.b16 %v5358, %v5356
    %v5403 = vpack.c.b16 %v5361, %v5359
    %v5404 = vpack.c.b16 %v5362, %v5360
    %v5405 = vpack.c.b16 %v5365, %v5363
    %v5406 = vpack.c.b16 %v5366, %v5364
    %v5407 = vpack.c.b16 %v5369, %v5367
    %v5408 = vpack.c.b16 %v5370, %v5368
    %v5409 = vpack.c.b16 %v5373, %v5371
    %v5410 = vpack.c.b16 %v5374, %v5372
    %v5411 = vpack.c.b16 %v5377, %v5375
    %v5412 = vpack.c.b16 %v5378, %v5376
    %v5413 = vpack.c.b16 %v5381, %v5379
    %v5414 = vpack.c.b16 %v5382, %v5380
    %5447 = vmatpush.bf16.msra.mxu0 %v5397
    %5448 = vmatpush.bf16.msra.mxu0 %v5395
    %5449 = vmatpush.bf16.msra.mxu0 %v5393
    %5450 = vmatpush.bf16.msra.mxu0 %v5391
    %5451 = vmatpush.bf16.msra.mxu0 %v5389
    %5452 = vmatpush.bf16.msra.mxu0 %v5387
    %5453 = vmatpush.bf16.msra.mxu0 %v5385
    %5454 = vmatpush.bf16.msra.mxu0 %v5383
    %5455 = vmatmul.bf16.gmra.mxu0 %v5247
    %v5456 = vpop.f32.mrf.mxu0
    %v5457 = vadd.f32 %v5283, %v5456
    %v5458 = vpop.f32.mrf.mxu0
    %v5459 = vadd.f32 %v5283, %v5458
    %5460 = vdwg.mxu0
    %5461 = vmatpush.bf16.msra.mxu0 %v5413
    %5462 = vmatpush.bf16.msra.mxu0 %v5411
    %5463 = vmatpush.bf16.msra.mxu0 %v5409
    %5464 = vmatpush.bf16.msra.mxu0 %v5407
    %5465 = vmatpush.bf16.msra.mxu0 %v5405
    %5466 = vmatpush.bf16.msra.mxu0 %v5403
    %5467 = vmatpush.bf16.msra.mxu0 %v5401
    %5468 = vmatpush.bf16.msra.mxu0 %v5399
    %5469 = vmatmul.bf16.gmra.mxu0 %v5248
    %v5470 = vpop.f32.mrf.mxu0
    %v5471 = vadd.f32 %v5457, %v5470
    %v5472 = vpop.f32.mrf.mxu0
    %v5473 = vadd.f32 %v5459, %v5472
    %5474 = vdwg.mxu0
    %5475 = vmatpush.bf16.msra.mxu0 %v5398
    %5476 = vmatpush.bf16.msra.mxu0 %v5396
    %5477 = vmatpush.bf16.msra.mxu0 %v5394
    %5478 = vmatpush.bf16.msra.mxu0 %v5392
    %5479 = vmatpush.bf16.msra.mxu0 %v5390
    %5480 = vmatpush.bf16.msra.mxu0 %v5388
    %5481 = vmatpush.bf16.msra.mxu0 %v5386
    %5482 = vmatpush.bf16.msra.mxu0 %v5384
    %5483 = vmatmul.bf16.gmra.mxu0 %v5247
    %v5484 = vpop.f32.mrf.mxu0
    %v5485 = vadd.f32 %v5284, %v5484
    %v5486 = vpop.f32.mrf.mxu0
    %v5487 = vadd.f32 %v5284, %v5486
    %5488 = vdwg.mxu0
    %5489 = vmatpush.bf16.msra.mxu0 %v5414
    %5490 = vmatpush.bf16.msra.mxu0 %v5412
    %5491 = vmatpush.bf16.msra.mxu0 %v5410
    %5492 = vmatpush.bf16.msra.mxu0 %v5408
    %5493 = vmatpush.bf16.msra.mxu0 %v5406
    %5494 = vmatpush.bf16.msra.mxu0 %v5404
    %5495 = vmatpush.bf16.msra.mxu0 %v5402
    %5496 = vmatpush.bf16.msra.mxu0 %v5400
    %5497 = vmatmul.bf16.gmra.mxu0 %v5248
    %v5498 = vpop.f32.mrf.mxu0
    %v5499 = vadd.f32 %v5485, %v5498
    %v5500 = vpop.f32.mrf.mxu0
    %v5501 = vadd.f32 %v5487, %v5500
    %5502 = vdwg.mxu0
    %v5503 = vld [vmem:[#allocation54] sm:$0xff]
    %v5504 = vld [vmem:[#allocation54 + $0x8] sm:$0xff]
    %v5505 = vld [vmem:[#allocation54 + $0x10] sm:$0xff]
    %v5506 = vld [vmem:[#allocation54 + $0x18] sm:$0xff]
    %v5507 = vld [vmem:[#allocation54 + $0x20] sm:$0xff]
    %v5508 = vld [vmem:[#allocation54 + $0x28] sm:$0xff]
    %v5509 = vld [vmem:[#allocation54 + $0x30] sm:$0xff]
    %v5510 = vld [vmem:[#allocation54 + $0x38] sm:$0xff]
    %v5511 = vld [vmem:[#allocation54 + $0x40] sm:$0xff]
    %v5512 = vld [vmem:[#allocation54 + $0x48] sm:$0xff]
    %v5513 = vld [vmem:[#allocation54 + $0x50] sm:$0xff]
    %v5514 = vld [vmem:[#allocation54 + $0x58] sm:$0xff]
    %v5515 = vld [vmem:[#allocation54 + $0x60] sm:$0xff]
    %v5516 = vld [vmem:[#allocation54 + $0x68] sm:$0xff]
    %v5517 = vld [vmem:[#allocation54 + $0x70] sm:$0xff]
    %v5518 = vld [vmem:[#allocation54 + $0x78] sm:$0xff]
    %v5519 = vld [vmem:[#allocation54 + $0x80] sm:$0xff]
    %v5520 = vld [vmem:[#allocation54 + $0x88] sm:$0xff]
    %v5521 = vld [vmem:[#allocation54 + $0x90] sm:$0xff]
    %v5522 = vld [vmem:[#allocation54 + $0x98] sm:$0xff]
    %v5523 = vld [vmem:[#allocation54 + $0xa0] sm:$0xff]
    %v5524 = vld [vmem:[#allocation54 + $0xa8] sm:$0xff]
    %v5525 = vld [vmem:[#allocation54 + $0xb0] sm:$0xff]
    %v5526 = vld [vmem:[#allocation54 + $0xb8] sm:$0xff]
    %v5527 = vld [vmem:[#allocation54 + $0xc0] sm:$0xff]
    %v5528 = vld [vmem:[#allocation54 + $0xc8] sm:$0xff]
    %v5529 = vld [vmem:[#allocation54 + $0xd0] sm:$0xff]
    %v5530 = vld [vmem:[#allocation54 + $0xd8] sm:$0xff]
    %v5531 = vld [vmem:[#allocation54 + $0xe0] sm:$0xff]
    %v5532 = vld [vmem:[#allocation54 + $0xe8] sm:$0xff]
    %v5533 = vld [vmem:[#allocation54 + $0xf0] sm:$0xff]
    %v5534 = vld [vmem:[#allocation54 + $0xf8] sm:$0xff]
    %v5535 = vld [vmem:[#allocation55] sm:$0x3]
    %v5537 = vperm.slane %v5535, 0
    %v5538 = vperm.slane %v5535, 1
    %v5573 = vunpack.c.l.b16 %v5503
    %v5574 = vunpack.c.h.b16 %v5503
    %v5575 = vunpack.c.l.b16 %v5504
    %v5576 = vunpack.c.h.b16 %v5504
    %v5577 = vunpack.c.l.b16 %v5505
    %v5578 = vunpack.c.h.b16 %v5505
    %v5579 = vunpack.c.l.b16 %v5506
    %v5580 = vunpack.c.h.b16 %v5506
    %v5581 = vunpack.c.l.b16 %v5507
    %v5582 = vunpack.c.h.b16 %v5507
    %v5583 = vunpack.c.l.b16 %v5508
    %v5584 = vunpack.c.h.b16 %v5508
    %v5585 = vunpack.c.l.b16 %v5509
    %v5586 = vunpack.c.h.b16 %v5509
    %v5587 = vunpack.c.l.b16 %v5510
    %v5588 = vunpack.c.h.b16 %v5510
    %v5589 = vunpack.c.l.b16 %v5511
    %v5590 = vunpack.c.h.b16 %v5511
    %v5591 = vunpack.c.l.b16 %v5512
    %v5592 = vunpack.c.h.b16 %v5512
    %v5593 = vunpack.c.l.b16 %v5513
    %v5594 = vunpack.c.h.b16 %v5513
    %v5595 = vunpack.c.l.b16 %v5514
    %v5596 = vunpack.c.h.b16 %v5514
    %v5597 = vunpack.c.l.b16 %v5515
    %v5598 = vunpack.c.h.b16 %v5515
    %v5599 = vunpack.c.l.b16 %v5516
    %v5600 = vunpack.c.h.b16 %v5516
    %v5601 = vunpack.c.l.b16 %v5517
    %v5602 = vunpack.c.h.b16 %v5517
    %v5603 = vunpack.c.l.b16 %v5518
    %v5604 = vunpack.c.h.b16 %v5518
    %v5605 = vunpack.c.l.b16 %v5519
    %v5606 = vunpack.c.h.b16 %v5519
    %v5607 = vunpack.c.l.b16 %v5520
    %v5608 = vunpack.c.h.b16 %v5520
    %v5609 = vunpack.c.l.b16 %v5521
    %v5610 = vunpack.c.h.b16 %v5521
    %v5611 = vunpack.c.l.b16 %v5522
    %v5612 = vunpack.c.h.b16 %v5522
    %v5613 = vunpack.c.l.b16 %v5523
    %v5614 = vunpack.c.h.b16 %v5523
    %v5615 = vunpack.c.l.b16 %v5524
    %v5616 = vunpack.c.h.b16 %v5524
    %v5617 = vunpack.c.l.b16 %v5525
    %v5618 = vunpack.c.h.b16 %v5525
    %v5619 = vunpack.c.l.b16 %v5526
    %v5620 = vunpack.c.h.b16 %v5526
    %v5621 = vunpack.c.l.b16 %v5527
    %v5622 = vunpack.c.h.b16 %v5527
    %v5623 = vunpack.c.l.b16 %v5528
    %v5624 = vunpack.c.h.b16 %v5528
    %v5625 = vunpack.c.l.b16 %v5529
    %v5626 = vunpack.c.h.b16 %v5529
    %v5627 = vunpack.c.l.b16 %v5530
    %v5628 = vunpack.c.h.b16 %v5530
    %v5629 = vunpack.c.l.b16 %v5531
    %v5630 = vunpack.c.h.b16 %v5531
    %v5631 = vunpack.c.l.b16 %v5532
    %v5632 = vunpack.c.h.b16 %v5532
    %v5633 = vunpack.c.l.b16 %v5533
    %v5634 = vunpack.c.h.b16 %v5533
    %v5635 = vunpack.c.l.b16 %v5534
    %v5636 = vunpack.c.h.b16 %v5534
    %v5637 = vpack.c.b16 %v5575, %v5573
    %v5638 = vpack.c.b16 %v5576, %v5574
    %v5639 = vpack.c.b16 %v5579, %v5577
    %v5640 = vpack.c.b16 %v5580, %v5578
    %v5641 = vpack.c.b16 %v5583, %v5581
    %v5642 = vpack.c.b16 %v5584, %v5582
    %v5643 = vpack.c.b16 %v5587, %v5585
    %v5644 = vpack.c.b16 %v5588, %v5586
    %v5645 = vpack.c.b16 %v5591, %v5589
    %v5646 = vpack.c.b16 %v5592, %v5590
    %v5647 = vpack.c.b16 %v5595, %v5593
    %v5648 = vpack.c.b16 %v5596, %v5594
    %v5649 = vpack.c.b16 %v5599, %v5597
    %v5650 = vpack.c.b16 %v5600, %v5598
    %v5651 = vpack.c.b16 %v5603, %v5601
    %v5652 = vpack.c.b16 %v5604, %v5602
    %v5653 = vpack.c.b16 %v5607, %v5605
    %v5654 = vpack.c.b16 %v5608, %v5606
    %v5655 = vpack.c.b16 %v5611, %v5609
    %v5656 = vpack.c.b16 %v5612, %v5610
    %v5657 = vpack.c.b16 %v5615, %v5613
    %v5658 = vpack.c.b16 %v5616, %v5614
    %v5659 = vpack.c.b16 %v5619, %v5617
    %v5660 = vpack.c.b16 %v5620, %v5618
    %v5661 = vpack.c.b16 %v5623, %v5621
    %v5662 = vpack.c.b16 %v5624, %v5622
    %v5663 = vpack.c.b16 %v5627, %v5625
    %v5664 = vpack.c.b16 %v5628, %v5626
    %v5665 = vpack.c.b16 %v5631, %v5629
    %v5666 = vpack.c.b16 %v5632, %v5630
    %v5667 = vpack.c.b16 %v5635, %v5633
    %v5668 = vpack.c.b16 %v5636, %v5634
    %5701 = vmatpush.bf16.msra.mxu0 %v5651
    %5702 = vmatpush.bf16.msra.mxu0 %v5649
    %5703 = vmatpush.bf16.msra.mxu0 %v5647
    %5704 = vmatpush.bf16.msra.mxu0 %v5645
    %5705 = vmatpush.bf16.msra.mxu0 %v5643
    %5706 = vmatpush.bf16.msra.mxu0 %v5641
    %5707 = vmatpush.bf16.msra.mxu0 %v5639
    %5708 = vmatpush.bf16.msra.mxu0 %v5637
    %5709 = vmatmul.bf16.gmra.mxu0 %v5247
    %v5710 = vpop.f32.mrf.mxu0
    %v5711 = vadd.f32 %v5537, %v5710
    %v5712 = vpop.f32.mrf.mxu0
    %v5713 = vadd.f32 %v5537, %v5712
    %5714 = vdwg.mxu0
    %5715 = vmatpush.bf16.msra.mxu0 %v5667
    %5716 = vmatpush.bf16.msra.mxu0 %v5665
    %5717 = vmatpush.bf16.msra.mxu0 %v5663
    %5718 = vmatpush.bf16.msra.mxu0 %v5661
    %5719 = vmatpush.bf16.msra.mxu0 %v5659
    %5720 = vmatpush.bf16.msra.mxu0 %v5657
    %5721 = vmatpush.bf16.msra.mxu0 %v5655
    %5722 = vmatpush.bf16.msra.mxu0 %v5653
    %5723 = vmatmul.bf16.gmra.mxu0 %v5248
    %v5724 = vpop.f32.mrf.mxu0
    %v5725 = vadd.f32 %v5711, %v5724
    %v5726 = vpop.f32.mrf.mxu0
    %v5727 = vadd.f32 %v5713, %v5726
    %5728 = vdwg.mxu0
    %5729 = vmatpush.bf16.msra.mxu0 %v5652
    %5730 = vmatpush.bf16.msra.mxu0 %v5650
    %5731 = vmatpush.bf16.msra.mxu0 %v5648
    %5732 = vmatpush.bf16.msra.mxu0 %v5646
    %5733 = vmatpush.bf16.msra.mxu0 %v5644
    %5734 = vmatpush.bf16.msra.mxu0 %v5642
    %5735 = vmatpush.bf16.msra.mxu0 %v5640
    %5736 = vmatpush.bf16.msra.mxu0 %v5638
    %5737 = vmatmul.bf16.gmra.mxu0 %v5247
    %v5738 = vpop.f32.mrf.mxu0
    %v5739 = vadd.f32 %v5538, %v5738
    %v5740 = vpop.f32.mrf.mxu0
    %v5741 = vadd.f32 %v5538, %v5740
    %5742 = vdwg.mxu0
    %5743 = vmatpush.bf16.msra.mxu0 %v5668
    %5744 = vmatpush.bf16.msra.mxu0 %v5666
    %5745 = vmatpush.bf16.msra.mxu0 %v5664
    %5746 = vmatpush.bf16.msra.mxu0 %v5662
    %5747 = vmatpush.bf16.msra.mxu0 %v5660
    %5748 = vmatpush.bf16.msra.mxu0 %v5658
    %5749 = vmatpush.bf16.msra.mxu0 %v5656
    %5750 = vmatpush.bf16.msra.mxu0 %v5654
    %5751 = vmatmul.bf16.gmra.mxu0 %v5248
    %v5752 = vpop.f32.mrf.mxu0
    %v5753 = vadd.f32 %v5739, %v5752
    %v5754 = vpop.f32.mrf.mxu0
    %v5755 = vadd.f32 %v5741, %v5754
    %5756 = vdwg.mxu0
    %v5757 = vmax.f32 %v5725, 0.0
    %v5758 = vmax.f32 %v5753, 0.0
    %v5759 = vmax.f32 %v5727, 0.0
    %v5760 = vmax.f32 %v5755, 0.0
    %vm5761 = vcmp.ne.f32.partialorder %v5725, %v5725
    %vm5762 = vcmp.ne.f32.partialorder %v5753, %v5753
    %vm5763 = vcmp.ne.f32.partialorder %v5727, %v5727
    %vm5764 = vcmp.ne.f32.partialorder %v5755, %v5755
    %v5765 = vadd.f32 %v5725, 0.0
    %v5766 = vadd.f32 %v5753, 0.0
    %v5767 = vadd.f32 %v5727, 0.0
    %v5768 = vadd.f32 %v5755, 0.0
    %v5769 = vand.u32 2147483647, %v5725
    %v5770 = vand.u32 2147483647, %v5753
    %v5771 = vand.u32 2147483647, %v5727
    %v5772 = vand.u32 2147483647, %v5755
    %v5773 = vsub.f32 0.0, %v5769
    %v5774 = vsub.f32 0.0, %v5770
    %v5775 = vsub.f32 0.0, %v5771
    %v5776 = vsub.f32 0.0, %v5772
    %v5777 = vmul.f32 %v5773, 1.442695
    %v5778 = vpow.pop %v5777
    %v5779 = vmul.f32 %v5774, 1.442695
    %v5780 = vpow.pop %v5779
    %v5781 = vmul.f32 %v5775, 1.442695
    %v5782 = vpow.pop %v5781
    %v5783 = vmul.f32 %v5776, 1.442695
    %v5784 = vpow.pop %v5783
    %v5785 = vadd.f32 %v5778, 1.0
    %v5786 = vlog2.pop %v5785
    %v5787 = vmul.f32 %v5786, 0.6931472
    %v5788 = vmul.f32 -0.5, %v5778
    %v5789 = vadd.f32 %v5788, 1.0
    %v5790 = vmul.f32 %v5789, %v5778
    %v5791 = vand.u32 2147483647, %v5778
    %vm5792 = vcmp.lt.f32.partialorder %v5791, 0.0004427343
    %v5793 = vsel %vm5792, %v5790, %v5787
    %v5794 = vadd.f32 %v5780, 1.0
    %v5795 = vlog2.pop %v5794
    %v5796 = vmul.f32 %v5795, 0.6931472
    %v5797 = vmul.f32 -0.5, %v5780
    %v5798 = vadd.f32 %v5797, 1.0
    %v5799 = vmul.f32 %v5798, %v5780
    %v5800 = vand.u32 2147483647, %v5780
    %vm5801 = vcmp.lt.f32.partialorder %v5800, 0.0004427343
    %v5802 = vsel %vm5801, %v5799, %v5796
    %v5803 = vadd.f32 %v5782, 1.0
    %v5804 = vlog2.pop %v5803
    %v5805 = vmul.f32 %v5804, 0.6931472
    %v5806 = vmul.f32 -0.5, %v5782
    %v5807 = vadd.f32 %v5806, 1.0
    %v5808 = vmul.f32 %v5807, %v5782
    %v5809 = vand.u32 2147483647, %v5782
    %vm5810 = vcmp.lt.f32.partialorder %v5809, 0.0004427343
    %v5811 = vsel %vm5810, %v5808, %v5805
    %v5812 = vadd.f32 %v5784, 1.0
    %v5813 = vlog2.pop %v5812
    %v5814 = vmul.f32 %v5813, 0.6931472
    %v5815 = vmul.f32 -0.5, %v5784
    %v5816 = vadd.f32 %v5815, 1.0
    %v5817 = vmul.f32 %v5816, %v5784
    %v5818 = vand.u32 2147483647, %v5784
    %vm5819 = vcmp.lt.f32.partialorder %v5818, 0.0004427343
    %v5820 = vsel %vm5819, %v5817, %v5814
    %v5821 = vadd.f32 %v5757, %v5793
    %v5822 = vadd.f32 %v5758, %v5802
    %v5823 = vadd.f32 %v5759, %v5811
    %v5824 = vadd.f32 %v5760, %v5820
    %v5825 = vsel %vm5761, %v5765, %v5821
    %v5826 = vsel %vm5762, %v5766, %v5822
    %v5827 = vsel %vm5763, %v5767, %v5823
    %v5828 = vsel %vm5764, %v5768, %v5824
    %v5829 = vadd.f32 %v5825, 1e-05
    %v5830 = vadd.f32 %v5826, 1e-05
    %v5831 = vadd.f32 %v5827, 1e-05
    %v5832 = vadd.f32 %v5828, 1e-05
    %v5833 = vld [vmem:[%s13] sm:$0xff]
    %v5834 = vld [vmem:[%s13 + $0x8] sm:$0xff]
    %v5835 = vld [vmem:[%s13 + $0x10] sm:$0x3]
    %v5836 = vld [vmem:[%s13 + $0x18] sm:$0x3]
    %v5837 = vmul.f32 %v5833, %v5829
    %v5838 = vmul.f32 %v5834, %v5830
    %v5839 = vmul.f32 %v5835, %v5831
    %v5840 = vmul.f32 %v5836, %v5832
    %v5841 = vadd.f32 %v5471, %v5837
    %v5842 = vadd.f32 %v5499, %v5838
    %v5843 = vadd.f32 %v5473, %v5839
    %v5844 = vadd.f32 %v5501, %v5840
    %v5845 = vpack.c.bf16 %v5843, %v5841
    %v5846 = vpack.c.bf16 %v5844, %v5842
    %v5847 = vld [vmem:[#allocation57] sm:$0xff]
    %v5848 = vld [vmem:[#allocation57 + $0x8] sm:$0xff]
    %v5849 = vld [vmem:[#allocation57 + $0x10] sm:$0xff]
    %v5850 = vld [vmem:[#allocation57 + $0x18] sm:$0xff]
    %v5851 = vld [vmem:[#allocation57 + $0x20] sm:$0xff]
    %v5852 = vld [vmem:[#allocation57 + $0x28] sm:$0xff]
    %v5853 = vld [vmem:[#allocation57 + $0x30] sm:$0xff]
    %v5854 = vld [vmem:[#allocation57 + $0x38] sm:$0xff]
    %v5855 = vld [vmem:[#allocation57 + $0x40] sm:$0xff]
    %v5856 = vld [vmem:[#allocation57 + $0x48] sm:$0xff]
    %v5857 = vld [vmem:[#allocation57 + $0x50] sm:$0xff]
    %v5858 = vld [vmem:[#allocation57 + $0x58] sm:$0xff]
    %v5859 = vld [vmem:[#allocation57 + $0x60] sm:$0xff]
    %v5860 = vld [vmem:[#allocation57 + $0x68] sm:$0xff]
    %v5861 = vld [vmem:[#allocation57 + $0x70] sm:$0xff]
    %v5862 = vld [vmem:[#allocation57 + $0x78] sm:$0xff]
    %v5863 = vld [vmem:[#allocation57 + $0x80] sm:$0xff]
    %v5864 = vld [vmem:[#allocation57 + $0x88] sm:$0xff]
    %v5865 = vld [vmem:[#allocation57 + $0x90] sm:$0xff]
    %v5866 = vld [vmem:[#allocation57 + $0x98] sm:$0xff]
    %v5867 = vld [vmem:[#allocation57 + $0xa0] sm:$0xff]
    %v5868 = vld [vmem:[#allocation57 + $0xa8] sm:$0xff]
    %v5869 = vld [vmem:[#allocation57 + $0xb0] sm:$0xff]
    %v5870 = vld [vmem:[#allocation57 + $0xb8] sm:$0xff]
    %v5871 = vld [vmem:[#allocation57 + $0xc0] sm:$0xff]
    %v5872 = vld [vmem:[#allocation57 + $0xc8] sm:$0xff]
    %v5873 = vld [vmem:[#allocation57 + $0xd0] sm:$0xff]
    %v5874 = vld [vmem:[#allocation57 + $0xd8] sm:$0xff]
    %v5875 = vld [vmem:[#allocation57 + $0xe0] sm:$0xff]
    %v5876 = vld [vmem:[#allocation57 + $0xe8] sm:$0xff]
    %v5877 = vld [vmem:[#allocation57 + $0xf0] sm:$0xff]
    %v5878 = vld [vmem:[#allocation57 + $0xf8] sm:$0xff]
    %v5879 = vld [vmem:[#allocation58] sm:$0x3]
    %v5881 = vperm.slane %v5879, 0
    %v5882 = vperm.slane %v5879, 1
    %v5885 = vmul.f32 %v3995, %v5881
    %v5886 = vmul.f32 %v3995, %v5882
    %v5887 = vmul.f32 %v4000, %v5881
    %v5888 = vmul.f32 %v4000, %v5882
    %v5921 = vunpack.c.l.b16 %v5847
    %v5922 = vunpack.c.h.b16 %v5847
    %v5923 = vunpack.c.l.b16 %v5848
    %v5924 = vunpack.c.h.b16 %v5848
    %v5925 = vunpack.c.l.b16 %v5849
    %v5926 = vunpack.c.h.b16 %v5849
    %v5927 = vunpack.c.l.b16 %v5850
    %v5928 = vunpack.c.h.b16 %v5850
    %v5929 = vunpack.c.l.b16 %v5851
    %v5930 = vunpack.c.h.b16 %v5851
    %v5931 = vunpack.c.l.b16 %v5852
    %v5932 = vunpack.c.h.b16 %v5852
    %v5933 = vunpack.c.l.b16 %v5853
    %v5934 = vunpack.c.h.b16 %v5853
    %v5935 = vunpack.c.l.b16 %v5854
    %v5936 = vunpack.c.h.b16 %v5854
    %v5937 = vunpack.c.l.b16 %v5855
    %v5938 = vunpack.c.h.b16 %v5855
    %v5939 = vunpack.c.l.b16 %v5856
    %v5940 = vunpack.c.h.b16 %v5856
    %v5941 = vunpack.c.l.b16 %v5857
    %v5942 = vunpack.c.h.b16 %v5857
    %v5943 = vunpack.c.l.b16 %v5858
    %v5944 = vunpack.c.h.b16 %v5858
    %v5945 = vunpack.c.l.b16 %v5859
    %v5946 = vunpack.c.h.b16 %v5859
    %v5947 = vunpack.c.l.b16 %v5860
    %v5948 = vunpack.c.h.b16 %v5860
    %v5949 = vunpack.c.l.b16 %v5861
    %v5950 = vunpack.c.h.b16 %v5861
    %v5951 = vunpack.c.l.b16 %v5862
    %v5952 = vunpack.c.h.b16 %v5862
    %v5953 = vunpack.c.l.b16 %v5863
    %v5954 = vunpack.c.h.b16 %v5863
    %v5955 = vunpack.c.l.b16 %v5864
    %v5956 = vunpack.c.h.b16 %v5864
    %v5957 = vunpack.c.l.b16 %v5865
    %v5958 = vunpack.c.h.b16 %v5865
    %v5959 = vunpack.c.l.b16 %v5866
    %v5960 = vunpack.c.h.b16 %v5866
    %v5961 = vunpack.c.l.b16 %v5867
    %v5962 = vunpack.c.h.b16 %v5867
    %v5963 = vunpack.c.l.b16 %v5868
    %v5964 = vunpack.c.h.b16 %v5868
    %v5965 = vunpack.c.l.b16 %v5869
    %v5966 = vunpack.c.h.b16 %v5869
    %v5967 = vunpack.c.l.b16 %v5870
    %v5968 = vunpack.c.h.b16 %v5870
    %v5969 = vunpack.c.l.b16 %v5871
    %v5970 = vunpack.c.h.b16 %v5871
    %v5971 = vunpack.c.l.b16 %v5872
    %v5972 = vunpack.c.h.b16 %v5872
    %v5973 = vunpack.c.l.b16 %v5873
    %v5974 = vunpack.c.h.b16 %v5873
    %v5975 = vunpack.c.l.b16 %v5874
    %v5976 = vunpack.c.h.b16 %v5874
    %v5977 = vunpack.c.l.b16 %v5875
    %v5978 = vunpack.c.h.b16 %v5875
    %v5979 = vunpack.c.l.b16 %v5876
    %v5980 = vunpack.c.h.b16 %v5876
    %v5981 = vunpack.c.l.b16 %v5877
    %v5982 = vunpack.c.h.b16 %v5877
    %v5983 = vunpack.c.l.b16 %v5878
    %v5984 = vunpack.c.h.b16 %v5878
    %v5985 = vpack.c.b16 %v5923, %v5921
    %v5986 = vpack.c.b16 %v5924, %v5922
    %v5987 = vpack.c.b16 %v5927, %v5925
    %v5988 = vpack.c.b16 %v5928, %v5926
    %v5989 = vpack.c.b16 %v5931, %v5929
    %v5990 = vpack.c.b16 %v5932, %v5930
    %v5991 = vpack.c.b16 %v5935, %v5933
    %v5992 = vpack.c.b16 %v5936, %v5934
    %v5993 = vpack.c.b16 %v5939, %v5937
    %v5994 = vpack.c.b16 %v5940, %v5938
    %v5995 = vpack.c.b16 %v5943, %v5941
    %v5996 = vpack.c.b16 %v5944, %v5942
    %v5997 = vpack.c.b16 %v5947, %v5945
    %v5998 = vpack.c.b16 %v5948, %v5946
    %v5999 = vpack.c.b16 %v5951, %v5949
    %v6000 = vpack.c.b16 %v5952, %v5950
    %v6001 = vpack.c.b16 %v5955, %v5953
    %v6002 = vpack.c.b16 %v5956, %v5954
    %v6003 = vpack.c.b16 %v5959, %v5957
    %v6004 = vpack.c.b16 %v5960, %v5958
    %v6005 = vpack.c.b16 %v5963, %v5961
    %v6006 = vpack.c.b16 %v5964, %v5962
    %v6007 = vpack.c.b16 %v5967, %v5965
    %v6008 = vpack.c.b16 %v5968, %v5966
    %v6009 = vpack.c.b16 %v5971, %v5969
    %v6010 = vpack.c.b16 %v5972, %v5970
    %v6011 = vpack.c.b16 %v5975, %v5973
    %v6012 = vpack.c.b16 %v5976, %v5974
    %v6013 = vpack.c.b16 %v5979, %v5977
    %v6014 = vpack.c.b16 %v5980, %v5978
    %v6015 = vpack.c.b16 %v5983, %v5981
    %v6016 = vpack.c.b16 %v5984, %v5982
    %6049 = vmatpush.bf16.msra.mxu0 %v5999
    %6050 = vmatpush.bf16.msra.mxu0 %v5997
    %6051 = vmatpush.bf16.msra.mxu0 %v5995
    %6052 = vmatpush.bf16.msra.mxu0 %v5993
    %6053 = vmatpush.bf16.msra.mxu0 %v5991
    %6054 = vmatpush.bf16.msra.mxu0 %v5989
    %6055 = vmatpush.bf16.msra.mxu0 %v5987
    %6056 = vmatpush.bf16.msra.mxu0 %v5985
    %6057 = vmatmul.bf16.gmra.mxu0 %v5845
    %v6058 = vpop.f32.mrf.mxu0
    %v6059 = vadd.f32 %v5885, %v6058
    %v6060 = vpop.f32.mrf.mxu0
    %v6061 = vadd.f32 %v5887, %v6060
    %6062 = vdwg.mxu0
    %6063 = vmatpush.bf16.msra.mxu0 %v6015
    %6064 = vmatpush.bf16.msra.mxu0 %v6013
    %6065 = vmatpush.bf16.msra.mxu0 %v6011
    %6066 = vmatpush.bf16.msra.mxu0 %v6009
    %6067 = vmatpush.bf16.msra.mxu0 %v6007
    %6068 = vmatpush.bf16.msra.mxu0 %v6005
    %6069 = vmatpush.bf16.msra.mxu0 %v6003
    %6070 = vmatpush.bf16.msra.mxu0 %v6001
    %6071 = vmatmul.bf16.gmra.mxu0 %v5846
    %v6072 = vpop.f32.mrf.mxu0
    %v6073 = vadd.f32 %v6059, %v6072
    %v6074 = vpop.f32.mrf.mxu0
    %v6075 = vadd.f32 %v6061, %v6074
    %6076 = vdwg.mxu0
    %6077 = vmatpush.bf16.msra.mxu0 %v6000
    %6078 = vmatpush.bf16.msra.mxu0 %v5998
    %6079 = vmatpush.bf16.msra.mxu0 %v5996
    %6080 = vmatpush.bf16.msra.mxu0 %v5994
    %6081 = vmatpush.bf16.msra.mxu0 %v5992
    %6082 = vmatpush.bf16.msra.mxu0 %v5990
    %6083 = vmatpush.bf16.msra.mxu0 %v5988
    %6084 = vmatpush.bf16.msra.mxu0 %v5986
    %6085 = vmatmul.bf16.gmra.mxu0 %v5845
    %v6086 = vpop.f32.mrf.mxu0
    %v6087 = vadd.f32 %v5886, %v6086
    %v6088 = vpop.f32.mrf.mxu0
    %v6089 = vadd.f32 %v5888, %v6088
    %6090 = vdwg.mxu0
    %6091 = vmatpush.bf16.msra.mxu0 %v6016
    %6092 = vmatpush.bf16.msra.mxu0 %v6014
    %6093 = vmatpush.bf16.msra.mxu0 %v6012
    %6094 = vmatpush.bf16.msra.mxu0 %v6010
    %6095 = vmatpush.bf16.msra.mxu0 %v6008
    %6096 = vmatpush.bf16.msra.mxu0 %v6006
    %6097 = vmatpush.bf16.msra.mxu0 %v6004
    %6098 = vmatpush.bf16.msra.mxu0 %v6002
    %6099 = vmatmul.bf16.gmra.mxu0 %v5846
    %v6100 = vpop.f32.mrf.mxu0
    %v6101 = vadd.f32 %v6087, %v6100
    %v6102 = vpop.f32.mrf.mxu0
    %v6103 = vadd.f32 %v6089, %v6102
    %6104 = vdwg.mxu0
    %v6105 = vld [vmem:[#allocation60] sm:$0x3]
    %v6107 = vperm.slane %v6105, 0
    %v6108 = vperm.slane %v6105, 1
    %v6111 = vadd.f32 %v6073, %v6107
    %v6112 = vadd.f32 %v6101, %v6108
    %v6113 = vadd.f32 %v6075, %v6107
    %v6114 = vadd.f32 %v6103, %v6108
    %v6115 = vmax.f32 %v6111, 0.0
    %v6116 = vmax.f32 %v6112, 0.0
    %v6117 = vmax.f32 %v6113, 0.0
    %v6118 = vmax.f32 %v6114, 0.0
    %v6119 = vpack.c.bf16 %v6117, %v6115
    %v6120 = vpack.c.bf16 %v6118, %v6116
    %v6121 = vld [vmem:[#allocation61] sm:$0xff]
    %v6122 = vld [vmem:[#allocation61 + $0x8] sm:$0xff]
    %v6123 = vld [vmem:[#allocation61 + $0x10] sm:$0xff]
    %v6124 = vld [vmem:[#allocation61 + $0x18] sm:$0xff]
    %v6125 = vld [vmem:[#allocation61 + $0x20] sm:$0xff]
    %v6126 = vld [vmem:[#allocation61 + $0x28] sm:$0xff]
    %v6127 = vld [vmem:[#allocation61 + $0x30] sm:$0xff]
    %v6128 = vld [vmem:[#allocation61 + $0x38] sm:$0xff]
    %v6129 = vld [vmem:[#allocation61 + $0x40] sm:$0xff]
    %v6130 = vld [vmem:[#allocation61 + $0x48] sm:$0xff]
    %v6131 = vld [vmem:[#allocation61 + $0x50] sm:$0xff]
    %v6132 = vld [vmem:[#allocation61 + $0x58] sm:$0xff]
    %v6133 = vld [vmem:[#allocation61 + $0x60] sm:$0xff]
    %v6134 = vld [vmem:[#allocation61 + $0x68] sm:$0xff]
    %v6135 = vld [vmem:[#allocation61 + $0x70] sm:$0xff]
    %v6136 = vld [vmem:[#allocation61 + $0x78] sm:$0xff]
    %v6137 = vld [vmem:[#allocation61 + $0x80] sm:$0xff]
    %v6138 = vld [vmem:[#allocation61 + $0x88] sm:$0xff]
    %v6139 = vld [vmem:[#allocation61 + $0x90] sm:$0xff]
    %v6140 = vld [vmem:[#allocation61 + $0x98] sm:$0xff]
    %v6141 = vld [vmem:[#allocation61 + $0xa0] sm:$0xff]
    %v6142 = vld [vmem:[#allocation61 + $0xa8] sm:$0xff]
    %v6143 = vld [vmem:[#allocation61 + $0xb0] sm:$0xff]
    %v6144 = vld [vmem:[#allocation61 + $0xb8] sm:$0xff]
    %v6145 = vld [vmem:[#allocation61 + $0xc0] sm:$0xff]
    %v6146 = vld [vmem:[#allocation61 + $0xc8] sm:$0xff]
    %v6147 = vld [vmem:[#allocation61 + $0xd0] sm:$0xff]
    %v6148 = vld [vmem:[#allocation61 + $0xd8] sm:$0xff]
    %v6149 = vld [vmem:[#allocation61 + $0xe0] sm:$0xff]
    %v6150 = vld [vmem:[#allocation61 + $0xe8] sm:$0xff]
    %v6151 = vld [vmem:[#allocation61 + $0xf0] sm:$0xff]
    %v6152 = vld [vmem:[#allocation61 + $0xf8] sm:$0xff]
    %v6153 = vld [vmem:[#allocation63] sm:$0x3]
    %v6155 = vperm.slane %v6153, 0
    %v6156 = vperm.slane %v6153, 1
    %v6191 = vunpack.c.l.b16 %v6121
    %v6192 = vunpack.c.h.b16 %v6121
    %v6193 = vunpack.c.l.b16 %v6122
    %v6194 = vunpack.c.h.b16 %v6122
    %v6195 = vunpack.c.l.b16 %v6123
    %v6196 = vunpack.c.h.b16 %v6123
    %v6197 = vunpack.c.l.b16 %v6124
    %v6198 = vunpack.c.h.b16 %v6124
    %v6199 = vunpack.c.l.b16 %v6125
    %v6200 = vunpack.c.h.b16 %v6125
    %v6201 = vunpack.c.l.b16 %v6126
    %v6202 = vunpack.c.h.b16 %v6126
    %v6203 = vunpack.c.l.b16 %v6127
    %v6204 = vunpack.c.h.b16 %v6127
    %v6205 = vunpack.c.l.b16 %v6128
    %v6206 = vunpack.c.h.b16 %v6128
    %v6207 = vunpack.c.l.b16 %v6129
    %v6208 = vunpack.c.h.b16 %v6129
    %v6209 = vunpack.c.l.b16 %v6130
    %v6210 = vunpack.c.h.b16 %v6130
    %v6211 = vunpack.c.l.b16 %v6131
    %v6212 = vunpack.c.h.b16 %v6131
    %v6213 = vunpack.c.l.b16 %v6132
    %v6214 = vunpack.c.h.b16 %v6132
    %v6215 = vunpack.c.l.b16 %v6133
    %v6216 = vunpack.c.h.b16 %v6133
    %v6217 = vunpack.c.l.b16 %v6134
    %v6218 = vunpack.c.h.b16 %v6134
    %v6219 = vunpack.c.l.b16 %v6135
    %v6220 = vunpack.c.h.b16 %v6135
    %v6221 = vunpack.c.l.b16 %v6136
    %v6222 = vunpack.c.h.b16 %v6136
    %v6223 = vunpack.c.l.b16 %v6137
    %v6224 = vunpack.c.h.b16 %v6137
    %v6225 = vunpack.c.l.b16 %v6138
    %v6226 = vunpack.c.h.b16 %v6138
    %v6227 = vunpack.c.l.b16 %v6139
    %v6228 = vunpack.c.h.b16 %v6139
    %v6229 = vunpack.c.l.b16 %v6140
    %v6230 = vunpack.c.h.b16 %v6140
    %v6231 = vunpack.c.l.b16 %v6141
    %v6232 = vunpack.c.h.b16 %v6141
    %v6233 = vunpack.c.l.b16 %v6142
    %v6234 = vunpack.c.h.b16 %v6142
    %v6235 = vunpack.c.l.b16 %v6143
    %v6236 = vunpack.c.h.b16 %v6143
    %v6237 = vunpack.c.l.b16 %v6144
    %v6238 = vunpack.c.h.b16 %v6144
    %v6239 = vunpack.c.l.b16 %v6145
    %v6240 = vunpack.c.h.b16 %v6145
    %v6241 = vunpack.c.l.b16 %v6146
    %v6242 = vunpack.c.h.b16 %v6146
    %v6243 = vunpack.c.l.b16 %v6147
    %v6244 = vunpack.c.h.b16 %v6147
    %v6245 = vunpack.c.l.b16 %v6148
    %v6246 = vunpack.c.h.b16 %v6148
    %v6247 = vunpack.c.l.b16 %v6149
    %v6248 = vunpack.c.h.b16 %v6149
    %v6249 = vunpack.c.l.b16 %v6150
    %v6250 = vunpack.c.h.b16 %v6150
    %v6251 = vunpack.c.l.b16 %v6151
    %v6252 = vunpack.c.h.b16 %v6151
    %v6253 = vunpack.c.l.b16 %v6152
    %v6254 = vunpack.c.h.b16 %v6152
    %v6255 = vpack.c.b16 %v6193, %v6191
    %v6256 = vpack.c.b16 %v6194, %v6192
    %v6257 = vpack.c.b16 %v6197, %v6195
    %v6258 = vpack.c.b16 %v6198, %v6196
    %v6259 = vpack.c.b16 %v6201, %v6199
    %v6260 = vpack.c.b16 %v6202, %v6200
    %v6261 = vpack.c.b16 %v6205, %v6203
    %v6262 = vpack.c.b16 %v6206, %v6204
    %v6263 = vpack.c.b16 %v6209, %v6207
    %v6264 = vpack.c.b16 %v6210, %v6208
    %v6265 = vpack.c.b16 %v6213, %v6211
    %v6266 = vpack.c.b16 %v6214, %v6212
    %v6267 = vpack.c.b16 %v6217, %v6215
    %v6268 = vpack.c.b16 %v6218, %v6216
    %v6269 = vpack.c.b16 %v6221, %v6219
    %v6270 = vpack.c.b16 %v6222, %v6220
    %v6271 = vpack.c.b16 %v6225, %v6223
    %v6272 = vpack.c.b16 %v6226, %v6224
    %v6273 = vpack.c.b16 %v6229, %v6227
    %v6274 = vpack.c.b16 %v6230, %v6228
    %v6275 = vpack.c.b16 %v6233, %v6231
    %v6276 = vpack.c.b16 %v6234, %v6232
    %v6277 = vpack.c.b16 %v6237, %v6235
    %v6278 = vpack.c.b16 %v6238, %v6236
    %v6279 = vpack.c.b16 %v6241, %v6239
    %v6280 = vpack.c.b16 %v6242, %v6240
    %v6281 = vpack.c.b16 %v6245, %v6243
    %v6282 = vpack.c.b16 %v6246, %v6244
    %v6283 = vpack.c.b16 %v6249, %v6247
    %v6284 = vpack.c.b16 %v6250, %v6248
    %v6285 = vpack.c.b16 %v6253, %v6251
    %v6286 = vpack.c.b16 %v6254, %v6252
    %6319 = vmatpush.bf16.msra.mxu0 %v6269
    %6320 = vmatpush.bf16.msra.mxu0 %v6267
    %6321 = vmatpush.bf16.msra.mxu0 %v6265
    %6322 = vmatpush.bf16.msra.mxu0 %v6263
    %6323 = vmatpush.bf16.msra.mxu0 %v6261
    %6324 = vmatpush.bf16.msra.mxu0 %v6259
    %6325 = vmatpush.bf16.msra.mxu0 %v6257
    %6326 = vmatpush.bf16.msra.mxu0 %v6255
    %6327 = vmatmul.bf16.gmra.mxu0 %v6119
    %v6328 = vpop.f32.mrf.mxu0
    %v6329 = vadd.f32 %v6155, %v6328
    %v6330 = vpop.f32.mrf.mxu0
    %v6331 = vadd.f32 %v6155, %v6330
    %6332 = vdwg.mxu0
    %6333 = vmatpush.bf16.msra.mxu0 %v6285
    %6334 = vmatpush.bf16.msra.mxu0 %v6283
    %6335 = vmatpush.bf16.msra.mxu0 %v6281
    %6336 = vmatpush.bf16.msra.mxu0 %v6279
    %6337 = vmatpush.bf16.msra.mxu0 %v6277
    %6338 = vmatpush.bf16.msra.mxu0 %v6275
    %6339 = vmatpush.bf16.msra.mxu0 %v6273
    %6340 = vmatpush.bf16.msra.mxu0 %v6271
    %6341 = vmatmul.bf16.gmra.mxu0 %v6120
    %v6342 = vpop.f32.mrf.mxu0
    %v6343 = vadd.f32 %v6329, %v6342
    %v6344 = vpop.f32.mrf.mxu0
    %v6345 = vadd.f32 %v6331, %v6344
    %6346 = vdwg.mxu0
    %6347 = vmatpush.bf16.msra.mxu0 %v6270
    %6348 = vmatpush.bf16.msra.mxu0 %v6268
    %6349 = vmatpush.bf16.msra.mxu0 %v6266
    %6350 = vmatpush.bf16.msra.mxu0 %v6264
    %6351 = vmatpush.bf16.msra.mxu0 %v6262
    %6352 = vmatpush.bf16.msra.mxu0 %v6260
    %6353 = vmatpush.bf16.msra.mxu0 %v6258
    %6354 = vmatpush.bf16.msra.mxu0 %v6256
    %6355 = vmatmul.bf16.gmra.mxu0 %v6119
    %v6356 = vpop.f32.mrf.mxu0
    %v6357 = vadd.f32 %v6156, %v6356
    %v6358 = vpop.f32.mrf.mxu0
    %v6359 = vadd.f32 %v6156, %v6358
    %6360 = vdwg.mxu0
    %6361 = vmatpush.bf16.msra.mxu0 %v6286
    %6362 = vmatpush.bf16.msra.mxu0 %v6284
    %6363 = vmatpush.bf16.msra.mxu0 %v6282
    %6364 = vmatpush.bf16.msra.mxu0 %v6280
    %6365 = vmatpush.bf16.msra.mxu0 %v6278
    %6366 = vmatpush.bf16.msra.mxu0 %v6276
    %6367 = vmatpush.bf16.msra.mxu0 %v6274
    %6368 = vmatpush.bf16.msra.mxu0 %v6272
    %6369 = vmatmul.bf16.gmra.mxu0 %v6120
    %v6370 = vpop.f32.mrf.mxu0
    %v6371 = vadd.f32 %v6357, %v6370
    %v6372 = vpop.f32.mrf.mxu0
    %v6373 = vadd.f32 %v6359, %v6372
    %6374 = vdwg.mxu0
    %v6375 = vmax.f32 %v6343, 0.0
    %v6376 = vmax.f32 %v6371, 0.0
    %v6377 = vmax.f32 %v6345, 0.0
    %v6378 = vmax.f32 %v6373, 0.0
    %v6379 = vpack.c.bf16 %v6377, %v6375
    %v6380 = vpack.c.bf16 %v6378, %v6376
    %v6381 = vld [vmem:[%s115] sm:$0xf]
    %v6382 = vld [vmem:[%s115 + $0x4] sm:$0xf]
    %v6383 = vld [vmem:[%s115 + $0x8] sm:$0xf]
    %v6384 = vld [vmem:[%s115 + $0xc] sm:$0xf]
    %v6385 = vld [vmem:[%s115 + $0x10] sm:$0xf]
    %v6386 = vld [vmem:[%s115 + $0x14] sm:$0xf]
    %v6387 = vld [vmem:[%s115 + $0x18] sm:$0xf]
    %v6388 = vld [vmem:[%s115 + $0x1c] sm:$0xf]
    %v6389 = vld [vmem:[%s115 + $0x20] sm:$0xf]
    %v6390 = vld [vmem:[%s115 + $0x24] sm:$0xf]
    %v6391 = vld [vmem:[%s115 + $0x28] sm:$0xf]
    %v6392 = vld [vmem:[%s115 + $0x2c] sm:$0xf]
    %v6393 = vld [vmem:[%s115 + $0x30] sm:$0xf]
    %v6394 = vld [vmem:[%s115 + $0x34] sm:$0xf]
    %v6395 = vld [vmem:[%s115 + $0x38] sm:$0xf]
    %v6396 = vld [vmem:[%s115 + $0x3c] sm:$0xf]
    %v6397 = vld [vmem:[%s115 + $0x40] sm:$0xf]
    %v6398 = vld [vmem:[%s115 + $0x44] sm:$0xf]
    %v6399 = vld [vmem:[%s115 + $0x48] sm:$0xf]
    %v6400 = vld [vmem:[%s115 + $0x4c] sm:$0xf]
    %v6401 = vld [vmem:[%s115 + $0x50] sm:$0xf]
    %v6402 = vld [vmem:[%s115 + $0x54] sm:$0xf]
    %v6403 = vld [vmem:[%s115 + $0x58] sm:$0xf]
    %v6404 = vld [vmem:[%s115 + $0x5c] sm:$0xf]
    %v6405 = vld [vmem:[%s115 + $0x60] sm:$0xf]
    %v6406 = vld [vmem:[%s115 + $0x64] sm:$0xf]
    %v6407 = vld [vmem:[%s115 + $0x68] sm:$0xf]
    %v6408 = vld [vmem:[%s115 + $0x6c] sm:$0xf]
    %v6409 = vld [vmem:[%s115 + $0x70] sm:$0xf]
    %v6410 = vld [vmem:[%s115 + $0x74] sm:$0xf]
    %v6411 = vld [vmem:[%s115 + $0x78] sm:$0xf]
    %v6412 = vld [vmem:[%s115 + $0x7c] sm:$0xf]
    %v6413 = vld [vmem:[#allocation64] sm:$0x1]
    %v6415 = vperm.slane %v6413, 0
    %v6449 = vunpack.c.l.b16 %v6381
    %v6450 = vunpack.c.l.b16 %v6382
    %v6451 = vunpack.c.l.b16 %v6383
    %v6452 = vunpack.c.l.b16 %v6384
    %v6453 = vunpack.c.l.b16 %v6385
    %v6454 = vunpack.c.l.b16 %v6386
    %v6455 = vunpack.c.l.b16 %v6387
    %v6456 = vunpack.c.l.b16 %v6388
    %v6457 = vunpack.c.l.b16 %v6389
    %v6458 = vunpack.c.l.b16 %v6390
    %v6459 = vunpack.c.l.b16 %v6391
    %v6460 = vunpack.c.l.b16 %v6392
    %v6461 = vunpack.c.l.b16 %v6393
    %v6462 = vunpack.c.l.b16 %v6394
    %v6463 = vunpack.c.l.b16 %v6395
    %v6464 = vunpack.c.l.b16 %v6396
    %v6465 = vunpack.c.l.b16 %v6397
    %v6466 = vunpack.c.l.b16 %v6398
    %v6467 = vunpack.c.l.b16 %v6399
    %v6468 = vunpack.c.l.b16 %v6400
    %v6469 = vunpack.c.l.b16 %v6401
    %v6470 = vunpack.c.l.b16 %v6402
    %v6471 = vunpack.c.l.b16 %v6403
    %v6472 = vunpack.c.l.b16 %v6404
    %v6473 = vunpack.c.l.b16 %v6405
    %v6474 = vunpack.c.l.b16 %v6406
    %v6475 = vunpack.c.l.b16 %v6407
    %v6476 = vunpack.c.l.b16 %v6408
    %v6477 = vunpack.c.l.b16 %v6409
    %v6478 = vunpack.c.l.b16 %v6410
    %v6479 = vunpack.c.l.b16 %v6411
    %v6480 = vunpack.c.l.b16 %v6412
    %v6481 = vpack.c.b16 %v6450, %v6449
    %v6482 = vpack.c.b16 %v6452, %v6451
    %v6483 = vpack.c.b16 %v6454, %v6453
    %v6484 = vpack.c.b16 %v6456, %v6455
    %v6485 = vpack.c.b16 %v6458, %v6457
    %v6486 = vpack.c.b16 %v6460, %v6459
    %v6487 = vpack.c.b16 %v6462, %v6461
    %v6488 = vpack.c.b16 %v6464, %v6463
    %v6489 = vpack.c.b16 %v6466, %v6465
    %v6490 = vpack.c.b16 %v6468, %v6467
    %v6491 = vpack.c.b16 %v6470, %v6469
    %v6492 = vpack.c.b16 %v6472, %v6471
    %v6493 = vpack.c.b16 %v6474, %v6473
    %v6494 = vpack.c.b16 %v6476, %v6475
    %v6495 = vpack.c.b16 %v6478, %v6477
    %v6496 = vpack.c.b16 %v6480, %v6479
    %6513 = vmatpush.bf16.msra.mxu0 %v6488
    %6514 = vmatpush.bf16.msra.mxu0 %v6487
    %6515 = vmatpush.bf16.msra.mxu0 %v6486
    %6516 = vmatpush.bf16.msra.mxu0 %v6485
    %6517 = vmatpush.bf16.msra.mxu0 %v6484
    %6518 = vmatpush.bf16.msra.mxu0 %v6483
    %6519 = vmatpush.bf16.msra.mxu0 %v6482
    %6520 = vmatpush.bf16.msra.mxu0 %v6481
    %6521 = vmatmul.bf16.gmra.mxu0 %v6379
    %v6522 = vpop.f32.mrf.mxu0
    %v6523 = vadd.f32 %v6415, %v6522
    %v6524 = vpop.f32.mrf.mxu0
    %v6525 = vadd.f32 %v6415, %v6524
    %6526 = vdwg.mxu0
    %6527 = vmatpush.bf16.msra.mxu0 %v6496
    %6528 = vmatpush.bf16.msra.mxu0 %v6495
    %6529 = vmatpush.bf16.msra.mxu0 %v6494
    %6530 = vmatpush.bf16.msra.mxu0 %v6493
    %6531 = vmatpush.bf16.msra.mxu0 %v6492
    %6532 = vmatpush.bf16.msra.mxu0 %v6491
    %6533 = vmatpush.bf16.msra.mxu0 %v6490
    %6534 = vmatpush.bf16.msra.mxu0 %v6489
    %6535 = vmatmul.bf16.gmra.mxu0 %v6380
    %v6536 = vpop.f32.mrf.mxu0
    %v6537 = vadd.f32 %v6523, %v6536
    %v6538 = vpop.f32.mrf.mxu0
    %v6539 = vadd.f32 %v6525, %v6538
    %6540 = vdwg.mxu0
    %v6541 = vld [vmem:[%s119] sm:$0xf]
    %v6542 = vld [vmem:[%s119 + $0x4] sm:$0xf]
    %v6543 = vld [vmem:[%s119 + $0x8] sm:$0xf]
    %v6544 = vld [vmem:[%s119 + $0xc] sm:$0xf]
    %v6545 = vld [vmem:[%s119 + $0x10] sm:$0xf]
    %v6546 = vld [vmem:[%s119 + $0x14] sm:$0xf]
    %v6547 = vld [vmem:[%s119 + $0x18] sm:$0xf]
    %v6548 = vld [vmem:[%s119 + $0x1c] sm:$0xf]
    %v6549 = vld [vmem:[%s119 + $0x20] sm:$0xf]
    %v6550 = vld [vmem:[%s119 + $0x24] sm:$0xf]
    %v6551 = vld [vmem:[%s119 + $0x28] sm:$0xf]
    %v6552 = vld [vmem:[%s119 + $0x2c] sm:$0xf]
    %v6553 = vld [vmem:[%s119 + $0x30] sm:$0xf]
    %v6554 = vld [vmem:[%s119 + $0x34] sm:$0xf]
    %v6555 = vld [vmem:[%s119 + $0x38] sm:$0xf]
    %v6556 = vld [vmem:[%s119 + $0x3c] sm:$0xf]
    %v6557 = vld [vmem:[%s119 + $0x40] sm:$0xf]
    %v6558 = vld [vmem:[%s119 + $0x44] sm:$0xf]
    %v6559 = vld [vmem:[%s119 + $0x48] sm:$0xf]
    %v6560 = vld [vmem:[%s119 + $0x4c] sm:$0xf]
    %v6561 = vld [vmem:[%s119 + $0x50] sm:$0xf]
    %v6562 = vld [vmem:[%s119 + $0x54] sm:$0xf]
    %v6563 = vld [vmem:[%s119 + $0x58] sm:$0xf]
    %v6564 = vld [vmem:[%s119 + $0x5c] sm:$0xf]
    %v6565 = vld [vmem:[%s119 + $0x60] sm:$0xf]
    %v6566 = vld [vmem:[%s119 + $0x64] sm:$0xf]
    %v6567 = vld [vmem:[%s119 + $0x68] sm:$0xf]
    %v6568 = vld [vmem:[%s119 + $0x6c] sm:$0xf]
    %v6569 = vld [vmem:[%s119 + $0x70] sm:$0xf]
    %v6570 = vld [vmem:[%s119 + $0x74] sm:$0xf]
    %v6571 = vld [vmem:[%s119 + $0x78] sm:$0xf]
    %v6572 = vld [vmem:[%s119 + $0x7c] sm:$0xf]
    %v6573 = vld [vmem:[#allocation66] sm:$0x1]
    %v6575 = vperm.slane %v6573, 0
    %v6609 = vunpack.c.l.b16 %v6541
    %v6610 = vunpack.c.l.b16 %v6542
    %v6611 = vunpack.c.l.b16 %v6543
    %v6612 = vunpack.c.l.b16 %v6544
    %v6613 = vunpack.c.l.b16 %v6545
    %v6614 = vunpack.c.l.b16 %v6546
    %v6615 = vunpack.c.l.b16 %v6547
    %v6616 = vunpack.c.l.b16 %v6548
    %v6617 = vunpack.c.l.b16 %v6549
    %v6618 = vunpack.c.l.b16 %v6550
    %v6619 = vunpack.c.l.b16 %v6551
    %v6620 = vunpack.c.l.b16 %v6552
    %v6621 = vunpack.c.l.b16 %v6553
    %v6622 = vunpack.c.l.b16 %v6554
    %v6623 = vunpack.c.l.b16 %v6555
    %v6624 = vunpack.c.l.b16 %v6556
    %v6625 = vunpack.c.l.b16 %v6557
    %v6626 = vunpack.c.l.b16 %v6558
    %v6627 = vunpack.c.l.b16 %v6559
    %v6628 = vunpack.c.l.b16 %v6560
    %v6629 = vunpack.c.l.b16 %v6561
    %v6630 = vunpack.c.l.b16 %v6562
    %v6631 = vunpack.c.l.b16 %v6563
    %v6632 = vunpack.c.l.b16 %v6564
    %v6633 = vunpack.c.l.b16 %v6565
    %v6634 = vunpack.c.l.b16 %v6566
    %v6635 = vunpack.c.l.b16 %v6567
    %v6636 = vunpack.c.l.b16 %v6568
    %v6637 = vunpack.c.l.b16 %v6569
    %v6638 = vunpack.c.l.b16 %v6570
    %v6639 = vunpack.c.l.b16 %v6571
    %v6640 = vunpack.c.l.b16 %v6572
    %v6641 = vpack.c.b16 %v6610, %v6609
    %v6642 = vpack.c.b16 %v6612, %v6611
    %v6643 = vpack.c.b16 %v6614, %v6613
    %v6644 = vpack.c.b16 %v6616, %v6615
    %v6645 = vpack.c.b16 %v6618, %v6617
    %v6646 = vpack.c.b16 %v6620, %v6619
    %v6647 = vpack.c.b16 %v6622, %v6621
    %v6648 = vpack.c.b16 %v6624, %v6623
    %v6649 = vpack.c.b16 %v6626, %v6625
    %v6650 = vpack.c.b16 %v6628, %v6627
    %v6651 = vpack.c.b16 %v6630, %v6629
    %v6652 = vpack.c.b16 %v6632, %v6631
    %v6653 = vpack.c.b16 %v6634, %v6633
    %v6654 = vpack.c.b16 %v6636, %v6635
    %v6655 = vpack.c.b16 %v6638, %v6637
    %v6656 = vpack.c.b16 %v6640, %v6639
    %6673 = vmatpush.bf16.msra.mxu0 %v6648
    %6674 = vmatpush.bf16.msra.mxu0 %v6647
    %6675 = vmatpush.bf16.msra.mxu0 %v6646
    %6676 = vmatpush.bf16.msra.mxu0 %v6645
    %6677 = vmatpush.bf16.msra.mxu0 %v6644
    %6678 = vmatpush.bf16.msra.mxu0 %v6643
    %6679 = vmatpush.bf16.msra.mxu0 %v6642
    %6680 = vmatpush.bf16.msra.mxu0 %v6641
    %6681 = vmatmul.bf16.gmra.mxu0 %v6379
    %v6682 = vpop.f32.mrf.mxu0
    %v6683 = vadd.f32 %v6575, %v6682
    %v6684 = vpop.f32.mrf.mxu0
    %v6685 = vadd.f32 %v6575, %v6684
    %6686 = vdwg.mxu0
    %6687 = vmatpush.bf16.msra.mxu0 %v6656
    %6688 = vmatpush.bf16.msra.mxu0 %v6655
    %6689 = vmatpush.bf16.msra.mxu0 %v6654
    %6690 = vmatpush.bf16.msra.mxu0 %v6653
    %6691 = vmatpush.bf16.msra.mxu0 %v6652
    %6692 = vmatpush.bf16.msra.mxu0 %v6651
    %6693 = vmatpush.bf16.msra.mxu0 %v6650
    %6694 = vmatpush.bf16.msra.mxu0 %v6649
    %6695 = vmatmul.bf16.gmra.mxu0 %v6380
    %v6696 = vpop.f32.mrf.mxu0
    %v6697 = vadd.f32 %v6683, %v6696
    %v6698 = vpop.f32.mrf.mxu0
    %v6699 = vadd.f32 %v6685, %v6698
    %6700 = vdwg.mxu0
    %v6701 = vmax.f32 %v6697, 0.0
    %v6702 = vmax.f32 %v6699, 0.0
    %vm6703 = vcmp.ne.f32.partialorder %v6697, %v6697
    %vm6704 = vcmp.ne.f32.partialorder %v6699, %v6699
    %v6705 = vadd.f32 %v6697, 0.0
    %v6706 = vadd.f32 %v6699, 0.0
    %v6707 = vand.u32 2147483647, %v6697
    %v6708 = vand.u32 2147483647, %v6699
    %v6709 = vsub.f32 0.0, %v6707
    %v6710 = vsub.f32 0.0, %v6708
    %v6711 = vmul.f32 %v6709, 1.442695
    %v6712 = vpow.pop %v6711
    %v6713 = vmul.f32 %v6710, 1.442695
    %v6714 = vpow.pop %v6713
    %v6715 = vadd.f32 %v6712, 1.0
    %v6716 = vlog2.pop %v6715
    %v6717 = vmul.f32 %v6716, 0.6931472
    %v6718 = vmul.f32 -0.5, %v6712
    %v6719 = vadd.f32 %v6718, 1.0
    %v6720 = vmul.f32 %v6719, %v6712
    %v6721 = vand.u32 2147483647, %v6712
    %vm6722 = vcmp.lt.f32.partialorder %v6721, 0.0004427343
    %v6723 = vsel %vm6722, %v6720, %v6717
    %v6724 = vadd.f32 %v6714, 1.0
    %v6725 = vlog2.pop %v6724
    %v6726 = vmul.f32 %v6725, 0.6931472
    %v6727 = vmul.f32 -0.5, %v6714
    %v6728 = vadd.f32 %v6727, 1.0
    %v6729 = vmul.f32 %v6728, %v6714
    %v6730 = vand.u32 2147483647, %v6714
    %vm6731 = vcmp.lt.f32.partialorder %v6730, 0.0004427343
    %v6732 = vsel %vm6731, %v6729, %v6726
    %v6733 = vadd.f32 %v6701, %v6723
    %v6734 = vadd.f32 %v6702, %v6732
    %v6735 = vsel %vm6703, %v6705, %v6733
    %v6736 = vsel %vm6704, %v6706, %v6734
    %v6737 = vadd.f32 %v6735, 1e-05
    %v6738 = vadd.f32 %v6736, 1e-05
    %v6739 = vld [vmem:[#allocation67] sm:$0xff]
    %v6740 = vld [vmem:[#allocation67 + $0x8] sm:$0xff]
    %v6741 = vld [vmem:[#allocation67 + $0x10] sm:$0xff]
    %v6742 = vld [vmem:[#allocation67 + $0x18] sm:$0xff]
    %v6743 = vld [vmem:[#allocation69] sm:$0xff]
    %v6744 = vld [vmem:[#allocation69 + $0x8] sm:$0xff]
    %v6745 = vld [vmem:[#allocation69 + $0x10] sm:$0xff]
    %v6746 = vld [vmem:[#allocation69 + $0x18] sm:$0xff]
    %v6747 = vld [vmem:[#allocation69 + $0x20] sm:$0xff]
    %v6748 = vld [vmem:[#allocation69 + $0x28] sm:$0xff]
    %v6749 = vld [vmem:[#allocation69 + $0x30] sm:$0xff]
    %v6750 = vld [vmem:[#allocation69 + $0x38] sm:$0xff]
    %v6751 = vld [vmem:[#allocation69 + $0x40] sm:$0xff]
    %v6752 = vld [vmem:[#allocation69 + $0x48] sm:$0xff]
    %v6753 = vld [vmem:[#allocation69 + $0x50] sm:$0xff]
    %v6754 = vld [vmem:[#allocation69 + $0x58] sm:$0xff]
    %v6755 = vld [vmem:[#allocation69 + $0x60] sm:$0xff]
    %v6756 = vld [vmem:[#allocation69 + $0x68] sm:$0xff]
    %v6757 = vld [vmem:[#allocation69 + $0x70] sm:$0xff]
    %v6758 = vld [vmem:[#allocation69 + $0x78] sm:$0xff]
    %v6759 = vld [vmem:[#allocation69 + $0x80] sm:$0xff]
    %v6760 = vld [vmem:[#allocation69 + $0x88] sm:$0xff]
    %v6761 = vld [vmem:[#allocation69 + $0x90] sm:$0xff]
    %v6762 = vld [vmem:[#allocation69 + $0x98] sm:$0xff]
    %v6763 = vld [vmem:[#allocation69 + $0xa0] sm:$0xff]
    %v6764 = vld [vmem:[#allocation69 + $0xa8] sm:$0xff]
    %v6765 = vld [vmem:[#allocation69 + $0xb0] sm:$0xff]
    %v6766 = vld [vmem:[#allocation69 + $0xb8] sm:$0xff]
    %v6767 = vld [vmem:[#allocation69 + $0xc0] sm:$0xff]
    %v6768 = vld [vmem:[#allocation69 + $0xc8] sm:$0xff]
    %v6769 = vld [vmem:[#allocation69 + $0xd0] sm:$0xff]
    %v6770 = vld [vmem:[#allocation69 + $0xd8] sm:$0xff]
    %v6771 = vld [vmem:[#allocation69 + $0xe0] sm:$0xff]
    %v6772 = vld [vmem:[#allocation69 + $0xe8] sm:$0xff]
    %v6773 = vld [vmem:[#allocation69 + $0xf0] sm:$0xff]
    %v6774 = vld [vmem:[#allocation69 + $0xf8] sm:$0xff]
    %v6807 = vunpack.c.l.b16 %v6743
    %v6808 = vunpack.c.h.b16 %v6743
    %v6809 = vunpack.c.l.b16 %v6744
    %v6810 = vunpack.c.h.b16 %v6744
    %v6811 = vunpack.c.l.b16 %v6745
    %v6812 = vunpack.c.h.b16 %v6745
    %v6813 = vunpack.c.l.b16 %v6746
    %v6814 = vunpack.c.h.b16 %v6746
    %v6815 = vunpack.c.l.b16 %v6747
    %v6816 = vunpack.c.h.b16 %v6747
    %v6817 = vunpack.c.l.b16 %v6748
    %v6818 = vunpack.c.h.b16 %v6748
    %v6819 = vunpack.c.l.b16 %v6749
    %v6820 = vunpack.c.h.b16 %v6749
    %v6821 = vunpack.c.l.b16 %v6750
    %v6822 = vunpack.c.h.b16 %v6750
    %v6823 = vunpack.c.l.b16 %v6751
    %v6824 = vunpack.c.h.b16 %v6751
    %v6825 = vunpack.c.l.b16 %v6752
    %v6826 = vunpack.c.h.b16 %v6752
    %v6827 = vunpack.c.l.b16 %v6753
    %v6828 = vunpack.c.h.b16 %v6753
    %v6829 = vunpack.c.l.b16 %v6754
    %v6830 = vunpack.c.h.b16 %v6754
    %v6831 = vunpack.c.l.b16 %v6755
    %v6832 = vunpack.c.h.b16 %v6755
    %v6833 = vunpack.c.l.b16 %v6756
    %v6834 = vunpack.c.h.b16 %v6756
    %v6835 = vunpack.c.l.b16 %v6757
    %v6836 = vunpack.c.h.b16 %v6757
    %v6837 = vunpack.c.l.b16 %v6758
    %v6838 = vunpack.c.h.b16 %v6758
    %v6839 = vunpack.c.l.b16 %v6759
    %v6840 = vunpack.c.h.b16 %v6759
    %v6841 = vunpack.c.l.b16 %v6760
    %v6842 = vunpack.c.h.b16 %v6760
    %v6843 = vunpack.c.l.b16 %v6761
    %v6844 = vunpack.c.h.b16 %v6761
    %v6845 = vunpack.c.l.b16 %v6762
    %v6846 = vunpack.c.h.b16 %v6762
    %v6847 = vunpack.c.l.b16 %v6763
    %v6848 = vunpack.c.h.b16 %v6763
    %v6849 = vunpack.c.l.b16 %v6764
    %v6850 = vunpack.c.h.b16 %v6764
    %v6851 = vunpack.c.l.b16 %v6765
    %v6852 = vunpack.c.h.b16 %v6765
    %v6853 = vunpack.c.l.b16 %v6766
    %v6854 = vunpack.c.h.b16 %v6766
    %v6855 = vunpack.c.l.b16 %v6767
    %v6856 = vunpack.c.h.b16 %v6767
    %v6857 = vunpack.c.l.b16 %v6768
    %v6858 = vunpack.c.h.b16 %v6768
    %v6859 = vunpack.c.l.b16 %v6769
    %v6860 = vunpack.c.h.b16 %v6769
    %v6861 = vunpack.c.l.b16 %v6770
    %v6862 = vunpack.c.h.b16 %v6770
    %v6863 = vunpack.c.l.b16 %v6771
    %v6864 = vunpack.c.h.b16 %v6771
    %v6865 = vunpack.c.l.b16 %v6772
    %v6866 = vunpack.c.h.b16 %v6772
    %v6867 = vunpack.c.l.b16 %v6773
    %v6868 = vunpack.c.h.b16 %v6773
    %v6869 = vunpack.c.l.b16 %v6774
    %v6870 = vunpack.c.h.b16 %v6774
    %v6871 = vpack.c.b16 %v6809, %v6807
    %v6872 = vpack.c.b16 %v6810, %v6808
    %v6873 = vpack.c.b16 %v6813, %v6811
    %v6874 = vpack.c.b16 %v6814, %v6812
    %v6875 = vpack.c.b16 %v6817, %v6815
    %v6876 = vpack.c.b16 %v6818, %v6816
    %v6877 = vpack.c.b16 %v6821, %v6819
    %v6878 = vpack.c.b16 %v6822, %v6820
    %v6879 = vpack.c.b16 %v6825, %v6823
    %v6880 = vpack.c.b16 %v6826, %v6824
    %v6881 = vpack.c.b16 %v6829, %v6827
    %v6882 = vpack.c.b16 %v6830, %v6828
    %v6883 = vpack.c.b16 %v6833, %v6831
    %v6884 = vpack.c.b16 %v6834, %v6832
    %v6885 = vpack.c.b16 %v6837, %v6835
    %v6886 = vpack.c.b16 %v6838, %v6836
    %v6887 = vpack.c.b16 %v6841, %v6839
    %v6888 = vpack.c.b16 %v6842, %v6840
    %v6889 = vpack.c.b16 %v6845, %v6843
    %v6890 = vpack.c.b16 %v6846, %v6844
    %v6891 = vpack.c.b16 %v6849, %v6847
    %v6892 = vpack.c.b16 %v6850, %v6848
    %v6893 = vpack.c.b16 %v6853, %v6851
    %v6894 = vpack.c.b16 %v6854, %v6852
    %v6895 = vpack.c.b16 %v6857, %v6855
    %v6896 = vpack.c.b16 %v6858, %v6856
    %v6897 = vpack.c.b16 %v6861, %v6859
    %v6898 = vpack.c.b16 %v6862, %v6860
    %v6899 = vpack.c.b16 %v6865, %v6863
    %v6900 = vpack.c.b16 %v6866, %v6864
    %v6901 = vpack.c.b16 %v6869, %v6867
    %v6902 = vpack.c.b16 %v6870, %v6868
    %6935 = vmatpush.bf16.msra.mxu0 %v6885
    %6936 = vmatpush.bf16.msra.mxu0 %v6883
    %6937 = vmatpush.bf16.msra.mxu0 %v6881
    %6938 = vmatpush.bf16.msra.mxu0 %v6879
    %6939 = vmatpush.bf16.msra.mxu0 %v6877
    %6940 = vmatpush.bf16.msra.mxu0 %v6875
    %6941 = vmatpush.bf16.msra.mxu0 %v6873
    %6942 = vmatpush.bf16.msra.mxu0 %v6871
    %6943 = vmatmul.bf16.gmra.mxu0 %v5845
    %v6944 = vpop.f32.mrf.mxu0
    %v6945 = vadd.f32 0.0, %v6944
    %v6946 = vpop.f32.mrf.mxu0
    %v6947 = vadd.f32 0.0, %v6946
    %6948 = vdwg.mxu0
    %6949 = vmatpush.bf16.msra.mxu0 %v6901
    %6950 = vmatpush.bf16.msra.mxu0 %v6899
    %6951 = vmatpush.bf16.msra.mxu0 %v6897
    %6952 = vmatpush.bf16.msra.mxu0 %v6895
    %6953 = vmatpush.bf16.msra.mxu0 %v6893
    %6954 = vmatpush.bf16.msra.mxu0 %v6891
    %6955 = vmatpush.bf16.msra.mxu0 %v6889
    %6956 = vmatpush.bf16.msra.mxu0 %v6887
    %6957 = vmatmul.bf16.gmra.mxu0 %v5846
    %v6958 = vpop.f32.mrf.mxu0
    %v6959 = vadd.f32 %v6945, %v6958
    %v6960 = vpop.f32.mrf.mxu0
    %v6961 = vadd.f32 %v6947, %v6960
    %6962 = vdwg.mxu0
    %6963 = vmatpush.bf16.msra.mxu0 %v6886
    %6964 = vmatpush.bf16.msra.mxu0 %v6884
    %6965 = vmatpush.bf16.msra.mxu0 %v6882
    %6966 = vmatpush.bf16.msra.mxu0 %v6880
    %6967 = vmatpush.bf16.msra.mxu0 %v6878
    %6968 = vmatpush.bf16.msra.mxu0 %v6876
    %6969 = vmatpush.bf16.msra.mxu0 %v6874
    %6970 = vmatpush.bf16.msra.mxu0 %v6872
    %6971 = vmatmul.bf16.gmra.mxu0 %v5845
    %v6972 = vpop.f32.mrf.mxu0
    %v6973 = vadd.f32 0.0, %v6972
    %v6974 = vpop.f32.mrf.mxu0
    %v6975 = vadd.f32 0.0, %v6974
    %6976 = vdwg.mxu0
    %6977 = vmatpush.bf16.msra.mxu0 %v6902
    %6978 = vmatpush.bf16.msra.mxu0 %v6900
    %6979 = vmatpush.bf16.msra.mxu0 %v6898
    %6980 = vmatpush.bf16.msra.mxu0 %v6896
    %6981 = vmatpush.bf16.msra.mxu0 %v6894
    %6982 = vmatpush.bf16.msra.mxu0 %v6892
    %6983 = vmatpush.bf16.msra.mxu0 %v6890
    %6984 = vmatpush.bf16.msra.mxu0 %v6888
    %6985 = vmatmul.bf16.gmra.mxu0 %v5846
    %v6986 = vpop.f32.mrf.mxu0
    %v6987 = vadd.f32 %v6973, %v6986
    %v6988 = vpop.f32.mrf.mxu0
    %v6989 = vadd.f32 %v6975, %v6988
    %6990 = vdwg.mxu0
    %v6995 = vunpack.c.l.b16 %v6739
    %v6996 = vunpack.c.h.b16 %v6739
    %v6997 = vunpack.c.l.b16 %v6740
    %v6998 = vunpack.c.h.b16 %v6740
    %v6999 = vunpack.c.l.b16 %v6741
    %v7000 = vunpack.c.h.b16 %v6741
    %v7001 = vunpack.c.l.b16 %v6742
    %v7002 = vunpack.c.h.b16 %v6742
    %v7003 = vpack.c.b16 %v6997, %v6995
    %v7004 = vpack.c.b16 %v6998, %v6996
    %v7005 = vpack.c.b16 %v7001, %v6999
    %v7006 = vpack.c.b16 %v7002, %v7000
    %7011 = vmatpush.bf16.msra.mxu0 0
    %7012 = vmatpush.bf16.msra.mxu0 0
    %7013 = vmatpush.bf16.msra.mxu0 0
    %7014 = vmatpush.bf16.msra.mxu0 0
    %7015 = vmatpush.bf16.msra.mxu0 0
    %7016 = vmatpush.bf16.msra.mxu0 0
    %7017 = vmatpush.bf16.msra.mxu0 %v7005
    %7018 = vmatpush.bf16.msra.mxu0 %v7003
    %7019 = vmatmul.bf16.gmra.mxu0 %v4929
    %v7020 = vpop.f32.mrf.mxu0
    %v7021 = vadd.f32 %v6959, %v7020
    %v7022 = vpop.f32.mrf.mxu0
    %v7023 = vadd.f32 %v6961, %v7022
    %7024 = vdwg.mxu0
    %7025 = vmatpush.bf16.msra.mxu0 0
    %7026 = vmatpush.bf16.msra.mxu0 0
    %7027 = vmatpush.bf16.msra.mxu0 0
    %7028 = vmatpush.bf16.msra.mxu0 0
    %7029 = vmatpush.bf16.msra.mxu0 0
    %7030 = vmatpush.bf16.msra.mxu0 0
    %7031 = vmatpush.bf16.msra.mxu0 %v7006
    %7032 = vmatpush.bf16.msra.mxu0 %v7004
    %7033 = vmatmul.bf16.gmra.mxu0 %v4929
    %v7034 = vpop.f32.mrf.mxu0
    %v7035 = vadd.f32 %v6987, %v7034
    %v7036 = vpop.f32.mrf.mxu0
    %v7037 = vadd.f32 %v6989, %v7036
    %7038 = vdwg.mxu0
    %v7039 = vld [vmem:[#allocation70] sm:$0x3]
    %v7041 = vperm.slane %v7039, 0
    %v7042 = vperm.slane %v7039, 1
    %v7045 = vadd.f32 %v7021, %v7041
    %v7046 = vadd.f32 %v7035, %v7042
    %v7047 = vadd.f32 %v7023, %v7041
    %v7048 = vadd.f32 %v7037, %v7042
    %v7049 = vmax.f32 %v7045, 0.0
    %v7050 = vmax.f32 %v7046, 0.0
    %v7051 = vmax.f32 %v7047, 0.0
    %v7052 = vmax.f32 %v7048, 0.0
    %v7053 = vpack.c.bf16 %v7051, %v7049
    %v7054 = vpack.c.bf16 %v7052, %v7050
    %v7055 = vld [vmem:[#allocation72] sm:$0xff]
    %v7056 = vld [vmem:[#allocation72 + $0x8] sm:$0xff]
    %v7057 = vld [vmem:[#allocation72 + $0x10] sm:$0xff]
    %v7058 = vld [vmem:[#allocation72 + $0x18] sm:$0xff]
    %v7059 = vld [vmem:[#allocation72 + $0x20] sm:$0xff]
    %v7060 = vld [vmem:[#allocation72 + $0x28] sm:$0xff]
    %v7061 = vld [vmem:[#allocation72 + $0x30] sm:$0xff]
    %v7062 = vld [vmem:[#allocation72 + $0x38] sm:$0xff]
    %v7063 = vld [vmem:[#allocation72 + $0x40] sm:$0xff]
    %v7064 = vld [vmem:[#allocation72 + $0x48] sm:$0xff]
    %v7065 = vld [vmem:[#allocation72 + $0x50] sm:$0xff]
    %v7066 = vld [vmem:[#allocation72 + $0x58] sm:$0xff]
    %v7067 = vld [vmem:[#allocation72 + $0x60] sm:$0xff]
    %v7068 = vld [vmem:[#allocation72 + $0x68] sm:$0xff]
    %v7069 = vld [vmem:[#allocation72 + $0x70] sm:$0xff]
    %v7070 = vld [vmem:[#allocation72 + $0x78] sm:$0xff]
    %v7071 = vld [vmem:[#allocation72 + $0x80] sm:$0xff]
    %v7072 = vld [vmem:[#allocation72 + $0x88] sm:$0xff]
    %v7073 = vld [vmem:[#allocation72 + $0x90] sm:$0xff]
    %v7074 = vld [vmem:[#allocation72 + $0x98] sm:$0xff]
    %v7075 = vld [vmem:[#allocation72 + $0xa0] sm:$0xff]
    %v7076 = vld [vmem:[#allocation72 + $0xa8] sm:$0xff]
    %v7077 = vld [vmem:[#allocation72 + $0xb0] sm:$0xff]
    %v7078 = vld [vmem:[#allocation72 + $0xb8] sm:$0xff]
    %v7079 = vld [vmem:[#allocation72 + $0xc0] sm:$0xff]
    %v7080 = vld [vmem:[#allocation72 + $0xc8] sm:$0xff]
    %v7081 = vld [vmem:[#allocation72 + $0xd0] sm:$0xff]
    %v7082 = vld [vmem:[#allocation72 + $0xd8] sm:$0xff]
    %v7083 = vld [vmem:[#allocation72 + $0xe0] sm:$0xff]
    %v7084 = vld [vmem:[#allocation72 + $0xe8] sm:$0xff]
    %v7085 = vld [vmem:[#allocation72 + $0xf0] sm:$0xff]
    %v7086 = vld [vmem:[#allocation72 + $0xf8] sm:$0xff]
    %v7087 = vld [vmem:[#allocation73] sm:$0x3]
    %v7089 = vperm.slane %v7087, 0
    %v7090 = vperm.slane %v7087, 1
    %v7125 = vunpack.c.l.b16 %v7055
    %v7126 = vunpack.c.h.b16 %v7055
    %v7127 = vunpack.c.l.b16 %v7056
    %v7128 = vunpack.c.h.b16 %v7056
    %v7129 = vunpack.c.l.b16 %v7057
    %v7130 = vunpack.c.h.b16 %v7057
    %v7131 = vunpack.c.l.b16 %v7058
    %v7132 = vunpack.c.h.b16 %v7058
    %v7133 = vunpack.c.l.b16 %v7059
    %v7134 = vunpack.c.h.b16 %v7059
    %v7135 = vunpack.c.l.b16 %v7060
    %v7136 = vunpack.c.h.b16 %v7060
    %v7137 = vunpack.c.l.b16 %v7061
    %v7138 = vunpack.c.h.b16 %v7061
    %v7139 = vunpack.c.l.b16 %v7062
    %v7140 = vunpack.c.h.b16 %v7062
    %v7141 = vunpack.c.l.b16 %v7063
    %v7142 = vunpack.c.h.b16 %v7063
    %v7143 = vunpack.c.l.b16 %v7064
    %v7144 = vunpack.c.h.b16 %v7064
    %v7145 = vunpack.c.l.b16 %v7065
    %v7146 = vunpack.c.h.b16 %v7065
    %v7147 = vunpack.c.l.b16 %v7066
    %v7148 = vunpack.c.h.b16 %v7066
    %v7149 = vunpack.c.l.b16 %v7067
    %v7150 = vunpack.c.h.b16 %v7067
    %v7151 = vunpack.c.l.b16 %v7068
    %v7152 = vunpack.c.h.b16 %v7068
    %v7153 = vunpack.c.l.b16 %v7069
    %v7154 = vunpack.c.h.b16 %v7069
    %v7155 = vunpack.c.l.b16 %v7070
    %v7156 = vunpack.c.h.b16 %v7070
    %v7157 = vunpack.c.l.b16 %v7071
    %v7158 = vunpack.c.h.b16 %v7071
    %v7159 = vunpack.c.l.b16 %v7072
    %v7160 = vunpack.c.h.b16 %v7072
    %v7161 = vunpack.c.l.b16 %v7073
    %v7162 = vunpack.c.h.b16 %v7073
    %v7163 = vunpack.c.l.b16 %v7074
    %v7164 = vunpack.c.h.b16 %v7074
    %v7165 = vunpack.c.l.b16 %v7075
    %v7166 = vunpack.c.h.b16 %v7075
    %v7167 = vunpack.c.l.b16 %v7076
    %v7168 = vunpack.c.h.b16 %v7076
    %v7169 = vunpack.c.l.b16 %v7077
    %v7170 = vunpack.c.h.b16 %v7077
    %v7171 = vunpack.c.l.b16 %v7078
    %v7172 = vunpack.c.h.b16 %v7078
    %v7173 = vunpack.c.l.b16 %v7079
    %v7174 = vunpack.c.h.b16 %v7079
    %v7175 = vunpack.c.l.b16 %v7080
    %v7176 = vunpack.c.h.b16 %v7080
    %v7177 = vunpack.c.l.b16 %v7081
    %v7178 = vunpack.c.h.b16 %v7081
    %v7179 = vunpack.c.l.b16 %v7082
    %v7180 = vunpack.c.h.b16 %v7082
    %v7181 = vunpack.c.l.b16 %v7083
    %v7182 = vunpack.c.h.b16 %v7083
    %v7183 = vunpack.c.l.b16 %v7084
    %v7184 = vunpack.c.h.b16 %v7084
    %v7185 = vunpack.c.l.b16 %v7085
    %v7186 = vunpack.c.h.b16 %v7085
    %v7187 = vunpack.c.l.b16 %v7086
    %v7188 = vunpack.c.h.b16 %v7086
    %v7189 = vpack.c.b16 %v7127, %v7125
    %v7190 = vpack.c.b16 %v7128, %v7126
    %v7191 = vpack.c.b16 %v7131, %v7129
    %v7192 = vpack.c.b16 %v7132, %v7130
    %v7193 = vpack.c.b16 %v7135, %v7133
    %v7194 = vpack.c.b16 %v7136, %v7134
    %v7195 = vpack.c.b16 %v7139, %v7137
    %v7196 = vpack.c.b16 %v7140, %v7138
    %v7197 = vpack.c.b16 %v7143, %v7141
    %v7198 = vpack.c.b16 %v7144, %v7142
    %v7199 = vpack.c.b16 %v7147, %v7145
    %v7200 = vpack.c.b16 %v7148, %v7146
    %v7201 = vpack.c.b16 %v7151, %v7149
    %v7202 = vpack.c.b16 %v7152, %v7150
    %v7203 = vpack.c.b16 %v7155, %v7153
    %v7204 = vpack.c.b16 %v7156, %v7154
    %v7205 = vpack.c.b16 %v7159, %v7157
    %v7206 = vpack.c.b16 %v7160, %v7158
    %v7207 = vpack.c.b16 %v7163, %v7161
    %v7208 = vpack.c.b16 %v7164, %v7162
    %v7209 = vpack.c.b16 %v7167, %v7165
    %v7210 = vpack.c.b16 %v7168, %v7166
    %v7211 = vpack.c.b16 %v7171, %v7169
    %v7212 = vpack.c.b16 %v7172, %v7170
    %v7213 = vpack.c.b16 %v7175, %v7173
    %v7214 = vpack.c.b16 %v7176, %v7174
    %v7215 = vpack.c.b16 %v7179, %v7177
    %v7216 = vpack.c.b16 %v7180, %v7178
    %v7217 = vpack.c.b16 %v7183, %v7181
    %v7218 = vpack.c.b16 %v7184, %v7182
    %v7219 = vpack.c.b16 %v7187, %v7185
    %v7220 = vpack.c.b16 %v7188, %v7186
    %7253 = vmatpush.bf16.msra.mxu0 %v7203
    %7254 = vmatpush.bf16.msra.mxu0 %v7201
    %7255 = vmatpush.bf16.msra.mxu0 %v7199
    %7256 = vmatpush.bf16.msra.mxu0 %v7197
    %7257 = vmatpush.bf16.msra.mxu0 %v7195
    %7258 = vmatpush.bf16.msra.mxu0 %v7193
    %7259 = vmatpush.bf16.msra.mxu0 %v7191
    %7260 = vmatpush.bf16.msra.mxu0 %v7189
    %7261 = vmatmul.bf16.gmra.mxu0 %v7053
    %v7262 = vpop.f32.mrf.mxu0
    %v7263 = vadd.f32 %v7089, %v7262
    %v7264 = vpop.f32.mrf.mxu0
    %v7265 = vadd.f32 %v7089, %v7264
    %7266 = vdwg.mxu0
    %7267 = vmatpush.bf16.msra.mxu0 %v7219
    %7268 = vmatpush.bf16.msra.mxu0 %v7217
    %7269 = vmatpush.bf16.msra.mxu0 %v7215
    %7270 = vmatpush.bf16.msra.mxu0 %v7213
    %7271 = vmatpush.bf16.msra.mxu0 %v7211
    %7272 = vmatpush.bf16.msra.mxu0 %v7209
    %7273 = vmatpush.bf16.msra.mxu0 %v7207
    %7274 = vmatpush.bf16.msra.mxu0 %v7205
    %7275 = vmatmul.bf16.gmra.mxu0 %v7054
    %v7276 = vpop.f32.mrf.mxu0
    %v7277 = vadd.f32 %v7263, %v7276
    %v7278 = vpop.f32.mrf.mxu0
    %v7279 = vadd.f32 %v7265, %v7278
    %7280 = vdwg.mxu0
    %7281 = vmatpush.bf16.msra.mxu0 %v7204
    %7282 = vmatpush.bf16.msra.mxu0 %v7202
    %7283 = vmatpush.bf16.msra.mxu0 %v7200
    %7284 = vmatpush.bf16.msra.mxu0 %v7198
    %7285 = vmatpush.bf16.msra.mxu0 %v7196
    %7286 = vmatpush.bf16.msra.mxu0 %v7194
    %7287 = vmatpush.bf16.msra.mxu0 %v7192
    %7288 = vmatpush.bf16.msra.mxu0 %v7190
    %7289 = vmatmul.bf16.gmra.mxu0 %v7053
    %v7290 = vpop.f32.mrf.mxu0
    %v7291 = vadd.f32 %v7090, %v7290
    %v7292 = vpop.f32.mrf.mxu0
    %v7293 = vadd.f32 %v7090, %v7292
    %7294 = vdwg.mxu0
    %7295 = vmatpush.bf16.msra.mxu0 %v7220
    %7296 = vmatpush.bf16.msra.mxu0 %v7218
    %7297 = vmatpush.bf16.msra.mxu0 %v7216
    %7298 = vmatpush.bf16.msra.mxu0 %v7214
    %7299 = vmatpush.bf16.msra.mxu0 %v7212
    %7300 = vmatpush.bf16.msra.mxu0 %v7210
    %7301 = vmatpush.bf16.msra.mxu0 %v7208
    %7302 = vmatpush.bf16.msra.mxu0 %v7206
    %7303 = vmatmul.bf16.gmra.mxu0 %v7054
    %v7304 = vpop.f32.mrf.mxu0
    %v7305 = vadd.f32 %v7291, %v7304
    %v7306 = vpop.f32.mrf.mxu0
    %v7307 = vadd.f32 %v7293, %v7306
    %7308 = vdwg.mxu0
    %v7309 = vmax.f32 %v7277, 0.0
    %v7310 = vmax.f32 %v7305, 0.0
    %v7311 = vmax.f32 %v7279, 0.0
    %v7312 = vmax.f32 %v7307, 0.0
    %v7313 = vpack.c.bf16 %v7311, %v7309
    %v7314 = vpack.c.bf16 %v7312, %v7310
    %v7315 = vld [vmem:[%s133] sm:$0xf]
    %v7316 = vld [vmem:[%s133 + $0x4] sm:$0xf]
    %v7317 = vld [vmem:[%s133 + $0x8] sm:$0xf]
    %v7318 = vld [vmem:[%s133 + $0xc] sm:$0xf]
    %v7319 = vld [vmem:[%s133 + $0x10] sm:$0xf]
    %v7320 = vld [vmem:[%s133 + $0x14] sm:$0xf]
    %v7321 = vld [vmem:[%s133 + $0x18] sm:$0xf]
    %v7322 = vld [vmem:[%s133 + $0x1c] sm:$0xf]
    %v7323 = vld [vmem:[%s133 + $0x20] sm:$0xf]
    %v7324 = vld [vmem:[%s133 + $0x24] sm:$0xf]
    %v7325 = vld [vmem:[%s133 + $0x28] sm:$0xf]
    %v7326 = vld [vmem:[%s133 + $0x2c] sm:$0xf]
    %v7327 = vld [vmem:[%s133 + $0x30] sm:$0xf]
    %v7328 = vld [vmem:[%s133 + $0x34] sm:$0xf]
    %v7329 = vld [vmem:[%s133 + $0x38] sm:$0xf]
    %v7330 = vld [vmem:[%s133 + $0x3c] sm:$0xf]
    %v7331 = vld [vmem:[%s133 + $0x40] sm:$0xf]
    %v7332 = vld [vmem:[%s133 + $0x44] sm:$0xf]
    %v7333 = vld [vmem:[%s133 + $0x48] sm:$0xf]
    %v7334 = vld [vmem:[%s133 + $0x4c] sm:$0xf]
    %v7335 = vld [vmem:[%s133 + $0x50] sm:$0xf]
    %v7336 = vld [vmem:[%s133 + $0x54] sm:$0xf]
    %v7337 = vld [vmem:[%s133 + $0x58] sm:$0xf]
    %v7338 = vld [vmem:[%s133 + $0x5c] sm:$0xf]
    %v7339 = vld [vmem:[%s133 + $0x60] sm:$0xf]
    %v7340 = vld [vmem:[%s133 + $0x64] sm:$0xf]
    %v7341 = vld [vmem:[%s133 + $0x68] sm:$0xf]
    %v7342 = vld [vmem:[%s133 + $0x6c] sm:$0xf]
    %v7343 = vld [vmem:[%s133 + $0x70] sm:$0xf]
    %v7344 = vld [vmem:[%s133 + $0x74] sm:$0xf]
    %v7345 = vld [vmem:[%s133 + $0x78] sm:$0xf]
    %v7346 = vld [vmem:[%s133 + $0x7c] sm:$0xf]
    %v7347 = vld [vmem:[#allocation75] sm:$0x1]
    %v7349 = vperm.slane %v7347, 0
    %v7383 = vunpack.c.l.b16 %v7315
    %v7384 = vunpack.c.l.b16 %v7316
    %v7385 = vunpack.c.l.b16 %v7317
    %v7386 = vunpack.c.l.b16 %v7318
    %v7387 = vunpack.c.l.b16 %v7319
    %v7388 = vunpack.c.l.b16 %v7320
    %v7389 = vunpack.c.l.b16 %v7321
    %v7390 = vunpack.c.l.b16 %v7322
    %v7391 = vunpack.c.l.b16 %v7323
    %v7392 = vunpack.c.l.b16 %v7324
    %v7393 = vunpack.c.l.b16 %v7325
    %v7394 = vunpack.c.l.b16 %v7326
    %v7395 = vunpack.c.l.b16 %v7327
    %v7396 = vunpack.c.l.b16 %v7328
    %v7397 = vunpack.c.l.b16 %v7329
    %v7398 = vunpack.c.l.b16 %v7330
    %v7399 = vunpack.c.l.b16 %v7331
    %v7400 = vunpack.c.l.b16 %v7332
    %v7401 = vunpack.c.l.b16 %v7333
    %v7402 = vunpack.c.l.b16 %v7334
    %v7403 = vunpack.c.l.b16 %v7335
    %v7404 = vunpack.c.l.b16 %v7336
    %v7405 = vunpack.c.l.b16 %v7337
    %v7406 = vunpack.c.l.b16 %v7338
    %v7407 = vunpack.c.l.b16 %v7339
    %v7408 = vunpack.c.l.b16 %v7340
    %v7409 = vunpack.c.l.b16 %v7341
    %v7410 = vunpack.c.l.b16 %v7342
    %v7411 = vunpack.c.l.b16 %v7343
    %v7412 = vunpack.c.l.b16 %v7344
    %v7413 = vunpack.c.l.b16 %v7345
    %v7414 = vunpack.c.l.b16 %v7346
    %v7415 = vpack.c.b16 %v7384, %v7383
    %v7416 = vpack.c.b16 %v7386, %v7385
    %v7417 = vpack.c.b16 %v7388, %v7387
    %v7418 = vpack.c.b16 %v7390, %v7389
    %v7419 = vpack.c.b16 %v7392, %v7391
    %v7420 = vpack.c.b16 %v7394, %v7393
    %v7421 = vpack.c.b16 %v7396, %v7395
    %v7422 = vpack.c.b16 %v7398, %v7397
    %v7423 = vpack.c.b16 %v7400, %v7399
    %v7424 = vpack.c.b16 %v7402, %v7401
    %v7425 = vpack.c.b16 %v7404, %v7403
    %v7426 = vpack.c.b16 %v7406, %v7405
    %v7427 = vpack.c.b16 %v7408, %v7407
    %v7428 = vpack.c.b16 %v7410, %v7409
    %v7429 = vpack.c.b16 %v7412, %v7411
    %v7430 = vpack.c.b16 %v7414, %v7413
    %7447 = vmatpush.bf16.msra.mxu0 %v7422
    %7448 = vmatpush.bf16.msra.mxu0 %v7421
    %7449 = vmatpush.bf16.msra.mxu0 %v7420
    %7450 = vmatpush.bf16.msra.mxu0 %v7419
    %7451 = vmatpush.bf16.msra.mxu0 %v7418
    %7452 = vmatpush.bf16.msra.mxu0 %v7417
    %7453 = vmatpush.bf16.msra.mxu0 %v7416
    %7454 = vmatpush.bf16.msra.mxu0 %v7415
    %7455 = vmatmul.bf16.gmra.mxu0 %v7313
    %v7456 = vpop.f32.mrf.mxu0
    %v7457 = vadd.f32 %v7349, %v7456
    %v7458 = vpop.f32.mrf.mxu0
    %v7459 = vadd.f32 %v7349, %v7458
    %7460 = vdwg.mxu0
    %7461 = vmatpush.bf16.msra.mxu0 %v7430
    %7462 = vmatpush.bf16.msra.mxu0 %v7429
    %7463 = vmatpush.bf16.msra.mxu0 %v7428
    %7464 = vmatpush.bf16.msra.mxu0 %v7427
    %7465 = vmatpush.bf16.msra.mxu0 %v7426
    %7466 = vmatpush.bf16.msra.mxu0 %v7425
    %7467 = vmatpush.bf16.msra.mxu0 %v7424
    %7468 = vmatpush.bf16.msra.mxu0 %v7423
    %7469 = vmatmul.bf16.gmra.mxu0 %v7314
    %v7470 = vpop.f32.mrf.mxu0
    %v7471 = vadd.f32 %v7457, %v7470
    %v7472 = vpop.f32.mrf.mxu0
    %v7473 = vadd.f32 %v7459, %v7472
    %7474 = vdwg.mxu0
    %7475 = vst.msk [vmem:[%s137] sm:$0xff] %vm2599, %v4447
    %vm7476 = vcmask 254976
    %7477 = vst.msk [vmem:[%s137 + $0x8] sm:$0x3] %vm7476, %v4449
    %7478 = vst.msk [vmem:[%s139] sm:$0xff] %vm2599, %v4647
    %7479 = vst.msk [vmem:[%s139 + $0x8] sm:$0x3] %vm7476, %v4648
    %7480 = vst.msk [vmem:[%s141] sm:$0xff] %vm2599, %v6537
    %7481 = vst.msk [vmem:[%s141 + $0x8] sm:$0x3] %vm7476, %v6539
    %7482 = vst.msk [vmem:[%s143] sm:$0xff] %vm2599, %v6737
    %7483 = vst.msk [vmem:[%s143 + $0x8] sm:$0x3] %vm7476, %v6738
    %vm7484 = vcmask 105472
    %7485 = vst.msk [vmem:[%s145] sm:$0xff] %vm7484, %v7471
    %vm7486 = vcmask 99328
    %7487 = vst.msk [vmem:[%s145 + $0x8] sm:$0x3] %vm7486, %v7473
    // Predicated region
    $region470: #{latent_forward.3} parent=1 // pred_check
      _
    $region471: #{latent_forward.3} parent=1 // pred_check_branch
      %7489 = sbr.rel (0) target = $region473
    $region472: #{latent_forward.3} parent=1 // pred_region
      _
    $region473: #{latent_forward.3} parent=1 // pred_fallthru
      _
    // Predicated region
    $region474: #{latent_forward.3} parent=1 // pred_check
      _
    $region475: #{latent_forward.3} parent=1 // pred_check_branch
      %7491 = sbr.rel (0) target = $region477
    $region476: #{latent_forward.3} parent=1 // pred_region
      _
    $region477: #{latent_forward.3} parent=1 // pred_fallthru
      _
    // Predicated region
    $region478: #{latent_forward.3} parent=1 // pred_check
      _
    $region479: #{latent_forward.3} parent=1 // pred_check_branch
      %7493 = sbr.rel (0) target = $region481
    $region480: #{latent_forward.3} parent=1 // pred_region
      _
    $region481: #{latent_forward.3} parent=1 // pred_fallthru
      _
    // Predicated region
    $region482: #{latent_forward.3} parent=1 // pred_check
      _
    $region483: #{latent_forward.3} parent=1 // pred_check_branch
      %7495 = sbr.rel (0) target = $region485
    $region484: #{latent_forward.3} parent=1 // pred_region
      _
    $region485: #{latent_forward.3} parent=1 // pred_fallthru
      _
    // Predicated region
    $region486: #{latent_forward.3} parent=1 // pred_check
      _
    $region487: #{latent_forward.3} parent=1 // pred_check_branch
      %7497 = sbr.rel (0) target = $region489
    $region488: #{latent_forward.3} parent=1 // pred_region
      _
    $region489: #{latent_forward.3} parent=1 // pred_fallthru
      _
    // Predicated region
    $region490: #{latent_forward.3} parent=1 // pred_check
      _
    $region491: #{latent_forward.3} parent=1 // pred_check_branch
      %7499 = sbr.rel (0) target = $region493
    $region492: #{latent_forward.3} parent=1 // pred_region
      _
    $region493: #{latent_forward.3} parent=1 // pred_fallthru
      _
    // Predicated region
    $region494: #{latent_forward.3} parent=1 // pred_check
      _
    $region495: #{latent_forward.3} parent=1 // pred_check_branch
      %7501 = sbr.rel (0) target = $region497
    $region496: #{latent_forward.3} parent=1 // pred_region
      _
    $region497: #{latent_forward.3} parent=1 // pred_fallthru
      _
    // Predicated region
    $region498: #{latent_forward.3} parent=1 // pred_check
      _
    $region499: #{latent_forward.3} parent=1 // pred_check_branch
      %7503 = sbr.rel (0) target = $region501
    $region500: #{latent_forward.3} parent=1 // pred_region
      _
    $region501: #{latent_forward.3} parent=1 // pred_fallthru
      _
    // Predicated region
    $region502: #{latent_forward.3} parent=1 // pred_check
      _
    $region503: #{latent_forward.3} parent=1 // pred_check_branch
      %7505 = sbr.rel (0) target = $region505
    $region504: #{latent_forward.3} parent=1 // pred_region
      _
    $region505: #{latent_forward.3} parent=1 // pred_fallthru
      _
    // Predicated region
    $region506: #{latent_forward.3} parent=1 // pred_check
      _
    $region507: #{latent_forward.3} parent=1 // pred_check_branch
      %7507 = sbr.rel (0) target = $region509
    $region508: #{latent_forward.3} parent=1 // pred_region
      _
    $region509: #{latent_forward.3} parent=1 // pred_fallthru
      _
    %7508 = vsyncpa [#allocation3], 1
    %7509 = vsyncpa [#allocation5], 1
    %7510 = vsyncpa [#allocation8], 1
    %7511 = vsyncpa [#allocation11], 1
    %7512 = vsyncpa [#allocation14], 1
    %7513 = vsyncpa [#allocation17], 1
    %7514 = vsyncpa [#allocation20], 1
    %7515 = vsyncpa [#allocation23], 1
    %7516 = vsyncpa [#allocation26], 1
    %7517 = vsyncpa [#allocation29], 1
    %7518 = vsyncpa [#allocation32], 1
    %7519 = vsyncpa [#allocation35], 1
    %7520 = vsyncpa [#allocation38], 1
    %7521 = vsyncpa [#allocation41], 1
    %7522 = vsyncpa [#allocation44], 1
    %7523 = vsyncpa [#allocation47], 1
    %7524 = vsyncpa [#allocation50], 1
    %7525 = vsyncpa [#allocation53], 1
    %7526 = vsyncpa [#allocation56], 1
    %7527 = vsyncpa [#allocation59], 1
    %7528 = vsyncpa [#allocation62], 1
    %7529 = vsyncpa [#allocation65], 1
    %7530 = vsyncpa [#allocation68], 1
    %7531 = vsyncpa [#allocation71], 1
    %7532 = vsyncpa [#allocation74], 1

</llo_original>
